<compile_context>
chip_gen: v6e
topology: v6e:2x2x1
jax: 0.10.0
libtpu: 0.0.40
codegen_flags: <defaults>
</compile_context>

<pallas_src>
from functools import partial

import jax
import jax.numpy as jnp
from jax.experimental import pallas as pl
from jax.experimental.pallas import tpu as pltpu


# ---------------------------------------------------------------------------
# Fused kernel: cv1 (1x1x1 conv+BN+ReLU) -> pad -> cv2 (3x3x3 conv+BN+ReLU)
#               [-> + residual]
# ---------------------------------------------------------------------------
def bottleneck_kernel(x_c_ref, x_p_ref, x_n_ref, w1_ref, b1_ref,
                      w2_ref, b2_ref, o_ref, y1p_ref, *, add):
    # x_c_ref : (1, TD, H, W, C1)    center depth slices of this tile
    # x_p_ref : (1, 1,  H, W, C1)    depth slice just before the tile (halo)
    # x_n_ref : (1, 1,  H, W, C1)    depth slice just after the tile  (halo)
    # w1_ref  : (C1, Cm)             BN-folded cv1 weight
    # b1_ref  : (1, Cm)              BN-folded cv1 bias
    # w2_ref  : (27, Cm, C2)         BN-folded cv2 weight, tap-major (kd,kh,kw)
    # b2_ref  : (1, C2)              BN-folded cv2 bias
    # o_ref   : (1, TD, H, W, C2)
    # y1p_ref : (TD+2, H+2, W+2, Cm) VMEM scratch: zero-padded cv1 output
    _, TD, H, W, C1 = x_c_ref.shape
    Cm = w1_ref.shape[1]
    C2 = o_ref.shape[4]
    rows = TD * H * W

    d = pl.program_id(1)
    is_first = d == 0
    is_last = d == pl.num_programs(1) - 1

    w1 = w1_ref[...]
    b1 = b1_ref[...]

    def cv1(x2d):
        y = jnp.dot(x2d, w1, preferred_element_type=jnp.float32)
        return jnp.maximum(y + b1, 0.0)

    # Zero the scratch; only the D/H/W borders actually need it (they realize
    # the 'same' padding of cv2), the interior is fully overwritten below.
    y1p_ref[...] = jnp.zeros_like(y1p_ref)

    # cv1 on the TD center slices (also reused as the residual when add=True).
    x_c2d = x_c_ref[...].reshape(rows, C1)
    y1_c = cv1(x_c2d).reshape(TD, H, W, Cm)
    y1p_ref[1:TD + 1, 1:H + 1, 1:W + 1, :] = y1_c

    # cv1 on the two depth-halo slices (recomputed here so the cv1 activation
    # never touches HBM); masked to zero where the halo leaves the volume.
    y1_p = cv1(x_p_ref[...].reshape(H * W, C1)).reshape(1, H, W, Cm)
    y1p_ref[0:1, 1:H + 1, 1:W + 1, :] = jnp.where(is_first, 0.0, y1_p)

    y1_n = cv1(x_n_ref[...].reshape(H * W, C1)).reshape(1, H, W, Cm)
    y1p_ref[TD + 1:TD + 2, 1:H + 1, 1:W + 1, :] = jnp.where(is_last, 0.0, y1_n)

    # cv2: 3x3x3 'same' conv as 27 shifted-window matmuls accumulated in f32.
    # (For large channel counts a further step is to fold the 27 taps into a
    #  single im2col matmul with K = 27*Cm and pad Cm/C2 to lane-dense sizes.)
    acc = jnp.zeros((rows, C2), jnp.float32)
    for kd in range(3):
        for kh in range(3):
            for kw in range(3):
                win = y1p_ref[kd:kd + TD, kh:kh + H, kw:kw + W, :]
                acc = acc + jnp.dot(win.reshape(rows, Cm),
                                    w2_ref[kd * 9 + kh * 3 + kw],
                                    preferred_element_type=jnp.float32)

    y = jnp.maximum(acc + b2_ref[...], 0.0)
    if add:
        # c1 == c2 here, so the residual is exactly the already-loaded x block.
        y = y + x_c2d
    o_ref[...] = y.reshape(1, TD, H, W, C2).astype(o_ref.dtype)


# ---------------------------------------------------------------------------
# Wrapper
# ---------------------------------------------------------------------------
def fold_bn(w, gamma, beta, mean, var, eps=1e-3):
    """Fold inference-mode BN into a conv whose output channel is the LAST
    axis of `w`. Returns (folded_weight, folded_bias)."""
    scale = gamma / jnp.sqrt(var + eps)
    return w * scale, beta - mean * scale


def bottleneck_forward(x_ncdhw, params, shortcut=True, d_tile=4):
    """x_ncdhw: (N, C1, D, H, W) float32. Returns (N, C2, D, H, W)."""
    w1f, b1f, w2f, b2f = params
    x = jnp.transpose(x_ncdhw, (0, 2, 3, 4, 1)).astype(jnp.float32)  # NDHWC
    N, D, H, W, C1 = x.shape
    Cm = w1f.shape[1]
    C2 = w2f.shape[-1]
    add = bool(shortcut) and (C1 == C2)

    # Largest divisor of D not exceeding d_tile (avoids partial depth tiles).
    TD = 1
    for t in range(1, min(D, max(int(d_tile), 1)) + 1):
        if D % t == 0:
            TD = t
    num_d = D // TD

    w2_taps = w2f.reshape(27, Cm, C2)  # tap-major (kd, kh, kw), BN folded

    def center_map(n, d):
        return (n, d, 0, 0, 0)

    def prev_map(n, d):  # depth slice d*TD - 1, clamped (masked in-kernel)
        return (n, jnp.maximum(d * TD - 1, 0), 0, 0, 0)

    def next_map(n, d):  # depth slice (d+1)*TD, clamped (masked in-kernel)
        return (n, jnp.minimum((d + 1) * TD, D - 1), 0, 0, 0)

    kern = partial(bottleneck_kernel, add=add)
    out = pl.pallas_call(
        kern,
        out_shape=jax.ShapeDtypeStruct((N, D, H, W, C2), jnp.float32),
        grid=(N, num_d),
        in_specs=[
            pl.BlockSpec((1, TD, H, W, C1), center_map),
            pl.BlockSpec((1, 1, H, W, C1), prev_map),
            pl.BlockSpec((1, 1, H, W, C1), next_map),
            pl.BlockSpec((C1, Cm), lambda n, d: (0, 0)),
            pl.BlockSpec((1, Cm), lambda n, d: (0, 0)),
            pl.BlockSpec((27, Cm, C2), lambda n, d: (0, 0, 0)),
            pl.BlockSpec((1, C2), lambda n, d: (0, 0)),
        ],
        out_specs=pl.BlockSpec((1, TD, H, W, C2), center_map),
        scratch_shapes=[pltpu.VMEM((TD + 2, H + 2, W + 2, Cm), jnp.float32)],
        compiler_params=pltpu.CompilerParams(
            dimension_semantics=("parallel", "parallel"),
            vmem_limit_bytes=64 * 1024 * 1024),
    )(x, x, x, w1f, b1f.reshape(1, Cm), w2_taps, b2f.reshape(1, C2))

    return jnp.transpose(out, (0, 4, 1, 2, 3))  # back to NCDHW


# ---------------------------------------------------------------------------
# Pure-JAX reference (unfolded BN) for correctness check
# ---------------------------------------------------------------------------
def reference_forward(x_ncdhw, w1, bn1, w2, bn2, shortcut=True, eps=1e-3):
    x = jnp.transpose(x_ncdhw, (0, 2, 3, 4, 1))
    g, b, m, v = bn1
    y = jnp.einsum('ndhwc,co->ndhwo', x, w1)
    y = (y - m) / jnp.sqrt(v + eps) * g + b
    y = jnp.maximum(y, 0.0)

    y2 = jax.lax.conv_general_dilated(
        y, w2, window_strides=(1, 1, 1),
        padding=((1, 1), (1, 1), (1, 1)),
        dimension_numbers=('NDHWC', 'DHWIO', 'NDHWC'))
    g, b, m, v = bn2
    y2 = (y2 - m) / jnp.sqrt(v + eps) * g + b
    y2 = jnp.maximum(y2, 0.0)

    if shortcut and x.shape[-1] == y2.shape[-1]:
        y2 = y2 + x
    return jnp.transpose(y2, (0, 4, 1, 2, 3))


# ---------------------------------------------------------------------------
if __name__ == "__main__":
    # Small shapes consistent with the module (Conv3d -> NCDHW input).
    N, C1, D, H, W = 2, 4, 8, 8, 8
    C2 = C1
    e = 0.5
    Cm = int(C2 * e)                      # hidden channels c_
    eps = 1e-3                            # BatchNorm3d eps

    key = jax.random.PRNGKey(0)
    ks = jax.random.split(key, 12)

    x = jax.random.normal(ks[0], (N, C1, D, H, W), jnp.float32)

    # cv1.conv.weight (Cm, C1, 1, 1, 1) stored here as (C1, Cm).
    w1 = jax.random.normal(ks[1], (C1, Cm), jnp.float32) * 0.3
    # cv2.conv.weight (C2, Cm, 3, 3, 3) stored here as DHWIO (3, 3, 3, Cm, C2).
    w2 = jax.random.normal(ks[2], (3, 3, 3, Cm, C2), jnp.float32) * 0.2

    bn1 = (jax.random.uniform(ks[3], (Cm,), jnp.float32, 0.5, 1.5),   # gamma
           jax.random.normal(ks[4], (Cm,), jnp.float32) * 0.1,        # beta
           jax.random.normal(ks[5], (Cm,), jnp.float32) * 0.1,        # mean
           jax.random.uniform(ks[6], (Cm,), jnp.float32, 0.5, 1.5))   # var
    bn2 = (jax.random.uniform(ks[7], (C2,), jnp.float32, 0.5, 1.5),
           jax.random.normal(ks[8], (C2,), jnp.float32) * 0.1,
           jax.random.normal(ks[9], (C2,), jnp.float32) * 0.1,
           jax.random.uniform(ks[10], (C2,), jnp.float32, 0.5, 1.5))

    # Fold inference-mode BN into the conv weights/bias.
    w1f, b1f = fold_bn(w1, *bn1, eps=eps)
    w2f, b2f = fold_bn(w2, *bn2, eps=eps)
    params = (w1f, b1f, w2f, b2f)

    # Exercise both the residual and the non-residual paths.
    for shortcut in (True, False):
        out = bottleneck_forward(x, params, shortcut=shortcut, d_tile=4)
        out = jax.block_until_ready(out)
        ref = reference_forward(x, w1, bn1, w2, bn2, shortcut=shortcut, eps=eps)
        ref = jax.block_until_ready(ref)
        assert out.shape == (N, C2, D, H, W)
        assert jnp.allclose(out, ref, atol=1e-4, rtol=1e-4), (
            shortcut, float(jnp.max(jnp.abs(out - ref))))

    print("KERNEL_OK")
</pallas_src>

<mosaic_0001>
module attributes {stable_mosaic.version = 11 : i64} {
  func.func @bottleneck_kernel(%arg0: i32, %arg1: i32, %arg2: memref<1x4x8x8x4xf32, #tpu.memory_space<vmem>>, %arg3: memref<1x1x8x8x4xf32, #tpu.memory_space<vmem>>, %arg4: memref<1x1x8x8x4xf32, #tpu.memory_space<vmem>>, %arg5: memref<4x2xf32, #tpu.memory_space<vmem>>, %arg6: memref<1x2xf32, #tpu.memory_space<vmem>>, %arg7: memref<27x2x4xf32, #tpu.memory_space<vmem>>, %arg8: memref<1x4xf32, #tpu.memory_space<vmem>>, %arg9: memref<1x4x8x8x4xf32, #tpu.memory_space<vmem>>, %arg10: memref<6x10x10x2xf32, #tpu.memory_space<vmem>>) attributes {dimension_semantics = [#tpu.dimension_semantics<parallel>, #tpu.dimension_semantics<parallel>], iteration_bounds = array<i64: 2, 2>, scalar_prefetch = 0 : i64, scratch_operands = 1 : i64, tpu.core_type = #tpu.core_type<tc>, window_params = [{transform_indices = @transform_0, window_bounds = array<i64: 1, 4, 8, 8, 4>}, {transform_indices = @transform_1, window_bounds = array<i64: 1, 1, 8, 8, 4>}, {transform_indices = @transform_2, window_bounds = array<i64: 1, 1, 8, 8, 4>}, {pipeline_mode = #tpu.pipeline_mode<synchronous>, transform_indices = @transform_3, window_bounds = array<i64: 4, 2>}, {pipeline_mode = #tpu.pipeline_mode<synchronous>, transform_indices = @transform_4, window_bounds = array<i64: 1, 2>}, {pipeline_mode = #tpu.pipeline_mode<synchronous>, transform_indices = @transform_5, window_bounds = array<i64: 27, 2, 4>}, {pipeline_mode = #tpu.pipeline_mode<synchronous>, transform_indices = @transform_6, window_bounds = array<i64: 1, 4>}, {transform_indices = @transform_7, window_bounds = array<i64: 1, 4, 8, 8, 4>}]} {
    %c0_i32 = arith.constant 0 : i32
    %0 = arith.cmpi eq, %arg1, %c0_i32 : i32
    %c1_i32 = arith.constant 1 : i32
    %1 = arith.cmpi eq, %arg1, %c1_i32 : i32
    %c0 = arith.constant 0 : index
    %c0_0 = arith.constant 0 : index
    %2 = vector.load %arg5[%c0, %c0_0] : memref<4x2xf32, #tpu.memory_space<vmem>>, vector<4x2xf32>
    %c0_1 = arith.constant 0 : index
    %c0_2 = arith.constant 0 : index
    %3 = vector.load %arg6[%c0_1, %c0_2] : memref<1x2xf32, #tpu.memory_space<vmem>>, vector<1x2xf32>
    %cst = arith.constant 0.000000e+00 : f32
    %4 = vector.broadcast %cst : f32 to vector<6x10x10x2xf32>
    %c0_3 = arith.constant 0 : index
    %c0_4 = arith.constant 0 : index
    %c0_5 = arith.constant 0 : index
    %c0_6 = arith.constant 0 : index
    %5 = vector.load %arg10[%c0_3, %c0_4, %c0_5, %c0_6] : memref<6x10x10x2xf32, #tpu.memory_space<vmem>>, vector<6x10x10x2xf32>
    tpu.vector_store %arg10[%c0_3, %c0_4, %c0_5, %c0_6], %4 {strides = array<i32>} : memref<6x10x10x2xf32, #tpu.memory_space<vmem>>, vector<6x10x10x2xf32>,
    %c0_7 = arith.constant 0 : index
    %c0_8 = arith.constant 0 : index
    %c0_9 = arith.constant 0 : index
    %c0_10 = arith.constant 0 : index
    %c0_11 = arith.constant 0 : index
    %6 = vector.load %arg2[%c0_7, %c0_8, %c0_9, %c0_10, %c0_11] : memref<1x4x8x8x4xf32, #tpu.memory_space<vmem>>, vector<1x4x8x8x4xf32>
    %7 = vector.shape_cast %6 : vector<1x4x8x8x4xf32> to vector<256x4xf32>
    %cst_12 = arith.constant dense<0.000000e+00> : vector<256x2xf32>
    %8 = tpu.matmul %7, %2, %cst_12 {dimension_numbers = #tpu.dot_dimension_numbers<[1], [0], [0], [1], [0, 0, 1, 1], [], []>} : vector<256x4xf32>, vector<4x2xf32>, vector<256x2xf32> -> vector<256x2xf32>
    %9 = vector.broadcast %3 : vector<1x2xf32> to vector<256x2xf32>
    %10 = arith.addf %8, %9 : vector<256x2xf32>
    %cst_13 = arith.constant 0.000000e+00 : f32
    %11 = vector.broadcast %cst_13 : f32 to vector<256x2xf32>
    %12 = arith.maximumf %10, %11 : vector<256x2xf32>
    %13 = vector.shape_cast %12 : vector<256x2xf32> to vector<4x8x8x2xf32>
    %c1 = arith.constant 1 : index
    %c1_14 = arith.constant 1 : index
    %c1_15 = arith.constant 1 : index
    %c0_16 = arith.constant 0 : index
    %14 = vector.load %arg10[%c1, %c1_14, %c1_15, %c0_16] : memref<6x10x10x2xf32, #tpu.memory_space<vmem>>, vector<4x8x8x2xf32>
    tpu.vector_store %arg10[%c1, %c1_14, %c1_15, %c0_16], %13 {strides = array<i32>} : memref<6x10x10x2xf32, #tpu.memory_space<vmem>>, vector<4x8x8x2xf32>,
    %c0_17 = arith.constant 0 : index
    %c0_18 = arith.constant 0 : index
    %c0_19 = arith.constant 0 : index
    %c0_20 = arith.constant 0 : index
    %c0_21 = arith.constant 0 : index
    %15 = vector.load %arg3[%c0_17, %c0_18, %c0_19, %c0_20, %c0_21] : memref<1x1x8x8x4xf32, #tpu.memory_space<vmem>>, vector<1x1x8x8x4xf32>
    %16 = vector.shape_cast %15 : vector<1x1x8x8x4xf32> to vector<64x4xf32>
    %cst_22 = arith.constant dense<0.000000e+00> : vector<64x2xf32>
    %17 = tpu.matmul %16, %2, %cst_22 {dimension_numbers = #tpu.dot_dimension_numbers<[1], [0], [0], [1], [0, 0, 1, 1], [], []>} : vector<64x4xf32>, vector<4x2xf32>, vector<64x2xf32> -> vector<64x2xf32>
    %18 = vector.broadcast %3 : vector<1x2xf32> to vector<64x2xf32>
    %19 = arith.addf %17, %18 : vector<64x2xf32>
    %cst_23 = arith.constant 0.000000e+00 : f32
    %20 = vector.broadcast %cst_23 : f32 to vector<64x2xf32>
    %21 = arith.maximumf %19, %20 : vector<64x2xf32>
    %22 = vector.shape_cast %21 : vector<64x2xf32> to vector<1x8x8x2xf32>
    %cst_24 = arith.constant 0.000000e+00 : f32
    %23 = vector.broadcast %cst_24 : f32 to vector<1x8x8x2xf32>
    %24 = arith.select %0, %23, %22 : vector<1x8x8x2xf32>
    %c0_25 = arith.constant 0 : index
    %c1_26 = arith.constant 1 : index
    %c1_27 = arith.constant 1 : index
    %c0_28 = arith.constant 0 : index
    %25 = vector.load %arg10[%c0_25, %c1_26, %c1_27, %c0_28] : memref<6x10x10x2xf32, #tpu.memory_space<vmem>>, vector<1x8x8x2xf32>
    tpu.vector_store %arg10[%c0_25, %c1_26, %c1_27, %c0_28], %24 {strides = array<i32>} : memref<6x10x10x2xf32, #tpu.memory_space<vmem>>, vector<1x8x8x2xf32>,
    %c0_29 = arith.constant 0 : index
    %c0_30 = arith.constant 0 : index
    %c0_31 = arith.constant 0 : index
    %c0_32 = arith.constant 0 : index
    %c0_33 = arith.constant 0 : index
    %26 = vector.load %arg4[%c0_29, %c0_30, %c0_31, %c0_32, %c0_33] : memref<1x1x8x8x4xf32, #tpu.memory_space<vmem>>, vector<1x1x8x8x4xf32>
    %27 = vector.shape_cast %26 : vector<1x1x8x8x4xf32> to vector<64x4xf32>
    %cst_34 = arith.constant dense<0.000000e+00> : vector<64x2xf32>
    %28 = tpu.matmul %27, %2, %cst_34 {dimension_numbers = #tpu.dot_dimension_numbers<[1], [0], [0], [1], [0, 0, 1, 1], [], []>} : vector<64x4xf32>, vector<4x2xf32>, vector<64x2xf32> -> vector<64x2xf32>
    %29 = vector.broadcast %3 : vector<1x2xf32> to vector<64x2xf32>
    %30 = arith.addf %28, %29 : vector<64x2xf32>
    %cst_35 = arith.constant 0.000000e+00 : f32
    %31 = vector.broadcast %cst_35 : f32 to vector<64x2xf32>
    %32 = arith.maximumf %30, %31 : vector<64x2xf32>
    %33 = vector.shape_cast %32 : vector<64x2xf32> to vector<1x8x8x2xf32>
    %cst_36 = arith.constant 0.000000e+00 : f32
    %34 = vector.broadcast %cst_36 : f32 to vector<1x8x8x2xf32>
    %35 = arith.select %1, %34, %33 : vector<1x8x8x2xf32>
    %c5 = arith.constant 5 : index
    %c1_37 = arith.constant 1 : index
    %c1_38 = arith.constant 1 : index
    %c0_39 = arith.constant 0 : index
    %36 = vector.load %arg10[%c5, %c1_37, %c1_38, %c0_39] : memref<6x10x10x2xf32, #tpu.memory_space<vmem>>, vector<1x8x8x2xf32>
    tpu.vector_store %arg10[%c5, %c1_37, %c1_38, %c0_39], %35 {strides = array<i32>} : memref<6x10x10x2xf32, #tpu.memory_space<vmem>>, vector<1x8x8x2xf32>,
    %cst_40 = arith.constant 0.000000e+00 : f32
    %37 = vector.broadcast %cst_40 : f32 to vector<256x4xf32>
    %c0_41 = arith.constant 0 : index
    %c0_42 = arith.constant 0 : index
    %c0_43 = arith.constant 0 : index
    %c0_44 = arith.constant 0 : index
    %38 = vector.load %arg10[%c0_41, %c0_42, %c0_43, %c0_44] : memref<6x10x10x2xf32, #tpu.memory_space<vmem>>, vector<4x8x8x2xf32>
    %39 = vector.shape_cast %38 : vector<4x8x8x2xf32> to vector<256x2xf32>
    %c0_45 = arith.constant 0 : index
    %c0_46 = arith.constant 0 : index
    %c0_47 = arith.constant 0 : index
    %40 = vector.load %arg7[%c0_45, %c0_46, %c0_47] : memref<27x2x4xf32, #tpu.memory_space<vmem>>, vector<1x2x4xf32>
    %41 = vector.shape_cast %40 : vector<1x2x4xf32> to vector<2x4xf32>
    %cst_48 = arith.constant dense<0.000000e+00> : vector<256x4xf32>
    %42 = tpu.matmul %39, %41, %cst_48 {dimension_numbers = #tpu.dot_dimension_numbers<[1], [0], [0], [1], [0, 0, 1, 1], [], []>} : vector<256x2xf32>, vector<2x4xf32>, vector<256x4xf32> -> vector<256x4xf32>
    %43 = arith.addf %37, %42 : vector<256x4xf32>
    %c0_49 = arith.constant 0 : index
    %c0_50 = arith.constant 0 : index
    %c1_51 = arith.constant 1 : index
    %c0_52 = arith.constant 0 : index
    %44 = vector.load %arg10[%c0_49, %c0_50, %c1_51, %c0_52] : memref<6x10x10x2xf32, #tpu.memory_space<vmem>>, vector<4x8x8x2xf32>
    %45 = vector.shape_cast %44 : vector<4x8x8x2xf32> to vector<256x2xf32>
    %c1_53 = arith.constant 1 : index
    %c0_54 = arith.constant 0 : index
    %c0_55 = arith.constant 0 : index
    %46 = vector.load %arg7[%c1_53, %c0_54, %c0_55] : memref<27x2x4xf32, #tpu.memory_space<vmem>>, vector<1x2x4xf32>
    %47 = vector.shape_cast %46 : vector<1x2x4xf32> to vector<2x4xf32>
    %cst_56 = arith.constant dense<0.000000e+00> : vector<256x4xf32>
    %48 = tpu.matmul %45, %47, %cst_56 {dimension_numbers = #tpu.dot_dimension_numbers<[1], [0], [0], [1], [0, 0, 1, 1], [], []>} : vector<256x2xf32>, vector<2x4xf32>, vector<256x4xf32> -> vector<256x4xf32>
    %49 = arith.addf %43, %48 : vector<256x4xf32>
    %c0_57 = arith.constant 0 : index
    %c0_58 = arith.constant 0 : index
    %c2 = arith.constant 2 : index
    %c0_59 = arith.constant 0 : index
    %50 = vector.load %arg10[%c0_57, %c0_58, %c2, %c0_59] : memref<6x10x10x2xf32, #tpu.memory_space<vmem>>, vector<4x8x8x2xf32>
    %51 = vector.shape_cast %50 : vector<4x8x8x2xf32> to vector<256x2xf32>
    %c2_60 = arith.constant 2 : index
    %c0_61 = arith.constant 0 : index
    %c0_62 = arith.constant 0 : index
    %52 = vector.load %arg7[%c2_60, %c0_61, %c0_62] : memref<27x2x4xf32, #tpu.memory_space<vmem>>, vector<1x2x4xf32>
    %53 = vector.shape_cast %52 : vector<1x2x4xf32> to vector<2x4xf32>
    %cst_63 = arith.constant dense<0.000000e+00> : vector<256x4xf32>
    %54 = tpu.matmul %51, %53, %cst_63 {dimension_numbers = #tpu.dot_dimension_numbers<[1], [0], [0], [1], [0, 0, 1, 1], [], []>} : vector<256x2xf32>, vector<2x4xf32>, vector<256x4xf32> -> vector<256x4xf32>
    %55 = arith.addf %49, %54 : vector<256x4xf32>
    %c0_64 = arith.constant 0 : index
    %c1_65 = arith.constant 1 : index
    %c0_66 = arith.constant 0 : index
    %c0_67 = arith.constant 0 : index
    %56 = vector.load %arg10[%c0_64, %c1_65, %c0_66, %c0_67] : memref<6x10x10x2xf32, #tpu.memory_space<vmem>>, vector<4x8x8x2xf32>
    %57 = vector.shape_cast %56 : vector<4x8x8x2xf32> to vector<256x2xf32>
    %c3 = arith.constant 3 : index
    %c0_68 = arith.constant 0 : index
    %c0_69 = arith.constant 0 : index
    %58 = vector.load %arg7[%c3, %c0_68, %c0_69] : memref<27x2x4xf32, #tpu.memory_space<vmem>>, vector<1x2x4xf32>
    %59 = vector.shape_cast %58 : vector<1x2x4xf32> to vector<2x4xf32>
    %cst_70 = arith.constant dense<0.000000e+00> : vector<256x4xf32>
    %60 = tpu.matmul %57, %59, %cst_70 {dimension_numbers = #tpu.dot_dimension_numbers<[1], [0], [0], [1], [0, 0, 1, 1], [], []>} : vector<256x2xf32>, vector<2x4xf32>, vector<256x4xf32> -> vector<256x4xf32>
    %61 = arith.addf %55, %60 : vector<256x4xf32>
    %c0_71 = arith.constant 0 : index
    %c1_72 = arith.constant 1 : index
    %c1_73 = arith.constant 1 : index
    %c0_74 = arith.constant 0 : index
    %62 = vector.load %arg10[%c0_71, %c1_72, %c1_73, %c0_74] : memref<6x10x10x2xf32, #tpu.memory_space<vmem>>, vector<4x8x8x2xf32>
    %63 = vector.shape_cast %62 : vector<4x8x8x2xf32> to vector<256x2xf32>
    %c4 = arith.constant 4 : index
    %c0_75 = arith.constant 0 : index
    %c0_76 = arith.constant 0 : index
    %64 = vector.load %arg7[%c4, %c0_75, %c0_76] : memref<27x2x4xf32, #tpu.memory_space<vmem>>, vector<1x2x4xf32>
    %65 = vector.shape_cast %64 : vector<1x2x4xf32> to vector<2x4xf32>
    %cst_77 = arith.constant dense<0.000000e+00> : vector<256x4xf32>
    %66 = tpu.matmul %63, %65, %cst_77 {dimension_numbers = #tpu.dot_dimension_numbers<[1], [0], [0], [1], [0, 0, 1, 1], [], []>} : vector<256x2xf32>, vector<2x4xf32>, vector<256x4xf32> -> vector<256x4xf32>
    %67 = arith.addf %61, %66 : vector<256x4xf32>
    %c0_78 = arith.constant 0 : index
    %c1_79 = arith.constant 1 : index
    %c2_80 = arith.constant 2 : index
    %c0_81 = arith.constant 0 : index
    %68 = vector.load %arg10[%c0_78, %c1_79, %c2_80, %c0_81] : memref<6x10x10x2xf32, #tpu.memory_space<vmem>>, vector<4x8x8x2xf32>
    %69 = vector.shape_cast %68 : vector<4x8x8x2xf32> to vector<256x2xf32>
    %c5_82 = arith.constant 5 : index
    %c0_83 = arith.constant 0 : index
    %c0_84 = arith.constant 0 : index
    %70 = vector.load %arg7[%c5_82, %c0_83, %c0_84] : memref<27x2x4xf32, #tpu.memory_space<vmem>>, vector<1x2x4xf32>
    %71 = vector.shape_cast %70 : vector<1x2x4xf32> to vector<2x4xf32>
    %cst_85 = arith.constant dense<0.000000e+00> : vector<256x4xf32>
    %72 = tpu.matmul %69, %71, %cst_85 {dimension_numbers = #tpu.dot_dimension_numbers<[1], [0], [0], [1], [0, 0, 1, 1], [], []>} : vector<256x2xf32>, vector<2x4xf32>, vector<256x4xf32> -> vector<256x4xf32>
    %73 = arith.addf %67, %72 : vector<256x4xf32>
    %c0_86 = arith.constant 0 : index
    %c2_87 = arith.constant 2 : index
    %c0_88 = arith.constant 0 : index
    %c0_89 = arith.constant 0 : index
    %74 = vector.load %arg10[%c0_86, %c2_87, %c0_88, %c0_89] : memref<6x10x10x2xf32, #tpu.memory_space<vmem>>, vector<4x8x8x2xf32>
    %75 = vector.shape_cast %74 : vector<4x8x8x2xf32> to vector<256x2xf32>
    %c6 = arith.constant 6 : index
    %c0_90 = arith.constant 0 : index
    %c0_91 = arith.constant 0 : index
    %76 = vector.load %arg7[%c6, %c0_90, %c0_91] : memref<27x2x4xf32, #tpu.memory_space<vmem>>, vector<1x2x4xf32>
    %77 = vector.shape_cast %76 : vector<1x2x4xf32> to vector<2x4xf32>
    %cst_92 = arith.constant dense<0.000000e+00> : vector<256x4xf32>
    %78 = tpu.matmul %75, %77, %cst_92 {dimension_numbers = #tpu.dot_dimension_numbers<[1], [0], [0], [1], [0, 0, 1, 1], [], []>} : vector<256x2xf32>, vector<2x4xf32>, vector<256x4xf32> -> vector<256x4xf32>
    %79 = arith.addf %73, %78 : vector<256x4xf32>
    %c0_93 = arith.constant 0 : index
    %c2_94 = arith.constant 2 : index
    %c1_95 = arith.constant 1 : index
    %c0_96 = arith.constant 0 : index
    %80 = vector.load %arg10[%c0_93, %c2_94, %c1_95, %c0_96] : memref<6x10x10x2xf32, #tpu.memory_space<vmem>>, vector<4x8x8x2xf32>
    %81 = vector.shape_cast %80 : vector<4x8x8x2xf32> to vector<256x2xf32>
    %c7 = arith.constant 7 : index
    %c0_97 = arith.constant 0 : index
    %c0_98 = arith.constant 0 : index
    %82 = vector.load %arg7[%c7, %c0_97, %c0_98] : memref<27x2x4xf32, #tpu.memory_space<vmem>>, vector<1x2x4xf32>
    %83 = vector.shape_cast %82 : vector<1x2x4xf32> to vector<2x4xf32>
    %cst_99 = arith.constant dense<0.000000e+00> : vector<256x4xf32>
    %84 = tpu.matmul %81, %83, %cst_99 {dimension_numbers = #tpu.dot_dimension_numbers<[1], [0], [0], [1], [0, 0, 1, 1], [], []>} : vector<256x2xf32>, vector<2x4xf32>, vector<256x4xf32> -> vector<256x4xf32>
    %85 = arith.addf %79, %84 : vector<256x4xf32>
    %c0_100 = arith.constant 0 : index
    %c2_101 = arith.constant 2 : index
    %c2_102 = arith.constant 2 : index
    %c0_103 = arith.constant 0 : index
    %86 = vector.load %arg10[%c0_100, %c2_101, %c2_102, %c0_103] : memref<6x10x10x2xf32, #tpu.memory_space<vmem>>, vector<4x8x8x2xf32>
    %87 = vector.shape_cast %86 : vector<4x8x8x2xf32> to vector<256x2xf32>
    %c8 = arith.constant 8 : index
    %c0_104 = arith.constant 0 : index
    %c0_105 = arith.constant 0 : index
    %88 = vector.load %arg7[%c8, %c0_104, %c0_105] : memref<27x2x4xf32, #tpu.memory_space<vmem>>, vector<1x2x4xf32>
    %89 = vector.shape_cast %88 : vector<1x2x4xf32> to vector<2x4xf32>
    %cst_106 = arith.constant dense<0.000000e+00> : vector<256x4xf32>
    %90 = tpu.matmul %87, %89, %cst_106 {dimension_numbers = #tpu.dot_dimension_numbers<[1], [0], [0], [1], [0, 0, 1, 1], [], []>} : vector<256x2xf32>, vector<2x4xf32>, vector<256x4xf32> -> vector<256x4xf32>
    %91 = arith.addf %85, %90 : vector<256x4xf32>
    %c1_107 = arith.constant 1 : index
    %c0_108 = arith.constant 0 : index
    %c0_109 = arith.constant 0 : index
    %c0_110 = arith.constant 0 : index
    %92 = vector.load %arg10[%c1_107, %c0_108, %c0_109, %c0_110] : memref<6x10x10x2xf32, #tpu.memory_space<vmem>>, vector<4x8x8x2xf32>
    %93 = vector.shape_cast %92 : vector<4x8x8x2xf32> to vector<256x2xf32>
    %c9 = arith.constant 9 : index
    %c0_111 = arith.constant 0 : index
    %c0_112 = arith.constant 0 : index
    %94 = vector.load %arg7[%c9, %c0_111, %c0_112] : memref<27x2x4xf32, #tpu.memory_space<vmem>>, vector<1x2x4xf32>
    %95 = vector.shape_cast %94 : vector<1x2x4xf32> to vector<2x4xf32>
    %cst_113 = arith.constant dense<0.000000e+00> : vector<256x4xf32>
    %96 = tpu.matmul %93, %95, %cst_113 {dimension_numbers = #tpu.dot_dimension_numbers<[1], [0], [0], [1], [0, 0, 1, 1], [], []>} : vector<256x2xf32>, vector<2x4xf32>, vector<256x4xf32> -> vector<256x4xf32>
    %97 = arith.addf %91, %96 : vector<256x4xf32>
    %c1_114 = arith.constant 1 : index
    %c0_115 = arith.constant 0 : index
    %c1_116 = arith.constant 1 : index
    %c0_117 = arith.constant 0 : index
    %98 = vector.load %arg10[%c1_114, %c0_115, %c1_116, %c0_117] : memref<6x10x10x2xf32, #tpu.memory_space<vmem>>, vector<4x8x8x2xf32>
    %99 = vector.shape_cast %98 : vector<4x8x8x2xf32> to vector<256x2xf32>
    %c10 = arith.constant 10 : index
    %c0_118 = arith.constant 0 : index
    %c0_119 = arith.constant 0 : index
    %100 = vector.load %arg7[%c10, %c0_118, %c0_119] : memref<27x2x4xf32, #tpu.memory_space<vmem>>, vector<1x2x4xf32>
    %101 = vector.shape_cast %100 : vector<1x2x4xf32> to vector<2x4xf32>
    %cst_120 = arith.constant dense<0.000000e+00> : vector<256x4xf32>
    %102 = tpu.matmul %99, %101, %cst_120 {dimension_numbers = #tpu.dot_dimension_numbers<[1], [0], [0], [1], [0, 0, 1, 1], [], []>} : vector<256x2xf32>, vector<2x4xf32>, vector<256x4xf32> -> vector<256x4xf32>
    %103 = arith.addf %97, %102 : vector<256x4xf32>
    %c1_121 = arith.constant 1 : index
    %c0_122 = arith.constant 0 : index
    %c2_123 = arith.constant 2 : index
    %c0_124 = arith.constant 0 : index
    %104 = vector.load %arg10[%c1_121, %c0_122, %c2_123, %c0_124] : memref<6x10x10x2xf32, #tpu.memory_space<vmem>>, vector<4x8x8x2xf32>
    %105 = vector.shape_cast %104 : vector<4x8x8x2xf32> to vector<256x2xf32>
    %c11 = arith.constant 11 : index
    %c0_125 = arith.constant 0 : index
    %c0_126 = arith.constant 0 : index
    %106 = vector.load %arg7[%c11, %c0_125, %c0_126] : memref<27x2x4xf32, #tpu.memory_space<vmem>>, vector<1x2x4xf32>
    %107 = vector.shape_cast %106 : vector<1x2x4xf32> to vector<2x4xf32>
    %cst_127 = arith.constant dense<0.000000e+00> : vector<256x4xf32>
    %108 = tpu.matmul %105, %107, %cst_127 {dimension_numbers = #tpu.dot_dimension_numbers<[1], [0], [0], [1], [0, 0, 1, 1], [], []>} : vector<256x2xf32>, vector<2x4xf32>, vector<256x4xf32> -> vector<256x4xf32>
    %109 = arith.addf %103, %108 : vector<256x4xf32>
    %c1_128 = arith.constant 1 : index
    %c1_129 = arith.constant 1 : index
    %c0_130 = arith.constant 0 : index
    %c0_131 = arith.constant 0 : index
    %110 = vector.load %arg10[%c1_128, %c1_129, %c0_130, %c0_131] : memref<6x10x10x2xf32, #tpu.memory_space<vmem>>, vector<4x8x8x2xf32>
    %111 = vector.shape_cast %110 : vector<4x8x8x2xf32> to vector<256x2xf32>
    %c12 = arith.constant 12 : index
    %c0_132 = arith.constant 0 : index
    %c0_133 = arith.constant 0 : index
    %112 = vector.load %arg7[%c12, %c0_132, %c0_133] : memref<27x2x4xf32, #tpu.memory_space<vmem>>, vector<1x2x4xf32>
    %113 = vector.shape_cast %112 : vector<1x2x4xf32> to vector<2x4xf32>
    %cst_134 = arith.constant dense<0.000000e+00> : vector<256x4xf32>
    %114 = tpu.matmul %111, %113, %cst_134 {dimension_numbers = #tpu.dot_dimension_numbers<[1], [0], [0], [1], [0, 0, 1, 1], [], []>} : vector<256x2xf32>, vector<2x4xf32>, vector<256x4xf32> -> vector<256x4xf32>
    %115 = arith.addf %109, %114 : vector<256x4xf32>
    %c1_135 = arith.constant 1 : index
    %c1_136 = arith.constant 1 : index
    %c1_137 = arith.constant 1 : index
    %c0_138 = arith.constant 0 : index
    %116 = vector.load %arg10[%c1_135, %c1_136, %c1_137, %c0_138] : memref<6x10x10x2xf32, #tpu.memory_space<vmem>>, vector<4x8x8x2xf32>
    %117 = vector.shape_cast %116 : vector<4x8x8x2xf32> to vector<256x2xf32>
    %c13 = arith.constant 13 : index
    %c0_139 = arith.constant 0 : index
    %c0_140 = arith.constant 0 : index
    %118 = vector.load %arg7[%c13, %c0_139, %c0_140] : memref<27x2x4xf32, #tpu.memory_space<vmem>>, vector<1x2x4xf32>
    %119 = vector.shape_cast %118 : vector<1x2x4xf32> to vector<2x4xf32>
    %cst_141 = arith.constant dense<0.000000e+00> : vector<256x4xf32>
    %120 = tpu.matmul %117, %119, %cst_141 {dimension_numbers = #tpu.dot_dimension_numbers<[1], [0], [0], [1], [0, 0, 1, 1], [], []>} : vector<256x2xf32>, vector<2x4xf32>, vector<256x4xf32> -> vector<256x4xf32>
    %121 = arith.addf %115, %120 : vector<256x4xf32>
    %c1_142 = arith.constant 1 : index
    %c1_143 = arith.constant 1 : index
    %c2_144 = arith.constant 2 : index
    %c0_145 = arith.constant 0 : index
    %122 = vector.load %arg10[%c1_142, %c1_143, %c2_144, %c0_145] : memref<6x10x10x2xf32, #tpu.memory_space<vmem>>, vector<4x8x8x2xf32>
    %123 = vector.shape_cast %122 : vector<4x8x8x2xf32> to vector<256x2xf32>
    %c14 = arith.constant 14 : index
    %c0_146 = arith.constant 0 : index
    %c0_147 = arith.constant 0 : index
    %124 = vector.load %arg7[%c14, %c0_146, %c0_147] : memref<27x2x4xf32, #tpu.memory_space<vmem>>, vector<1x2x4xf32>
    %125 = vector.shape_cast %124 : vector<1x2x4xf32> to vector<2x4xf32>
    %cst_148 = arith.constant dense<0.000000e+00> : vector<256x4xf32>
    %126 = tpu.matmul %123, %125, %cst_148 {dimension_numbers = #tpu.dot_dimension_numbers<[1], [0], [0], [1], [0, 0, 1, 1], [], []>} : vector<256x2xf32>, vector<2x4xf32>, vector<256x4xf32> -> vector<256x4xf32>
    %127 = arith.addf %121, %126 : vector<256x4xf32>
    %c1_149 = arith.constant 1 : index
    %c2_150 = arith.constant 2 : index
    %c0_151 = arith.constant 0 : index
    %c0_152 = arith.constant 0 : index
    %128 = vector.load %arg10[%c1_149, %c2_150, %c0_151, %c0_152] : memref<6x10x10x2xf32, #tpu.memory_space<vmem>>, vector<4x8x8x2xf32>
    %129 = vector.shape_cast %128 : vector<4x8x8x2xf32> to vector<256x2xf32>
    %c15 = arith.constant 15 : index
    %c0_153 = arith.constant 0 : index
    %c0_154 = arith.constant 0 : index
    %130 = vector.load %arg7[%c15, %c0_153, %c0_154] : memref<27x2x4xf32, #tpu.memory_space<vmem>>, vector<1x2x4xf32>
    %131 = vector.shape_cast %130 : vector<1x2x4xf32> to vector<2x4xf32>
    %cst_155 = arith.constant dense<0.000000e+00> : vector<256x4xf32>
    %132 = tpu.matmul %129, %131, %cst_155 {dimension_numbers = #tpu.dot_dimension_numbers<[1], [0], [0], [1], [0, 0, 1, 1], [], []>} : vector<256x2xf32>, vector<2x4xf32>, vector<256x4xf32> -> vector<256x4xf32>
    %133 = arith.addf %127, %132 : vector<256x4xf32>
    %c1_156 = arith.constant 1 : index
    %c2_157 = arith.constant 2 : index
    %c1_158 = arith.constant 1 : index
    %c0_159 = arith.constant 0 : index
    %134 = vector.load %arg10[%c1_156, %c2_157, %c1_158, %c0_159] : memref<6x10x10x2xf32, #tpu.memory_space<vmem>>, vector<4x8x8x2xf32>
    %135 = vector.shape_cast %134 : vector<4x8x8x2xf32> to vector<256x2xf32>
    %c16 = arith.constant 16 : index
    %c0_160 = arith.constant 0 : index
    %c0_161 = arith.constant 0 : index
    %136 = vector.load %arg7[%c16, %c0_160, %c0_161] : memref<27x2x4xf32, #tpu.memory_space<vmem>>, vector<1x2x4xf32>
    %137 = vector.shape_cast %136 : vector<1x2x4xf32> to vector<2x4xf32>
    %cst_162 = arith.constant dense<0.000000e+00> : vector<256x4xf32>
    %138 = tpu.matmul %135, %137, %cst_162 {dimension_numbers = #tpu.dot_dimension_numbers<[1], [0], [0], [1], [0, 0, 1, 1], [], []>} : vector<256x2xf32>, vector<2x4xf32>, vector<256x4xf32> -> vector<256x4xf32>
    %139 = arith.addf %133, %138 : vector<256x4xf32>
    %c1_163 = arith.constant 1 : index
    %c2_164 = arith.constant 2 : index
    %c2_165 = arith.constant 2 : index
    %c0_166 = arith.constant 0 : index
    %140 = vector.load %arg10[%c1_163, %c2_164, %c2_165, %c0_166] : memref<6x10x10x2xf32, #tpu.memory_space<vmem>>, vector<4x8x8x2xf32>
    %141 = vector.shape_cast %140 : vector<4x8x8x2xf32> to vector<256x2xf32>
    %c17 = arith.constant 17 : index
    %c0_167 = arith.constant 0 : index
    %c0_168 = arith.constant 0 : index
    %142 = vector.load %arg7[%c17, %c0_167, %c0_168] : memref<27x2x4xf32, #tpu.memory_space<vmem>>, vector<1x2x4xf32>
    %143 = vector.shape_cast %142 : vector<1x2x4xf32> to vector<2x4xf32>
    %cst_169 = arith.constant dense<0.000000e+00> : vector<256x4xf32>
    %144 = tpu.matmul %141, %143, %cst_169 {dimension_numbers = #tpu.dot_dimension_numbers<[1], [0], [0], [1], [0, 0, 1, 1], [], []>} : vector<256x2xf32>, vector<2x4xf32>, vector<256x4xf32> -> vector<256x4xf32>
    %145 = arith.addf %139, %144 : vector<256x4xf32>
    %c2_170 = arith.constant 2 : index
    %c0_171 = arith.constant 0 : index
    %c0_172 = arith.constant 0 : index
    %c0_173 = arith.constant 0 : index
    %146 = vector.load %arg10[%c2_170, %c0_171, %c0_172, %c0_173] : memref<6x10x10x2xf32, #tpu.memory_space<vmem>>, vector<4x8x8x2xf32>
    %147 = vector.shape_cast %146 : vector<4x8x8x2xf32> to vector<256x2xf32>
    %c18 = arith.constant 18 : index
    %c0_174 = arith.constant 0 : index
    %c0_175 = arith.constant 0 : index
    %148 = vector.load %arg7[%c18, %c0_174, %c0_175] : memref<27x2x4xf32, #tpu.memory_space<vmem>>, vector<1x2x4xf32>
    %149 = vector.shape_cast %148 : vector<1x2x4xf32> to vector<2x4xf32>
    %cst_176 = arith.constant dense<0.000000e+00> : vector<256x4xf32>
    %150 = tpu.matmul %147, %149, %cst_176 {dimension_numbers = #tpu.dot_dimension_numbers<[1], [0], [0], [1], [0, 0, 1, 1], [], []>} : vector<256x2xf32>, vector<2x4xf32>, vector<256x4xf32> -> vector<256x4xf32>
    %151 = arith.addf %145, %150 : vector<256x4xf32>
    %c2_177 = arith.constant 2 : index
    %c0_178 = arith.constant 0 : index
    %c1_179 = arith.constant 1 : index
    %c0_180 = arith.constant 0 : index
    %152 = vector.load %arg10[%c2_177, %c0_178, %c1_179, %c0_180] : memref<6x10x10x2xf32, #tpu.memory_space<vmem>>, vector<4x8x8x2xf32>
    %153 = vector.shape_cast %152 : vector<4x8x8x2xf32> to vector<256x2xf32>
    %c19 = arith.constant 19 : index
    %c0_181 = arith.constant 0 : index
    %c0_182 = arith.constant 0 : index
    %154 = vector.load %arg7[%c19, %c0_181, %c0_182] : memref<27x2x4xf32, #tpu.memory_space<vmem>>, vector<1x2x4xf32>
    %155 = vector.shape_cast %154 : vector<1x2x4xf32> to vector<2x4xf32>
    %cst_183 = arith.constant dense<0.000000e+00> : vector<256x4xf32>
    %156 = tpu.matmul %153, %155, %cst_183 {dimension_numbers = #tpu.dot_dimension_numbers<[1], [0], [0], [1], [0, 0, 1, 1], [], []>} : vector<256x2xf32>, vector<2x4xf32>, vector<256x4xf32> -> vector<256x4xf32>
    %157 = arith.addf %151, %156 : vector<256x4xf32>
    %c2_184 = arith.constant 2 : index
    %c0_185 = arith.constant 0 : index
    %c2_186 = arith.constant 2 : index
    %c0_187 = arith.constant 0 : index
    %158 = vector.load %arg10[%c2_184, %c0_185, %c2_186, %c0_187] : memref<6x10x10x2xf32, #tpu.memory_space<vmem>>, vector<4x8x8x2xf32>
    %159 = vector.shape_cast %158 : vector<4x8x8x2xf32> to vector<256x2xf32>
    %c20 = arith.constant 20 : index
    %c0_188 = arith.constant 0 : index
    %c0_189 = arith.constant 0 : index
    %160 = vector.load %arg7[%c20, %c0_188, %c0_189] : memref<27x2x4xf32, #tpu.memory_space<vmem>>, vector<1x2x4xf32>
    %161 = vector.shape_cast %160 : vector<1x2x4xf32> to vector<2x4xf32>
    %cst_190 = arith.constant dense<0.000000e+00> : vector<256x4xf32>
    %162 = tpu.matmul %159, %161, %cst_190 {dimension_numbers = #tpu.dot_dimension_numbers<[1], [0], [0], [1], [0, 0, 1, 1], [], []>} : vector<256x2xf32>, vector<2x4xf32>, vector<256x4xf32> -> vector<256x4xf32>
    %163 = arith.addf %157, %162 : vector<256x4xf32>
    %c2_191 = arith.constant 2 : index
    %c1_192 = arith.constant 1 : index
    %c0_193 = arith.constant 0 : index
    %c0_194 = arith.constant 0 : index
    %164 = vector.load %arg10[%c2_191, %c1_192, %c0_193, %c0_194] : memref<6x10x10x2xf32, #tpu.memory_space<vmem>>, vector<4x8x8x2xf32>
    %165 = vector.shape_cast %164 : vector<4x8x8x2xf32> to vector<256x2xf32>
    %c21 = arith.constant 21 : index
    %c0_195 = arith.constant 0 : index
    %c0_196 = arith.constant 0 : index
    %166 = vector.load %arg7[%c21, %c0_195, %c0_196] : memref<27x2x4xf32, #tpu.memory_space<vmem>>, vector<1x2x4xf32>
    %167 = vector.shape_cast %166 : vector<1x2x4xf32> to vector<2x4xf32>
    %cst_197 = arith.constant dense<0.000000e+00> : vector<256x4xf32>
    %168 = tpu.matmul %165, %167, %cst_197 {dimension_numbers = #tpu.dot_dimension_numbers<[1], [0], [0], [1], [0, 0, 1, 1], [], []>} : vector<256x2xf32>, vector<2x4xf32>, vector<256x4xf32> -> vector<256x4xf32>
    %169 = arith.addf %163, %168 : vector<256x4xf32>
    %c2_198 = arith.constant 2 : index
    %c1_199 = arith.constant 1 : index
    %c1_200 = arith.constant 1 : index
    %c0_201 = arith.constant 0 : index
    %170 = vector.load %arg10[%c2_198, %c1_199, %c1_200, %c0_201] : memref<6x10x10x2xf32, #tpu.memory_space<vmem>>, vector<4x8x8x2xf32>
    %171 = vector.shape_cast %170 : vector<4x8x8x2xf32> to vector<256x2xf32>
    %c22 = arith.constant 22 : index
    %c0_202 = arith.constant 0 : index
    %c0_203 = arith.constant 0 : index
    %172 = vector.load %arg7[%c22, %c0_202, %c0_203] : memref<27x2x4xf32, #tpu.memory_space<vmem>>, vector<1x2x4xf32>
    %173 = vector.shape_cast %172 : vector<1x2x4xf32> to vector<2x4xf32>
    %cst_204 = arith.constant dense<0.000000e+00> : vector<256x4xf32>
    %174 = tpu.matmul %171, %173, %cst_204 {dimension_numbers = #tpu.dot_dimension_numbers<[1], [0], [0], [1], [0, 0, 1, 1], [], []>} : vector<256x2xf32>, vector<2x4xf32>, vector<256x4xf32> -> vector<256x4xf32>
    %175 = arith.addf %169, %174 : vector<256x4xf32>
    %c2_205 = arith.constant 2 : index
    %c1_206 = arith.constant 1 : index
    %c2_207 = arith.constant 2 : index
    %c0_208 = arith.constant 0 : index
    %176 = vector.load %arg10[%c2_205, %c1_206, %c2_207, %c0_208] : memref<6x10x10x2xf32, #tpu.memory_space<vmem>>, vector<4x8x8x2xf32>
    %177 = vector.shape_cast %176 : vector<4x8x8x2xf32> to vector<256x2xf32>
    %c23 = arith.constant 23 : index
    %c0_209 = arith.constant 0 : index
    %c0_210 = arith.constant 0 : index
    %178 = vector.load %arg7[%c23, %c0_209, %c0_210] : memref<27x2x4xf32, #tpu.memory_space<vmem>>, vector<1x2x4xf32>
    %179 = vector.shape_cast %178 : vector<1x2x4xf32> to vector<2x4xf32>
    %cst_211 = arith.constant dense<0.000000e+00> : vector<256x4xf32>
    %180 = tpu.matmul %177, %179, %cst_211 {dimension_numbers = #tpu.dot_dimension_numbers<[1], [0], [0], [1], [0, 0, 1, 1], [], []>} : vector<256x2xf32>, vector<2x4xf32>, vector<256x4xf32> -> vector<256x4xf32>
    %181 = arith.addf %175, %180 : vector<256x4xf32>
    %c2_212 = arith.constant 2 : index
    %c2_213 = arith.constant 2 : index
    %c0_214 = arith.constant 0 : index
    %c0_215 = arith.constant 0 : index
    %182 = vector.load %arg10[%c2_212, %c2_213, %c0_214, %c0_215] : memref<6x10x10x2xf32, #tpu.memory_space<vmem>>, vector<4x8x8x2xf32>
    %183 = vector.shape_cast %182 : vector<4x8x8x2xf32> to vector<256x2xf32>
    %c24 = arith.constant 24 : index
    %c0_216 = arith.constant 0 : index
    %c0_217 = arith.constant 0 : index
    %184 = vector.load %arg7[%c24, %c0_216, %c0_217] : memref<27x2x4xf32, #tpu.memory_space<vmem>>, vector<1x2x4xf32>
    %185 = vector.shape_cast %184 : vector<1x2x4xf32> to vector<2x4xf32>
    %cst_218 = arith.constant dense<0.000000e+00> : vector<256x4xf32>
    %186 = tpu.matmul %183, %185, %cst_218 {dimension_numbers = #tpu.dot_dimension_numbers<[1], [0], [0], [1], [0, 0, 1, 1], [], []>} : vector<256x2xf32>, vector<2x4xf32>, vector<256x4xf32> -> vector<256x4xf32>
    %187 = arith.addf %181, %186 : vector<256x4xf32>
    %c2_219 = arith.constant 2 : index
    %c2_220 = arith.constant 2 : index
    %c1_221 = arith.constant 1 : index
    %c0_222 = arith.constant 0 : index
    %188 = vector.load %arg10[%c2_219, %c2_220, %c1_221, %c0_222] : memref<6x10x10x2xf32, #tpu.memory_space<vmem>>, vector<4x8x8x2xf32>
    %189 = vector.shape_cast %188 : vector<4x8x8x2xf32> to vector<256x2xf32>
    %c25 = arith.constant 25 : index
    %c0_223 = arith.constant 0 : index
    %c0_224 = arith.constant 0 : index
    %190 = vector.load %arg7[%c25, %c0_223, %c0_224] : memref<27x2x4xf32, #tpu.memory_space<vmem>>, vector<1x2x4xf32>
    %191 = vector.shape_cast %190 : vector<1x2x4xf32> to vector<2x4xf32>
    %cst_225 = arith.constant dense<0.000000e+00> : vector<256x4xf32>
    %192 = tpu.matmul %189, %191, %cst_225 {dimension_numbers = #tpu.dot_dimension_numbers<[1], [0], [0], [1], [0, 0, 1, 1], [], []>} : vector<256x2xf32>, vector<2x4xf32>, vector<256x4xf32> -> vector<256x4xf32>
    %193 = arith.addf %187, %192 : vector<256x4xf32>
    %c2_226 = arith.constant 2 : index
    %c2_227 = arith.constant 2 : index
    %c2_228 = arith.constant 2 : index
    %c0_229 = arith.constant 0 : index
    %194 = vector.load %arg10[%c2_226, %c2_227, %c2_228, %c0_229] : memref<6x10x10x2xf32, #tpu.memory_space<vmem>>, vector<4x8x8x2xf32>
    %195 = vector.shape_cast %194 : vector<4x8x8x2xf32> to vector<256x2xf32>
    %c26 = arith.constant 26 : index
    %c0_230 = arith.constant 0 : index
    %c0_231 = arith.constant 0 : index
    %196 = vector.load %arg7[%c26, %c0_230, %c0_231] : memref<27x2x4xf32, #tpu.memory_space<vmem>>, vector<1x2x4xf32>
    %197 = vector.shape_cast %196 : vector<1x2x4xf32> to vector<2x4xf32>
    %cst_232 = arith.constant dense<0.000000e+00> : vector<256x4xf32>
    %198 = tpu.matmul %195, %197, %cst_232 {dimension_numbers = #tpu.dot_dimension_numbers<[1], [0], [0], [1], [0, 0, 1, 1], [], []>} : vector<256x2xf32>, vector<2x4xf32>, vector<256x4xf32> -> vector<256x4xf32>
    %199 = arith.addf %193, %198 : vector<256x4xf32>
    %c0_233 = arith.constant 0 : index
    %c0_234 = arith.constant 0 : index
    %200 = vector.load %arg8[%c0_233, %c0_234] : memref<1x4xf32, #tpu.memory_space<vmem>>, vector<1x4xf32>
    %201 = vector.broadcast %200 : vector<1x4xf32> to vector<256x4xf32>
    %202 = arith.addf %199, %201 : vector<256x4xf32>
    %cst_235 = arith.constant 0.000000e+00 : f32
    %203 = vector.broadcast %cst_235 : f32 to vector<256x4xf32>
    %204 = arith.maximumf %202, %203 : vector<256x4xf32>
    %205 = arith.addf %204, %7 : vector<256x4xf32>
    %206 = vector.shape_cast %205 : vector<256x4xf32> to vector<1x4x8x8x4xf32>
    %c0_236 = arith.constant 0 : index
    %c0_237 = arith.constant 0 : index
    %c0_238 = arith.constant 0 : index
    %c0_239 = arith.constant 0 : index
    %c0_240 = arith.constant 0 : index
    %207 = vector.load %arg9[%c0_236, %c0_237, %c0_238, %c0_239, %c0_240] : memref<1x4x8x8x4xf32, #tpu.memory_space<vmem>>, vector<1x4x8x8x4xf32>
    tpu.vector_store %arg9[%c0_236, %c0_237, %c0_238, %c0_239, %c0_240], %206 {strides = array<i32>} : memref<1x4x8x8x4xf32, #tpu.memory_space<vmem>>, vector<1x4x8x8x4xf32>,
    return
  }
  func.func @transform_0(%arg0: i32, %arg1: i32) -> (i32, i32, i32, i32, i32) {
    %c0_i32 = arith.constant 0 : i32
    %c0_i32_0 = arith.constant 0 : i32
    %c0_i32_1 = arith.constant 0 : i32
    %c0_i32_2 = arith.constant 0 : i32
    return %arg0, %arg1, %c0_i32, %c0_i32_0, %c0_i32_1 : i32, i32, i32, i32, i32
  }
  func.func @transform_1(%arg0: i32, %arg1: i32) -> (i32, i32, i32, i32, i32) {
    %c4_i32 = arith.constant 4 : i32
    %0 = arith.muli %arg1, %c4_i32 : i32
    %c1_i32 = arith.constant 1 : i32
    %1 = arith.subi %0, %c1_i32 : i32
    %c0_i32 = arith.constant 0 : i32
    %2 = arith.maxsi %1, %c0_i32 : i32
    %c0_i32_0 = arith.constant 0 : i32
    %c0_i32_1 = arith.constant 0 : i32
    %c0_i32_2 = arith.constant 0 : i32
    %c0_i32_3 = arith.constant 0 : i32
    return %arg0, %2, %c0_i32_0, %c0_i32_1, %c0_i32_2 : i32, i32, i32, i32, i32
  }
  func.func @transform_2(%arg0: i32, %arg1: i32) -> (i32, i32, i32, i32, i32) {
    %c1_i32 = arith.constant 1 : i32
    %0 = arith.addi %arg1, %c1_i32 : i32
    %c4_i32 = arith.constant 4 : i32
    %1 = arith.muli %0, %c4_i32 : i32
    %c7_i32 = arith.constant 7 : i32
    %2 = arith.minsi %1, %c7_i32 : i32
    %c0_i32 = arith.constant 0 : i32
    %c0_i32_0 = arith.constant 0 : i32
    %c0_i32_1 = arith.constant 0 : i32
    %c0_i32_2 = arith.constant 0 : i32
    return %arg0, %2, %c0_i32, %c0_i32_0, %c0_i32_1 : i32, i32, i32, i32, i32
  }
  func.func @transform_3(%arg0: i32, %arg1: i32) -> (i32, i32) {
    %c0_i32 = arith.constant 0 : i32
    %c0_i32_0 = arith.constant 0 : i32
    %c0_i32_1 = arith.constant 0 : i32
    return %c0_i32, %c0_i32_0 : i32, i32
  }
  func.func @transform_4(%arg0: i32, %arg1: i32) -> (i32, i32) {
    %c0_i32 = arith.constant 0 : i32
    %c0_i32_0 = arith.constant 0 : i32
    %c0_i32_1 = arith.constant 0 : i32
    return %c0_i32, %c0_i32_0 : i32, i32
  }
  func.func @transform_5(%arg0: i32, %arg1: i32) -> (i32, i32, i32) {
    %c0_i32 = arith.constant 0 : i32
    %c0_i32_0 = arith.constant 0 : i32
    %c0_i32_1 = arith.constant 0 : i32
    %c0_i32_2 = arith.constant 0 : i32
    return %c0_i32, %c0_i32_0, %c0_i32_1 : i32, i32, i32
  }
  func.func @transform_6(%arg0: i32, %arg1: i32) -> (i32, i32) {
    %c0_i32 = arith.constant 0 : i32
    %c0_i32_0 = arith.constant 0 : i32
    %c0_i32_1 = arith.constant 0 : i32
    return %c0_i32, %c0_i32_0 : i32, i32
  }
  func.func @transform_7(%arg0: i32, %arg1: i32) -> (i32, i32, i32, i32, i32) {
    %c0_i32 = arith.constant 0 : i32
    %c0_i32_0 = arith.constant 0 : i32
    %c0_i32_1 = arith.constant 0 : i32
    %c0_i32_2 = arith.constant 0 : i32
    return %arg0, %arg1, %c0_i32, %c0_i32_0, %c0_i32_1 : i32, i32, i32, i32, i32
  }
}

</mosaic_0001>

<llo_original>
// kernel: tpu_custom_call.1
$region0: #{tpu_custom_call.1}
  #allocation0 [shape = 'u32[]', space=smem, size = 0x4, offset = 0x4, fixed_abs, tag = 'smem constant byte address 0x4 - core index']
  #allocation1 [shape = 'u32[144,128]{1,0:T(1,128)}', space=vmem, size = 0x12000, scoped, tag = 'internal scratch']
  #allocation2 [shape = 'f32[6,10,10,2]{3,2,1,0:T(8,128)}', space=vmem, size = 0x78000, scoped, tag = 'scratch operand']
  %s0 = inlined_call_operand.vmem [shape: f32[2,8,8,8,4], index: 0, kind: input, shape index: {}]
  %s1 = inlined_call_operand.vmem [shape: f32[2,8,8,8,4], index: 1, kind: input, shape index: {}]
  %s2 = inlined_call_operand.vmem [shape: f32[2,8,8,8,4], index: 2, kind: input, shape index: {}]
  %s3 = inlined_call_operand.vmem [shape: f32[4,2], index: 3, kind: input, shape index: {}]
  %s4 = inlined_call_operand.vmem [shape: f32[1,2], index: 4, kind: input, shape index: {}]
  %s5 = inlined_call_operand.vmem [shape: f32[27,2,4], index: 5, kind: input, shape index: {}]
  %s6 = inlined_call_operand.vmem [shape: f32[1,4], index: 6, kind: input, shape index: {}]
  %s7 = inlined_call_operand.vmem [shape: f32[2,8,8,8,4], index: 7, kind: output, shape index: {}]
  %s8 = sld [smem:[#allocation0]]
  $region61: #{tpu_custom_call.1} parent=0
    _
  %s10 = ssub.s32 1, %s8
  %s11 = scalar_select 0, %s10, %s8
  loop: start=0, step=1, limit=6
  $region2: #{tpu_custom_call.1} parent=0 // loop_pre_header
    _
  $region3: #{tpu_custom_call.1} parent=0 // loop_header
    %s13 = sphi 0, %s17
    %p14 = scmp.ge.s32.totalorder %s13, 6
    %s20 = sphi 0, %s32
    %s21 = sphi 0, %s28
    %s22 = sphi 0, %s20
    %s23 = sphi 0, %s21
    %s24 = sphi 0, %s22
    %s25 = sphi 0, %s23
    %s37 = sphi 0, %s39
    %s40 = sphi 0, %s37
    %s41 = sphi 0, %s40
    %s57 = sphi 0, %s41
    %s73 = sphi 0, %s75
    %s76 = sphi 0, %s73
    %s77 = sphi 0, %s76
    %s93 = sphi 0, %s77
    %s109 = sphi 0, %s111
    %s112 = sphi 0, %s109
    %s113 = sphi 0, %s112
    %s129 = sphi 0, %s113
    %s133 = sphi 0, %s133
    %s135 = sphi 0, %s133
    %s136 = sphi 0, %s135
    %s150 = sphi 0, %s136
    %s154 = sphi 0, %s154
    %s156 = sphi 0, %s154
    %s157 = sphi 0, %s156
    %s171 = sphi 0, %s157
    %s175 = sphi 0, %s175
    %s177 = sphi 0, %s175
    %s178 = sphi 0, %s177
    %s192 = sphi 0, %s178
    %s196 = sphi 0, %s196
    %s198 = sphi 0, %s196
    %s199 = sphi 0, %s198
    %s213 = sphi 0, %s199
    %s221 = sphi 0, %s223
    %s224 = sphi 0, %s221
    %s225 = sphi 0, %s224
    %s241 = sphi 0, %s225
  $region4: #{tpu_custom_call.1} parent=0 // loop_header_branch
    %16 = sbr.rel (%p14) target = $region8
  $region5: #{tpu_custom_call.1} parent=0 // loop_body
    %s18 = ssub.s32 %s13, 1
    %s19 = ssub.s32 %s13, 2
    %s26 = sadd.s32 1, %s21
    %p27 = scmp.ge.s32.totalorder %s26, 2
    %s28 = scalar_select %p27, 0, %s26
    %s29 = sadd.s32 1, %s20
    %s30 = scalar_select %p27, %s29, %s20
    %p31 = scmp.ge.s32.totalorder %s30, 2
    %s32 = scalar_select %p31, 0, %s30
    %s33 = ssub.s32 %s20, %s32
    %s34 = ssub.s32 %s21, %s28
    %s35 = sor.u32 %s33, %s34
    %p36 = scmp.eq.s32.totalorder %s35, 0
    %s38 = sadd.s32 %s37, 1
    %s39 = scalar_select %p36, %s37, %s38
    %p42 = pneg %p36
    %p43 = scmp.eq.s32.totalorder %s13, 3
    %p44 = por %p42, %p43
    %p45 = scmp.ne.s32.totalorder %s37, %s40
    %p46 = scmp.eq.s32.totalorder %s13, 0
    %p47 = por %p45, %p46
    %p48 = scmp.ne.s32.totalorder %s37, %s40
    %p49 = scmp.eq.s32.totalorder %s18, 3
    %p50 = por %p48, %p49
    %p51 = scmp.ne.s32.totalorder %s40, %s41
    %p52 = scmp.eq.s32.totalorder %s18, 0
    %p53 = por %p51, %p52
    %p54 = scmp.ne.s32.totalorder %s40, %s41
    %p55 = scmp.eq.s32.totalorder %s19, 3
    %p56 = por %p54, %p55
    %p58 = scmp.ne.s32.totalorder %s41, %s57
    %p59 = scmp.eq.s32.totalorder %s19, 0
    %p60 = por %p58, %p59
    %s61 = smul.u32 %s21, 4
    %s62 = ssub.s32 %s61, 1
    %p63 = scmp.gt.s32.totalorder %s62, 0
    %s64 = scalar_select %p63, %s62, 0
    %s65 = smul.u32 %s28, 4
    %s66 = ssub.s32 %s65, 1
    %p67 = scmp.gt.s32.totalorder %s66, 0
    %s68 = scalar_select %p67, %s66, 0
    %s69 = ssub.s32 %s20, %s32
    %s70 = ssub.s32 %s64, %s68
    %s71 = sor.u32 %s69, %s70
    %p72 = scmp.eq.s32.totalorder %s71, 0
    %s74 = sadd.s32 %s73, 1
    %s75 = scalar_select %p72, %s73, %s74
    %p78 = pneg %p72
    %p79 = scmp.eq.s32.totalorder %s13, 3
    %p80 = por %p78, %p79
    %p81 = scmp.ne.s32.totalorder %s73, %s76
    %p82 = scmp.eq.s32.totalorder %s13, 0
    %p83 = por %p81, %p82
    %p84 = scmp.ne.s32.totalorder %s73, %s76
    %p85 = scmp.eq.s32.totalorder %s18, 3
    %p86 = por %p84, %p85
    %p87 = scmp.ne.s32.totalorder %s76, %s77
    %p88 = scmp.eq.s32.totalorder %s18, 0
    %p89 = por %p87, %p88
    %p90 = scmp.ne.s32.totalorder %s76, %s77
    %p91 = scmp.eq.s32.totalorder %s19, 3
    %p92 = por %p90, %p91
    %p94 = scmp.ne.s32.totalorder %s77, %s93
    %p95 = scmp.eq.s32.totalorder %s19, 0
    %p96 = por %p94, %p95
    %s97 = sadd.s32 %s21, 1
    %s98 = smul.u32 %s97, 4
    %p99 = scmp.lt.s32.totalorder %s98, 7
    %s100 = scalar_select %p99, %s98, 7
    %s101 = sadd.s32 %s28, 1
    %s102 = smul.u32 %s101, 4
    %p103 = scmp.lt.s32.totalorder %s102, 7
    %s104 = scalar_select %p103, %s102, 7
    %s105 = ssub.s32 %s20, %s32
    %s106 = ssub.s32 %s100, %s104
    %s107 = sor.u32 %s105, %s106
    %p108 = scmp.eq.s32.totalorder %s107, 0
    %s110 = sadd.s32 %s109, 1
    %s111 = scalar_select %p108, %s109, %s110
    %p114 = pneg %p108
    %p115 = scmp.eq.s32.totalorder %s13, 3
    %p116 = por %p114, %p115
    %p117 = scmp.ne.s32.totalorder %s109, %s112
    %p118 = scmp.eq.s32.totalorder %s13, 0
    %p119 = por %p117, %p118
    %p120 = scmp.ne.s32.totalorder %s109, %s112
    %p121 = scmp.eq.s32.totalorder %s18, 3
    %p122 = por %p120, %p121
    %p123 = scmp.ne.s32.totalorder %s112, %s113
    %p124 = scmp.eq.s32.totalorder %s18, 0
    %p125 = por %p123, %p124
    %p126 = scmp.ne.s32.totalorder %s112, %s113
    %p127 = scmp.eq.s32.totalorder %s19, 3
    %p128 = por %p126, %p127
    %p130 = scmp.ne.s32.totalorder %s113, %s129
    %p131 = scmp.eq.s32.totalorder %s19, 0
    %p132 = por %p130, %p131
    %s134 = sadd.s32 %s133, 1
    %p137 = scmp.eq.s32.totalorder %s13, 3
    %p138 = scmp.ne.s32.totalorder %s133, %s135
    %p139 = scmp.eq.s32.totalorder %s13, 0
    %p140 = por %p138, %p139
    %p141 = scmp.ne.s32.totalorder %s133, %s135
    %p142 = scmp.eq.s32.totalorder %s18, 3
    %p143 = por %p141, %p142
    %p144 = scmp.ne.s32.totalorder %s135, %s136
    %p145 = scmp.eq.s32.totalorder %s18, 0
    %p146 = por %p144, %p145
    %p147 = scmp.ne.s32.totalorder %s135, %s136
    %p148 = scmp.eq.s32.totalorder %s19, 3
    %p149 = por %p147, %p148
    %p151 = scmp.ne.s32.totalorder %s136, %s150
    %p152 = scmp.eq.s32.totalorder %s19, 0
    %p153 = por %p151, %p152
    %s155 = sadd.s32 %s154, 1
    %p158 = scmp.eq.s32.totalorder %s13, 3
    %p159 = scmp.ne.s32.totalorder %s154, %s156
    %p160 = scmp.eq.s32.totalorder %s13, 0
    %p161 = por %p159, %p160
    %p162 = scmp.ne.s32.totalorder %s154, %s156
    %p163 = scmp.eq.s32.totalorder %s18, 3
    %p164 = por %p162, %p163
    %p165 = scmp.ne.s32.totalorder %s156, %s157
    %p166 = scmp.eq.s32.totalorder %s18, 0
    %p167 = por %p165, %p166
    %p168 = scmp.ne.s32.totalorder %s156, %s157
    %p169 = scmp.eq.s32.totalorder %s19, 3
    %p170 = por %p168, %p169
    %p172 = scmp.ne.s32.totalorder %s157, %s171
    %p173 = scmp.eq.s32.totalorder %s19, 0
    %p174 = por %p172, %p173
    %s176 = sadd.s32 %s175, 1
    %p179 = scmp.eq.s32.totalorder %s13, 3
    %p180 = scmp.ne.s32.totalorder %s175, %s177
    %p181 = scmp.eq.s32.totalorder %s13, 0
    %p182 = por %p180, %p181
    %p183 = scmp.ne.s32.totalorder %s175, %s177
    %p184 = scmp.eq.s32.totalorder %s18, 3
    %p185 = por %p183, %p184
    %p186 = scmp.ne.s32.totalorder %s177, %s178
    %p187 = scmp.eq.s32.totalorder %s18, 0
    %p188 = por %p186, %p187
    %p189 = scmp.ne.s32.totalorder %s177, %s178
    %p190 = scmp.eq.s32.totalorder %s19, 3
    %p191 = por %p189, %p190
    %p193 = scmp.ne.s32.totalorder %s178, %s192
    %p194 = scmp.eq.s32.totalorder %s19, 0
    %p195 = por %p193, %p194
    %s197 = sadd.s32 %s196, 1
    %p200 = scmp.eq.s32.totalorder %s13, 3
    %p201 = scmp.ne.s32.totalorder %s196, %s198
    %p202 = scmp.eq.s32.totalorder %s13, 0
    %p203 = por %p201, %p202
    %p204 = scmp.ne.s32.totalorder %s196, %s198
    %p205 = scmp.eq.s32.totalorder %s18, 3
    %p206 = por %p204, %p205
    %p207 = scmp.ne.s32.totalorder %s198, %s199
    %p208 = scmp.eq.s32.totalorder %s18, 0
    %p209 = por %p207, %p208
    %p210 = scmp.ne.s32.totalorder %s198, %s199
    %p211 = scmp.eq.s32.totalorder %s19, 3
    %p212 = por %p210, %p211
    %p214 = scmp.ne.s32.totalorder %s199, %s213
    %p215 = scmp.eq.s32.totalorder %s19, 0
    %p216 = por %p214, %p215
    %s217 = ssub.s32 %s20, %s32
    %s218 = ssub.s32 %s21, %s28
    %s219 = sor.u32 %s217, %s218
    %p220 = scmp.eq.s32.totalorder %s219, 0
    %s222 = sadd.s32 %s221, 1
    %s223 = scalar_select %p220, %s221, %s222
    %p226 = pneg %p220
    %p227 = scmp.eq.s32.totalorder %s13, 3
    %p228 = por %p226, %p227
    %p229 = scmp.ne.s32.totalorder %s221, %s224
    %p230 = scmp.eq.s32.totalorder %s13, 0
    %p231 = por %p229, %p230
    %p232 = scmp.ne.s32.totalorder %s221, %s224
    %p233 = scmp.eq.s32.totalorder %s18, 3
    %p234 = por %p232, %p233
    %p235 = scmp.ne.s32.totalorder %s224, %s225
    %p236 = scmp.eq.s32.totalorder %s18, 0
    %p237 = por %p235, %p236
    %p238 = scmp.ne.s32.totalorder %s224, %s225
    %p239 = scmp.eq.s32.totalorder %s19, 3
    %p240 = por %p238, %p239
    %p242 = scmp.ne.s32.totalorder %s225, %s241
    %p243 = scmp.eq.s32.totalorder %s19, 0
    %p244 = por %p242, %p243
    %p245 = scmp.le.s32.totalorder 1, %s13
    %p246 = scmp.lt.s32.totalorder %s13, 5
    %p247 = pnand %p245, %p246
    %p248 = pneg %p247
    // Predicated region
    $region9: #{tpu_custom_call.1} parent=5 // pred_check
      _
    $region10: #{tpu_custom_call.1} parent=5 // pred_check_branch
      %250 = sbr.rel (%p247) target = $region12
    $region11: #{tpu_custom_call.1} parent=5 // pred_region
      %s251 = ssub.s32 %s13, 1
      // Predicated region
      $region13: #{tpu_custom_call.1} parent=11 // pred_check
        %p252 = pneg %p146
      $region14: #{tpu_custom_call.1} parent=11 // pred_check_branch
        %254 = sbr.rel (%p252) target = $region16
      $region15: #{tpu_custom_call.1} parent=11 // pred_region
        _
      $region16: #{tpu_custom_call.1} parent=11 // pred_fallthru
        _
      // Predicated region
      $region17: #{tpu_custom_call.1} parent=11 // pred_check
        %p255 = pneg %p167
      $region18: #{tpu_custom_call.1} parent=11 // pred_check_branch
        %257 = sbr.rel (%p255) target = $region20
      $region19: #{tpu_custom_call.1} parent=11 // pred_region
        _
      $region20: #{tpu_custom_call.1} parent=11 // pred_fallthru
        _
      // Predicated region
      $region21: #{tpu_custom_call.1} parent=11 // pred_check
        %p258 = pneg %p188
      $region22: #{tpu_custom_call.1} parent=11 // pred_check_branch
        %260 = sbr.rel (%p258) target = $region24
      $region23: #{tpu_custom_call.1} parent=11 // pred_region
        _
      $region24: #{tpu_custom_call.1} parent=11 // pred_fallthru
        _
      // Predicated region
      $region25: #{tpu_custom_call.1} parent=11 // pred_check
        %p261 = pneg %p209
      $region26: #{tpu_custom_call.1} parent=11 // pred_check_branch
        %263 = sbr.rel (%p261) target = $region28
      $region27: #{tpu_custom_call.1} parent=11 // pred_region
        _
      $region28: #{tpu_custom_call.1} parent=11 // pred_fallthru
        _
    $region12: #{tpu_custom_call.1} parent=5 // pred_fallthru
      _
    %p264 = scmp.lt.s32.totalorder %s13, 4
    // Predicated region
    $region29: #{tpu_custom_call.1} parent=5 // pred_check
      %p265 = pneg %p264
    $region30: #{tpu_custom_call.1} parent=5 // pred_check_branch
      %267 = sbr.rel (%p265) target = $region32
    $region31: #{tpu_custom_call.1} parent=5 // pred_region
      // Predicated region
      $region33: #{tpu_custom_call.1} parent=31 // pred_check
        %p268 = pneg %p47
      $region34: #{tpu_custom_call.1} parent=31 // pred_check_branch
        %270 = sbr.rel (%p268) target = $region36
      $region35: #{tpu_custom_call.1} parent=31 // pred_region
        %s271 = smul.u32 4, %s21
        %p272 = scmp.lt.s32.totalorder %s20, 1
        %s273 = scalar_select %p272, %s20, 1
        %p274 = scmp.lt.s32.totalorder %s271, 7
        %s275 = scalar_select %p274, %s271, 7
        %s276 = smul.addr %s275, 8
        %s277 = smul.addr %s273, 64
        %s278 = sadd.s32 %s276, %s277
        %s279 = smul.addr %s278, 8
        %s280 = scalar_lea.vmem %s0, %s279
        %s281 = smul.u32 4, %s21
      $region36: #{tpu_custom_call.1} parent=31 // pred_fallthru
        _
      // Predicated region
      $region37: #{tpu_custom_call.1} parent=31 // pred_check
        %p282 = pneg %p83
      $region38: #{tpu_custom_call.1} parent=31 // pred_check_branch
        %284 = sbr.rel (%p282) target = $region40
      $region39: #{tpu_custom_call.1} parent=31 // pred_region
        %s285 = smul.u32 %s21, 4
        %s286 = ssub.s32 %s285, 1
        %p287 = scmp.gt.s32.totalorder %s286, 0
        %s288 = scalar_select %p287, %s286, 0
        %p289 = scmp.lt.s32.totalorder %s20, 1
        %s290 = scalar_select %p289, %s20, 1
        %p291 = scmp.lt.s32.totalorder %s288, 7
        %s292 = scalar_select %p291, %s288, 7
        %s293 = smul.addr %s292, 8
        %s294 = smul.addr %s290, 64
        %s295 = sadd.s32 %s293, %s294
        %s296 = smul.addr %s295, 8
        %s297 = scalar_lea.vmem %s1, %s296
        %s298 = smul.u32 %s21, 4
        %s299 = ssub.s32 %s298, 1
        %p300 = scmp.gt.s32.totalorder %s299, 0
        %s301 = scalar_select %p300, %s299, 0
      $region40: #{tpu_custom_call.1} parent=31 // pred_fallthru
        _
      // Predicated region
      $region41: #{tpu_custom_call.1} parent=31 // pred_check
        %p302 = pneg %p119
      $region42: #{tpu_custom_call.1} parent=31 // pred_check_branch
        %304 = sbr.rel (%p302) target = $region44
      $region43: #{tpu_custom_call.1} parent=31 // pred_region
        %s305 = sadd.s32 %s21, 1
        %s306 = smul.u32 %s305, 4
        %p307 = scmp.lt.s32.totalorder %s306, 7
        %s308 = scalar_select %p307, %s306, 7
        %p309 = scmp.lt.s32.totalorder %s20, 1
        %s310 = scalar_select %p309, %s20, 1
        %p311 = scmp.lt.s32.totalorder %s308, 7
        %s312 = scalar_select %p311, %s308, 7
        %s313 = smul.addr %s312, 8
        %s314 = smul.addr %s310, 64
        %s315 = sadd.s32 %s313, %s314
        %s316 = smul.addr %s315, 8
        %s317 = scalar_lea.vmem %s2, %s316
        %s318 = sadd.s32 %s21, 1
        %s319 = smul.u32 %s318, 4
        %p320 = scmp.lt.s32.totalorder %s319, 7
        %s321 = scalar_select %p320, %s319, 7
      $region44: #{tpu_custom_call.1} parent=31 // pred_fallthru
        _
    $region32: #{tpu_custom_call.1} parent=5 // pred_fallthru
      _
    %p322 = scmp.le.s32.totalorder 1, %s13
    %p323 = scmp.lt.s32.totalorder %s13, 5
    %p324 = pnand %p322, %p323
    %p325 = pneg %p324
    // Predicated region
    $region45: #{tpu_custom_call.1} parent=5 // pred_check
      _
    $region46: #{tpu_custom_call.1} parent=5 // pred_check_branch
      %327 = sbr.rel (%p324) target = $region48
    $region47: #{tpu_custom_call.1} parent=5 // pred_region
      %s328 = ssub.s32 %s13, 1
      %s329 = smul.u32 4, %s23
      %p330 = scmp.lt.s32.totalorder %s22, 1
      %s331 = scalar_select %p330, %s22, 1
      %p332 = scmp.lt.s32.totalorder %s329, 7
      %s333 = scalar_select %p332, %s329, 7
      %s334 = smul.addr %s333, 8
      %s335 = smul.addr %s331, 64
      %s336 = sadd.s32 %s334, %s335
      %s337 = smul.addr %s336, 8
      %s338 = scalar_lea.vmem %s0, %s337
      %p339 = pneg %p53
      %p340 = pneg %p50
      %s341 = smul.u32 %s23, 4
      %s342 = ssub.s32 %s341, 1
      %p343 = scmp.gt.s32.totalorder %s342, 0
      %s344 = scalar_select %p343, %s342, 0
      %p345 = scmp.lt.s32.totalorder %s22, 1
      %s346 = scalar_select %p345, %s22, 1
      %p347 = scmp.lt.s32.totalorder %s344, 7
      %s348 = scalar_select %p347, %s344, 7
      %s349 = smul.addr %s348, 8
      %s350 = smul.addr %s346, 64
      %s351 = sadd.s32 %s349, %s350
      %s352 = smul.addr %s351, 8
      %s353 = scalar_lea.vmem %s1, %s352
      %p354 = pneg %p89
      %p355 = pneg %p86
      %s356 = sadd.s32 %s23, 1
      %s357 = smul.u32 %s356, 4
      %p358 = scmp.lt.s32.totalorder %s357, 7
      %s359 = scalar_select %p358, %s357, 7
      %p360 = scmp.lt.s32.totalorder %s22, 1
      %s361 = scalar_select %p360, %s22, 1
      %p362 = scmp.lt.s32.totalorder %s359, 7
      %s363 = scalar_select %p362, %s359, 7
      %s364 = smul.addr %s363, 8
      %s365 = smul.addr %s361, 64
      %s366 = sadd.s32 %s364, %s365
      %s367 = smul.addr %s366, 8
      %s368 = scalar_lea.vmem %s2, %s367
      %p369 = pneg %p125
      %p370 = pneg %p122
      %p371 = pneg %p146
      %p372 = pneg %p143
      %p373 = pneg %p167
      %p374 = pneg %p164
      %p375 = pneg %p188
      %p376 = pneg %p185
      %p377 = pneg %p209
      %p378 = pneg %p206
      %p379 = pneg %p237
      %p380 = pneg %p234
      %s381 = smul.u32 4, %s23
      %p382 = scmp.lt.s32.totalorder %s22, 1
      %s383 = scalar_select %p382, %s22, 1
      %p384 = scmp.lt.s32.totalorder %s381, 7
      %s385 = scalar_select %p384, %s381, 7
      %s386 = smul.addr %s385, 8
      %s387 = smul.addr %s383, 64
      %s388 = sadd.s32 %s386, %s387
      %s389 = smul.addr %s388, 8
      %s390 = scalar_lea.vmem %s7, %s389
      %s391 = smul.u32 4, %s23
      %p392 = scmp.lt.s32.totalorder %s22, 1
      %s393 = scalar_select %p392, %s22, 1
      %p394 = scmp.lt.s32.totalorder %s391, 7
      %s395 = scalar_select %p394, %s391, 7
      %s396 = smul.addr %s395, 8
      %s397 = smul.addr %s393, 64
      %s398 = sadd.s32 %s396, %s397
      %s399 = smul.addr %s398, 8
      %s400 = scalar_lea.vmem %s0, %s399
      %s401 = smul.u32 4, %s23
      %s402 = smul.u32 %s23, 4
      %s403 = ssub.s32 %s402, 1
      %p404 = scmp.gt.s32.totalorder %s403, 0
      %s405 = scalar_select %p404, %s403, 0
      %p406 = scmp.lt.s32.totalorder %s22, 1
      %s407 = scalar_select %p406, %s22, 1
      %p408 = scmp.lt.s32.totalorder %s405, 7
      %s409 = scalar_select %p408, %s405, 7
      %s410 = smul.addr %s409, 8
      %s411 = smul.addr %s407, 64
      %s412 = sadd.s32 %s410, %s411
      %s413 = smul.addr %s412, 8
      %s414 = scalar_lea.vmem %s1, %s413
      %s415 = smul.u32 %s23, 4
      %s416 = ssub.s32 %s415, 1
      %p417 = scmp.gt.s32.totalorder %s416, 0
      %s418 = scalar_select %p417, %s416, 0
      %s419 = sadd.s32 %s23, 1
      %s420 = smul.u32 %s419, 4
      %p421 = scmp.lt.s32.totalorder %s420, 7
      %s422 = scalar_select %p421, %s420, 7
      %p423 = scmp.lt.s32.totalorder %s22, 1
      %s424 = scalar_select %p423, %s22, 1
      %p425 = scmp.lt.s32.totalorder %s422, 7
      %s426 = scalar_select %p425, %s422, 7
      %s427 = smul.addr %s426, 8
      %s428 = smul.addr %s424, 64
      %s429 = sadd.s32 %s427, %s428
      %s430 = smul.addr %s429, 8
      %s431 = scalar_lea.vmem %s2, %s430
      %s432 = sadd.s32 %s23, 1
      %s433 = smul.u32 %s432, 4
      %p434 = scmp.lt.s32.totalorder %s433, 7
      %s435 = scalar_select %p434, %s433, 7
      %s436 = smul.u32 4, %s23
      %p437 = scmp.lt.s32.totalorder %s22, 1
      %s438 = scalar_select %p437, %s22, 1
      %p439 = scmp.lt.s32.totalorder %s436, 7
      %s440 = scalar_select %p439, %s436, 7
      %s441 = smul.addr %s440, 8
      %s442 = smul.addr %s438, 64
      %s443 = sadd.s32 %s441, %s442
      %s444 = smul.addr %s443, 8
      %s445 = scalar_lea.vmem %s7, %s444
      %s446 = smul.u32 4, %s23
      %p447 = scmp.eq.s32.totalorder %s23, 0
      %p448 = scmp.eq.s32.totalorder %s23, 1
      %v449 = vld [vmem:[%s3] sm:$0xf]
      %v450 = vld [vmem:[%s4] sm:$0x1]
      %vm451 = vcmask 15360
      %452 = vst.msk [vmem:[#allocation2] sm:$0xff] %vm451, 0.0
      %vm453 = vcmask 9216
      %454 = vst.msk [vmem:[#allocation2 + $0x8] sm:$0x3] %vm453, 0.0
      %455 = vst.msk [vmem:[#allocation2 + $0x10] sm:$0xff] %vm451, 0.0
      %456 = vst.msk [vmem:[#allocation2 + $0x18] sm:$0x3] %vm453, 0.0
      %457 = vst.msk [vmem:[#allocation2 + $0x20] sm:$0xff] %vm451, 0.0
      %458 = vst.msk [vmem:[#allocation2 + $0x28] sm:$0x3] %vm453, 0.0
      %459 = vst.msk [vmem:[#allocation2 + $0x30] sm:$0xff] %vm451, 0.0
      %460 = vst.msk [vmem:[#allocation2 + $0x38] sm:$0x3] %vm453, 0.0
      %461 = vst.msk [vmem:[#allocation2 + $0x40] sm:$0xff] %vm451, 0.0
      %462 = vst.msk [vmem:[#allocation2 + $0x48] sm:$0x3] %vm453, 0.0
      %463 = vst.msk [vmem:[#allocation2 + $0x50] sm:$0xff] %vm451, 0.0
      %464 = vst.msk [vmem:[#allocation2 + $0x58] sm:$0x3] %vm453, 0.0
      %465 = vst.msk [vmem:[#allocation2 + $0x60] sm:$0xff] %vm451, 0.0
      %466 = vst.msk [vmem:[#allocation2 + $0x68] sm:$0x3] %vm453, 0.0
      %467 = vst.msk [vmem:[#allocation2 + $0x70] sm:$0xff] %vm451, 0.0
      %468 = vst.msk [vmem:[#allocation2 + $0x78] sm:$0x3] %vm453, 0.0
      %469 = vst.msk [vmem:[#allocation2 + $0x80] sm:$0xff] %vm451, 0.0
      %470 = vst.msk [vmem:[#allocation2 + $0x88] sm:$0x3] %vm453, 0.0
      %471 = vst.msk [vmem:[#allocation2 + $0x90] sm:$0xff] %vm451, 0.0
      %472 = vst.msk [vmem:[#allocation2 + $0x98] sm:$0x3] %vm453, 0.0
      %473 = vst.msk [vmem:[#allocation2 + $0xa0] sm:$0xff] %vm451, 0.0
      %474 = vst.msk [vmem:[#allocation2 + $0xa8] sm:$0x3] %vm453, 0.0
      %475 = vst.msk [vmem:[#allocation2 + $0xb0] sm:$0xff] %vm451, 0.0
      %476 = vst.msk [vmem:[#allocation2 + $0xb8] sm:$0x3] %vm453, 0.0
      %477 = vst.msk [vmem:[#allocation2 + $0xc0] sm:$0xff] %vm451, 0.0
      %478 = vst.msk [vmem:[#allocation2 + $0xc8] sm:$0x3] %vm453, 0.0
      %479 = vst.msk [vmem:[#allocation2 + $0xd0] sm:$0xff] %vm451, 0.0
      %480 = vst.msk [vmem:[#allocation2 + $0xd8] sm:$0x3] %vm453, 0.0
      %481 = vst.msk [vmem:[#allocation2 + $0xe0] sm:$0xff] %vm451, 0.0
      %482 = vst.msk [vmem:[#allocation2 + $0xe8] sm:$0x3] %vm453, 0.0
      %483 = vst.msk [vmem:[#allocation2 + $0xf0] sm:$0xff] %vm451, 0.0
      %484 = vst.msk [vmem:[#allocation2 + $0xf8] sm:$0x3] %vm453, 0.0
      %485 = vst.msk [vmem:[#allocation2 + $0x100] sm:$0xff] %vm451, 0.0
      %486 = vst.msk [vmem:[#allocation2 + $0x108] sm:$0x3] %vm453, 0.0
      %487 = vst.msk [vmem:[#allocation2 + $0x110] sm:$0xff] %vm451, 0.0
      %488 = vst.msk [vmem:[#allocation2 + $0x118] sm:$0x3] %vm453, 0.0
      %489 = vst.msk [vmem:[#allocation2 + $0x120] sm:$0xff] %vm451, 0.0
      %490 = vst.msk [vmem:[#allocation2 + $0x128] sm:$0x3] %vm453, 0.0
      %491 = vst.msk [vmem:[#allocation2 + $0x130] sm:$0xff] %vm451, 0.0
      %492 = vst.msk [vmem:[#allocation2 + $0x138] sm:$0x3] %vm453, 0.0
      %493 = vst.msk [vmem:[#allocation2 + $0x140] sm:$0xff] %vm451, 0.0
      %494 = vst.msk [vmem:[#allocation2 + $0x148] sm:$0x3] %vm453, 0.0
      %495 = vst.msk [vmem:[#allocation2 + $0x150] sm:$0xff] %vm451, 0.0
      %496 = vst.msk [vmem:[#allocation2 + $0x158] sm:$0x3] %vm453, 0.0
      %497 = vst.msk [vmem:[#allocation2 + $0x160] sm:$0xff] %vm451, 0.0
      %498 = vst.msk [vmem:[#allocation2 + $0x168] sm:$0x3] %vm453, 0.0
      %499 = vst.msk [vmem:[#allocation2 + $0x170] sm:$0xff] %vm451, 0.0
      %500 = vst.msk [vmem:[#allocation2 + $0x178] sm:$0x3] %vm453, 0.0
      %501 = vst.msk [vmem:[#allocation2 + $0x180] sm:$0xff] %vm451, 0.0
      %502 = vst.msk [vmem:[#allocation2 + $0x188] sm:$0x3] %vm453, 0.0
      %503 = vst.msk [vmem:[#allocation2 + $0x190] sm:$0xff] %vm451, 0.0
      %504 = vst.msk [vmem:[#allocation2 + $0x198] sm:$0x3] %vm453, 0.0
      %505 = vst.msk [vmem:[#allocation2 + $0x1a0] sm:$0xff] %vm451, 0.0
      %506 = vst.msk [vmem:[#allocation2 + $0x1a8] sm:$0x3] %vm453, 0.0
      %507 = vst.msk [vmem:[#allocation2 + $0x1b0] sm:$0xff] %vm451, 0.0
      %508 = vst.msk [vmem:[#allocation2 + $0x1b8] sm:$0x3] %vm453, 0.0
      %509 = vst.msk [vmem:[#allocation2 + $0x1c0] sm:$0xff] %vm451, 0.0
      %510 = vst.msk [vmem:[#allocation2 + $0x1c8] sm:$0x3] %vm453, 0.0
      %511 = vst.msk [vmem:[#allocation2 + $0x1d0] sm:$0xff] %vm451, 0.0
      %512 = vst.msk [vmem:[#allocation2 + $0x1d8] sm:$0x3] %vm453, 0.0
      %513 = vst.msk [vmem:[#allocation2 + $0x1e0] sm:$0xff] %vm451, 0.0
      %514 = vst.msk [vmem:[#allocation2 + $0x1e8] sm:$0x3] %vm453, 0.0
      %515 = vst.msk [vmem:[#allocation2 + $0x1f0] sm:$0xff] %vm451, 0.0
      %516 = vst.msk [vmem:[#allocation2 + $0x1f8] sm:$0x3] %vm453, 0.0
      %517 = vst.msk [vmem:[#allocation2 + $0x200] sm:$0xff] %vm451, 0.0
      %518 = vst.msk [vmem:[#allocation2 + $0x208] sm:$0x3] %vm453, 0.0
      %519 = vst.msk [vmem:[#allocation2 + $0x210] sm:$0xff] %vm451, 0.0
      %520 = vst.msk [vmem:[#allocation2 + $0x218] sm:$0x3] %vm453, 0.0
      %521 = vst.msk [vmem:[#allocation2 + $0x220] sm:$0xff] %vm451, 0.0
      %522 = vst.msk [vmem:[#allocation2 + $0x228] sm:$0x3] %vm453, 0.0
      %523 = vst.msk [vmem:[#allocation2 + $0x230] sm:$0xff] %vm451, 0.0
      %524 = vst.msk [vmem:[#allocation2 + $0x238] sm:$0x3] %vm453, 0.0
      %525 = vst.msk [vmem:[#allocation2 + $0x240] sm:$0xff] %vm451, 0.0
      %526 = vst.msk [vmem:[#allocation2 + $0x248] sm:$0x3] %vm453, 0.0
      %527 = vst.msk [vmem:[#allocation2 + $0x250] sm:$0xff] %vm451, 0.0
      %528 = vst.msk [vmem:[#allocation2 + $0x258] sm:$0x3] %vm453, 0.0
      %529 = vst.msk [vmem:[#allocation2 + $0x260] sm:$0xff] %vm451, 0.0
      %530 = vst.msk [vmem:[#allocation2 + $0x268] sm:$0x3] %vm453, 0.0
      %531 = vst.msk [vmem:[#allocation2 + $0x270] sm:$0xff] %vm451, 0.0
      %532 = vst.msk [vmem:[#allocation2 + $0x278] sm:$0x3] %vm453, 0.0
      %533 = vst.msk [vmem:[#allocation2 + $0x280] sm:$0xff] %vm451, 0.0
      %534 = vst.msk [vmem:[#allocation2 + $0x288] sm:$0x3] %vm453, 0.0
      %535 = vst.msk [vmem:[#allocation2 + $0x290] sm:$0xff] %vm451, 0.0
      %536 = vst.msk [vmem:[#allocation2 + $0x298] sm:$0x3] %vm453, 0.0
      %537 = vst.msk [vmem:[#allocation2 + $0x2a0] sm:$0xff] %vm451, 0.0
      %538 = vst.msk [vmem:[#allocation2 + $0x2a8] sm:$0x3] %vm453, 0.0
      %539 = vst.msk [vmem:[#allocation2 + $0x2b0] sm:$0xff] %vm451, 0.0
      %540 = vst.msk [vmem:[#allocation2 + $0x2b8] sm:$0x3] %vm453, 0.0
      %541 = vst.msk [vmem:[#allocation2 + $0x2c0] sm:$0xff] %vm451, 0.0
      %542 = vst.msk [vmem:[#allocation2 + $0x2c8] sm:$0x3] %vm453, 0.0
      %543 = vst.msk [vmem:[#allocation2 + $0x2d0] sm:$0xff] %vm451, 0.0
      %544 = vst.msk [vmem:[#allocation2 + $0x2d8] sm:$0x3] %vm453, 0.0
      %545 = vst.msk [vmem:[#allocation2 + $0x2e0] sm:$0xff] %vm451, 0.0
      %546 = vst.msk [vmem:[#allocation2 + $0x2e8] sm:$0x3] %vm453, 0.0
      %547 = vst.msk [vmem:[#allocation2 + $0x2f0] sm:$0xff] %vm451, 0.0
      %548 = vst.msk [vmem:[#allocation2 + $0x2f8] sm:$0x3] %vm453, 0.0
      %549 = vst.msk [vmem:[#allocation2 + $0x300] sm:$0xff] %vm451, 0.0
      %550 = vst.msk [vmem:[#allocation2 + $0x308] sm:$0x3] %vm453, 0.0
      %551 = vst.msk [vmem:[#allocation2 + $0x310] sm:$0xff] %vm451, 0.0
      %552 = vst.msk [vmem:[#allocation2 + $0x318] sm:$0x3] %vm453, 0.0
      %553 = vst.msk [vmem:[#allocation2 + $0x320] sm:$0xff] %vm451, 0.0
      %554 = vst.msk [vmem:[#allocation2 + $0x328] sm:$0x3] %vm453, 0.0
      %555 = vst.msk [vmem:[#allocation2 + $0x330] sm:$0xff] %vm451, 0.0
      %556 = vst.msk [vmem:[#allocation2 + $0x338] sm:$0x3] %vm453, 0.0
      %557 = vst.msk [vmem:[#allocation2 + $0x340] sm:$0xff] %vm451, 0.0
      %558 = vst.msk [vmem:[#allocation2 + $0x348] sm:$0x3] %vm453, 0.0
      %559 = vst.msk [vmem:[#allocation2 + $0x350] sm:$0xff] %vm451, 0.0
      %560 = vst.msk [vmem:[#allocation2 + $0x358] sm:$0x3] %vm453, 0.0
      %561 = vst.msk [vmem:[#allocation2 + $0x360] sm:$0xff] %vm451, 0.0
      %562 = vst.msk [vmem:[#allocation2 + $0x368] sm:$0x3] %vm453, 0.0
      %563 = vst.msk [vmem:[#allocation2 + $0x370] sm:$0xff] %vm451, 0.0
      %564 = vst.msk [vmem:[#allocation2 + $0x378] sm:$0x3] %vm453, 0.0
      %565 = vst.msk [vmem:[#allocation2 + $0x380] sm:$0xff] %vm451, 0.0
      %566 = vst.msk [vmem:[#allocation2 + $0x388] sm:$0x3] %vm453, 0.0
      %567 = vst.msk [vmem:[#allocation2 + $0x390] sm:$0xff] %vm451, 0.0
      %568 = vst.msk [vmem:[#allocation2 + $0x398] sm:$0x3] %vm453, 0.0
      %569 = vst.msk [vmem:[#allocation2 + $0x3a0] sm:$0xff] %vm451, 0.0
      %570 = vst.msk [vmem:[#allocation2 + $0x3a8] sm:$0x3] %vm453, 0.0
      %571 = vst.msk [vmem:[#allocation2 + $0x3b0] sm:$0xff] %vm451, 0.0
      %572 = vst.msk [vmem:[#allocation2 + $0x3b8] sm:$0x3] %vm453, 0.0
      %v573 = vld [vmem:[%s400] sm:$0xff]
      %v574 = vld [vmem:[%s400 + $0x8] sm:$0xff]
      %v575 = vld [vmem:[%s400 + $0x10] sm:$0xff]
      %v576 = vld [vmem:[%s400 + $0x18] sm:$0xff]
      %v577 = vld [vmem:[%s400 + $0x20] sm:$0xff]
      %v578 = vld [vmem:[%s400 + $0x28] sm:$0xff]
      %v579 = vld [vmem:[%s400 + $0x30] sm:$0xff]
      %v580 = vld [vmem:[%s400 + $0x38] sm:$0xff]
      %v581 = vld [vmem:[%s400 + $0x40] sm:$0xff]
      %v582 = vld [vmem:[%s400 + $0x48] sm:$0xff]
      %v583 = vld [vmem:[%s400 + $0x50] sm:$0xff]
      %v584 = vld [vmem:[%s400 + $0x58] sm:$0xff]
      %v585 = vld [vmem:[%s400 + $0x60] sm:$0xff]
      %v586 = vld [vmem:[%s400 + $0x68] sm:$0xff]
      %v587 = vld [vmem:[%s400 + $0x70] sm:$0xff]
      %v588 = vld [vmem:[%s400 + $0x78] sm:$0xff]
      %v589 = vld [vmem:[%s400 + $0x80] sm:$0xff]
      %v590 = vld [vmem:[%s400 + $0x88] sm:$0xff]
      %v591 = vld [vmem:[%s400 + $0x90] sm:$0xff]
      %v592 = vld [vmem:[%s400 + $0x98] sm:$0xff]
      %v593 = vld [vmem:[%s400 + $0xa0] sm:$0xff]
      %v594 = vld [vmem:[%s400 + $0xa8] sm:$0xff]
      %v595 = vld [vmem:[%s400 + $0xb0] sm:$0xff]
      %v596 = vld [vmem:[%s400 + $0xb8] sm:$0xff]
      %v597 = vld [vmem:[%s400 + $0xc0] sm:$0xff]
      %v598 = vld [vmem:[%s400 + $0xc8] sm:$0xff]
      %v599 = vld [vmem:[%s400 + $0xd0] sm:$0xff]
      %v600 = vld [vmem:[%s400 + $0xd8] sm:$0xff]
      %v601 = vld [vmem:[%s400 + $0xe0] sm:$0xff]
      %v602 = vld [vmem:[%s400 + $0xe8] sm:$0xff]
      %v603 = vld [vmem:[%s400 + $0xf0] sm:$0xff]
      %v604 = vld [vmem:[%s400 + $0xf8] sm:$0xff]
      %v606 = vlaneseq
      %v607 = vshrl.u32 %v606, 7
      %v608 = vsub.s32 0, %v607
      %v609 = vrot.slane %v450, %v608
      %vm611 = vcmask 31744
      %v613 = vsel %vm611, %v573, 0
      %v616 = vsel %vm611, %v574, 0
      %v619 = vsel %vm611, %v575, 0
      %v622 = vsel %vm611, %v576, 0
      %v625 = vsel %vm611, %v577, 0
      %v628 = vsel %vm611, %v578, 0
      %v631 = vsel %vm611, %v579, 0
      %v634 = vsel %vm611, %v580, 0
      %v637 = vsel %vm611, %v581, 0
      %v640 = vsel %vm611, %v582, 0
      %v643 = vsel %vm611, %v583, 0
      %v646 = vsel %vm611, %v584, 0
      %v649 = vsel %vm611, %v585, 0
      %v652 = vsel %vm611, %v586, 0
      %v655 = vsel %vm611, %v587, 0
      %v658 = vsel %vm611, %v588, 0
      %v661 = vsel %vm611, %v589, 0
      %v664 = vsel %vm611, %v590, 0
      %v667 = vsel %vm611, %v591, 0
      %v670 = vsel %vm611, %v592, 0
      %v673 = vsel %vm611, %v593, 0
      %v676 = vsel %vm611, %v594, 0
      %v679 = vsel %vm611, %v595, 0
      %v682 = vsel %vm611, %v596, 0
      %v685 = vsel %vm611, %v597, 0
      %v688 = vsel %vm611, %v598, 0
      %v691 = vsel %vm611, %v599, 0
      %v694 = vsel %vm611, %v600, 0
      %v697 = vsel %vm611, %v601, 0
      %v700 = vsel %vm611, %v602, 0
      %v703 = vsel %vm611, %v603, 0
      %v706 = vsel %vm611, %v604, 0
      %vm708 = vcmask 1043456
      %v710 = vsel %vm708, %v449, 0
      %712 = vmatprep.subr.mxu0 0.0
      %713 = vmatpush1.msra.mxu0 0.0
      %714 = vmatprep.subr.mxu0 0.0
      %715 = vmatpush1.msra.mxu0 0.0
      %716 = vmatprep.subr.mxu0 0.0
      %717 = vmatpush1.msra.mxu0 0.0
      %718 = vmatprep.subr.mxu0 0.0
      %719 = vmatpush1.msra.mxu0 0.0
      %720 = vmatprep.subr.mxu0 0.0
      %721 = vmatpush1.msra.mxu0 0.0
      %722 = vmatprep.subr.mxu0 0.0
      %723 = vmatpush1.msra.mxu0 0.0
      %724 = vmatprep.subr.mxu0 0.0
      %725 = vmatpush1.msra.mxu0 0.0
      %726 = vmatprep.subr.mxu0 0.0
      %727 = vmatpush1.msra.mxu0 0.0
      %728 = vmatprep.subr.mxu0 0.0
      %729 = vmatpush1.msra.mxu0 0.0
      %730 = vmatprep.subr.mxu0 0.0
      %731 = vmatpush1.msra.mxu0 0.0
      %732 = vmatprep.subr.mxu0 0.0
      %733 = vmatpush1.msra.mxu0 0.0
      %734 = vmatprep.subr.mxu0 0.0
      %735 = vmatpush1.msra.mxu0 0.0
      %736 = vmatprep.subr.mxu0 0.0
      %737 = vmatpush1.msra.mxu0 0.0
      %738 = vmatprep.subr.mxu0 0.0
      %739 = vmatpush1.msra.mxu0 0.0
      %740 = vmatprep.subr.mxu0 0.0
      %741 = vmatpush1.msra.mxu0 0.0
      %742 = vmatprep.subr.mxu0 0.0
      %743 = vmatpush1.msra.mxu0 %v710
      %744 = vmatprep.subr.mxu0 0.0
      %745 = vmatpush2.msra.mxu0 0.0
      %746 = vmatprep.subr.mxu0 0.0
      %747 = vmatpush2.msra.mxu0 0.0
      %748 = vmatprep.subr.mxu0 0.0
      %749 = vmatpush2.msra.mxu0 0.0
      %750 = vmatprep.subr.mxu0 0.0
      %751 = vmatpush2.msra.mxu0 0.0
      %752 = vmatprep.subr.mxu0 0.0
      %753 = vmatpush2.msra.mxu0 0.0
      %754 = vmatprep.subr.mxu0 0.0
      %755 = vmatpush2.msra.mxu0 0.0
      %756 = vmatprep.subr.mxu0 0.0
      %757 = vmatpush2.msra.mxu0 0.0
      %758 = vmatprep.subr.mxu0 0.0
      %759 = vmatpush2.msra.mxu0 0.0
      %760 = vmatprep.subr.mxu0 0.0
      %761 = vmatpush2.msra.mxu0 0.0
      %762 = vmatprep.subr.mxu0 0.0
      %763 = vmatpush2.msra.mxu0 0.0
      %764 = vmatprep.subr.mxu0 0.0
      %765 = vmatpush2.msra.mxu0 0.0
      %766 = vmatprep.subr.mxu0 0.0
      %767 = vmatpush2.msra.mxu0 0.0
      %768 = vmatprep.subr.mxu0 0.0
      %769 = vmatpush2.msra.mxu0 0.0
      %770 = vmatprep.subr.mxu0 0.0
      %771 = vmatpush2.msra.mxu0 0.0
      %772 = vmatprep.subr.mxu0 0.0
      %773 = vmatpush2.msra.mxu0 0.0
      %774 = vmatprep.subr.mxu0 0.0
      %775 = vmatpush2.msra.mxu0 0.0
      %776 = vmatprep.mubr.f32.mxu0 0.0
      %777 = vmatmul.mubr.f32.gmra.mxu0 %v613
      %v778 = vpop.f32.mrf.mxu0
      %v779 = vadd.f32 %v609, %v778
      %v780 = vpop.f32.mrf.mxu0
      %781 = vmatprep.mubr.f32.mxu0 0.0
      %782 = vmatmul.mubr.f32.gmra.mxu0 %v616
      %v783 = vpop.f32.mrf.mxu0
      %v784 = vadd.f32 %v609, %v783
      %v785 = vpop.f32.mrf.mxu0
      %786 = vmatprep.mubr.f32.mxu0 0.0
      %787 = vmatmul.mubr.f32.gmra.mxu0 %v619
      %v788 = vpop.f32.mrf.mxu0
      %v789 = vadd.f32 %v609, %v788
      %v790 = vpop.f32.mrf.mxu0
      %791 = vmatprep.mubr.f32.mxu0 0.0
      %792 = vmatmul.mubr.f32.gmra.mxu0 %v622
      %v793 = vpop.f32.mrf.mxu0
      %v794 = vadd.f32 %v609, %v793
      %v795 = vpop.f32.mrf.mxu0
      %796 = vmatprep.mubr.f32.mxu0 0.0
      %797 = vmatmul.mubr.f32.gmra.mxu0 %v625
      %v798 = vpop.f32.mrf.mxu0
      %v799 = vadd.f32 %v609, %v798
      %v800 = vpop.f32.mrf.mxu0
      %801 = vmatprep.mubr.f32.mxu0 0.0
      %802 = vmatmul.mubr.f32.gmra.mxu0 %v628
      %v803 = vpop.f32.mrf.mxu0
      %v804 = vadd.f32 %v609, %v803
      %v805 = vpop.f32.mrf.mxu0
      %806 = vmatprep.mubr.f32.mxu0 0.0
      %807 = vmatmul.mubr.f32.gmra.mxu0 %v631
      %v808 = vpop.f32.mrf.mxu0
      %v809 = vadd.f32 %v609, %v808
      %v810 = vpop.f32.mrf.mxu0
      %811 = vmatprep.mubr.f32.mxu0 0.0
      %812 = vmatmul.mubr.f32.gmra.mxu0 %v634
      %v813 = vpop.f32.mrf.mxu0
      %v814 = vadd.f32 %v609, %v813
      %v815 = vpop.f32.mrf.mxu0
      %816 = vmatprep.mubr.f32.mxu0 0.0
      %817 = vmatmul.mubr.f32.gmra.mxu0 %v637
      %v818 = vpop.f32.mrf.mxu0
      %v819 = vadd.f32 %v609, %v818
      %v820 = vpop.f32.mrf.mxu0
      %821 = vmatprep.mubr.f32.mxu0 0.0
      %822 = vmatmul.mubr.f32.gmra.mxu0 %v640
      %v823 = vpop.f32.mrf.mxu0
      %v824 = vadd.f32 %v609, %v823
      %v825 = vpop.f32.mrf.mxu0
      %826 = vmatprep.mubr.f32.mxu0 0.0
      %827 = vmatmul.mubr.f32.gmra.mxu0 %v643
      %v828 = vpop.f32.mrf.mxu0
      %v829 = vadd.f32 %v609, %v828
      %v830 = vpop.f32.mrf.mxu0
      %831 = vmatprep.mubr.f32.mxu0 0.0
      %832 = vmatmul.mubr.f32.gmra.mxu0 %v646
      %v833 = vpop.f32.mrf.mxu0
      %v834 = vadd.f32 %v609, %v833
      %v835 = vpop.f32.mrf.mxu0
      %836 = vmatprep.mubr.f32.mxu0 0.0
      %837 = vmatmul.mubr.f32.gmra.mxu0 %v649
      %v838 = vpop.f32.mrf.mxu0
      %v839 = vadd.f32 %v609, %v838
      %v840 = vpop.f32.mrf.mxu0
      %841 = vmatprep.mubr.f32.mxu0 0.0
      %842 = vmatmul.mubr.f32.gmra.mxu0 %v652
      %v843 = vpop.f32.mrf.mxu0
      %v844 = vadd.f32 %v609, %v843
      %v845 = vpop.f32.mrf.mxu0
      %846 = vmatprep.mubr.f32.mxu0 0.0
      %847 = vmatmul.mubr.f32.gmra.mxu0 %v655
      %v848 = vpop.f32.mrf.mxu0
      %v849 = vadd.f32 %v609, %v848
      %v850 = vpop.f32.mrf.mxu0
      %851 = vmatprep.mubr.f32.mxu0 0.0
      %852 = vmatmul.mubr.f32.gmra.mxu0 %v658
      %v853 = vpop.f32.mrf.mxu0
      %v854 = vadd.f32 %v609, %v853
      %v855 = vpop.f32.mrf.mxu0
      %856 = vmatprep.mubr.f32.mxu0 0.0
      %857 = vmatmul.mubr.f32.gmra.mxu0 %v661
      %v858 = vpop.f32.mrf.mxu0
      %v859 = vadd.f32 %v609, %v858
      %v860 = vpop.f32.mrf.mxu0
      %861 = vmatprep.mubr.f32.mxu0 0.0
      %862 = vmatmul.mubr.f32.gmra.mxu0 %v664
      %v863 = vpop.f32.mrf.mxu0
      %v864 = vadd.f32 %v609, %v863
      %v865 = vpop.f32.mrf.mxu0
      %866 = vmatprep.mubr.f32.mxu0 0.0
      %867 = vmatmul.mubr.f32.gmra.mxu0 %v667
      %v868 = vpop.f32.mrf.mxu0
      %v869 = vadd.f32 %v609, %v868
      %v870 = vpop.f32.mrf.mxu0
      %871 = vmatprep.mubr.f32.mxu0 0.0
      %872 = vmatmul.mubr.f32.gmra.mxu0 %v670
      %v873 = vpop.f32.mrf.mxu0
      %v874 = vadd.f32 %v609, %v873
      %v875 = vpop.f32.mrf.mxu0
      %876 = vmatprep.mubr.f32.mxu0 0.0
      %877 = vmatmul.mubr.f32.gmra.mxu0 %v673
      %v878 = vpop.f32.mrf.mxu0
      %v879 = vadd.f32 %v609, %v878
      %v880 = vpop.f32.mrf.mxu0
      %881 = vmatprep.mubr.f32.mxu0 0.0
      %882 = vmatmul.mubr.f32.gmra.mxu0 %v676
      %v883 = vpop.f32.mrf.mxu0
      %v884 = vadd.f32 %v609, %v883
      %v885 = vpop.f32.mrf.mxu0
      %886 = vmatprep.mubr.f32.mxu0 0.0
      %887 = vmatmul.mubr.f32.gmra.mxu0 %v679
      %v888 = vpop.f32.mrf.mxu0
      %v889 = vadd.f32 %v609, %v888
      %v890 = vpop.f32.mrf.mxu0
      %891 = vmatprep.mubr.f32.mxu0 0.0
      %892 = vmatmul.mubr.f32.gmra.mxu0 %v682
      %v893 = vpop.f32.mrf.mxu0
      %v894 = vadd.f32 %v609, %v893
      %v895 = vpop.f32.mrf.mxu0
      %896 = vmatprep.mubr.f32.mxu0 0.0
      %897 = vmatmul.mubr.f32.gmra.mxu0 %v685
      %v898 = vpop.f32.mrf.mxu0
      %v899 = vadd.f32 %v609, %v898
      %v900 = vpop.f32.mrf.mxu0
      %901 = vmatprep.mubr.f32.mxu0 0.0
      %902 = vmatmul.mubr.f32.gmra.mxu0 %v688
      %v903 = vpop.f32.mrf.mxu0
      %v904 = vadd.f32 %v609, %v903
      %v905 = vpop.f32.mrf.mxu0
      %906 = vmatprep.mubr.f32.mxu0 0.0
      %907 = vmatmul.mubr.f32.gmra.mxu0 %v691
      %v908 = vpop.f32.mrf.mxu0
      %v909 = vadd.f32 %v609, %v908
      %v910 = vpop.f32.mrf.mxu0
      %911 = vmatprep.mubr.f32.mxu0 0.0
      %912 = vmatmul.mubr.f32.gmra.mxu0 %v694
      %v913 = vpop.f32.mrf.mxu0
      %v914 = vadd.f32 %v609, %v913
      %v915 = vpop.f32.mrf.mxu0
      %916 = vmatprep.mubr.f32.mxu0 0.0
      %917 = vmatmul.mubr.f32.gmra.mxu0 %v697
      %v918 = vpop.f32.mrf.mxu0
      %v919 = vadd.f32 %v609, %v918
      %v920 = vpop.f32.mrf.mxu0
      %921 = vmatprep.mubr.f32.mxu0 0.0
      %922 = vmatmul.mubr.f32.gmra.mxu0 %v700
      %v923 = vpop.f32.mrf.mxu0
      %v924 = vadd.f32 %v609, %v923
      %v925 = vpop.f32.mrf.mxu0
      %926 = vmatprep.mubr.f32.mxu0 0.0
      %927 = vmatmul.mubr.f32.gmra.mxu0 %v703
      %v928 = vpop.f32.mrf.mxu0
      %v929 = vadd.f32 %v609, %v928
      %v930 = vpop.f32.mrf.mxu0
      %931 = vmatprep.mubr.f32.mxu0 0.0
      %932 = vmatmul.mubr.f32.gmra.mxu0 %v706
      %v933 = vpop.f32.mrf.mxu0
      %v934 = vadd.f32 %v609, %v933
      %v935 = vpop.f32.mrf.mxu0
      %936 = vdwg.mxu0
      %v937 = vmax.f32 %v779, 0.0
      %v938 = vmax.f32 %v784, 0.0
      %v939 = vmax.f32 %v789, 0.0
      %v940 = vmax.f32 %v794, 0.0
      %v941 = vmax.f32 %v799, 0.0
      %v942 = vmax.f32 %v804, 0.0
      %v943 = vmax.f32 %v809, 0.0
      %v944 = vmax.f32 %v814, 0.0
      %v945 = vmax.f32 %v819, 0.0
      %v946 = vmax.f32 %v824, 0.0
      %v947 = vmax.f32 %v829, 0.0
      %v948 = vmax.f32 %v834, 0.0
      %v949 = vmax.f32 %v839, 0.0
      %v950 = vmax.f32 %v844, 0.0
      %v951 = vmax.f32 %v849, 0.0
      %v952 = vmax.f32 %v854, 0.0
      %v953 = vmax.f32 %v859, 0.0
      %v954 = vmax.f32 %v864, 0.0
      %v955 = vmax.f32 %v869, 0.0
      %v956 = vmax.f32 %v874, 0.0
      %v957 = vmax.f32 %v879, 0.0
      %v958 = vmax.f32 %v884, 0.0
      %v959 = vmax.f32 %v889, 0.0
      %v960 = vmax.f32 %v894, 0.0
      %v961 = vmax.f32 %v899, 0.0
      %v962 = vmax.f32 %v904, 0.0
      %v963 = vmax.f32 %v909, 0.0
      %v964 = vmax.f32 %v914, 0.0
      %v965 = vmax.f32 %v919, 0.0
      %v966 = vmax.f32 %v924, 0.0
      %v967 = vmax.f32 %v929, 0.0
      %v968 = vmax.f32 %v934, 0.0
      %s969 = scalar_lea.vmem [#allocation2], 176
      %970 = vst.msk [vmem:[%s969 + $0x1] sm:$0xff] %vm451, %v937
      %971 = vst.msk [vmem:[%s969 + $0x11] sm:$0xff] %vm451, %v938
      %972 = vst.msk [vmem:[%s969 + $0x21] sm:$0xff] %vm451, %v939
      %973 = vst.msk [vmem:[%s969 + $0x31] sm:$0xff] %vm451, %v940
      %974 = vst.msk [vmem:[%s969 + $0x41] sm:$0xff] %vm451, %v941
      %975 = vst.msk [vmem:[%s969 + $0x51] sm:$0xff] %vm451, %v942
      %976 = vst.msk [vmem:[%s969 + $0x61] sm:$0xff] %vm451, %v943
      %977 = vst.msk [vmem:[%s969 + $0x71] sm:$0xff] %vm451, %v944
      %978 = vst.msk [vmem:[%s969 + $0xa1] sm:$0xff] %vm451, %v945
      %979 = vst.msk [vmem:[%s969 + $0xb1] sm:$0xff] %vm451, %v946
      %980 = vst.msk [vmem:[%s969 + $0xc1] sm:$0xff] %vm451, %v947
      %981 = vst.msk [vmem:[%s969 + $0xd1] sm:$0xff] %vm451, %v948
      %982 = vst.msk [vmem:[%s969 + $0xe1] sm:$0xff] %vm451, %v949
      %983 = vst.msk [vmem:[%s969 + $0xf1] sm:$0xff] %vm451, %v950
      %984 = vst.msk [vmem:[%s969 + $0x101] sm:$0xff] %vm451, %v951
      %985 = vst.msk [vmem:[%s969 + $0x111] sm:$0xff] %vm451, %v952
      %986 = vst.msk [vmem:[%s969 + $0x141] sm:$0xff] %vm451, %v953
      %987 = vst.msk [vmem:[%s969 + $0x151] sm:$0xff] %vm451, %v954
      %988 = vst.msk [vmem:[%s969 + $0x161] sm:$0xff] %vm451, %v955
      %989 = vst.msk [vmem:[%s969 + $0x171] sm:$0xff] %vm451, %v956
      %990 = vst.msk [vmem:[%s969 + $0x181] sm:$0xff] %vm451, %v957
      %991 = vst.msk [vmem:[%s969 + $0x191] sm:$0xff] %vm451, %v958
      %992 = vst.msk [vmem:[%s969 + $0x1a1] sm:$0xff] %vm451, %v959
      %993 = vst.msk [vmem:[%s969 + $0x1b1] sm:$0xff] %vm451, %v960
      %994 = vst.msk [vmem:[%s969 + $0x1e1] sm:$0xff] %vm451, %v961
      %995 = vst.msk [vmem:[%s969 + $0x1f1] sm:$0xff] %vm451, %v962
      %996 = vst.msk [vmem:[%s969 + $0x201] sm:$0xff] %vm451, %v963
      %997 = vst.msk [vmem:[%s969 + $0x211] sm:$0xff] %vm451, %v964
      %998 = vst.msk [vmem:[%s969 + $0x221] sm:$0xff] %vm451, %v965
      %999 = vst.msk [vmem:[%s969 + $0x231] sm:$0xff] %vm451, %v966
      %1000 = vst.msk [vmem:[%s969 + $0x241] sm:$0xff] %vm451, %v967
      %1001 = vst.msk [vmem:[%s969 + $0x251] sm:$0xff] %vm451, %v968
      %v1002 = vld [vmem:[%s414] sm:$0xff]
      %v1003 = vld [vmem:[%s414 + $0x8] sm:$0xff]
      %v1004 = vld [vmem:[%s414 + $0x10] sm:$0xff]
      %v1005 = vld [vmem:[%s414 + $0x18] sm:$0xff]
      %v1006 = vld [vmem:[%s414 + $0x20] sm:$0xff]
      %v1007 = vld [vmem:[%s414 + $0x28] sm:$0xff]
      %v1008 = vld [vmem:[%s414 + $0x30] sm:$0xff]
      %v1009 = vld [vmem:[%s414 + $0x38] sm:$0xff]
      %v1011 = vsel %vm611, %v1002, 0
      %v1014 = vsel %vm611, %v1003, 0
      %v1017 = vsel %vm611, %v1004, 0
      %v1020 = vsel %vm611, %v1005, 0
      %v1023 = vsel %vm611, %v1006, 0
      %v1026 = vsel %vm611, %v1007, 0
      %v1029 = vsel %vm611, %v1008, 0
      %v1032 = vsel %vm611, %v1009, 0
      %1034 = vmatprep.subr.mxu0 0.0
      %1035 = vmatpush1.msra.mxu0 0.0
      %1036 = vmatprep.subr.mxu0 0.0
      %1037 = vmatpush1.msra.mxu0 0.0
      %1038 = vmatprep.subr.mxu0 0.0
      %1039 = vmatpush1.msra.mxu0 0.0
      %1040 = vmatprep.subr.mxu0 0.0
      %1041 = vmatpush1.msra.mxu0 0.0
      %1042 = vmatprep.subr.mxu0 0.0
      %1043 = vmatpush1.msra.mxu0 0.0
      %1044 = vmatprep.subr.mxu0 0.0
      %1045 = vmatpush1.msra.mxu0 0.0
      %1046 = vmatprep.subr.mxu0 0.0
      %1047 = vmatpush1.msra.mxu0 0.0
      %1048 = vmatprep.subr.mxu0 0.0
      %1049 = vmatpush1.msra.mxu0 0.0
      %1050 = vmatprep.subr.mxu0 0.0
      %1051 = vmatpush1.msra.mxu0 0.0
      %1052 = vmatprep.subr.mxu0 0.0
      %1053 = vmatpush1.msra.mxu0 0.0
      %1054 = vmatprep.subr.mxu0 0.0
      %1055 = vmatpush1.msra.mxu0 0.0
      %1056 = vmatprep.subr.mxu0 0.0
      %1057 = vmatpush1.msra.mxu0 0.0
      %1058 = vmatprep.subr.mxu0 0.0
      %1059 = vmatpush1.msra.mxu0 0.0
      %1060 = vmatprep.subr.mxu0 0.0
      %1061 = vmatpush1.msra.mxu0 0.0
      %1062 = vmatprep.subr.mxu0 0.0
      %1063 = vmatpush1.msra.mxu0 0.0
      %1064 = vmatprep.subr.mxu0 0.0
      %1065 = vmatpush1.msra.mxu0 %v710
      %1066 = vmatprep.subr.mxu0 0.0
      %1067 = vmatpush2.msra.mxu0 0.0
      %1068 = vmatprep.subr.mxu0 0.0
      %1069 = vmatpush2.msra.mxu0 0.0
      %1070 = vmatprep.subr.mxu0 0.0
      %1071 = vmatpush2.msra.mxu0 0.0
      %1072 = vmatprep.subr.mxu0 0.0
      %1073 = vmatpush2.msra.mxu0 0.0
      %1074 = vmatprep.subr.mxu0 0.0
      %1075 = vmatpush2.msra.mxu0 0.0
      %1076 = vmatprep.subr.mxu0 0.0
      %1077 = vmatpush2.msra.mxu0 0.0
      %1078 = vmatprep.subr.mxu0 0.0
      %1079 = vmatpush2.msra.mxu0 0.0
      %1080 = vmatprep.subr.mxu0 0.0
      %1081 = vmatpush2.msra.mxu0 0.0
      %1082 = vmatprep.subr.mxu0 0.0
      %1083 = vmatpush2.msra.mxu0 0.0
      %1084 = vmatprep.subr.mxu0 0.0
      %1085 = vmatpush2.msra.mxu0 0.0
      %1086 = vmatprep.subr.mxu0 0.0
      %1087 = vmatpush2.msra.mxu0 0.0
      %1088 = vmatprep.subr.mxu0 0.0
      %1089 = vmatpush2.msra.mxu0 0.0
      %1090 = vmatprep.subr.mxu0 0.0
      %1091 = vmatpush2.msra.mxu0 0.0
      %1092 = vmatprep.subr.mxu0 0.0
      %1093 = vmatpush2.msra.mxu0 0.0
      %1094 = vmatprep.subr.mxu0 0.0
      %1095 = vmatpush2.msra.mxu0 0.0
      %1096 = vmatprep.subr.mxu0 0.0
      %1097 = vmatpush2.msra.mxu0 0.0
      %1098 = vmatprep.mubr.f32.mxu0 0.0
      %1099 = vmatmul.mubr.f32.gmra.mxu0 %v1011
      %v1100 = vpop.f32.mrf.mxu0
      %v1101 = vadd.f32 %v609, %v1100
      %v1102 = vpop.f32.mrf.mxu0
      %1103 = vmatprep.mubr.f32.mxu0 0.0
      %1104 = vmatmul.mubr.f32.gmra.mxu0 %v1014
      %v1105 = vpop.f32.mrf.mxu0
      %v1106 = vadd.f32 %v609, %v1105
      %v1107 = vpop.f32.mrf.mxu0
      %1108 = vmatprep.mubr.f32.mxu0 0.0
      %1109 = vmatmul.mubr.f32.gmra.mxu0 %v1017
      %v1110 = vpop.f32.mrf.mxu0
      %v1111 = vadd.f32 %v609, %v1110
      %v1112 = vpop.f32.mrf.mxu0
      %1113 = vmatprep.mubr.f32.mxu0 0.0
      %1114 = vmatmul.mubr.f32.gmra.mxu0 %v1020
      %v1115 = vpop.f32.mrf.mxu0
      %v1116 = vadd.f32 %v609, %v1115
      %v1117 = vpop.f32.mrf.mxu0
      %1118 = vmatprep.mubr.f32.mxu0 0.0
      %1119 = vmatmul.mubr.f32.gmra.mxu0 %v1023
      %v1120 = vpop.f32.mrf.mxu0
      %v1121 = vadd.f32 %v609, %v1120
      %v1122 = vpop.f32.mrf.mxu0
      %1123 = vmatprep.mubr.f32.mxu0 0.0
      %1124 = vmatmul.mubr.f32.gmra.mxu0 %v1026
      %v1125 = vpop.f32.mrf.mxu0
      %v1126 = vadd.f32 %v609, %v1125
      %v1127 = vpop.f32.mrf.mxu0
      %1128 = vmatprep.mubr.f32.mxu0 0.0
      %1129 = vmatmul.mubr.f32.gmra.mxu0 %v1029
      %v1130 = vpop.f32.mrf.mxu0
      %v1131 = vadd.f32 %v609, %v1130
      %v1132 = vpop.f32.mrf.mxu0
      %1133 = vmatprep.mubr.f32.mxu0 0.0
      %1134 = vmatmul.mubr.f32.gmra.mxu0 %v1032
      %v1135 = vpop.f32.mrf.mxu0
      %v1136 = vadd.f32 %v609, %v1135
      %v1137 = vpop.f32.mrf.mxu0
      %1138 = vdwg.mxu0
      %v1139 = vmax.f32 %v1101, 0.0
      %v1140 = vmax.f32 %v1106, 0.0
      %v1141 = vmax.f32 %v1111, 0.0
      %v1142 = vmax.f32 %v1116, 0.0
      %v1143 = vmax.f32 %v1121, 0.0
      %v1144 = vmax.f32 %v1126, 0.0
      %v1145 = vmax.f32 %v1131, 0.0
      %v1146 = vmax.f32 %v1136, 0.0
      %s1147 = scalar_select %p447, 1, 0
      %v1148 = vstv %s1147
      %vm1149 = vcmp.eq.s32.totalorder %v1148, 1
      %v1150 = vsel %vm1149, 0.0, %v1139
      %v1151 = vsel %vm1149, 0.0, %v1140
      %v1152 = vsel %vm1149, 0.0, %v1141
      %v1153 = vsel %vm1149, 0.0, %v1142
      %v1154 = vsel %vm1149, 0.0, %v1143
      %v1155 = vsel %vm1149, 0.0, %v1144
      %v1156 = vsel %vm1149, 0.0, %v1145
      %v1157 = vsel %vm1149, 0.0, %v1146
      %s1158 = scalar_lea.vmem [#allocation2], 16
      %1159 = vst.msk [vmem:[%s1158 + $0x1] sm:$0xff] %vm451, %v1150
      %1160 = vst.msk [vmem:[%s1158 + $0x11] sm:$0xff] %vm451, %v1151
      %1161 = vst.msk [vmem:[%s1158 + $0x21] sm:$0xff] %vm451, %v1152
      %1162 = vst.msk [vmem:[%s1158 + $0x31] sm:$0xff] %vm451, %v1153
      %1163 = vst.msk [vmem:[%s1158 + $0x41] sm:$0xff] %vm451, %v1154
      %1164 = vst.msk [vmem:[%s1158 + $0x51] sm:$0xff] %vm451, %v1155
      %1165 = vst.msk [vmem:[%s1158 + $0x61] sm:$0xff] %vm451, %v1156
      %1166 = vst.msk [vmem:[%s1158 + $0x71] sm:$0xff] %vm451, %v1157
      %v1167 = vld [vmem:[%s431] sm:$0xff]
      %v1168 = vld [vmem:[%s431 + $0x8] sm:$0xff]
      %v1169 = vld [vmem:[%s431 + $0x10] sm:$0xff]
      %v1170 = vld [vmem:[%s431 + $0x18] sm:$0xff]
      %v1171 = vld [vmem:[%s431 + $0x20] sm:$0xff]
      %v1172 = vld [vmem:[%s431 + $0x28] sm:$0xff]
      %v1173 = vld [vmem:[%s431 + $0x30] sm:$0xff]
      %v1174 = vld [vmem:[%s431 + $0x38] sm:$0xff]
      %v1176 = vsel %vm611, %v1167, 0
      %v1179 = vsel %vm611, %v1168, 0
      %v1182 = vsel %vm611, %v1169, 0
      %v1185 = vsel %vm611, %v1170, 0
      %v1188 = vsel %vm611, %v1171, 0
      %v1191 = vsel %vm611, %v1172, 0
      %v1194 = vsel %vm611, %v1173, 0
      %v1197 = vsel %vm611, %v1174, 0
      %1199 = vmatprep.subr.mxu0 0.0
      %1200 = vmatpush1.msra.mxu0 0.0
      %1201 = vmatprep.subr.mxu0 0.0
      %1202 = vmatpush1.msra.mxu0 0.0
      %1203 = vmatprep.subr.mxu0 0.0
      %1204 = vmatpush1.msra.mxu0 0.0
      %1205 = vmatprep.subr.mxu0 0.0
      %1206 = vmatpush1.msra.mxu0 0.0
      %1207 = vmatprep.subr.mxu0 0.0
      %1208 = vmatpush1.msra.mxu0 0.0
      %1209 = vmatprep.subr.mxu0 0.0
      %1210 = vmatpush1.msra.mxu0 0.0
      %1211 = vmatprep.subr.mxu0 0.0
      %1212 = vmatpush1.msra.mxu0 0.0
      %1213 = vmatprep.subr.mxu0 0.0
      %1214 = vmatpush1.msra.mxu0 0.0
      %1215 = vmatprep.subr.mxu0 0.0
      %1216 = vmatpush1.msra.mxu0 0.0
      %1217 = vmatprep.subr.mxu0 0.0
      %1218 = vmatpush1.msra.mxu0 0.0
      %1219 = vmatprep.subr.mxu0 0.0
      %1220 = vmatpush1.msra.mxu0 0.0
      %1221 = vmatprep.subr.mxu0 0.0
      %1222 = vmatpush1.msra.mxu0 0.0
      %1223 = vmatprep.subr.mxu0 0.0
      %1224 = vmatpush1.msra.mxu0 0.0
      %1225 = vmatprep.subr.mxu0 0.0
      %1226 = vmatpush1.msra.mxu0 0.0
      %1227 = vmatprep.subr.mxu0 0.0
      %1228 = vmatpush1.msra.mxu0 0.0
      %1229 = vmatprep.subr.mxu0 0.0
      %1230 = vmatpush1.msra.mxu0 %v710
      %1231 = vmatprep.subr.mxu0 0.0
      %1232 = vmatpush2.msra.mxu0 0.0
      %1233 = vmatprep.subr.mxu0 0.0
      %1234 = vmatpush2.msra.mxu0 0.0
      %1235 = vmatprep.subr.mxu0 0.0
      %1236 = vmatpush2.msra.mxu0 0.0
      %1237 = vmatprep.subr.mxu0 0.0
      %1238 = vmatpush2.msra.mxu0 0.0
      %1239 = vmatprep.subr.mxu0 0.0
      %1240 = vmatpush2.msra.mxu0 0.0
      %1241 = vmatprep.subr.mxu0 0.0
      %1242 = vmatpush2.msra.mxu0 0.0
      %1243 = vmatprep.subr.mxu0 0.0
      %1244 = vmatpush2.msra.mxu0 0.0
      %1245 = vmatprep.subr.mxu0 0.0
      %1246 = vmatpush2.msra.mxu0 0.0
      %1247 = vmatprep.subr.mxu0 0.0
      %1248 = vmatpush2.msra.mxu0 0.0
      %1249 = vmatprep.subr.mxu0 0.0
      %1250 = vmatpush2.msra.mxu0 0.0
      %1251 = vmatprep.subr.mxu0 0.0
      %1252 = vmatpush2.msra.mxu0 0.0
      %1253 = vmatprep.subr.mxu0 0.0
      %1254 = vmatpush2.msra.mxu0 0.0
      %1255 = vmatprep.subr.mxu0 0.0
      %1256 = vmatpush2.msra.mxu0 0.0
      %1257 = vmatprep.subr.mxu0 0.0
      %1258 = vmatpush2.msra.mxu0 0.0
      %1259 = vmatprep.subr.mxu0 0.0
      %1260 = vmatpush2.msra.mxu0 0.0
      %1261 = vmatprep.subr.mxu0 0.0
      %1262 = vmatpush2.msra.mxu0 0.0
      %1263 = vmatprep.mubr.f32.mxu0 0.0
      %1264 = vmatmul.mubr.f32.gmra.mxu0 %v1176
      %v1265 = vpop.f32.mrf.mxu0
      %v1266 = vadd.f32 %v609, %v1265
      %v1267 = vpop.f32.mrf.mxu0
      %1268 = vmatprep.mubr.f32.mxu0 0.0
      %1269 = vmatmul.mubr.f32.gmra.mxu0 %v1179
      %v1270 = vpop.f32.mrf.mxu0
      %v1271 = vadd.f32 %v609, %v1270
      %v1272 = vpop.f32.mrf.mxu0
      %1273 = vmatprep.mubr.f32.mxu0 0.0
      %1274 = vmatmul.mubr.f32.gmra.mxu0 %v1182
      %v1275 = vpop.f32.mrf.mxu0
      %v1276 = vadd.f32 %v609, %v1275
      %v1277 = vpop.f32.mrf.mxu0
      %1278 = vmatprep.mubr.f32.mxu0 0.0
      %1279 = vmatmul.mubr.f32.gmra.mxu0 %v1185
      %v1280 = vpop.f32.mrf.mxu0
      %v1281 = vadd.f32 %v609, %v1280
      %v1282 = vpop.f32.mrf.mxu0
      %1283 = vmatprep.mubr.f32.mxu0 0.0
      %1284 = vmatmul.mubr.f32.gmra.mxu0 %v1188
      %v1285 = vpop.f32.mrf.mxu0
      %v1286 = vadd.f32 %v609, %v1285
      %v1287 = vpop.f32.mrf.mxu0
      %1288 = vmatprep.mubr.f32.mxu0 0.0
      %1289 = vmatmul.mubr.f32.gmra.mxu0 %v1191
      %v1290 = vpop.f32.mrf.mxu0
      %v1291 = vadd.f32 %v609, %v1290
      %v1292 = vpop.f32.mrf.mxu0
      %1293 = vmatprep.mubr.f32.mxu0 0.0
      %1294 = vmatmul.mubr.f32.gmra.mxu0 %v1194
      %v1295 = vpop.f32.mrf.mxu0
      %v1296 = vadd.f32 %v609, %v1295
      %v1297 = vpop.f32.mrf.mxu0
      %1298 = vmatprep.mubr.f32.mxu0 0.0
      %1299 = vmatmul.mubr.f32.gmra.mxu0 %v1197
      %v1300 = vpop.f32.mrf.mxu0
      %v1301 = vadd.f32 %v609, %v1300
      %v1302 = vpop.f32.mrf.mxu0
      %1303 = vdwg.mxu0
      %v1304 = vmax.f32 %v1266, 0.0
      %v1305 = vmax.f32 %v1271, 0.0
      %v1306 = vmax.f32 %v1276, 0.0
      %v1307 = vmax.f32 %v1281, 0.0
      %v1308 = vmax.f32 %v1286, 0.0
      %v1309 = vmax.f32 %v1291, 0.0
      %v1310 = vmax.f32 %v1296, 0.0
      %v1311 = vmax.f32 %v1301, 0.0
      %s1312 = scalar_select %p448, 1, 0
      %v1313 = vstv %s1312
      %vm1314 = vcmp.eq.s32.totalorder %v1313, 1
      %v1315 = vsel %vm1314, 0.0, %v1304
      %v1316 = vsel %vm1314, 0.0, %v1305
      %v1317 = vsel %vm1314, 0.0, %v1306
      %v1318 = vsel %vm1314, 0.0, %v1307
      %v1319 = vsel %vm1314, 0.0, %v1308
      %v1320 = vsel %vm1314, 0.0, %v1309
      %v1321 = vsel %vm1314, 0.0, %v1310
      %v1322 = vsel %vm1314, 0.0, %v1311
      %s1323 = scalar_lea.vmem [#allocation2], 816
      %1324 = vst.msk [vmem:[%s1323 + $0x1] sm:$0xff] %vm451, %v1315
      %1325 = vst.msk [vmem:[%s1323 + $0x11] sm:$0xff] %vm451, %v1316
      %1326 = vst.msk [vmem:[%s1323 + $0x21] sm:$0xff] %vm451, %v1317
      %1327 = vst.msk [vmem:[%s1323 + $0x31] sm:$0xff] %vm451, %v1318
      %1328 = vst.msk [vmem:[%s1323 + $0x41] sm:$0xff] %vm451, %v1319
      %1329 = vst.msk [vmem:[%s1323 + $0x51] sm:$0xff] %vm451, %v1320
      %1330 = vst.msk [vmem:[%s1323 + $0x61] sm:$0xff] %vm451, %v1321
      %1331 = vst.msk [vmem:[%s1323 + $0x71] sm:$0xff] %vm451, %v1322
      %v1332 = vld [vmem:[#allocation2] sm:$0xff]
      %v1333 = vld [vmem:[#allocation2 + $0x10] sm:$0xff]
      %v1334 = vld [vmem:[#allocation2 + $0x20] sm:$0xff]
      %v1335 = vld [vmem:[#allocation2 + $0x30] sm:$0xff]
      %v1336 = vld [vmem:[#allocation2 + $0x40] sm:$0xff]
      %v1337 = vld [vmem:[#allocation2 + $0x50] sm:$0xff]
      %v1338 = vld [vmem:[#allocation2 + $0x60] sm:$0xff]
      %v1339 = vld [vmem:[#allocation2 + $0x70] sm:$0xff]
      %v1340 = vld [vmem:[#allocation2 + $0xa0] sm:$0xff]
      %v1341 = vld [vmem:[#allocation2 + $0xb0] sm:$0xff]
      %v1342 = vld [vmem:[#allocation2 + $0xc0] sm:$0xff]
      %v1343 = vld [vmem:[#allocation2 + $0xd0] sm:$0xff]
      %v1344 = vld [vmem:[#allocation2 + $0xe0] sm:$0xff]
      %v1345 = vld [vmem:[#allocation2 + $0xf0] sm:$0xff]
      %v1346 = vld [vmem:[#allocation2 + $0x100] sm:$0xff]
      %v1347 = vld [vmem:[#allocation2 + $0x110] sm:$0xff]
      %v1348 = vld [vmem:[#allocation2 + $0x140] sm:$0xff]
      %v1349 = vld [vmem:[#allocation2 + $0x150] sm:$0xff]
      %v1350 = vld [vmem:[#allocation2 + $0x160] sm:$0xff]
      %v1351 = vld [vmem:[#allocation2 + $0x170] sm:$0xff]
      %v1352 = vld [vmem:[#allocation2 + $0x180] sm:$0xff]
      %v1353 = vld [vmem:[#allocation2 + $0x190] sm:$0xff]
      %v1354 = vld [vmem:[#allocation2 + $0x1a0] sm:$0xff]
      %v1355 = vld [vmem:[#allocation2 + $0x1b0] sm:$0xff]
      %v1356 = vld [vmem:[#allocation2 + $0x1e0] sm:$0xff]
      %v1357 = vld [vmem:[#allocation2 + $0x1f0] sm:$0xff]
      %v1358 = vld [vmem:[#allocation2 + $0x200] sm:$0xff]
      %v1359 = vld [vmem:[#allocation2 + $0x210] sm:$0xff]
      %v1360 = vld [vmem:[#allocation2 + $0x220] sm:$0xff]
      %v1361 = vld [vmem:[#allocation2 + $0x230] sm:$0xff]
      %v1362 = vld [vmem:[#allocation2 + $0x240] sm:$0xff]
      %v1363 = vld [vmem:[#allocation2 + $0x250] sm:$0xff]
      %v1364 = vld [vmem:[%s5] sm:$0x3]
      %v1365 = vld [vmem:[#allocation2 + $0x1] sm:$0xff]
      %v1366 = vld [vmem:[#allocation2 + $0x11] sm:$0xff]
      %v1367 = vld [vmem:[#allocation2 + $0x21] sm:$0xff]
      %v1368 = vld [vmem:[#allocation2 + $0x31] sm:$0xff]
      %v1369 = vld [vmem:[#allocation2 + $0x41] sm:$0xff]
      %v1370 = vld [vmem:[#allocation2 + $0x51] sm:$0xff]
      %v1371 = vld [vmem:[#allocation2 + $0x61] sm:$0xff]
      %v1372 = vld [vmem:[#allocation2 + $0x71] sm:$0xff]
      %v1373 = vld [vmem:[#allocation2 + $0xa1] sm:$0xff]
      %v1374 = vld [vmem:[#allocation2 + $0xb1] sm:$0xff]
      %v1375 = vld [vmem:[#allocation2 + $0xc1] sm:$0xff]
      %v1376 = vld [vmem:[#allocation2 + $0xd1] sm:$0xff]
      %v1377 = vld [vmem:[#allocation2 + $0xe1] sm:$0xff]
      %v1378 = vld [vmem:[#allocation2 + $0xf1] sm:$0xff]
      %v1379 = vld [vmem:[#allocation2 + $0x101] sm:$0xff]
      %v1380 = vld [vmem:[#allocation2 + $0x111] sm:$0xff]
      %v1381 = vld [vmem:[#allocation2 + $0x141] sm:$0xff]
      %v1382 = vld [vmem:[#allocation2 + $0x151] sm:$0xff]
      %v1383 = vld [vmem:[#allocation2 + $0x161] sm:$0xff]
      %v1384 = vld [vmem:[#allocation2 + $0x171] sm:$0xff]
      %v1385 = vld [vmem:[#allocation2 + $0x181] sm:$0xff]
      %v1386 = vld [vmem:[#allocation2 + $0x191] sm:$0xff]
      %v1387 = vld [vmem:[#allocation2 + $0x1a1] sm:$0xff]
      %v1388 = vld [vmem:[#allocation2 + $0x1b1] sm:$0xff]
      %v1389 = vld [vmem:[#allocation2 + $0x1e1] sm:$0xff]
      %v1390 = vld [vmem:[#allocation2 + $0x1f1] sm:$0xff]
      %v1391 = vld [vmem:[#allocation2 + $0x201] sm:$0xff]
      %v1392 = vld [vmem:[#allocation2 + $0x211] sm:$0xff]
      %v1393 = vld [vmem:[#allocation2 + $0x221] sm:$0xff]
      %v1394 = vld [vmem:[#allocation2 + $0x231] sm:$0xff]
      %v1395 = vld [vmem:[#allocation2 + $0x241] sm:$0xff]
      %v1396 = vld [vmem:[#allocation2 + $0x251] sm:$0xff]
      %s1397 = scalar_lea.vmem %s5, 2
      %v1398 = vld [vmem:[%s1397] sm:$0x3]
      %v1400 = vsel %vm451, %v1365, 0
      %v1403 = vsel %vm451, %v1366, 0
      %v1406 = vsel %vm451, %v1367, 0
      %v1409 = vsel %vm451, %v1368, 0
      %v1412 = vsel %vm451, %v1369, 0
      %v1415 = vsel %vm451, %v1370, 0
      %v1418 = vsel %vm451, %v1371, 0
      %v1421 = vsel %vm451, %v1372, 0
      %v1424 = vsel %vm451, %v1373, 0
      %v1427 = vsel %vm451, %v1374, 0
      %v1430 = vsel %vm451, %v1375, 0
      %v1433 = vsel %vm451, %v1376, 0
      %v1436 = vsel %vm451, %v1377, 0
      %v1439 = vsel %vm451, %v1378, 0
      %v1442 = vsel %vm451, %v1379, 0
      %v1445 = vsel %vm451, %v1380, 0
      %v1448 = vsel %vm451, %v1381, 0
      %v1451 = vsel %vm451, %v1382, 0
      %v1454 = vsel %vm451, %v1383, 0
      %v1457 = vsel %vm451, %v1384, 0
      %v1460 = vsel %vm451, %v1385, 0
      %v1463 = vsel %vm451, %v1386, 0
      %v1466 = vsel %vm451, %v1387, 0
      %v1469 = vsel %vm451, %v1388, 0
      %v1472 = vsel %vm451, %v1389, 0
      %v1475 = vsel %vm451, %v1390, 0
      %v1478 = vsel %vm451, %v1391, 0
      %v1481 = vsel %vm451, %v1392, 0
      %v1484 = vsel %vm451, %v1393, 0
      %v1487 = vsel %vm451, %v1394, 0
      %v1490 = vsel %vm451, %v1395, 0
      %v1493 = vsel %vm451, %v1396, 0
      %vm1495 = vcmask 1041408
      %v1497 = vsel %vm1495, %v1398, 0
      %1499 = vmatprep.subr.mxu0 0.0
      %1500 = vmatpush1.msra.mxu0 0.0
      %1501 = vmatprep.subr.mxu0 0.0
      %1502 = vmatpush1.msra.mxu0 0.0
      %1503 = vmatprep.subr.mxu0 0.0
      %1504 = vmatpush1.msra.mxu0 0.0
      %1505 = vmatprep.subr.mxu0 0.0
      %1506 = vmatpush1.msra.mxu0 0.0
      %1507 = vmatprep.subr.mxu0 0.0
      %1508 = vmatpush1.msra.mxu0 0.0
      %1509 = vmatprep.subr.mxu0 0.0
      %1510 = vmatpush1.msra.mxu0 0.0
      %1511 = vmatprep.subr.mxu0 0.0
      %1512 = vmatpush1.msra.mxu0 0.0
      %1513 = vmatprep.subr.mxu0 0.0
      %1514 = vmatpush1.msra.mxu0 0.0
      %1515 = vmatprep.subr.mxu0 0.0
      %1516 = vmatpush1.msra.mxu0 0.0
      %1517 = vmatprep.subr.mxu0 0.0
      %1518 = vmatpush1.msra.mxu0 0.0
      %1519 = vmatprep.subr.mxu0 0.0
      %1520 = vmatpush1.msra.mxu0 0.0
      %1521 = vmatprep.subr.mxu0 0.0
      %1522 = vmatpush1.msra.mxu0 0.0
      %1523 = vmatprep.subr.mxu0 0.0
      %1524 = vmatpush1.msra.mxu0 0.0
      %1525 = vmatprep.subr.mxu0 0.0
      %1526 = vmatpush1.msra.mxu0 0.0
      %1527 = vmatprep.subr.mxu0 0.0
      %1528 = vmatpush1.msra.mxu0 0.0
      %1529 = vmatprep.subr.mxu0 0.0
      %1530 = vmatpush1.msra.mxu0 %v1497
      %1531 = vmatprep.subr.mxu0 0.0
      %1532 = vmatpush2.msra.mxu0 0.0
      %1533 = vmatprep.subr.mxu0 0.0
      %1534 = vmatpush2.msra.mxu0 0.0
      %1535 = vmatprep.subr.mxu0 0.0
      %1536 = vmatpush2.msra.mxu0 0.0
      %1537 = vmatprep.subr.mxu0 0.0
      %1538 = vmatpush2.msra.mxu0 0.0
      %1539 = vmatprep.subr.mxu0 0.0
      %1540 = vmatpush2.msra.mxu0 0.0
      %1541 = vmatprep.subr.mxu0 0.0
      %1542 = vmatpush2.msra.mxu0 0.0
      %1543 = vmatprep.subr.mxu0 0.0
      %1544 = vmatpush2.msra.mxu0 0.0
      %1545 = vmatprep.subr.mxu0 0.0
      %1546 = vmatpush2.msra.mxu0 0.0
      %1547 = vmatprep.subr.mxu0 0.0
      %1548 = vmatpush2.msra.mxu0 0.0
      %1549 = vmatprep.subr.mxu0 0.0
      %1550 = vmatpush2.msra.mxu0 0.0
      %1551 = vmatprep.subr.mxu0 0.0
      %1552 = vmatpush2.msra.mxu0 0.0
      %1553 = vmatprep.subr.mxu0 0.0
      %1554 = vmatpush2.msra.mxu0 0.0
      %1555 = vmatprep.subr.mxu0 0.0
      %1556 = vmatpush2.msra.mxu0 0.0
      %1557 = vmatprep.subr.mxu0 0.0
      %1558 = vmatpush2.msra.mxu0 0.0
      %1559 = vmatprep.subr.mxu0 0.0
      %1560 = vmatpush2.msra.mxu0 0.0
      %1561 = vmatprep.subr.mxu0 0.0
      %1562 = vmatpush2.msra.mxu0 0.0
      %1563 = vmatprep.mubr.f32.mxu0 0.0
      %1564 = vmatmul.mubr.f32.gmra.mxu0 %v1400
      %v1565 = vpop.f32.mrf.mxu0
      %v1566 = vadd.f32 0.0, %v1565
      %v1567 = vpop.f32.mrf.mxu0
      %1568 = vmatprep.mubr.f32.mxu0 0.0
      %1569 = vmatmul.mubr.f32.gmra.mxu0 %v1403
      %v1570 = vpop.f32.mrf.mxu0
      %v1571 = vadd.f32 0.0, %v1570
      %v1572 = vpop.f32.mrf.mxu0
      %1573 = vmatprep.mubr.f32.mxu0 0.0
      %1574 = vmatmul.mubr.f32.gmra.mxu0 %v1406
      %v1575 = vpop.f32.mrf.mxu0
      %v1576 = vadd.f32 0.0, %v1575
      %v1577 = vpop.f32.mrf.mxu0
      %1578 = vmatprep.mubr.f32.mxu0 0.0
      %1579 = vmatmul.mubr.f32.gmra.mxu0 %v1409
      %v1580 = vpop.f32.mrf.mxu0
      %v1581 = vadd.f32 0.0, %v1580
      %v1582 = vpop.f32.mrf.mxu0
      %1583 = vmatprep.mubr.f32.mxu0 0.0
      %1584 = vmatmul.mubr.f32.gmra.mxu0 %v1412
      %v1585 = vpop.f32.mrf.mxu0
      %v1586 = vadd.f32 0.0, %v1585
      %v1587 = vpop.f32.mrf.mxu0
      %1588 = vmatprep.mubr.f32.mxu0 0.0
      %1589 = vmatmul.mubr.f32.gmra.mxu0 %v1415
      %v1590 = vpop.f32.mrf.mxu0
      %v1591 = vadd.f32 0.0, %v1590
      %v1592 = vpop.f32.mrf.mxu0
      %1593 = vmatprep.mubr.f32.mxu0 0.0
      %1594 = vmatmul.mubr.f32.gmra.mxu0 %v1418
      %v1595 = vpop.f32.mrf.mxu0
      %v1596 = vadd.f32 0.0, %v1595
      %v1597 = vpop.f32.mrf.mxu0
      %1598 = vmatprep.mubr.f32.mxu0 0.0
      %1599 = vmatmul.mubr.f32.gmra.mxu0 %v1421
      %v1600 = vpop.f32.mrf.mxu0
      %v1601 = vadd.f32 0.0, %v1600
      %v1602 = vpop.f32.mrf.mxu0
      %1603 = vmatprep.mubr.f32.mxu0 0.0
      %1604 = vmatmul.mubr.f32.gmra.mxu0 %v1424
      %v1605 = vpop.f32.mrf.mxu0
      %v1606 = vadd.f32 0.0, %v1605
      %v1607 = vpop.f32.mrf.mxu0
      %1608 = vmatprep.mubr.f32.mxu0 0.0
      %1609 = vmatmul.mubr.f32.gmra.mxu0 %v1427
      %v1610 = vpop.f32.mrf.mxu0
      %v1611 = vadd.f32 0.0, %v1610
      %v1612 = vpop.f32.mrf.mxu0
      %1613 = vmatprep.mubr.f32.mxu0 0.0
      %1614 = vmatmul.mubr.f32.gmra.mxu0 %v1430
      %v1615 = vpop.f32.mrf.mxu0
      %v1616 = vadd.f32 0.0, %v1615
      %v1617 = vpop.f32.mrf.mxu0
      %1618 = vmatprep.mubr.f32.mxu0 0.0
      %1619 = vmatmul.mubr.f32.gmra.mxu0 %v1433
      %v1620 = vpop.f32.mrf.mxu0
      %v1621 = vadd.f32 0.0, %v1620
      %v1622 = vpop.f32.mrf.mxu0
      %1623 = vmatprep.mubr.f32.mxu0 0.0
      %1624 = vmatmul.mubr.f32.gmra.mxu0 %v1436
      %v1625 = vpop.f32.mrf.mxu0
      %v1626 = vadd.f32 0.0, %v1625
      %v1627 = vpop.f32.mrf.mxu0
      %1628 = vmatprep.mubr.f32.mxu0 0.0
      %1629 = vmatmul.mubr.f32.gmra.mxu0 %v1439
      %v1630 = vpop.f32.mrf.mxu0
      %v1631 = vadd.f32 0.0, %v1630
      %v1632 = vpop.f32.mrf.mxu0
      %1633 = vmatprep.mubr.f32.mxu0 0.0
      %1634 = vmatmul.mubr.f32.gmra.mxu0 %v1442
      %v1635 = vpop.f32.mrf.mxu0
      %v1636 = vadd.f32 0.0, %v1635
      %v1637 = vpop.f32.mrf.mxu0
      %1638 = vmatprep.mubr.f32.mxu0 0.0
      %1639 = vmatmul.mubr.f32.gmra.mxu0 %v1445
      %v1640 = vpop.f32.mrf.mxu0
      %v1641 = vadd.f32 0.0, %v1640
      %v1642 = vpop.f32.mrf.mxu0
      %1643 = vmatprep.mubr.f32.mxu0 0.0
      %1644 = vmatmul.mubr.f32.gmra.mxu0 %v1448
      %v1645 = vpop.f32.mrf.mxu0
      %v1646 = vadd.f32 0.0, %v1645
      %v1647 = vpop.f32.mrf.mxu0
      %1648 = vmatprep.mubr.f32.mxu0 0.0
      %1649 = vmatmul.mubr.f32.gmra.mxu0 %v1451
      %v1650 = vpop.f32.mrf.mxu0
      %v1651 = vadd.f32 0.0, %v1650
      %v1652 = vpop.f32.mrf.mxu0
      %1653 = vmatprep.mubr.f32.mxu0 0.0
      %1654 = vmatmul.mubr.f32.gmra.mxu0 %v1454
      %v1655 = vpop.f32.mrf.mxu0
      %v1656 = vadd.f32 0.0, %v1655
      %v1657 = vpop.f32.mrf.mxu0
      %1658 = vmatprep.mubr.f32.mxu0 0.0
      %1659 = vmatmul.mubr.f32.gmra.mxu0 %v1457
      %v1660 = vpop.f32.mrf.mxu0
      %v1661 = vadd.f32 0.0, %v1660
      %v1662 = vpop.f32.mrf.mxu0
      %1663 = vmatprep.mubr.f32.mxu0 0.0
      %1664 = vmatmul.mubr.f32.gmra.mxu0 %v1460
      %v1665 = vpop.f32.mrf.mxu0
      %v1666 = vadd.f32 0.0, %v1665
      %v1667 = vpop.f32.mrf.mxu0
      %1668 = vmatprep.mubr.f32.mxu0 0.0
      %1669 = vmatmul.mubr.f32.gmra.mxu0 %v1463
      %v1670 = vpop.f32.mrf.mxu0
      %v1671 = vadd.f32 0.0, %v1670
      %v1672 = vpop.f32.mrf.mxu0
      %1673 = vmatprep.mubr.f32.mxu0 0.0
      %1674 = vmatmul.mubr.f32.gmra.mxu0 %v1466
      %v1675 = vpop.f32.mrf.mxu0
      %v1676 = vadd.f32 0.0, %v1675
      %v1677 = vpop.f32.mrf.mxu0
      %1678 = vmatprep.mubr.f32.mxu0 0.0
      %1679 = vmatmul.mubr.f32.gmra.mxu0 %v1469
      %v1680 = vpop.f32.mrf.mxu0
      %v1681 = vadd.f32 0.0, %v1680
      %v1682 = vpop.f32.mrf.mxu0
      %1683 = vmatprep.mubr.f32.mxu0 0.0
      %1684 = vmatmul.mubr.f32.gmra.mxu0 %v1472
      %v1685 = vpop.f32.mrf.mxu0
      %v1686 = vadd.f32 0.0, %v1685
      %v1687 = vpop.f32.mrf.mxu0
      %1688 = vmatprep.mubr.f32.mxu0 0.0
      %1689 = vmatmul.mubr.f32.gmra.mxu0 %v1475
      %v1690 = vpop.f32.mrf.mxu0
      %v1691 = vadd.f32 0.0, %v1690
      %v1692 = vpop.f32.mrf.mxu0
      %1693 = vmatprep.mubr.f32.mxu0 0.0
      %1694 = vmatmul.mubr.f32.gmra.mxu0 %v1478
      %v1695 = vpop.f32.mrf.mxu0
      %v1696 = vadd.f32 0.0, %v1695
      %v1697 = vpop.f32.mrf.mxu0
      %1698 = vmatprep.mubr.f32.mxu0 0.0
      %1699 = vmatmul.mubr.f32.gmra.mxu0 %v1481
      %v1700 = vpop.f32.mrf.mxu0
      %v1701 = vadd.f32 0.0, %v1700
      %v1702 = vpop.f32.mrf.mxu0
      %1703 = vmatprep.mubr.f32.mxu0 0.0
      %1704 = vmatmul.mubr.f32.gmra.mxu0 %v1484
      %v1705 = vpop.f32.mrf.mxu0
      %v1706 = vadd.f32 0.0, %v1705
      %v1707 = vpop.f32.mrf.mxu0
      %1708 = vmatprep.mubr.f32.mxu0 0.0
      %1709 = vmatmul.mubr.f32.gmra.mxu0 %v1487
      %v1710 = vpop.f32.mrf.mxu0
      %v1711 = vadd.f32 0.0, %v1710
      %v1712 = vpop.f32.mrf.mxu0
      %1713 = vmatprep.mubr.f32.mxu0 0.0
      %1714 = vmatmul.mubr.f32.gmra.mxu0 %v1490
      %v1715 = vpop.f32.mrf.mxu0
      %v1716 = vadd.f32 0.0, %v1715
      %v1717 = vpop.f32.mrf.mxu0
      %1718 = vmatprep.mubr.f32.mxu0 0.0
      %1719 = vmatmul.mubr.f32.gmra.mxu0 %v1493
      %v1720 = vpop.f32.mrf.mxu0
      %v1721 = vadd.f32 0.0, %v1720
      %v1722 = vpop.f32.mrf.mxu0
      %1723 = vdwg.mxu0
      %v1725 = vsel %vm451, %v1332, 0
      %v1728 = vsel %vm451, %v1333, 0
      %v1731 = vsel %vm451, %v1334, 0
      %v1734 = vsel %vm451, %v1335, 0
      %v1737 = vsel %vm451, %v1336, 0
      %v1740 = vsel %vm451, %v1337, 0
      %v1743 = vsel %vm451, %v1338, 0
      %v1746 = vsel %vm451, %v1339, 0
      %v1749 = vsel %vm451, %v1340, 0
      %v1752 = vsel %vm451, %v1341, 0
      %v1755 = vsel %vm451, %v1342, 0
      %v1758 = vsel %vm451, %v1343, 0
      %v1761 = vsel %vm451, %v1344, 0
      %v1764 = vsel %vm451, %v1345, 0
      %v1767 = vsel %vm451, %v1346, 0
      %v1770 = vsel %vm451, %v1347, 0
      %v1773 = vsel %vm451, %v1348, 0
      %v1776 = vsel %vm451, %v1349, 0
      %v1779 = vsel %vm451, %v1350, 0
      %v1782 = vsel %vm451, %v1351, 0
      %v1785 = vsel %vm451, %v1352, 0
      %v1788 = vsel %vm451, %v1353, 0
      %v1791 = vsel %vm451, %v1354, 0
      %v1794 = vsel %vm451, %v1355, 0
      %v1797 = vsel %vm451, %v1356, 0
      %v1800 = vsel %vm451, %v1357, 0
      %v1803 = vsel %vm451, %v1358, 0
      %v1806 = vsel %vm451, %v1359, 0
      %v1809 = vsel %vm451, %v1360, 0
      %v1812 = vsel %vm451, %v1361, 0
      %v1815 = vsel %vm451, %v1362, 0
      %v1818 = vsel %vm451, %v1363, 0
      %v1821 = vsel %vm1495, %v1364, 0
      %1823 = vmatprep.subr.mxu0 0.0
      %1824 = vmatpush1.msra.mxu0 0.0
      %1825 = vmatprep.subr.mxu0 0.0
      %1826 = vmatpush1.msra.mxu0 0.0
      %1827 = vmatprep.subr.mxu0 0.0
      %1828 = vmatpush1.msra.mxu0 0.0
      %1829 = vmatprep.subr.mxu0 0.0
      %1830 = vmatpush1.msra.mxu0 0.0
      %1831 = vmatprep.subr.mxu0 0.0
      %1832 = vmatpush1.msra.mxu0 0.0
      %1833 = vmatprep.subr.mxu0 0.0
      %1834 = vmatpush1.msra.mxu0 0.0
      %1835 = vmatprep.subr.mxu0 0.0
      %1836 = vmatpush1.msra.mxu0 0.0
      %1837 = vmatprep.subr.mxu0 0.0
      %1838 = vmatpush1.msra.mxu0 0.0
      %1839 = vmatprep.subr.mxu0 0.0
      %1840 = vmatpush1.msra.mxu0 0.0
      %1841 = vmatprep.subr.mxu0 0.0
      %1842 = vmatpush1.msra.mxu0 0.0
      %1843 = vmatprep.subr.mxu0 0.0
      %1844 = vmatpush1.msra.mxu0 0.0
      %1845 = vmatprep.subr.mxu0 0.0
      %1846 = vmatpush1.msra.mxu0 0.0
      %1847 = vmatprep.subr.mxu0 0.0
      %1848 = vmatpush1.msra.mxu0 0.0
      %1849 = vmatprep.subr.mxu0 0.0
      %1850 = vmatpush1.msra.mxu0 0.0
      %1851 = vmatprep.subr.mxu0 0.0
      %1852 = vmatpush1.msra.mxu0 0.0
      %1853 = vmatprep.subr.mxu0 0.0
      %1854 = vmatpush1.msra.mxu0 %v1821
      %1855 = vmatprep.subr.mxu0 0.0
      %1856 = vmatpush2.msra.mxu0 0.0
      %1857 = vmatprep.subr.mxu0 0.0
      %1858 = vmatpush2.msra.mxu0 0.0
      %1859 = vmatprep.subr.mxu0 0.0
      %1860 = vmatpush2.msra.mxu0 0.0
      %1861 = vmatprep.subr.mxu0 0.0
      %1862 = vmatpush2.msra.mxu0 0.0
      %1863 = vmatprep.subr.mxu0 0.0
      %1864 = vmatpush2.msra.mxu0 0.0
      %1865 = vmatprep.subr.mxu0 0.0
      %1866 = vmatpush2.msra.mxu0 0.0
      %1867 = vmatprep.subr.mxu0 0.0
      %1868 = vmatpush2.msra.mxu0 0.0
      %1869 = vmatprep.subr.mxu0 0.0
      %1870 = vmatpush2.msra.mxu0 0.0
      %1871 = vmatprep.subr.mxu0 0.0
      %1872 = vmatpush2.msra.mxu0 0.0
      %1873 = vmatprep.subr.mxu0 0.0
      %1874 = vmatpush2.msra.mxu0 0.0
      %1875 = vmatprep.subr.mxu0 0.0
      %1876 = vmatpush2.msra.mxu0 0.0
      %1877 = vmatprep.subr.mxu0 0.0
      %1878 = vmatpush2.msra.mxu0 0.0
      %1879 = vmatprep.subr.mxu0 0.0
      %1880 = vmatpush2.msra.mxu0 0.0
      %1881 = vmatprep.subr.mxu0 0.0
      %1882 = vmatpush2.msra.mxu0 0.0
      %1883 = vmatprep.subr.mxu0 0.0
      %1884 = vmatpush2.msra.mxu0 0.0
      %1885 = vmatprep.subr.mxu0 0.0
      %1886 = vmatpush2.msra.mxu0 0.0
      %1887 = vmatprep.mubr.f32.mxu0 0.0
      %1888 = vmatmul.mubr.f32.gmra.mxu0 %v1725
      %v1889 = vpop.f32.mrf.mxu0
      %v1890 = vadd.f32 %v1566, %v1889
      %v1891 = vpop.f32.mrf.mxu0
      %1892 = vmatprep.mubr.f32.mxu0 0.0
      %1893 = vmatmul.mubr.f32.gmra.mxu0 %v1728
      %v1894 = vpop.f32.mrf.mxu0
      %v1895 = vadd.f32 %v1571, %v1894
      %v1896 = vpop.f32.mrf.mxu0
      %1897 = vmatprep.mubr.f32.mxu0 0.0
      %1898 = vmatmul.mubr.f32.gmra.mxu0 %v1731
      %v1899 = vpop.f32.mrf.mxu0
      %v1900 = vadd.f32 %v1576, %v1899
      %v1901 = vpop.f32.mrf.mxu0
      %1902 = vmatprep.mubr.f32.mxu0 0.0
      %1903 = vmatmul.mubr.f32.gmra.mxu0 %v1734
      %v1904 = vpop.f32.mrf.mxu0
      %v1905 = vadd.f32 %v1581, %v1904
      %v1906 = vpop.f32.mrf.mxu0
      %1907 = vmatprep.mubr.f32.mxu0 0.0
      %1908 = vmatmul.mubr.f32.gmra.mxu0 %v1737
      %v1909 = vpop.f32.mrf.mxu0
      %v1910 = vadd.f32 %v1586, %v1909
      %v1911 = vpop.f32.mrf.mxu0
      %1912 = vmatprep.mubr.f32.mxu0 0.0
      %1913 = vmatmul.mubr.f32.gmra.mxu0 %v1740
      %v1914 = vpop.f32.mrf.mxu0
      %v1915 = vadd.f32 %v1591, %v1914
      %v1916 = vpop.f32.mrf.mxu0
      %1917 = vmatprep.mubr.f32.mxu0 0.0
      %1918 = vmatmul.mubr.f32.gmra.mxu0 %v1743
      %v1919 = vpop.f32.mrf.mxu0
      %v1920 = vadd.f32 %v1596, %v1919
      %v1921 = vpop.f32.mrf.mxu0
      %1922 = vmatprep.mubr.f32.mxu0 0.0
      %1923 = vmatmul.mubr.f32.gmra.mxu0 %v1746
      %v1924 = vpop.f32.mrf.mxu0
      %v1925 = vadd.f32 %v1601, %v1924
      %v1926 = vpop.f32.mrf.mxu0
      %1927 = vmatprep.mubr.f32.mxu0 0.0
      %1928 = vmatmul.mubr.f32.gmra.mxu0 %v1749
      %v1929 = vpop.f32.mrf.mxu0
      %v1930 = vadd.f32 %v1606, %v1929
      %v1931 = vpop.f32.mrf.mxu0
      %1932 = vmatprep.mubr.f32.mxu0 0.0
      %1933 = vmatmul.mubr.f32.gmra.mxu0 %v1752
      %v1934 = vpop.f32.mrf.mxu0
      %v1935 = vadd.f32 %v1611, %v1934
      %v1936 = vpop.f32.mrf.mxu0
      %1937 = vmatprep.mubr.f32.mxu0 0.0
      %1938 = vmatmul.mubr.f32.gmra.mxu0 %v1755
      %v1939 = vpop.f32.mrf.mxu0
      %v1940 = vadd.f32 %v1616, %v1939
      %v1941 = vpop.f32.mrf.mxu0
      %1942 = vmatprep.mubr.f32.mxu0 0.0
      %1943 = vmatmul.mubr.f32.gmra.mxu0 %v1758
      %v1944 = vpop.f32.mrf.mxu0
      %v1945 = vadd.f32 %v1621, %v1944
      %v1946 = vpop.f32.mrf.mxu0
      %1947 = vmatprep.mubr.f32.mxu0 0.0
      %1948 = vmatmul.mubr.f32.gmra.mxu0 %v1761
      %v1949 = vpop.f32.mrf.mxu0
      %v1950 = vadd.f32 %v1626, %v1949
      %v1951 = vpop.f32.mrf.mxu0
      %1952 = vmatprep.mubr.f32.mxu0 0.0
      %1953 = vmatmul.mubr.f32.gmra.mxu0 %v1764
      %v1954 = vpop.f32.mrf.mxu0
      %v1955 = vadd.f32 %v1631, %v1954
      %v1956 = vpop.f32.mrf.mxu0
      %1957 = vmatprep.mubr.f32.mxu0 0.0
      %1958 = vmatmul.mubr.f32.gmra.mxu0 %v1767
      %v1959 = vpop.f32.mrf.mxu0
      %v1960 = vadd.f32 %v1636, %v1959
      %v1961 = vpop.f32.mrf.mxu0
      %1962 = vmatprep.mubr.f32.mxu0 0.0
      %1963 = vmatmul.mubr.f32.gmra.mxu0 %v1770
      %v1964 = vpop.f32.mrf.mxu0
      %v1965 = vadd.f32 %v1641, %v1964
      %v1966 = vpop.f32.mrf.mxu0
      %1967 = vmatprep.mubr.f32.mxu0 0.0
      %1968 = vmatmul.mubr.f32.gmra.mxu0 %v1773
      %v1969 = vpop.f32.mrf.mxu0
      %v1970 = vadd.f32 %v1646, %v1969
      %v1971 = vpop.f32.mrf.mxu0
      %1972 = vmatprep.mubr.f32.mxu0 0.0
      %1973 = vmatmul.mubr.f32.gmra.mxu0 %v1776
      %v1974 = vpop.f32.mrf.mxu0
      %v1975 = vadd.f32 %v1651, %v1974
      %v1976 = vpop.f32.mrf.mxu0
      %1977 = vmatprep.mubr.f32.mxu0 0.0
      %1978 = vmatmul.mubr.f32.gmra.mxu0 %v1779
      %v1979 = vpop.f32.mrf.mxu0
      %v1980 = vadd.f32 %v1656, %v1979
      %v1981 = vpop.f32.mrf.mxu0
      %1982 = vmatprep.mubr.f32.mxu0 0.0
      %1983 = vmatmul.mubr.f32.gmra.mxu0 %v1782
      %v1984 = vpop.f32.mrf.mxu0
      %v1985 = vadd.f32 %v1661, %v1984
      %v1986 = vpop.f32.mrf.mxu0
      %1987 = vmatprep.mubr.f32.mxu0 0.0
      %1988 = vmatmul.mubr.f32.gmra.mxu0 %v1785
      %v1989 = vpop.f32.mrf.mxu0
      %v1990 = vadd.f32 %v1666, %v1989
      %v1991 = vpop.f32.mrf.mxu0
      %1992 = vmatprep.mubr.f32.mxu0 0.0
      %1993 = vmatmul.mubr.f32.gmra.mxu0 %v1788
      %v1994 = vpop.f32.mrf.mxu0
      %v1995 = vadd.f32 %v1671, %v1994
      %v1996 = vpop.f32.mrf.mxu0
      %1997 = vmatprep.mubr.f32.mxu0 0.0
      %1998 = vmatmul.mubr.f32.gmra.mxu0 %v1791
      %v1999 = vpop.f32.mrf.mxu0
      %v2000 = vadd.f32 %v1676, %v1999
      %v2001 = vpop.f32.mrf.mxu0
      %2002 = vmatprep.mubr.f32.mxu0 0.0
      %2003 = vmatmul.mubr.f32.gmra.mxu0 %v1794
      %v2004 = vpop.f32.mrf.mxu0
      %v2005 = vadd.f32 %v1681, %v2004
      %v2006 = vpop.f32.mrf.mxu0
      %2007 = vmatprep.mubr.f32.mxu0 0.0
      %2008 = vmatmul.mubr.f32.gmra.mxu0 %v1797
      %v2009 = vpop.f32.mrf.mxu0
      %v2010 = vadd.f32 %v1686, %v2009
      %v2011 = vpop.f32.mrf.mxu0
      %2012 = vmatprep.mubr.f32.mxu0 0.0
      %2013 = vmatmul.mubr.f32.gmra.mxu0 %v1800
      %v2014 = vpop.f32.mrf.mxu0
      %v2015 = vadd.f32 %v1691, %v2014
      %v2016 = vpop.f32.mrf.mxu0
      %2017 = vmatprep.mubr.f32.mxu0 0.0
      %2018 = vmatmul.mubr.f32.gmra.mxu0 %v1803
      %v2019 = vpop.f32.mrf.mxu0
      %v2020 = vadd.f32 %v1696, %v2019
      %v2021 = vpop.f32.mrf.mxu0
      %2022 = vmatprep.mubr.f32.mxu0 0.0
      %2023 = vmatmul.mubr.f32.gmra.mxu0 %v1806
      %v2024 = vpop.f32.mrf.mxu0
      %v2025 = vadd.f32 %v1701, %v2024
      %v2026 = vpop.f32.mrf.mxu0
      %2027 = vmatprep.mubr.f32.mxu0 0.0
      %2028 = vmatmul.mubr.f32.gmra.mxu0 %v1809
      %v2029 = vpop.f32.mrf.mxu0
      %v2030 = vadd.f32 %v1706, %v2029
      %v2031 = vpop.f32.mrf.mxu0
      %2032 = vmatprep.mubr.f32.mxu0 0.0
      %2033 = vmatmul.mubr.f32.gmra.mxu0 %v1812
      %v2034 = vpop.f32.mrf.mxu0
      %v2035 = vadd.f32 %v1711, %v2034
      %v2036 = vpop.f32.mrf.mxu0
      %2037 = vmatprep.mubr.f32.mxu0 0.0
      %2038 = vmatmul.mubr.f32.gmra.mxu0 %v1815
      %v2039 = vpop.f32.mrf.mxu0
      %v2040 = vadd.f32 %v1716, %v2039
      %v2041 = vpop.f32.mrf.mxu0
      %2042 = vmatprep.mubr.f32.mxu0 0.0
      %2043 = vmatmul.mubr.f32.gmra.mxu0 %v1818
      %v2044 = vpop.f32.mrf.mxu0
      %v2045 = vadd.f32 %v1721, %v2044
      %v2046 = vpop.f32.mrf.mxu0
      %2047 = vdwg.mxu0
      %v2048 = vld [vmem:[#allocation2 + $0x2] sm:$0xff]
      %v2049 = vld [vmem:[#allocation2 + $0x12] sm:$0xff]
      %v2050 = vld [vmem:[#allocation2 + $0x22] sm:$0xff]
      %v2051 = vld [vmem:[#allocation2 + $0x32] sm:$0xff]
      %v2052 = vld [vmem:[#allocation2 + $0x42] sm:$0xff]
      %v2053 = vld [vmem:[#allocation2 + $0x52] sm:$0xff]
      %v2054 = vld [vmem:[#allocation2 + $0x62] sm:$0xff]
      %v2055 = vld [vmem:[#allocation2 + $0x72] sm:$0xff]
      %v2056 = vld [vmem:[#allocation2 + $0xa2] sm:$0xff]
      %v2057 = vld [vmem:[#allocation2 + $0xb2] sm:$0xff]
      %v2058 = vld [vmem:[#allocation2 + $0xc2] sm:$0xff]
      %v2059 = vld [vmem:[#allocation2 + $0xd2] sm:$0xff]
      %v2060 = vld [vmem:[#allocation2 + $0xe2] sm:$0xff]
      %v2061 = vld [vmem:[#allocation2 + $0xf2] sm:$0xff]
      %v2062 = vld [vmem:[#allocation2 + $0x102] sm:$0xff]
      %v2063 = vld [vmem:[#allocation2 + $0x112] sm:$0xff]
      %v2064 = vld [vmem:[#allocation2 + $0x142] sm:$0xff]
      %v2065 = vld [vmem:[#allocation2 + $0x152] sm:$0xff]
      %v2066 = vld [vmem:[#allocation2 + $0x162] sm:$0xff]
      %v2067 = vld [vmem:[#allocation2 + $0x172] sm:$0xff]
      %v2068 = vld [vmem:[#allocation2 + $0x182] sm:$0xff]
      %v2069 = vld [vmem:[#allocation2 + $0x192] sm:$0xff]
      %v2070 = vld [vmem:[#allocation2 + $0x1a2] sm:$0xff]
      %v2071 = vld [vmem:[#allocation2 + $0x1b2] sm:$0xff]
      %v2072 = vld [vmem:[#allocation2 + $0x1e2] sm:$0xff]
      %v2073 = vld [vmem:[#allocation2 + $0x1f2] sm:$0xff]
      %v2074 = vld [vmem:[#allocation2 + $0x202] sm:$0xff]
      %v2075 = vld [vmem:[#allocation2 + $0x212] sm:$0xff]
      %v2076 = vld [vmem:[#allocation2 + $0x222] sm:$0xff]
      %v2077 = vld [vmem:[#allocation2 + $0x232] sm:$0xff]
      %v2078 = vld [vmem:[#allocation2 + $0x242] sm:$0xff]
      %v2079 = vld [vmem:[#allocation2 + $0x252] sm:$0xff]
      %s2080 = scalar_lea.vmem %s5, 4
      %v2081 = vld [vmem:[%s2080] sm:$0x3]
      %v2083 = vsel %vm451, %v2048, 0
      %v2086 = vsel %vm451, %v2049, 0
      %v2089 = vsel %vm451, %v2050, 0
      %v2092 = vsel %vm451, %v2051, 0
      %v2095 = vsel %vm451, %v2052, 0
      %v2098 = vsel %vm451, %v2053, 0
      %v2101 = vsel %vm451, %v2054, 0
      %v2104 = vsel %vm451, %v2055, 0
      %v2107 = vsel %vm451, %v2056, 0
      %v2110 = vsel %vm451, %v2057, 0
      %v2113 = vsel %vm451, %v2058, 0
      %v2116 = vsel %vm451, %v2059, 0
      %v2119 = vsel %vm451, %v2060, 0
      %v2122 = vsel %vm451, %v2061, 0
      %v2125 = vsel %vm451, %v2062, 0
      %v2128 = vsel %vm451, %v2063, 0
      %v2131 = vsel %vm451, %v2064, 0
      %v2134 = vsel %vm451, %v2065, 0
      %v2137 = vsel %vm451, %v2066, 0
      %v2140 = vsel %vm451, %v2067, 0
      %v2143 = vsel %vm451, %v2068, 0
      %v2146 = vsel %vm451, %v2069, 0
      %v2149 = vsel %vm451, %v2070, 0
      %v2152 = vsel %vm451, %v2071, 0
      %v2155 = vsel %vm451, %v2072, 0
      %v2158 = vsel %vm451, %v2073, 0
      %v2161 = vsel %vm451, %v2074, 0
      %v2164 = vsel %vm451, %v2075, 0
      %v2167 = vsel %vm451, %v2076, 0
      %v2170 = vsel %vm451, %v2077, 0
      %v2173 = vsel %vm451, %v2078, 0
      %v2176 = vsel %vm451, %v2079, 0
      %v2179 = vsel %vm1495, %v2081, 0
      %2181 = vmatprep.subr.mxu0 0.0
      %2182 = vmatpush1.msra.mxu0 0.0
      %2183 = vmatprep.subr.mxu0 0.0
      %2184 = vmatpush1.msra.mxu0 0.0
      %2185 = vmatprep.subr.mxu0 0.0
      %2186 = vmatpush1.msra.mxu0 0.0
      %2187 = vmatprep.subr.mxu0 0.0
      %2188 = vmatpush1.msra.mxu0 0.0
      %2189 = vmatprep.subr.mxu0 0.0
      %2190 = vmatpush1.msra.mxu0 0.0
      %2191 = vmatprep.subr.mxu0 0.0
      %2192 = vmatpush1.msra.mxu0 0.0
      %2193 = vmatprep.subr.mxu0 0.0
      %2194 = vmatpush1.msra.mxu0 0.0
      %2195 = vmatprep.subr.mxu0 0.0
      %2196 = vmatpush1.msra.mxu0 0.0
      %2197 = vmatprep.subr.mxu0 0.0
      %2198 = vmatpush1.msra.mxu0 0.0
      %2199 = vmatprep.subr.mxu0 0.0
      %2200 = vmatpush1.msra.mxu0 0.0
      %2201 = vmatprep.subr.mxu0 0.0
      %2202 = vmatpush1.msra.mxu0 0.0
      %2203 = vmatprep.subr.mxu0 0.0
      %2204 = vmatpush1.msra.mxu0 0.0
      %2205 = vmatprep.subr.mxu0 0.0
      %2206 = vmatpush1.msra.mxu0 0.0
      %2207 = vmatprep.subr.mxu0 0.0
      %2208 = vmatpush1.msra.mxu0 0.0
      %2209 = vmatprep.subr.mxu0 0.0
      %2210 = vmatpush1.msra.mxu0 0.0
      %2211 = vmatprep.subr.mxu0 0.0
      %2212 = vmatpush1.msra.mxu0 %v2179
      %2213 = vmatprep.subr.mxu0 0.0
      %2214 = vmatpush2.msra.mxu0 0.0
      %2215 = vmatprep.subr.mxu0 0.0
      %2216 = vmatpush2.msra.mxu0 0.0
      %2217 = vmatprep.subr.mxu0 0.0
      %2218 = vmatpush2.msra.mxu0 0.0
      %2219 = vmatprep.subr.mxu0 0.0
      %2220 = vmatpush2.msra.mxu0 0.0
      %2221 = vmatprep.subr.mxu0 0.0
      %2222 = vmatpush2.msra.mxu0 0.0
      %2223 = vmatprep.subr.mxu0 0.0
      %2224 = vmatpush2.msra.mxu0 0.0
      %2225 = vmatprep.subr.mxu0 0.0
      %2226 = vmatpush2.msra.mxu0 0.0
      %2227 = vmatprep.subr.mxu0 0.0
      %2228 = vmatpush2.msra.mxu0 0.0
      %2229 = vmatprep.subr.mxu0 0.0
      %2230 = vmatpush2.msra.mxu0 0.0
      %2231 = vmatprep.subr.mxu0 0.0
      %2232 = vmatpush2.msra.mxu0 0.0
      %2233 = vmatprep.subr.mxu0 0.0
      %2234 = vmatpush2.msra.mxu0 0.0
      %2235 = vmatprep.subr.mxu0 0.0
      %2236 = vmatpush2.msra.mxu0 0.0
      %2237 = vmatprep.subr.mxu0 0.0
      %2238 = vmatpush2.msra.mxu0 0.0
      %2239 = vmatprep.subr.mxu0 0.0
      %2240 = vmatpush2.msra.mxu0 0.0
      %2241 = vmatprep.subr.mxu0 0.0
      %2242 = vmatpush2.msra.mxu0 0.0
      %2243 = vmatprep.subr.mxu0 0.0
      %2244 = vmatpush2.msra.mxu0 0.0
      %2245 = vmatprep.mubr.f32.mxu0 0.0
      %2246 = vmatmul.mubr.f32.gmra.mxu0 %v2083
      %v2247 = vpop.f32.mrf.mxu0
      %v2248 = vadd.f32 0.0, %v2247
      %v2249 = vpop.f32.mrf.mxu0
      %2250 = vmatprep.mubr.f32.mxu0 0.0
      %2251 = vmatmul.mubr.f32.gmra.mxu0 %v2086
      %v2252 = vpop.f32.mrf.mxu0
      %v2253 = vadd.f32 0.0, %v2252
      %v2254 = vpop.f32.mrf.mxu0
      %2255 = vmatprep.mubr.f32.mxu0 0.0
      %2256 = vmatmul.mubr.f32.gmra.mxu0 %v2089
      %v2257 = vpop.f32.mrf.mxu0
      %v2258 = vadd.f32 0.0, %v2257
      %v2259 = vpop.f32.mrf.mxu0
      %2260 = vmatprep.mubr.f32.mxu0 0.0
      %2261 = vmatmul.mubr.f32.gmra.mxu0 %v2092
      %v2262 = vpop.f32.mrf.mxu0
      %v2263 = vadd.f32 0.0, %v2262
      %v2264 = vpop.f32.mrf.mxu0
      %2265 = vmatprep.mubr.f32.mxu0 0.0
      %2266 = vmatmul.mubr.f32.gmra.mxu0 %v2095
      %v2267 = vpop.f32.mrf.mxu0
      %v2268 = vadd.f32 0.0, %v2267
      %v2269 = vpop.f32.mrf.mxu0
      %2270 = vmatprep.mubr.f32.mxu0 0.0
      %2271 = vmatmul.mubr.f32.gmra.mxu0 %v2098
      %v2272 = vpop.f32.mrf.mxu0
      %v2273 = vadd.f32 0.0, %v2272
      %v2274 = vpop.f32.mrf.mxu0
      %2275 = vmatprep.mubr.f32.mxu0 0.0
      %2276 = vmatmul.mubr.f32.gmra.mxu0 %v2101
      %v2277 = vpop.f32.mrf.mxu0
      %v2278 = vadd.f32 0.0, %v2277
      %v2279 = vpop.f32.mrf.mxu0
      %2280 = vmatprep.mubr.f32.mxu0 0.0
      %2281 = vmatmul.mubr.f32.gmra.mxu0 %v2104
      %v2282 = vpop.f32.mrf.mxu0
      %v2283 = vadd.f32 0.0, %v2282
      %v2284 = vpop.f32.mrf.mxu0
      %2285 = vmatprep.mubr.f32.mxu0 0.0
      %2286 = vmatmul.mubr.f32.gmra.mxu0 %v2107
      %v2287 = vpop.f32.mrf.mxu0
      %v2288 = vadd.f32 0.0, %v2287
      %v2289 = vpop.f32.mrf.mxu0
      %2290 = vmatprep.mubr.f32.mxu0 0.0
      %2291 = vmatmul.mubr.f32.gmra.mxu0 %v2110
      %v2292 = vpop.f32.mrf.mxu0
      %v2293 = vadd.f32 0.0, %v2292
      %v2294 = vpop.f32.mrf.mxu0
      %2295 = vmatprep.mubr.f32.mxu0 0.0
      %2296 = vmatmul.mubr.f32.gmra.mxu0 %v2113
      %v2297 = vpop.f32.mrf.mxu0
      %v2298 = vadd.f32 0.0, %v2297
      %v2299 = vpop.f32.mrf.mxu0
      %2300 = vmatprep.mubr.f32.mxu0 0.0
      %2301 = vmatmul.mubr.f32.gmra.mxu0 %v2116
      %v2302 = vpop.f32.mrf.mxu0
      %v2303 = vadd.f32 0.0, %v2302
      %v2304 = vpop.f32.mrf.mxu0
      %2305 = vmatprep.mubr.f32.mxu0 0.0
      %2306 = vmatmul.mubr.f32.gmra.mxu0 %v2119
      %v2307 = vpop.f32.mrf.mxu0
      %v2308 = vadd.f32 0.0, %v2307
      %v2309 = vpop.f32.mrf.mxu0
      %2310 = vmatprep.mubr.f32.mxu0 0.0
      %2311 = vmatmul.mubr.f32.gmra.mxu0 %v2122
      %v2312 = vpop.f32.mrf.mxu0
      %v2313 = vadd.f32 0.0, %v2312
      %v2314 = vpop.f32.mrf.mxu0
      %2315 = vmatprep.mubr.f32.mxu0 0.0
      %2316 = vmatmul.mubr.f32.gmra.mxu0 %v2125
      %v2317 = vpop.f32.mrf.mxu0
      %v2318 = vadd.f32 0.0, %v2317
      %v2319 = vpop.f32.mrf.mxu0
      %2320 = vmatprep.mubr.f32.mxu0 0.0
      %2321 = vmatmul.mubr.f32.gmra.mxu0 %v2128
      %v2322 = vpop.f32.mrf.mxu0
      %v2323 = vadd.f32 0.0, %v2322
      %v2324 = vpop.f32.mrf.mxu0
      %2325 = vmatprep.mubr.f32.mxu0 0.0
      %2326 = vmatmul.mubr.f32.gmra.mxu0 %v2131
      %v2327 = vpop.f32.mrf.mxu0
      %v2328 = vadd.f32 0.0, %v2327
      %v2329 = vpop.f32.mrf.mxu0
      %2330 = vmatprep.mubr.f32.mxu0 0.0
      %2331 = vmatmul.mubr.f32.gmra.mxu0 %v2134
      %v2332 = vpop.f32.mrf.mxu0
      %v2333 = vadd.f32 0.0, %v2332
      %v2334 = vpop.f32.mrf.mxu0
      %2335 = vmatprep.mubr.f32.mxu0 0.0
      %2336 = vmatmul.mubr.f32.gmra.mxu0 %v2137
      %v2337 = vpop.f32.mrf.mxu0
      %v2338 = vadd.f32 0.0, %v2337
      %v2339 = vpop.f32.mrf.mxu0
      %2340 = vmatprep.mubr.f32.mxu0 0.0
      %2341 = vmatmul.mubr.f32.gmra.mxu0 %v2140
      %v2342 = vpop.f32.mrf.mxu0
      %v2343 = vadd.f32 0.0, %v2342
      %v2344 = vpop.f32.mrf.mxu0
      %2345 = vmatprep.mubr.f32.mxu0 0.0
      %2346 = vmatmul.mubr.f32.gmra.mxu0 %v2143
      %v2347 = vpop.f32.mrf.mxu0
      %v2348 = vadd.f32 0.0, %v2347
      %v2349 = vpop.f32.mrf.mxu0
      %2350 = vmatprep.mubr.f32.mxu0 0.0
      %2351 = vmatmul.mubr.f32.gmra.mxu0 %v2146
      %v2352 = vpop.f32.mrf.mxu0
      %v2353 = vadd.f32 0.0, %v2352
      %v2354 = vpop.f32.mrf.mxu0
      %2355 = vmatprep.mubr.f32.mxu0 0.0
      %2356 = vmatmul.mubr.f32.gmra.mxu0 %v2149
      %v2357 = vpop.f32.mrf.mxu0
      %v2358 = vadd.f32 0.0, %v2357
      %v2359 = vpop.f32.mrf.mxu0
      %2360 = vmatprep.mubr.f32.mxu0 0.0
      %2361 = vmatmul.mubr.f32.gmra.mxu0 %v2152
      %v2362 = vpop.f32.mrf.mxu0
      %v2363 = vadd.f32 0.0, %v2362
      %v2364 = vpop.f32.mrf.mxu0
      %2365 = vmatprep.mubr.f32.mxu0 0.0
      %2366 = vmatmul.mubr.f32.gmra.mxu0 %v2155
      %v2367 = vpop.f32.mrf.mxu0
      %v2368 = vadd.f32 0.0, %v2367
      %v2369 = vpop.f32.mrf.mxu0
      %2370 = vmatprep.mubr.f32.mxu0 0.0
      %2371 = vmatmul.mubr.f32.gmra.mxu0 %v2158
      %v2372 = vpop.f32.mrf.mxu0
      %v2373 = vadd.f32 0.0, %v2372
      %v2374 = vpop.f32.mrf.mxu0
      %2375 = vmatprep.mubr.f32.mxu0 0.0
      %2376 = vmatmul.mubr.f32.gmra.mxu0 %v2161
      %v2377 = vpop.f32.mrf.mxu0
      %v2378 = vadd.f32 0.0, %v2377
      %v2379 = vpop.f32.mrf.mxu0
      %2380 = vmatprep.mubr.f32.mxu0 0.0
      %2381 = vmatmul.mubr.f32.gmra.mxu0 %v2164
      %v2382 = vpop.f32.mrf.mxu0
      %v2383 = vadd.f32 0.0, %v2382
      %v2384 = vpop.f32.mrf.mxu0
      %2385 = vmatprep.mubr.f32.mxu0 0.0
      %2386 = vmatmul.mubr.f32.gmra.mxu0 %v2167
      %v2387 = vpop.f32.mrf.mxu0
      %v2388 = vadd.f32 0.0, %v2387
      %v2389 = vpop.f32.mrf.mxu0
      %2390 = vmatprep.mubr.f32.mxu0 0.0
      %2391 = vmatmul.mubr.f32.gmra.mxu0 %v2170
      %v2392 = vpop.f32.mrf.mxu0
      %v2393 = vadd.f32 0.0, %v2392
      %v2394 = vpop.f32.mrf.mxu0
      %2395 = vmatprep.mubr.f32.mxu0 0.0
      %2396 = vmatmul.mubr.f32.gmra.mxu0 %v2173
      %v2397 = vpop.f32.mrf.mxu0
      %v2398 = vadd.f32 0.0, %v2397
      %v2399 = vpop.f32.mrf.mxu0
      %2400 = vmatprep.mubr.f32.mxu0 0.0
      %2401 = vmatmul.mubr.f32.gmra.mxu0 %v2176
      %v2402 = vpop.f32.mrf.mxu0
      %v2403 = vadd.f32 0.0, %v2402
      %v2404 = vpop.f32.mrf.mxu0
      %2405 = vdwg.mxu0
      %v2406 = vadd.f32 %v1890, %v2248
      %v2407 = vadd.f32 %v1895, %v2253
      %v2408 = vadd.f32 %v1900, %v2258
      %v2409 = vadd.f32 %v1905, %v2263
      %v2410 = vadd.f32 %v1910, %v2268
      %v2411 = vadd.f32 %v1915, %v2273
      %v2412 = vadd.f32 %v1920, %v2278
      %v2413 = vadd.f32 %v1925, %v2283
      %v2414 = vadd.f32 %v1930, %v2288
      %v2415 = vadd.f32 %v1935, %v2293
      %v2416 = vadd.f32 %v1940, %v2298
      %v2417 = vadd.f32 %v1945, %v2303
      %v2418 = vadd.f32 %v1950, %v2308
      %v2419 = vadd.f32 %v1955, %v2313
      %v2420 = vadd.f32 %v1960, %v2318
      %v2421 = vadd.f32 %v1965, %v2323
      %v2422 = vadd.f32 %v1970, %v2328
      %v2423 = vadd.f32 %v1975, %v2333
      %v2424 = vadd.f32 %v1980, %v2338
      %v2425 = vadd.f32 %v1985, %v2343
      %v2426 = vadd.f32 %v1990, %v2348
      %v2427 = vadd.f32 %v1995, %v2353
      %v2428 = vadd.f32 %v2000, %v2358
      %v2429 = vadd.f32 %v2005, %v2363
      %v2430 = vadd.f32 %v2010, %v2368
      %v2431 = vadd.f32 %v2015, %v2373
      %v2432 = vadd.f32 %v2020, %v2378
      %v2433 = vadd.f32 %v2025, %v2383
      %v2434 = vadd.f32 %v2030, %v2388
      %v2435 = vadd.f32 %v2035, %v2393
      %v2436 = vadd.f32 %v2040, %v2398
      %v2437 = vadd.f32 %v2045, %v2403
      %v2438 = vld [vmem:[%s1158] sm:$0xff]
      %v2439 = vld [vmem:[%s1158 + $0x10] sm:$0xff]
      %v2440 = vld [vmem:[%s1158 + $0x20] sm:$0xff]
      %v2441 = vld [vmem:[%s1158 + $0x30] sm:$0xff]
      %v2442 = vld [vmem:[%s1158 + $0x40] sm:$0xff]
      %v2443 = vld [vmem:[%s1158 + $0x50] sm:$0xff]
      %v2444 = vld [vmem:[%s1158 + $0x60] sm:$0xff]
      %v2445 = vld [vmem:[%s1158 + $0x70] sm:$0xff]
      %v2446 = vld [vmem:[%s1158 + $0xa0] sm:$0xff]
      %v2447 = vld [vmem:[%s1158 + $0xb0] sm:$0xff]
      %v2448 = vld [vmem:[%s1158 + $0xc0] sm:$0xff]
      %v2449 = vld [vmem:[%s1158 + $0xd0] sm:$0xff]
      %v2450 = vld [vmem:[%s1158 + $0xe0] sm:$0xff]
      %v2451 = vld [vmem:[%s1158 + $0xf0] sm:$0xff]
      %v2452 = vld [vmem:[%s1158 + $0x100] sm:$0xff]
      %v2453 = vld [vmem:[%s1158 + $0x110] sm:$0xff]
      %v2454 = vld [vmem:[%s1158 + $0x140] sm:$0xff]
      %v2455 = vld [vmem:[%s1158 + $0x150] sm:$0xff]
      %v2456 = vld [vmem:[%s1158 + $0x160] sm:$0xff]
      %v2457 = vld [vmem:[%s1158 + $0x170] sm:$0xff]
      %v2458 = vld [vmem:[%s1158 + $0x180] sm:$0xff]
      %v2459 = vld [vmem:[%s1158 + $0x190] sm:$0xff]
      %v2460 = vld [vmem:[%s1158 + $0x1a0] sm:$0xff]
      %v2461 = vld [vmem:[%s1158 + $0x1b0] sm:$0xff]
      %v2462 = vld [vmem:[%s1158 + $0x1e0] sm:$0xff]
      %v2463 = vld [vmem:[%s1158 + $0x1f0] sm:$0xff]
      %v2464 = vld [vmem:[%s1158 + $0x200] sm:$0xff]
      %v2465 = vld [vmem:[%s1158 + $0x210] sm:$0xff]
      %v2466 = vld [vmem:[%s1158 + $0x220] sm:$0xff]
      %v2467 = vld [vmem:[%s1158 + $0x230] sm:$0xff]
      %v2468 = vld [vmem:[%s1158 + $0x240] sm:$0xff]
      %v2469 = vld [vmem:[%s1158 + $0x250] sm:$0xff]
      %s2470 = scalar_lea.vmem %s5, 6
      %v2471 = vld [vmem:[%s2470] sm:$0x3]
      %v2473 = vsel %vm451, %v2438, 0
      %v2476 = vsel %vm451, %v2439, 0
      %v2479 = vsel %vm451, %v2440, 0
      %v2482 = vsel %vm451, %v2441, 0
      %v2485 = vsel %vm451, %v2442, 0
      %v2488 = vsel %vm451, %v2443, 0
      %v2491 = vsel %vm451, %v2444, 0
      %v2494 = vsel %vm451, %v2445, 0
      %v2497 = vsel %vm451, %v2446, 0
      %v2500 = vsel %vm451, %v2447, 0
      %v2503 = vsel %vm451, %v2448, 0
      %v2506 = vsel %vm451, %v2449, 0
      %v2509 = vsel %vm451, %v2450, 0
      %v2512 = vsel %vm451, %v2451, 0
      %v2515 = vsel %vm451, %v2452, 0
      %v2518 = vsel %vm451, %v2453, 0
      %v2521 = vsel %vm451, %v2454, 0
      %v2524 = vsel %vm451, %v2455, 0
      %v2527 = vsel %vm451, %v2456, 0
      %v2530 = vsel %vm451, %v2457, 0
      %v2533 = vsel %vm451, %v2458, 0
      %v2536 = vsel %vm451, %v2459, 0
      %v2539 = vsel %vm451, %v2460, 0
      %v2542 = vsel %vm451, %v2461, 0
      %v2545 = vsel %vm451, %v2462, 0
      %v2548 = vsel %vm451, %v2463, 0
      %v2551 = vsel %vm451, %v2464, 0
      %v2554 = vsel %vm451, %v2465, 0
      %v2557 = vsel %vm451, %v2466, 0
      %v2560 = vsel %vm451, %v2467, 0
      %v2563 = vsel %vm451, %v2468, 0
      %v2566 = vsel %vm451, %v2469, 0
      %v2569 = vsel %vm1495, %v2471, 0
      %2571 = vmatprep.subr.mxu0 0.0
      %2572 = vmatpush1.msra.mxu0 0.0
      %2573 = vmatprep.subr.mxu0 0.0
      %2574 = vmatpush1.msra.mxu0 0.0
      %2575 = vmatprep.subr.mxu0 0.0
      %2576 = vmatpush1.msra.mxu0 0.0
      %2577 = vmatprep.subr.mxu0 0.0
      %2578 = vmatpush1.msra.mxu0 0.0
      %2579 = vmatprep.subr.mxu0 0.0
      %2580 = vmatpush1.msra.mxu0 0.0
      %2581 = vmatprep.subr.mxu0 0.0
      %2582 = vmatpush1.msra.mxu0 0.0
      %2583 = vmatprep.subr.mxu0 0.0
      %2584 = vmatpush1.msra.mxu0 0.0
      %2585 = vmatprep.subr.mxu0 0.0
      %2586 = vmatpush1.msra.mxu0 0.0
      %2587 = vmatprep.subr.mxu0 0.0
      %2588 = vmatpush1.msra.mxu0 0.0
      %2589 = vmatprep.subr.mxu0 0.0
      %2590 = vmatpush1.msra.mxu0 0.0
      %2591 = vmatprep.subr.mxu0 0.0
      %2592 = vmatpush1.msra.mxu0 0.0
      %2593 = vmatprep.subr.mxu0 0.0
      %2594 = vmatpush1.msra.mxu0 0.0
      %2595 = vmatprep.subr.mxu0 0.0
      %2596 = vmatpush1.msra.mxu0 0.0
      %2597 = vmatprep.subr.mxu0 0.0
      %2598 = vmatpush1.msra.mxu0 0.0
      %2599 = vmatprep.subr.mxu0 0.0
      %2600 = vmatpush1.msra.mxu0 0.0
      %2601 = vmatprep.subr.mxu0 0.0
      %2602 = vmatpush1.msra.mxu0 %v2569
      %2603 = vmatprep.subr.mxu0 0.0
      %2604 = vmatpush2.msra.mxu0 0.0
      %2605 = vmatprep.subr.mxu0 0.0
      %2606 = vmatpush2.msra.mxu0 0.0
      %2607 = vmatprep.subr.mxu0 0.0
      %2608 = vmatpush2.msra.mxu0 0.0
      %2609 = vmatprep.subr.mxu0 0.0
      %2610 = vmatpush2.msra.mxu0 0.0
      %2611 = vmatprep.subr.mxu0 0.0
      %2612 = vmatpush2.msra.mxu0 0.0
      %2613 = vmatprep.subr.mxu0 0.0
      %2614 = vmatpush2.msra.mxu0 0.0
      %2615 = vmatprep.subr.mxu0 0.0
      %2616 = vmatpush2.msra.mxu0 0.0
      %2617 = vmatprep.subr.mxu0 0.0
      %2618 = vmatpush2.msra.mxu0 0.0
      %2619 = vmatprep.subr.mxu0 0.0
      %2620 = vmatpush2.msra.mxu0 0.0
      %2621 = vmatprep.subr.mxu0 0.0
      %2622 = vmatpush2.msra.mxu0 0.0
      %2623 = vmatprep.subr.mxu0 0.0
      %2624 = vmatpush2.msra.mxu0 0.0
      %2625 = vmatprep.subr.mxu0 0.0
      %2626 = vmatpush2.msra.mxu0 0.0
      %2627 = vmatprep.subr.mxu0 0.0
      %2628 = vmatpush2.msra.mxu0 0.0
      %2629 = vmatprep.subr.mxu0 0.0
      %2630 = vmatpush2.msra.mxu0 0.0
      %2631 = vmatprep.subr.mxu0 0.0
      %2632 = vmatpush2.msra.mxu0 0.0
      %2633 = vmatprep.subr.mxu0 0.0
      %2634 = vmatpush2.msra.mxu0 0.0
      %2635 = vmatprep.mubr.f32.mxu0 0.0
      %2636 = vmatmul.mubr.f32.gmra.mxu0 %v2473
      %v2637 = vpop.f32.mrf.mxu0
      %v2638 = vadd.f32 0.0, %v2637
      %v2639 = vpop.f32.mrf.mxu0
      %2640 = vmatprep.mubr.f32.mxu0 0.0
      %2641 = vmatmul.mubr.f32.gmra.mxu0 %v2476
      %v2642 = vpop.f32.mrf.mxu0
      %v2643 = vadd.f32 0.0, %v2642
      %v2644 = vpop.f32.mrf.mxu0
      %2645 = vmatprep.mubr.f32.mxu0 0.0
      %2646 = vmatmul.mubr.f32.gmra.mxu0 %v2479
      %v2647 = vpop.f32.mrf.mxu0
      %v2648 = vadd.f32 0.0, %v2647
      %v2649 = vpop.f32.mrf.mxu0
      %2650 = vmatprep.mubr.f32.mxu0 0.0
      %2651 = vmatmul.mubr.f32.gmra.mxu0 %v2482
      %v2652 = vpop.f32.mrf.mxu0
      %v2653 = vadd.f32 0.0, %v2652
      %v2654 = vpop.f32.mrf.mxu0
      %2655 = vmatprep.mubr.f32.mxu0 0.0
      %2656 = vmatmul.mubr.f32.gmra.mxu0 %v2485
      %v2657 = vpop.f32.mrf.mxu0
      %v2658 = vadd.f32 0.0, %v2657
      %v2659 = vpop.f32.mrf.mxu0
      %2660 = vmatprep.mubr.f32.mxu0 0.0
      %2661 = vmatmul.mubr.f32.gmra.mxu0 %v2488
      %v2662 = vpop.f32.mrf.mxu0
      %v2663 = vadd.f32 0.0, %v2662
      %v2664 = vpop.f32.mrf.mxu0
      %2665 = vmatprep.mubr.f32.mxu0 0.0
      %2666 = vmatmul.mubr.f32.gmra.mxu0 %v2491
      %v2667 = vpop.f32.mrf.mxu0
      %v2668 = vadd.f32 0.0, %v2667
      %v2669 = vpop.f32.mrf.mxu0
      %2670 = vmatprep.mubr.f32.mxu0 0.0
      %2671 = vmatmul.mubr.f32.gmra.mxu0 %v2494
      %v2672 = vpop.f32.mrf.mxu0
      %v2673 = vadd.f32 0.0, %v2672
      %v2674 = vpop.f32.mrf.mxu0
      %2675 = vmatprep.mubr.f32.mxu0 0.0
      %2676 = vmatmul.mubr.f32.gmra.mxu0 %v2497
      %v2677 = vpop.f32.mrf.mxu0
      %v2678 = vadd.f32 0.0, %v2677
      %v2679 = vpop.f32.mrf.mxu0
      %2680 = vmatprep.mubr.f32.mxu0 0.0
      %2681 = vmatmul.mubr.f32.gmra.mxu0 %v2500
      %v2682 = vpop.f32.mrf.mxu0
      %v2683 = vadd.f32 0.0, %v2682
      %v2684 = vpop.f32.mrf.mxu0
      %2685 = vmatprep.mubr.f32.mxu0 0.0
      %2686 = vmatmul.mubr.f32.gmra.mxu0 %v2503
      %v2687 = vpop.f32.mrf.mxu0
      %v2688 = vadd.f32 0.0, %v2687
      %v2689 = vpop.f32.mrf.mxu0
      %2690 = vmatprep.mubr.f32.mxu0 0.0
      %2691 = vmatmul.mubr.f32.gmra.mxu0 %v2506
      %v2692 = vpop.f32.mrf.mxu0
      %v2693 = vadd.f32 0.0, %v2692
      %v2694 = vpop.f32.mrf.mxu0
      %2695 = vmatprep.mubr.f32.mxu0 0.0
      %2696 = vmatmul.mubr.f32.gmra.mxu0 %v2509
      %v2697 = vpop.f32.mrf.mxu0
      %v2698 = vadd.f32 0.0, %v2697
      %v2699 = vpop.f32.mrf.mxu0
      %2700 = vmatprep.mubr.f32.mxu0 0.0
      %2701 = vmatmul.mubr.f32.gmra.mxu0 %v2512
      %v2702 = vpop.f32.mrf.mxu0
      %v2703 = vadd.f32 0.0, %v2702
      %v2704 = vpop.f32.mrf.mxu0
      %2705 = vmatprep.mubr.f32.mxu0 0.0
      %2706 = vmatmul.mubr.f32.gmra.mxu0 %v2515
      %v2707 = vpop.f32.mrf.mxu0
      %v2708 = vadd.f32 0.0, %v2707
      %v2709 = vpop.f32.mrf.mxu0
      %2710 = vmatprep.mubr.f32.mxu0 0.0
      %2711 = vmatmul.mubr.f32.gmra.mxu0 %v2518
      %v2712 = vpop.f32.mrf.mxu0
      %v2713 = vadd.f32 0.0, %v2712
      %v2714 = vpop.f32.mrf.mxu0
      %2715 = vmatprep.mubr.f32.mxu0 0.0
      %2716 = vmatmul.mubr.f32.gmra.mxu0 %v2521
      %v2717 = vpop.f32.mrf.mxu0
      %v2718 = vadd.f32 0.0, %v2717
      %v2719 = vpop.f32.mrf.mxu0
      %2720 = vmatprep.mubr.f32.mxu0 0.0
      %2721 = vmatmul.mubr.f32.gmra.mxu0 %v2524
      %v2722 = vpop.f32.mrf.mxu0
      %v2723 = vadd.f32 0.0, %v2722
      %v2724 = vpop.f32.mrf.mxu0
      %2725 = vmatprep.mubr.f32.mxu0 0.0
      %2726 = vmatmul.mubr.f32.gmra.mxu0 %v2527
      %v2727 = vpop.f32.mrf.mxu0
      %v2728 = vadd.f32 0.0, %v2727
      %v2729 = vpop.f32.mrf.mxu0
      %2730 = vmatprep.mubr.f32.mxu0 0.0
      %2731 = vmatmul.mubr.f32.gmra.mxu0 %v2530
      %v2732 = vpop.f32.mrf.mxu0
      %v2733 = vadd.f32 0.0, %v2732
      %v2734 = vpop.f32.mrf.mxu0
      %2735 = vmatprep.mubr.f32.mxu0 0.0
      %2736 = vmatmul.mubr.f32.gmra.mxu0 %v2533
      %v2737 = vpop.f32.mrf.mxu0
      %v2738 = vadd.f32 0.0, %v2737
      %v2739 = vpop.f32.mrf.mxu0
      %2740 = vmatprep.mubr.f32.mxu0 0.0
      %2741 = vmatmul.mubr.f32.gmra.mxu0 %v2536
      %v2742 = vpop.f32.mrf.mxu0
      %v2743 = vadd.f32 0.0, %v2742
      %v2744 = vpop.f32.mrf.mxu0
      %2745 = vmatprep.mubr.f32.mxu0 0.0
      %2746 = vmatmul.mubr.f32.gmra.mxu0 %v2539
      %v2747 = vpop.f32.mrf.mxu0
      %v2748 = vadd.f32 0.0, %v2747
      %v2749 = vpop.f32.mrf.mxu0
      %2750 = vmatprep.mubr.f32.mxu0 0.0
      %2751 = vmatmul.mubr.f32.gmra.mxu0 %v2542
      %v2752 = vpop.f32.mrf.mxu0
      %v2753 = vadd.f32 0.0, %v2752
      %v2754 = vpop.f32.mrf.mxu0
      %2755 = vmatprep.mubr.f32.mxu0 0.0
      %2756 = vmatmul.mubr.f32.gmra.mxu0 %v2545
      %v2757 = vpop.f32.mrf.mxu0
      %v2758 = vadd.f32 0.0, %v2757
      %v2759 = vpop.f32.mrf.mxu0
      %2760 = vmatprep.mubr.f32.mxu0 0.0
      %2761 = vmatmul.mubr.f32.gmra.mxu0 %v2548
      %v2762 = vpop.f32.mrf.mxu0
      %v2763 = vadd.f32 0.0, %v2762
      %v2764 = vpop.f32.mrf.mxu0
      %2765 = vmatprep.mubr.f32.mxu0 0.0
      %2766 = vmatmul.mubr.f32.gmra.mxu0 %v2551
      %v2767 = vpop.f32.mrf.mxu0
      %v2768 = vadd.f32 0.0, %v2767
      %v2769 = vpop.f32.mrf.mxu0
      %2770 = vmatprep.mubr.f32.mxu0 0.0
      %2771 = vmatmul.mubr.f32.gmra.mxu0 %v2554
      %v2772 = vpop.f32.mrf.mxu0
      %v2773 = vadd.f32 0.0, %v2772
      %v2774 = vpop.f32.mrf.mxu0
      %2775 = vmatprep.mubr.f32.mxu0 0.0
      %2776 = vmatmul.mubr.f32.gmra.mxu0 %v2557
      %v2777 = vpop.f32.mrf.mxu0
      %v2778 = vadd.f32 0.0, %v2777
      %v2779 = vpop.f32.mrf.mxu0
      %2780 = vmatprep.mubr.f32.mxu0 0.0
      %2781 = vmatmul.mubr.f32.gmra.mxu0 %v2560
      %v2782 = vpop.f32.mrf.mxu0
      %v2783 = vadd.f32 0.0, %v2782
      %v2784 = vpop.f32.mrf.mxu0
      %2785 = vmatprep.mubr.f32.mxu0 0.0
      %2786 = vmatmul.mubr.f32.gmra.mxu0 %v2563
      %v2787 = vpop.f32.mrf.mxu0
      %v2788 = vadd.f32 0.0, %v2787
      %v2789 = vpop.f32.mrf.mxu0
      %2790 = vmatprep.mubr.f32.mxu0 0.0
      %2791 = vmatmul.mubr.f32.gmra.mxu0 %v2566
      %v2792 = vpop.f32.mrf.mxu0
      %v2793 = vadd.f32 0.0, %v2792
      %v2794 = vpop.f32.mrf.mxu0
      %2795 = vdwg.mxu0
      %v2796 = vadd.f32 %v2406, %v2638
      %v2797 = vadd.f32 %v2407, %v2643
      %v2798 = vadd.f32 %v2408, %v2648
      %v2799 = vadd.f32 %v2409, %v2653
      %v2800 = vadd.f32 %v2410, %v2658
      %v2801 = vadd.f32 %v2411, %v2663
      %v2802 = vadd.f32 %v2412, %v2668
      %v2803 = vadd.f32 %v2413, %v2673
      %v2804 = vadd.f32 %v2414, %v2678
      %v2805 = vadd.f32 %v2415, %v2683
      %v2806 = vadd.f32 %v2416, %v2688
      %v2807 = vadd.f32 %v2417, %v2693
      %v2808 = vadd.f32 %v2418, %v2698
      %v2809 = vadd.f32 %v2419, %v2703
      %v2810 = vadd.f32 %v2420, %v2708
      %v2811 = vadd.f32 %v2421, %v2713
      %v2812 = vadd.f32 %v2422, %v2718
      %v2813 = vadd.f32 %v2423, %v2723
      %v2814 = vadd.f32 %v2424, %v2728
      %v2815 = vadd.f32 %v2425, %v2733
      %v2816 = vadd.f32 %v2426, %v2738
      %v2817 = vadd.f32 %v2427, %v2743
      %v2818 = vadd.f32 %v2428, %v2748
      %v2819 = vadd.f32 %v2429, %v2753
      %v2820 = vadd.f32 %v2430, %v2758
      %v2821 = vadd.f32 %v2431, %v2763
      %v2822 = vadd.f32 %v2432, %v2768
      %v2823 = vadd.f32 %v2433, %v2773
      %v2824 = vadd.f32 %v2434, %v2778
      %v2825 = vadd.f32 %v2435, %v2783
      %v2826 = vadd.f32 %v2436, %v2788
      %v2827 = vadd.f32 %v2437, %v2793
      %v2828 = vld [vmem:[%s1158 + $0x1] sm:$0xff]
      %v2829 = vld [vmem:[%s1158 + $0x11] sm:$0xff]
      %v2830 = vld [vmem:[%s1158 + $0x21] sm:$0xff]
      %v2831 = vld [vmem:[%s1158 + $0x31] sm:$0xff]
      %v2832 = vld [vmem:[%s1158 + $0x41] sm:$0xff]
      %v2833 = vld [vmem:[%s1158 + $0x51] sm:$0xff]
      %v2834 = vld [vmem:[%s1158 + $0x61] sm:$0xff]
      %v2835 = vld [vmem:[%s1158 + $0x71] sm:$0xff]
      %v2836 = vld [vmem:[%s1158 + $0xa1] sm:$0xff]
      %v2837 = vld [vmem:[%s1158 + $0xb1] sm:$0xff]
      %v2838 = vld [vmem:[%s1158 + $0xc1] sm:$0xff]
      %v2839 = vld [vmem:[%s1158 + $0xd1] sm:$0xff]
      %v2840 = vld [vmem:[%s1158 + $0xe1] sm:$0xff]
      %v2841 = vld [vmem:[%s1158 + $0xf1] sm:$0xff]
      %v2842 = vld [vmem:[%s1158 + $0x101] sm:$0xff]
      %v2843 = vld [vmem:[%s1158 + $0x111] sm:$0xff]
      %v2844 = vld [vmem:[%s1158 + $0x141] sm:$0xff]
      %v2845 = vld [vmem:[%s1158 + $0x151] sm:$0xff]
      %v2846 = vld [vmem:[%s1158 + $0x161] sm:$0xff]
      %v2847 = vld [vmem:[%s1158 + $0x171] sm:$0xff]
      %v2848 = vld [vmem:[%s1158 + $0x181] sm:$0xff]
      %v2849 = vld [vmem:[%s1158 + $0x191] sm:$0xff]
      %v2850 = vld [vmem:[%s1158 + $0x1a1] sm:$0xff]
      %v2851 = vld [vmem:[%s1158 + $0x1b1] sm:$0xff]
      %v2852 = vld [vmem:[%s1158 + $0x1e1] sm:$0xff]
      %v2853 = vld [vmem:[%s1158 + $0x1f1] sm:$0xff]
      %v2854 = vld [vmem:[%s1158 + $0x201] sm:$0xff]
      %v2855 = vld [vmem:[%s1158 + $0x211] sm:$0xff]
      %v2856 = vld [vmem:[%s1158 + $0x221] sm:$0xff]
      %v2857 = vld [vmem:[%s1158 + $0x231] sm:$0xff]
      %v2858 = vld [vmem:[%s1158 + $0x241] sm:$0xff]
      %v2859 = vld [vmem:[%s1158 + $0x251] sm:$0xff]
      %s2860 = scalar_lea.vmem %s5, 8
      %v2861 = vld [vmem:[%s2860] sm:$0x3]
      %v2863 = vsel %vm451, %v2828, 0
      %v2866 = vsel %vm451, %v2829, 0
      %v2869 = vsel %vm451, %v2830, 0
      %v2872 = vsel %vm451, %v2831, 0
      %v2875 = vsel %vm451, %v2832, 0
      %v2878 = vsel %vm451, %v2833, 0
      %v2881 = vsel %vm451, %v2834, 0
      %v2884 = vsel %vm451, %v2835, 0
      %v2887 = vsel %vm451, %v2836, 0
      %v2890 = vsel %vm451, %v2837, 0
      %v2893 = vsel %vm451, %v2838, 0
      %v2896 = vsel %vm451, %v2839, 0
      %v2899 = vsel %vm451, %v2840, 0
      %v2902 = vsel %vm451, %v2841, 0
      %v2905 = vsel %vm451, %v2842, 0
      %v2908 = vsel %vm451, %v2843, 0
      %v2911 = vsel %vm451, %v2844, 0
      %v2914 = vsel %vm451, %v2845, 0
      %v2917 = vsel %vm451, %v2846, 0
      %v2920 = vsel %vm451, %v2847, 0
      %v2923 = vsel %vm451, %v2848, 0
      %v2926 = vsel %vm451, %v2849, 0
      %v2929 = vsel %vm451, %v2850, 0
      %v2932 = vsel %vm451, %v2851, 0
      %v2935 = vsel %vm451, %v2852, 0
      %v2938 = vsel %vm451, %v2853, 0
      %v2941 = vsel %vm451, %v2854, 0
      %v2944 = vsel %vm451, %v2855, 0
      %v2947 = vsel %vm451, %v2856, 0
      %v2950 = vsel %vm451, %v2857, 0
      %v2953 = vsel %vm451, %v2858, 0
      %v2956 = vsel %vm451, %v2859, 0
      %v2959 = vsel %vm1495, %v2861, 0
      %2961 = vmatprep.subr.mxu0 0.0
      %2962 = vmatpush1.msra.mxu0 0.0
      %2963 = vmatprep.subr.mxu0 0.0
      %2964 = vmatpush1.msra.mxu0 0.0
      %2965 = vmatprep.subr.mxu0 0.0
      %2966 = vmatpush1.msra.mxu0 0.0
      %2967 = vmatprep.subr.mxu0 0.0
      %2968 = vmatpush1.msra.mxu0 0.0
      %2969 = vmatprep.subr.mxu0 0.0
      %2970 = vmatpush1.msra.mxu0 0.0
      %2971 = vmatprep.subr.mxu0 0.0
      %2972 = vmatpush1.msra.mxu0 0.0
      %2973 = vmatprep.subr.mxu0 0.0
      %2974 = vmatpush1.msra.mxu0 0.0
      %2975 = vmatprep.subr.mxu0 0.0
      %2976 = vmatpush1.msra.mxu0 0.0
      %2977 = vmatprep.subr.mxu0 0.0
      %2978 = vmatpush1.msra.mxu0 0.0
      %2979 = vmatprep.subr.mxu0 0.0
      %2980 = vmatpush1.msra.mxu0 0.0
      %2981 = vmatprep.subr.mxu0 0.0
      %2982 = vmatpush1.msra.mxu0 0.0
      %2983 = vmatprep.subr.mxu0 0.0
      %2984 = vmatpush1.msra.mxu0 0.0
      %2985 = vmatprep.subr.mxu0 0.0
      %2986 = vmatpush1.msra.mxu0 0.0
      %2987 = vmatprep.subr.mxu0 0.0
      %2988 = vmatpush1.msra.mxu0 0.0
      %2989 = vmatprep.subr.mxu0 0.0
      %2990 = vmatpush1.msra.mxu0 0.0
      %2991 = vmatprep.subr.mxu0 0.0
      %2992 = vmatpush1.msra.mxu0 %v2959
      %2993 = vmatprep.subr.mxu0 0.0
      %2994 = vmatpush2.msra.mxu0 0.0
      %2995 = vmatprep.subr.mxu0 0.0
      %2996 = vmatpush2.msra.mxu0 0.0
      %2997 = vmatprep.subr.mxu0 0.0
      %2998 = vmatpush2.msra.mxu0 0.0
      %2999 = vmatprep.subr.mxu0 0.0
      %3000 = vmatpush2.msra.mxu0 0.0
      %3001 = vmatprep.subr.mxu0 0.0
      %3002 = vmatpush2.msra.mxu0 0.0
      %3003 = vmatprep.subr.mxu0 0.0
      %3004 = vmatpush2.msra.mxu0 0.0
      %3005 = vmatprep.subr.mxu0 0.0
      %3006 = vmatpush2.msra.mxu0 0.0
      %3007 = vmatprep.subr.mxu0 0.0
      %3008 = vmatpush2.msra.mxu0 0.0
      %3009 = vmatprep.subr.mxu0 0.0
      %3010 = vmatpush2.msra.mxu0 0.0
      %3011 = vmatprep.subr.mxu0 0.0
      %3012 = vmatpush2.msra.mxu0 0.0
      %3013 = vmatprep.subr.mxu0 0.0
      %3014 = vmatpush2.msra.mxu0 0.0
      %3015 = vmatprep.subr.mxu0 0.0
      %3016 = vmatpush2.msra.mxu0 0.0
      %3017 = vmatprep.subr.mxu0 0.0
      %3018 = vmatpush2.msra.mxu0 0.0
      %3019 = vmatprep.subr.mxu0 0.0
      %3020 = vmatpush2.msra.mxu0 0.0
      %3021 = vmatprep.subr.mxu0 0.0
      %3022 = vmatpush2.msra.mxu0 0.0
      %3023 = vmatprep.subr.mxu0 0.0
      %3024 = vmatpush2.msra.mxu0 0.0
      %3025 = vmatprep.mubr.f32.mxu0 0.0
      %3026 = vmatmul.mubr.f32.gmra.mxu0 %v2863
      %v3027 = vpop.f32.mrf.mxu0
      %v3028 = vadd.f32 0.0, %v3027
      %v3029 = vpop.f32.mrf.mxu0
      %3030 = vmatprep.mubr.f32.mxu0 0.0
      %3031 = vmatmul.mubr.f32.gmra.mxu0 %v2866
      %v3032 = vpop.f32.mrf.mxu0
      %v3033 = vadd.f32 0.0, %v3032
      %v3034 = vpop.f32.mrf.mxu0
      %3035 = vmatprep.mubr.f32.mxu0 0.0
      %3036 = vmatmul.mubr.f32.gmra.mxu0 %v2869
      %v3037 = vpop.f32.mrf.mxu0
      %v3038 = vadd.f32 0.0, %v3037
      %v3039 = vpop.f32.mrf.mxu0
      %3040 = vmatprep.mubr.f32.mxu0 0.0
      %3041 = vmatmul.mubr.f32.gmra.mxu0 %v2872
      %v3042 = vpop.f32.mrf.mxu0
      %v3043 = vadd.f32 0.0, %v3042
      %v3044 = vpop.f32.mrf.mxu0
      %3045 = vmatprep.mubr.f32.mxu0 0.0
      %3046 = vmatmul.mubr.f32.gmra.mxu0 %v2875
      %v3047 = vpop.f32.mrf.mxu0
      %v3048 = vadd.f32 0.0, %v3047
      %v3049 = vpop.f32.mrf.mxu0
      %3050 = vmatprep.mubr.f32.mxu0 0.0
      %3051 = vmatmul.mubr.f32.gmra.mxu0 %v2878
      %v3052 = vpop.f32.mrf.mxu0
      %v3053 = vadd.f32 0.0, %v3052
      %v3054 = vpop.f32.mrf.mxu0
      %3055 = vmatprep.mubr.f32.mxu0 0.0
      %3056 = vmatmul.mubr.f32.gmra.mxu0 %v2881
      %v3057 = vpop.f32.mrf.mxu0
      %v3058 = vadd.f32 0.0, %v3057
      %v3059 = vpop.f32.mrf.mxu0
      %3060 = vmatprep.mubr.f32.mxu0 0.0
      %3061 = vmatmul.mubr.f32.gmra.mxu0 %v2884
      %v3062 = vpop.f32.mrf.mxu0
      %v3063 = vadd.f32 0.0, %v3062
      %v3064 = vpop.f32.mrf.mxu0
      %3065 = vmatprep.mubr.f32.mxu0 0.0
      %3066 = vmatmul.mubr.f32.gmra.mxu0 %v2887
      %v3067 = vpop.f32.mrf.mxu0
      %v3068 = vadd.f32 0.0, %v3067
      %v3069 = vpop.f32.mrf.mxu0
      %3070 = vmatprep.mubr.f32.mxu0 0.0
      %3071 = vmatmul.mubr.f32.gmra.mxu0 %v2890
      %v3072 = vpop.f32.mrf.mxu0
      %v3073 = vadd.f32 0.0, %v3072
      %v3074 = vpop.f32.mrf.mxu0
      %3075 = vmatprep.mubr.f32.mxu0 0.0
      %3076 = vmatmul.mubr.f32.gmra.mxu0 %v2893
      %v3077 = vpop.f32.mrf.mxu0
      %v3078 = vadd.f32 0.0, %v3077
      %v3079 = vpop.f32.mrf.mxu0
      %3080 = vmatprep.mubr.f32.mxu0 0.0
      %3081 = vmatmul.mubr.f32.gmra.mxu0 %v2896
      %v3082 = vpop.f32.mrf.mxu0
      %v3083 = vadd.f32 0.0, %v3082
      %v3084 = vpop.f32.mrf.mxu0
      %3085 = vmatprep.mubr.f32.mxu0 0.0
      %3086 = vmatmul.mubr.f32.gmra.mxu0 %v2899
      %v3087 = vpop.f32.mrf.mxu0
      %v3088 = vadd.f32 0.0, %v3087
      %v3089 = vpop.f32.mrf.mxu0
      %3090 = vmatprep.mubr.f32.mxu0 0.0
      %3091 = vmatmul.mubr.f32.gmra.mxu0 %v2902
      %v3092 = vpop.f32.mrf.mxu0
      %v3093 = vadd.f32 0.0, %v3092
      %v3094 = vpop.f32.mrf.mxu0
      %3095 = vmatprep.mubr.f32.mxu0 0.0
      %3096 = vmatmul.mubr.f32.gmra.mxu0 %v2905
      %v3097 = vpop.f32.mrf.mxu0
      %v3098 = vadd.f32 0.0, %v3097
      %v3099 = vpop.f32.mrf.mxu0
      %3100 = vmatprep.mubr.f32.mxu0 0.0
      %3101 = vmatmul.mubr.f32.gmra.mxu0 %v2908
      %v3102 = vpop.f32.mrf.mxu0
      %v3103 = vadd.f32 0.0, %v3102
      %v3104 = vpop.f32.mrf.mxu0
      %3105 = vmatprep.mubr.f32.mxu0 0.0
      %3106 = vmatmul.mubr.f32.gmra.mxu0 %v2911
      %v3107 = vpop.f32.mrf.mxu0
      %v3108 = vadd.f32 0.0, %v3107
      %v3109 = vpop.f32.mrf.mxu0
      %3110 = vmatprep.mubr.f32.mxu0 0.0
      %3111 = vmatmul.mubr.f32.gmra.mxu0 %v2914
      %v3112 = vpop.f32.mrf.mxu0
      %v3113 = vadd.f32 0.0, %v3112
      %v3114 = vpop.f32.mrf.mxu0
      %3115 = vmatprep.mubr.f32.mxu0 0.0
      %3116 = vmatmul.mubr.f32.gmra.mxu0 %v2917
      %v3117 = vpop.f32.mrf.mxu0
      %v3118 = vadd.f32 0.0, %v3117
      %v3119 = vpop.f32.mrf.mxu0
      %3120 = vmatprep.mubr.f32.mxu0 0.0
      %3121 = vmatmul.mubr.f32.gmra.mxu0 %v2920
      %v3122 = vpop.f32.mrf.mxu0
      %v3123 = vadd.f32 0.0, %v3122
      %v3124 = vpop.f32.mrf.mxu0
      %3125 = vmatprep.mubr.f32.mxu0 0.0
      %3126 = vmatmul.mubr.f32.gmra.mxu0 %v2923
      %v3127 = vpop.f32.mrf.mxu0
      %v3128 = vadd.f32 0.0, %v3127
      %v3129 = vpop.f32.mrf.mxu0
      %3130 = vmatprep.mubr.f32.mxu0 0.0
      %3131 = vmatmul.mubr.f32.gmra.mxu0 %v2926
      %v3132 = vpop.f32.mrf.mxu0
      %v3133 = vadd.f32 0.0, %v3132
      %v3134 = vpop.f32.mrf.mxu0
      %3135 = vmatprep.mubr.f32.mxu0 0.0
      %3136 = vmatmul.mubr.f32.gmra.mxu0 %v2929
      %v3137 = vpop.f32.mrf.mxu0
      %v3138 = vadd.f32 0.0, %v3137
      %v3139 = vpop.f32.mrf.mxu0
      %3140 = vmatprep.mubr.f32.mxu0 0.0
      %3141 = vmatmul.mubr.f32.gmra.mxu0 %v2932
      %v3142 = vpop.f32.mrf.mxu0
      %v3143 = vadd.f32 0.0, %v3142
      %v3144 = vpop.f32.mrf.mxu0
      %3145 = vmatprep.mubr.f32.mxu0 0.0
      %3146 = vmatmul.mubr.f32.gmra.mxu0 %v2935
      %v3147 = vpop.f32.mrf.mxu0
      %v3148 = vadd.f32 0.0, %v3147
      %v3149 = vpop.f32.mrf.mxu0
      %3150 = vmatprep.mubr.f32.mxu0 0.0
      %3151 = vmatmul.mubr.f32.gmra.mxu0 %v2938
      %v3152 = vpop.f32.mrf.mxu0
      %v3153 = vadd.f32 0.0, %v3152
      %v3154 = vpop.f32.mrf.mxu0
      %3155 = vmatprep.mubr.f32.mxu0 0.0
      %3156 = vmatmul.mubr.f32.gmra.mxu0 %v2941
      %v3157 = vpop.f32.mrf.mxu0
      %v3158 = vadd.f32 0.0, %v3157
      %v3159 = vpop.f32.mrf.mxu0
      %3160 = vmatprep.mubr.f32.mxu0 0.0
      %3161 = vmatmul.mubr.f32.gmra.mxu0 %v2944
      %v3162 = vpop.f32.mrf.mxu0
      %v3163 = vadd.f32 0.0, %v3162
      %v3164 = vpop.f32.mrf.mxu0
      %3165 = vmatprep.mubr.f32.mxu0 0.0
      %3166 = vmatmul.mubr.f32.gmra.mxu0 %v2947
      %v3167 = vpop.f32.mrf.mxu0
      %v3168 = vadd.f32 0.0, %v3167
      %v3169 = vpop.f32.mrf.mxu0
      %3170 = vmatprep.mubr.f32.mxu0 0.0
      %3171 = vmatmul.mubr.f32.gmra.mxu0 %v2950
      %v3172 = vpop.f32.mrf.mxu0
      %v3173 = vadd.f32 0.0, %v3172
      %v3174 = vpop.f32.mrf.mxu0
      %3175 = vmatprep.mubr.f32.mxu0 0.0
      %3176 = vmatmul.mubr.f32.gmra.mxu0 %v2953
      %v3177 = vpop.f32.mrf.mxu0
      %v3178 = vadd.f32 0.0, %v3177
      %v3179 = vpop.f32.mrf.mxu0
      %3180 = vmatprep.mubr.f32.mxu0 0.0
      %3181 = vmatmul.mubr.f32.gmra.mxu0 %v2956
      %v3182 = vpop.f32.mrf.mxu0
      %v3183 = vadd.f32 0.0, %v3182
      %v3184 = vpop.f32.mrf.mxu0
      %3185 = vdwg.mxu0
      %v3186 = vadd.f32 %v2796, %v3028
      %v3187 = vadd.f32 %v2797, %v3033
      %v3188 = vadd.f32 %v2798, %v3038
      %v3189 = vadd.f32 %v2799, %v3043
      %v3190 = vadd.f32 %v2800, %v3048
      %v3191 = vadd.f32 %v2801, %v3053
      %v3192 = vadd.f32 %v2802, %v3058
      %v3193 = vadd.f32 %v2803, %v3063
      %v3194 = vadd.f32 %v2804, %v3068
      %v3195 = vadd.f32 %v2805, %v3073
      %v3196 = vadd.f32 %v2806, %v3078
      %v3197 = vadd.f32 %v2807, %v3083
      %v3198 = vadd.f32 %v2808, %v3088
      %v3199 = vadd.f32 %v2809, %v3093
      %v3200 = vadd.f32 %v2810, %v3098
      %v3201 = vadd.f32 %v2811, %v3103
      %v3202 = vadd.f32 %v2812, %v3108
      %v3203 = vadd.f32 %v2813, %v3113
      %v3204 = vadd.f32 %v2814, %v3118
      %v3205 = vadd.f32 %v2815, %v3123
      %v3206 = vadd.f32 %v2816, %v3128
      %v3207 = vadd.f32 %v2817, %v3133
      %v3208 = vadd.f32 %v2818, %v3138
      %v3209 = vadd.f32 %v2819, %v3143
      %v3210 = vadd.f32 %v2820, %v3148
      %v3211 = vadd.f32 %v2821, %v3153
      %v3212 = vadd.f32 %v2822, %v3158
      %v3213 = vadd.f32 %v2823, %v3163
      %v3214 = vadd.f32 %v2824, %v3168
      %v3215 = vadd.f32 %v2825, %v3173
      %v3216 = vadd.f32 %v2826, %v3178
      %v3217 = vadd.f32 %v2827, %v3183
      %v3218 = vld [vmem:[%s1158 + $0x2] sm:$0xff]
      %v3219 = vld [vmem:[%s1158 + $0x12] sm:$0xff]
      %v3220 = vld [vmem:[%s1158 + $0x22] sm:$0xff]
      %v3221 = vld [vmem:[%s1158 + $0x32] sm:$0xff]
      %v3222 = vld [vmem:[%s1158 + $0x42] sm:$0xff]
      %v3223 = vld [vmem:[%s1158 + $0x52] sm:$0xff]
      %v3224 = vld [vmem:[%s1158 + $0x62] sm:$0xff]
      %v3225 = vld [vmem:[%s1158 + $0x72] sm:$0xff]
      %v3226 = vld [vmem:[%s1158 + $0xa2] sm:$0xff]
      %v3227 = vld [vmem:[%s1158 + $0xb2] sm:$0xff]
      %v3228 = vld [vmem:[%s1158 + $0xc2] sm:$0xff]
      %v3229 = vld [vmem:[%s1158 + $0xd2] sm:$0xff]
      %v3230 = vld [vmem:[%s1158 + $0xe2] sm:$0xff]
      %v3231 = vld [vmem:[%s1158 + $0xf2] sm:$0xff]
      %v3232 = vld [vmem:[%s1158 + $0x102] sm:$0xff]
      %v3233 = vld [vmem:[%s1158 + $0x112] sm:$0xff]
      %v3234 = vld [vmem:[%s1158 + $0x142] sm:$0xff]
      %v3235 = vld [vmem:[%s1158 + $0x152] sm:$0xff]
      %v3236 = vld [vmem:[%s1158 + $0x162] sm:$0xff]
      %v3237 = vld [vmem:[%s1158 + $0x172] sm:$0xff]
      %v3238 = vld [vmem:[%s1158 + $0x182] sm:$0xff]
      %v3239 = vld [vmem:[%s1158 + $0x192] sm:$0xff]
      %v3240 = vld [vmem:[%s1158 + $0x1a2] sm:$0xff]
      %v3241 = vld [vmem:[%s1158 + $0x1b2] sm:$0xff]
      %v3242 = vld [vmem:[%s1158 + $0x1e2] sm:$0xff]
      %v3243 = vld [vmem:[%s1158 + $0x1f2] sm:$0xff]
      %v3244 = vld [vmem:[%s1158 + $0x202] sm:$0xff]
      %v3245 = vld [vmem:[%s1158 + $0x212] sm:$0xff]
      %v3246 = vld [vmem:[%s1158 + $0x222] sm:$0xff]
      %v3247 = vld [vmem:[%s1158 + $0x232] sm:$0xff]
      %v3248 = vld [vmem:[%s1158 + $0x242] sm:$0xff]
      %v3249 = vld [vmem:[%s1158 + $0x252] sm:$0xff]
      %s3250 = scalar_lea.vmem %s5, 10
      %v3251 = vld [vmem:[%s3250] sm:$0x3]
      %v3253 = vsel %vm451, %v3218, 0
      %v3256 = vsel %vm451, %v3219, 0
      %v3259 = vsel %vm451, %v3220, 0
      %v3262 = vsel %vm451, %v3221, 0
      %v3265 = vsel %vm451, %v3222, 0
      %v3268 = vsel %vm451, %v3223, 0
      %v3271 = vsel %vm451, %v3224, 0
      %v3274 = vsel %vm451, %v3225, 0
      %v3277 = vsel %vm451, %v3226, 0
      %v3280 = vsel %vm451, %v3227, 0
      %v3283 = vsel %vm451, %v3228, 0
      %v3286 = vsel %vm451, %v3229, 0
      %v3289 = vsel %vm451, %v3230, 0
      %v3292 = vsel %vm451, %v3231, 0
      %v3295 = vsel %vm451, %v3232, 0
      %v3298 = vsel %vm451, %v3233, 0
      %v3301 = vsel %vm451, %v3234, 0
      %v3304 = vsel %vm451, %v3235, 0
      %v3307 = vsel %vm451, %v3236, 0
      %v3310 = vsel %vm451, %v3237, 0
      %v3313 = vsel %vm451, %v3238, 0
      %v3316 = vsel %vm451, %v3239, 0
      %v3319 = vsel %vm451, %v3240, 0
      %v3322 = vsel %vm451, %v3241, 0
      %v3325 = vsel %vm451, %v3242, 0
      %v3328 = vsel %vm451, %v3243, 0
      %v3331 = vsel %vm451, %v3244, 0
      %v3334 = vsel %vm451, %v3245, 0
      %v3337 = vsel %vm451, %v3246, 0
      %v3340 = vsel %vm451, %v3247, 0
      %v3343 = vsel %vm451, %v3248, 0
      %v3346 = vsel %vm451, %v3249, 0
      %v3349 = vsel %vm1495, %v3251, 0
      %3351 = vmatprep.subr.mxu0 0.0
      %3352 = vmatpush1.msra.mxu0 0.0
      %3353 = vmatprep.subr.mxu0 0.0
      %3354 = vmatpush1.msra.mxu0 0.0
      %3355 = vmatprep.subr.mxu0 0.0
      %3356 = vmatpush1.msra.mxu0 0.0
      %3357 = vmatprep.subr.mxu0 0.0
      %3358 = vmatpush1.msra.mxu0 0.0
      %3359 = vmatprep.subr.mxu0 0.0
      %3360 = vmatpush1.msra.mxu0 0.0
      %3361 = vmatprep.subr.mxu0 0.0
      %3362 = vmatpush1.msra.mxu0 0.0
      %3363 = vmatprep.subr.mxu0 0.0
      %3364 = vmatpush1.msra.mxu0 0.0
      %3365 = vmatprep.subr.mxu0 0.0
      %3366 = vmatpush1.msra.mxu0 0.0
      %3367 = vmatprep.subr.mxu0 0.0
      %3368 = vmatpush1.msra.mxu0 0.0
      %3369 = vmatprep.subr.mxu0 0.0
      %3370 = vmatpush1.msra.mxu0 0.0
      %3371 = vmatprep.subr.mxu0 0.0
      %3372 = vmatpush1.msra.mxu0 0.0
      %3373 = vmatprep.subr.mxu0 0.0
      %3374 = vmatpush1.msra.mxu0 0.0
      %3375 = vmatprep.subr.mxu0 0.0
      %3376 = vmatpush1.msra.mxu0 0.0
      %3377 = vmatprep.subr.mxu0 0.0
      %3378 = vmatpush1.msra.mxu0 0.0
      %3379 = vmatprep.subr.mxu0 0.0
      %3380 = vmatpush1.msra.mxu0 0.0
      %3381 = vmatprep.subr.mxu0 0.0
      %3382 = vmatpush1.msra.mxu0 %v3349
      %3383 = vmatprep.subr.mxu0 0.0
      %3384 = vmatpush2.msra.mxu0 0.0
      %3385 = vmatprep.subr.mxu0 0.0
      %3386 = vmatpush2.msra.mxu0 0.0
      %3387 = vmatprep.subr.mxu0 0.0
      %3388 = vmatpush2.msra.mxu0 0.0
      %3389 = vmatprep.subr.mxu0 0.0
      %3390 = vmatpush2.msra.mxu0 0.0
      %3391 = vmatprep.subr.mxu0 0.0
      %3392 = vmatpush2.msra.mxu0 0.0
      %3393 = vmatprep.subr.mxu0 0.0
      %3394 = vmatpush2.msra.mxu0 0.0
      %3395 = vmatprep.subr.mxu0 0.0
      %3396 = vmatpush2.msra.mxu0 0.0
      %3397 = vmatprep.subr.mxu0 0.0
      %3398 = vmatpush2.msra.mxu0 0.0
      %3399 = vmatprep.subr.mxu0 0.0
      %3400 = vmatpush2.msra.mxu0 0.0
      %3401 = vmatprep.subr.mxu0 0.0
      %3402 = vmatpush2.msra.mxu0 0.0
      %3403 = vmatprep.subr.mxu0 0.0
      %3404 = vmatpush2.msra.mxu0 0.0
      %3405 = vmatprep.subr.mxu0 0.0
      %3406 = vmatpush2.msra.mxu0 0.0
      %3407 = vmatprep.subr.mxu0 0.0
      %3408 = vmatpush2.msra.mxu0 0.0
      %3409 = vmatprep.subr.mxu0 0.0
      %3410 = vmatpush2.msra.mxu0 0.0
      %3411 = vmatprep.subr.mxu0 0.0
      %3412 = vmatpush2.msra.mxu0 0.0
      %3413 = vmatprep.subr.mxu0 0.0
      %3414 = vmatpush2.msra.mxu0 0.0
      %3415 = vmatprep.mubr.f32.mxu0 0.0
      %3416 = vmatmul.mubr.f32.gmra.mxu0 %v3253
      %v3417 = vpop.f32.mrf.mxu0
      %v3418 = vadd.f32 0.0, %v3417
      %v3419 = vpop.f32.mrf.mxu0
      %3420 = vmatprep.mubr.f32.mxu0 0.0
      %3421 = vmatmul.mubr.f32.gmra.mxu0 %v3256
      %v3422 = vpop.f32.mrf.mxu0
      %v3423 = vadd.f32 0.0, %v3422
      %v3424 = vpop.f32.mrf.mxu0
      %3425 = vmatprep.mubr.f32.mxu0 0.0
      %3426 = vmatmul.mubr.f32.gmra.mxu0 %v3259
      %v3427 = vpop.f32.mrf.mxu0
      %v3428 = vadd.f32 0.0, %v3427
      %v3429 = vpop.f32.mrf.mxu0
      %3430 = vmatprep.mubr.f32.mxu0 0.0
      %3431 = vmatmul.mubr.f32.gmra.mxu0 %v3262
      %v3432 = vpop.f32.mrf.mxu0
      %v3433 = vadd.f32 0.0, %v3432
      %v3434 = vpop.f32.mrf.mxu0
      %3435 = vmatprep.mubr.f32.mxu0 0.0
      %3436 = vmatmul.mubr.f32.gmra.mxu0 %v3265
      %v3437 = vpop.f32.mrf.mxu0
      %v3438 = vadd.f32 0.0, %v3437
      %v3439 = vpop.f32.mrf.mxu0
      %3440 = vmatprep.mubr.f32.mxu0 0.0
      %3441 = vmatmul.mubr.f32.gmra.mxu0 %v3268
      %v3442 = vpop.f32.mrf.mxu0
      %v3443 = vadd.f32 0.0, %v3442
      %v3444 = vpop.f32.mrf.mxu0
      %3445 = vmatprep.mubr.f32.mxu0 0.0
      %3446 = vmatmul.mubr.f32.gmra.mxu0 %v3271
      %v3447 = vpop.f32.mrf.mxu0
      %v3448 = vadd.f32 0.0, %v3447
      %v3449 = vpop.f32.mrf.mxu0
      %3450 = vmatprep.mubr.f32.mxu0 0.0
      %3451 = vmatmul.mubr.f32.gmra.mxu0 %v3274
      %v3452 = vpop.f32.mrf.mxu0
      %v3453 = vadd.f32 0.0, %v3452
      %v3454 = vpop.f32.mrf.mxu0
      %3455 = vmatprep.mubr.f32.mxu0 0.0
      %3456 = vmatmul.mubr.f32.gmra.mxu0 %v3277
      %v3457 = vpop.f32.mrf.mxu0
      %v3458 = vadd.f32 0.0, %v3457
      %v3459 = vpop.f32.mrf.mxu0
      %3460 = vmatprep.mubr.f32.mxu0 0.0
      %3461 = vmatmul.mubr.f32.gmra.mxu0 %v3280
      %v3462 = vpop.f32.mrf.mxu0
      %v3463 = vadd.f32 0.0, %v3462
      %v3464 = vpop.f32.mrf.mxu0
      %3465 = vmatprep.mubr.f32.mxu0 0.0
      %3466 = vmatmul.mubr.f32.gmra.mxu0 %v3283
      %v3467 = vpop.f32.mrf.mxu0
      %v3468 = vadd.f32 0.0, %v3467
      %v3469 = vpop.f32.mrf.mxu0
      %3470 = vmatprep.mubr.f32.mxu0 0.0
      %3471 = vmatmul.mubr.f32.gmra.mxu0 %v3286
      %v3472 = vpop.f32.mrf.mxu0
      %v3473 = vadd.f32 0.0, %v3472
      %v3474 = vpop.f32.mrf.mxu0
      %3475 = vmatprep.mubr.f32.mxu0 0.0
      %3476 = vmatmul.mubr.f32.gmra.mxu0 %v3289
      %v3477 = vpop.f32.mrf.mxu0
      %v3478 = vadd.f32 0.0, %v3477
      %v3479 = vpop.f32.mrf.mxu0
      %3480 = vmatprep.mubr.f32.mxu0 0.0
      %3481 = vmatmul.mubr.f32.gmra.mxu0 %v3292
      %v3482 = vpop.f32.mrf.mxu0
      %v3483 = vadd.f32 0.0, %v3482
      %v3484 = vpop.f32.mrf.mxu0
      %3485 = vmatprep.mubr.f32.mxu0 0.0
      %3486 = vmatmul.mubr.f32.gmra.mxu0 %v3295
      %v3487 = vpop.f32.mrf.mxu0
      %v3488 = vadd.f32 0.0, %v3487
      %v3489 = vpop.f32.mrf.mxu0
      %3490 = vmatprep.mubr.f32.mxu0 0.0
      %3491 = vmatmul.mubr.f32.gmra.mxu0 %v3298
      %v3492 = vpop.f32.mrf.mxu0
      %v3493 = vadd.f32 0.0, %v3492
      %v3494 = vpop.f32.mrf.mxu0
      %3495 = vmatprep.mubr.f32.mxu0 0.0
      %3496 = vmatmul.mubr.f32.gmra.mxu0 %v3301
      %v3497 = vpop.f32.mrf.mxu0
      %v3498 = vadd.f32 0.0, %v3497
      %v3499 = vpop.f32.mrf.mxu0
      %3500 = vmatprep.mubr.f32.mxu0 0.0
      %3501 = vmatmul.mubr.f32.gmra.mxu0 %v3304
      %v3502 = vpop.f32.mrf.mxu0
      %v3503 = vadd.f32 0.0, %v3502
      %v3504 = vpop.f32.mrf.mxu0
      %3505 = vmatprep.mubr.f32.mxu0 0.0
      %3506 = vmatmul.mubr.f32.gmra.mxu0 %v3307
      %v3507 = vpop.f32.mrf.mxu0
      %v3508 = vadd.f32 0.0, %v3507
      %v3509 = vpop.f32.mrf.mxu0
      %3510 = vmatprep.mubr.f32.mxu0 0.0
      %3511 = vmatmul.mubr.f32.gmra.mxu0 %v3310
      %v3512 = vpop.f32.mrf.mxu0
      %v3513 = vadd.f32 0.0, %v3512
      %v3514 = vpop.f32.mrf.mxu0
      %3515 = vmatprep.mubr.f32.mxu0 0.0
      %3516 = vmatmul.mubr.f32.gmra.mxu0 %v3313
      %v3517 = vpop.f32.mrf.mxu0
      %v3518 = vadd.f32 0.0, %v3517
      %v3519 = vpop.f32.mrf.mxu0
      %3520 = vmatprep.mubr.f32.mxu0 0.0
      %3521 = vmatmul.mubr.f32.gmra.mxu0 %v3316
      %v3522 = vpop.f32.mrf.mxu0
      %v3523 = vadd.f32 0.0, %v3522
      %v3524 = vpop.f32.mrf.mxu0
      %3525 = vmatprep.mubr.f32.mxu0 0.0
      %3526 = vmatmul.mubr.f32.gmra.mxu0 %v3319
      %v3527 = vpop.f32.mrf.mxu0
      %v3528 = vadd.f32 0.0, %v3527
      %v3529 = vpop.f32.mrf.mxu0
      %3530 = vmatprep.mubr.f32.mxu0 0.0
      %3531 = vmatmul.mubr.f32.gmra.mxu0 %v3322
      %v3532 = vpop.f32.mrf.mxu0
      %v3533 = vadd.f32 0.0, %v3532
      %v3534 = vpop.f32.mrf.mxu0
      %3535 = vmatprep.mubr.f32.mxu0 0.0
      %3536 = vmatmul.mubr.f32.gmra.mxu0 %v3325
      %v3537 = vpop.f32.mrf.mxu0
      %v3538 = vadd.f32 0.0, %v3537
      %v3539 = vpop.f32.mrf.mxu0
      %3540 = vmatprep.mubr.f32.mxu0 0.0
      %3541 = vmatmul.mubr.f32.gmra.mxu0 %v3328
      %v3542 = vpop.f32.mrf.mxu0
      %v3543 = vadd.f32 0.0, %v3542
      %v3544 = vpop.f32.mrf.mxu0
      %3545 = vmatprep.mubr.f32.mxu0 0.0
      %3546 = vmatmul.mubr.f32.gmra.mxu0 %v3331
      %v3547 = vpop.f32.mrf.mxu0
      %v3548 = vadd.f32 0.0, %v3547
      %v3549 = vpop.f32.mrf.mxu0
      %3550 = vmatprep.mubr.f32.mxu0 0.0
      %3551 = vmatmul.mubr.f32.gmra.mxu0 %v3334
      %v3552 = vpop.f32.mrf.mxu0
      %v3553 = vadd.f32 0.0, %v3552
      %v3554 = vpop.f32.mrf.mxu0
      %3555 = vmatprep.mubr.f32.mxu0 0.0
      %3556 = vmatmul.mubr.f32.gmra.mxu0 %v3337
      %v3557 = vpop.f32.mrf.mxu0
      %v3558 = vadd.f32 0.0, %v3557
      %v3559 = vpop.f32.mrf.mxu0
      %3560 = vmatprep.mubr.f32.mxu0 0.0
      %3561 = vmatmul.mubr.f32.gmra.mxu0 %v3340
      %v3562 = vpop.f32.mrf.mxu0
      %v3563 = vadd.f32 0.0, %v3562
      %v3564 = vpop.f32.mrf.mxu0
      %3565 = vmatprep.mubr.f32.mxu0 0.0
      %3566 = vmatmul.mubr.f32.gmra.mxu0 %v3343
      %v3567 = vpop.f32.mrf.mxu0
      %v3568 = vadd.f32 0.0, %v3567
      %v3569 = vpop.f32.mrf.mxu0
      %3570 = vmatprep.mubr.f32.mxu0 0.0
      %3571 = vmatmul.mubr.f32.gmra.mxu0 %v3346
      %v3572 = vpop.f32.mrf.mxu0
      %v3573 = vadd.f32 0.0, %v3572
      %v3574 = vpop.f32.mrf.mxu0
      %3575 = vdwg.mxu0
      %v3576 = vadd.f32 %v3186, %v3418
      %v3577 = vadd.f32 %v3187, %v3423
      %v3578 = vadd.f32 %v3188, %v3428
      %v3579 = vadd.f32 %v3189, %v3433
      %v3580 = vadd.f32 %v3190, %v3438
      %v3581 = vadd.f32 %v3191, %v3443
      %v3582 = vadd.f32 %v3192, %v3448
      %v3583 = vadd.f32 %v3193, %v3453
      %v3584 = vadd.f32 %v3194, %v3458
      %v3585 = vadd.f32 %v3195, %v3463
      %v3586 = vadd.f32 %v3196, %v3468
      %v3587 = vadd.f32 %v3197, %v3473
      %v3588 = vadd.f32 %v3198, %v3478
      %v3589 = vadd.f32 %v3199, %v3483
      %v3590 = vadd.f32 %v3200, %v3488
      %v3591 = vadd.f32 %v3201, %v3493
      %v3592 = vadd.f32 %v3202, %v3498
      %v3593 = vadd.f32 %v3203, %v3503
      %v3594 = vadd.f32 %v3204, %v3508
      %v3595 = vadd.f32 %v3205, %v3513
      %v3596 = vadd.f32 %v3206, %v3518
      %v3597 = vadd.f32 %v3207, %v3523
      %v3598 = vadd.f32 %v3208, %v3528
      %v3599 = vadd.f32 %v3209, %v3533
      %v3600 = vadd.f32 %v3210, %v3538
      %v3601 = vadd.f32 %v3211, %v3543
      %v3602 = vadd.f32 %v3212, %v3548
      %v3603 = vadd.f32 %v3213, %v3553
      %v3604 = vadd.f32 %v3214, %v3558
      %v3605 = vadd.f32 %v3215, %v3563
      %v3606 = vadd.f32 %v3216, %v3568
      %v3607 = vadd.f32 %v3217, %v3573
      %s3608 = scalar_lea.vmem [#allocation2], 32
      %v3609 = vld [vmem:[%s3608] sm:$0xff]
      %v3610 = vld [vmem:[%s3608 + $0x10] sm:$0xff]
      %v3611 = vld [vmem:[%s3608 + $0x20] sm:$0xff]
      %v3612 = vld [vmem:[%s3608 + $0x30] sm:$0xff]
      %v3613 = vld [vmem:[%s3608 + $0x40] sm:$0xff]
      %v3614 = vld [vmem:[%s3608 + $0x50] sm:$0xff]
      %v3615 = vld [vmem:[%s3608 + $0x60] sm:$0xff]
      %v3616 = vld [vmem:[%s3608 + $0x70] sm:$0xff]
      %v3617 = vld [vmem:[%s3608 + $0xa0] sm:$0xff]
      %v3618 = vld [vmem:[%s3608 + $0xb0] sm:$0xff]
      %v3619 = vld [vmem:[%s3608 + $0xc0] sm:$0xff]
      %v3620 = vld [vmem:[%s3608 + $0xd0] sm:$0xff]
      %v3621 = vld [vmem:[%s3608 + $0xe0] sm:$0xff]
      %v3622 = vld [vmem:[%s3608 + $0xf0] sm:$0xff]
      %v3623 = vld [vmem:[%s3608 + $0x100] sm:$0xff]
      %v3624 = vld [vmem:[%s3608 + $0x110] sm:$0xff]
      %v3625 = vld [vmem:[%s3608 + $0x140] sm:$0xff]
      %v3626 = vld [vmem:[%s3608 + $0x150] sm:$0xff]
      %v3627 = vld [vmem:[%s3608 + $0x160] sm:$0xff]
      %v3628 = vld [vmem:[%s3608 + $0x170] sm:$0xff]
      %v3629 = vld [vmem:[%s3608 + $0x180] sm:$0xff]
      %v3630 = vld [vmem:[%s3608 + $0x190] sm:$0xff]
      %v3631 = vld [vmem:[%s3608 + $0x1a0] sm:$0xff]
      %v3632 = vld [vmem:[%s3608 + $0x1b0] sm:$0xff]
      %v3633 = vld [vmem:[%s3608 + $0x1e0] sm:$0xff]
      %v3634 = vld [vmem:[%s3608 + $0x1f0] sm:$0xff]
      %v3635 = vld [vmem:[%s3608 + $0x200] sm:$0xff]
      %v3636 = vld [vmem:[%s3608 + $0x210] sm:$0xff]
      %v3637 = vld [vmem:[%s3608 + $0x220] sm:$0xff]
      %v3638 = vld [vmem:[%s3608 + $0x230] sm:$0xff]
      %v3639 = vld [vmem:[%s3608 + $0x240] sm:$0xff]
      %v3640 = vld [vmem:[%s3608 + $0x250] sm:$0xff]
      %s3641 = scalar_lea.vmem %s5, 12
      %v3642 = vld [vmem:[%s3641] sm:$0x3]
      %v3644 = vsel %vm451, %v3609, 0
      %v3647 = vsel %vm451, %v3610, 0
      %v3650 = vsel %vm451, %v3611, 0
      %v3653 = vsel %vm451, %v3612, 0
      %v3656 = vsel %vm451, %v3613, 0
      %v3659 = vsel %vm451, %v3614, 0
      %v3662 = vsel %vm451, %v3615, 0
      %v3665 = vsel %vm451, %v3616, 0
      %v3668 = vsel %vm451, %v3617, 0
      %v3671 = vsel %vm451, %v3618, 0
      %v3674 = vsel %vm451, %v3619, 0
      %v3677 = vsel %vm451, %v3620, 0
      %v3680 = vsel %vm451, %v3621, 0
      %v3683 = vsel %vm451, %v3622, 0
      %v3686 = vsel %vm451, %v3623, 0
      %v3689 = vsel %vm451, %v3624, 0
      %v3692 = vsel %vm451, %v3625, 0
      %v3695 = vsel %vm451, %v3626, 0
      %v3698 = vsel %vm451, %v3627, 0
      %v3701 = vsel %vm451, %v3628, 0
      %v3704 = vsel %vm451, %v3629, 0
      %v3707 = vsel %vm451, %v3630, 0
      %v3710 = vsel %vm451, %v3631, 0
      %v3713 = vsel %vm451, %v3632, 0
      %v3716 = vsel %vm451, %v3633, 0
      %v3719 = vsel %vm451, %v3634, 0
      %v3722 = vsel %vm451, %v3635, 0
      %v3725 = vsel %vm451, %v3636, 0
      %v3728 = vsel %vm451, %v3637, 0
      %v3731 = vsel %vm451, %v3638, 0
      %v3734 = vsel %vm451, %v3639, 0
      %v3737 = vsel %vm451, %v3640, 0
      %v3740 = vsel %vm1495, %v3642, 0
      %3742 = vmatprep.subr.mxu0 0.0
      %3743 = vmatpush1.msra.mxu0 0.0
      %3744 = vmatprep.subr.mxu0 0.0
      %3745 = vmatpush1.msra.mxu0 0.0
      %3746 = vmatprep.subr.mxu0 0.0
      %3747 = vmatpush1.msra.mxu0 0.0
      %3748 = vmatprep.subr.mxu0 0.0
      %3749 = vmatpush1.msra.mxu0 0.0
      %3750 = vmatprep.subr.mxu0 0.0
      %3751 = vmatpush1.msra.mxu0 0.0
      %3752 = vmatprep.subr.mxu0 0.0
      %3753 = vmatpush1.msra.mxu0 0.0
      %3754 = vmatprep.subr.mxu0 0.0
      %3755 = vmatpush1.msra.mxu0 0.0
      %3756 = vmatprep.subr.mxu0 0.0
      %3757 = vmatpush1.msra.mxu0 0.0
      %3758 = vmatprep.subr.mxu0 0.0
      %3759 = vmatpush1.msra.mxu0 0.0
      %3760 = vmatprep.subr.mxu0 0.0
      %3761 = vmatpush1.msra.mxu0 0.0
      %3762 = vmatprep.subr.mxu0 0.0
      %3763 = vmatpush1.msra.mxu0 0.0
      %3764 = vmatprep.subr.mxu0 0.0
      %3765 = vmatpush1.msra.mxu0 0.0
      %3766 = vmatprep.subr.mxu0 0.0
      %3767 = vmatpush1.msra.mxu0 0.0
      %3768 = vmatprep.subr.mxu0 0.0
      %3769 = vmatpush1.msra.mxu0 0.0
      %3770 = vmatprep.subr.mxu0 0.0
      %3771 = vmatpush1.msra.mxu0 0.0
      %3772 = vmatprep.subr.mxu0 0.0
      %3773 = vmatpush1.msra.mxu0 %v3740
      %3774 = vmatprep.subr.mxu0 0.0
      %3775 = vmatpush2.msra.mxu0 0.0
      %3776 = vmatprep.subr.mxu0 0.0
      %3777 = vmatpush2.msra.mxu0 0.0
      %3778 = vmatprep.subr.mxu0 0.0
      %3779 = vmatpush2.msra.mxu0 0.0
      %3780 = vmatprep.subr.mxu0 0.0
      %3781 = vmatpush2.msra.mxu0 0.0
      %3782 = vmatprep.subr.mxu0 0.0
      %3783 = vmatpush2.msra.mxu0 0.0
      %3784 = vmatprep.subr.mxu0 0.0
      %3785 = vmatpush2.msra.mxu0 0.0
      %3786 = vmatprep.subr.mxu0 0.0
      %3787 = vmatpush2.msra.mxu0 0.0
      %3788 = vmatprep.subr.mxu0 0.0
      %3789 = vmatpush2.msra.mxu0 0.0
      %3790 = vmatprep.subr.mxu0 0.0
      %3791 = vmatpush2.msra.mxu0 0.0
      %3792 = vmatprep.subr.mxu0 0.0
      %3793 = vmatpush2.msra.mxu0 0.0
      %3794 = vmatprep.subr.mxu0 0.0
      %3795 = vmatpush2.msra.mxu0 0.0
      %3796 = vmatprep.subr.mxu0 0.0
      %3797 = vmatpush2.msra.mxu0 0.0
      %3798 = vmatprep.subr.mxu0 0.0
      %3799 = vmatpush2.msra.mxu0 0.0
      %3800 = vmatprep.subr.mxu0 0.0
      %3801 = vmatpush2.msra.mxu0 0.0
      %3802 = vmatprep.subr.mxu0 0.0
      %3803 = vmatpush2.msra.mxu0 0.0
      %3804 = vmatprep.subr.mxu0 0.0
      %3805 = vmatpush2.msra.mxu0 0.0
      %3806 = vmatprep.mubr.f32.mxu0 0.0
      %3807 = vmatmul.mubr.f32.gmra.mxu0 %v3644
      %v3808 = vpop.f32.mrf.mxu0
      %v3809 = vadd.f32 0.0, %v3808
      %v3810 = vpop.f32.mrf.mxu0
      %3811 = vmatprep.mubr.f32.mxu0 0.0
      %3812 = vmatmul.mubr.f32.gmra.mxu0 %v3647
      %v3813 = vpop.f32.mrf.mxu0
      %v3814 = vadd.f32 0.0, %v3813
      %v3815 = vpop.f32.mrf.mxu0
      %3816 = vmatprep.mubr.f32.mxu0 0.0
      %3817 = vmatmul.mubr.f32.gmra.mxu0 %v3650
      %v3818 = vpop.f32.mrf.mxu0
      %v3819 = vadd.f32 0.0, %v3818
      %v3820 = vpop.f32.mrf.mxu0
      %3821 = vmatprep.mubr.f32.mxu0 0.0
      %3822 = vmatmul.mubr.f32.gmra.mxu0 %v3653
      %v3823 = vpop.f32.mrf.mxu0
      %v3824 = vadd.f32 0.0, %v3823
      %v3825 = vpop.f32.mrf.mxu0
      %3826 = vmatprep.mubr.f32.mxu0 0.0
      %3827 = vmatmul.mubr.f32.gmra.mxu0 %v3656
      %v3828 = vpop.f32.mrf.mxu0
      %v3829 = vadd.f32 0.0, %v3828
      %v3830 = vpop.f32.mrf.mxu0
      %3831 = vmatprep.mubr.f32.mxu0 0.0
      %3832 = vmatmul.mubr.f32.gmra.mxu0 %v3659
      %v3833 = vpop.f32.mrf.mxu0
      %v3834 = vadd.f32 0.0, %v3833
      %v3835 = vpop.f32.mrf.mxu0
      %3836 = vmatprep.mubr.f32.mxu0 0.0
      %3837 = vmatmul.mubr.f32.gmra.mxu0 %v3662
      %v3838 = vpop.f32.mrf.mxu0
      %v3839 = vadd.f32 0.0, %v3838
      %v3840 = vpop.f32.mrf.mxu0
      %3841 = vmatprep.mubr.f32.mxu0 0.0
      %3842 = vmatmul.mubr.f32.gmra.mxu0 %v3665
      %v3843 = vpop.f32.mrf.mxu0
      %v3844 = vadd.f32 0.0, %v3843
      %v3845 = vpop.f32.mrf.mxu0
      %3846 = vmatprep.mubr.f32.mxu0 0.0
      %3847 = vmatmul.mubr.f32.gmra.mxu0 %v3668
      %v3848 = vpop.f32.mrf.mxu0
      %v3849 = vadd.f32 0.0, %v3848
      %v3850 = vpop.f32.mrf.mxu0
      %3851 = vmatprep.mubr.f32.mxu0 0.0
      %3852 = vmatmul.mubr.f32.gmra.mxu0 %v3671
      %v3853 = vpop.f32.mrf.mxu0
      %v3854 = vadd.f32 0.0, %v3853
      %v3855 = vpop.f32.mrf.mxu0
      %3856 = vmatprep.mubr.f32.mxu0 0.0
      %3857 = vmatmul.mubr.f32.gmra.mxu0 %v3674
      %v3858 = vpop.f32.mrf.mxu0
      %v3859 = vadd.f32 0.0, %v3858
      %v3860 = vpop.f32.mrf.mxu0
      %3861 = vmatprep.mubr.f32.mxu0 0.0
      %3862 = vmatmul.mubr.f32.gmra.mxu0 %v3677
      %v3863 = vpop.f32.mrf.mxu0
      %v3864 = vadd.f32 0.0, %v3863
      %v3865 = vpop.f32.mrf.mxu0
      %3866 = vmatprep.mubr.f32.mxu0 0.0
      %3867 = vmatmul.mubr.f32.gmra.mxu0 %v3680
      %v3868 = vpop.f32.mrf.mxu0
      %v3869 = vadd.f32 0.0, %v3868
      %v3870 = vpop.f32.mrf.mxu0
      %3871 = vmatprep.mubr.f32.mxu0 0.0
      %3872 = vmatmul.mubr.f32.gmra.mxu0 %v3683
      %v3873 = vpop.f32.mrf.mxu0
      %v3874 = vadd.f32 0.0, %v3873
      %v3875 = vpop.f32.mrf.mxu0
      %3876 = vmatprep.mubr.f32.mxu0 0.0
      %3877 = vmatmul.mubr.f32.gmra.mxu0 %v3686
      %v3878 = vpop.f32.mrf.mxu0
      %v3879 = vadd.f32 0.0, %v3878
      %v3880 = vpop.f32.mrf.mxu0
      %3881 = vmatprep.mubr.f32.mxu0 0.0
      %3882 = vmatmul.mubr.f32.gmra.mxu0 %v3689
      %v3883 = vpop.f32.mrf.mxu0
      %v3884 = vadd.f32 0.0, %v3883
      %v3885 = vpop.f32.mrf.mxu0
      %3886 = vmatprep.mubr.f32.mxu0 0.0
      %3887 = vmatmul.mubr.f32.gmra.mxu0 %v3692
      %v3888 = vpop.f32.mrf.mxu0
      %v3889 = vadd.f32 0.0, %v3888
      %v3890 = vpop.f32.mrf.mxu0
      %3891 = vmatprep.mubr.f32.mxu0 0.0
      %3892 = vmatmul.mubr.f32.gmra.mxu0 %v3695
      %v3893 = vpop.f32.mrf.mxu0
      %v3894 = vadd.f32 0.0, %v3893
      %v3895 = vpop.f32.mrf.mxu0
      %3896 = vmatprep.mubr.f32.mxu0 0.0
      %3897 = vmatmul.mubr.f32.gmra.mxu0 %v3698
      %v3898 = vpop.f32.mrf.mxu0
      %v3899 = vadd.f32 0.0, %v3898
      %v3900 = vpop.f32.mrf.mxu0
      %3901 = vmatprep.mubr.f32.mxu0 0.0
      %3902 = vmatmul.mubr.f32.gmra.mxu0 %v3701
      %v3903 = vpop.f32.mrf.mxu0
      %v3904 = vadd.f32 0.0, %v3903
      %v3905 = vpop.f32.mrf.mxu0
      %3906 = vmatprep.mubr.f32.mxu0 0.0
      %3907 = vmatmul.mubr.f32.gmra.mxu0 %v3704
      %v3908 = vpop.f32.mrf.mxu0
      %v3909 = vadd.f32 0.0, %v3908
      %v3910 = vpop.f32.mrf.mxu0
      %3911 = vmatprep.mubr.f32.mxu0 0.0
      %3912 = vmatmul.mubr.f32.gmra.mxu0 %v3707
      %v3913 = vpop.f32.mrf.mxu0
      %v3914 = vadd.f32 0.0, %v3913
      %v3915 = vpop.f32.mrf.mxu0
      %3916 = vmatprep.mubr.f32.mxu0 0.0
      %3917 = vmatmul.mubr.f32.gmra.mxu0 %v3710
      %v3918 = vpop.f32.mrf.mxu0
      %v3919 = vadd.f32 0.0, %v3918
      %v3920 = vpop.f32.mrf.mxu0
      %3921 = vmatprep.mubr.f32.mxu0 0.0
      %3922 = vmatmul.mubr.f32.gmra.mxu0 %v3713
      %v3923 = vpop.f32.mrf.mxu0
      %v3924 = vadd.f32 0.0, %v3923
      %v3925 = vpop.f32.mrf.mxu0
      %3926 = vmatprep.mubr.f32.mxu0 0.0
      %3927 = vmatmul.mubr.f32.gmra.mxu0 %v3716
      %v3928 = vpop.f32.mrf.mxu0
      %v3929 = vadd.f32 0.0, %v3928
      %v3930 = vpop.f32.mrf.mxu0
      %3931 = vmatprep.mubr.f32.mxu0 0.0
      %3932 = vmatmul.mubr.f32.gmra.mxu0 %v3719
      %v3933 = vpop.f32.mrf.mxu0
      %v3934 = vadd.f32 0.0, %v3933
      %v3935 = vpop.f32.mrf.mxu0
      %3936 = vmatprep.mubr.f32.mxu0 0.0
      %3937 = vmatmul.mubr.f32.gmra.mxu0 %v3722
      %v3938 = vpop.f32.mrf.mxu0
      %v3939 = vadd.f32 0.0, %v3938
      %v3940 = vpop.f32.mrf.mxu0
      %3941 = vmatprep.mubr.f32.mxu0 0.0
      %3942 = vmatmul.mubr.f32.gmra.mxu0 %v3725
      %v3943 = vpop.f32.mrf.mxu0
      %v3944 = vadd.f32 0.0, %v3943
      %v3945 = vpop.f32.mrf.mxu0
      %3946 = vmatprep.mubr.f32.mxu0 0.0
      %3947 = vmatmul.mubr.f32.gmra.mxu0 %v3728
      %v3948 = vpop.f32.mrf.mxu0
      %v3949 = vadd.f32 0.0, %v3948
      %v3950 = vpop.f32.mrf.mxu0
      %3951 = vmatprep.mubr.f32.mxu0 0.0
      %3952 = vmatmul.mubr.f32.gmra.mxu0 %v3731
      %v3953 = vpop.f32.mrf.mxu0
      %v3954 = vadd.f32 0.0, %v3953
      %v3955 = vpop.f32.mrf.mxu0
      %3956 = vmatprep.mubr.f32.mxu0 0.0
      %3957 = vmatmul.mubr.f32.gmra.mxu0 %v3734
      %v3958 = vpop.f32.mrf.mxu0
      %v3959 = vadd.f32 0.0, %v3958
      %v3960 = vpop.f32.mrf.mxu0
      %3961 = vmatprep.mubr.f32.mxu0 0.0
      %3962 = vmatmul.mubr.f32.gmra.mxu0 %v3737
      %v3963 = vpop.f32.mrf.mxu0
      %v3964 = vadd.f32 0.0, %v3963
      %v3965 = vpop.f32.mrf.mxu0
      %3966 = vdwg.mxu0
      %v3967 = vadd.f32 %v3576, %v3809
      %v3968 = vadd.f32 %v3577, %v3814
      %v3969 = vadd.f32 %v3578, %v3819
      %v3970 = vadd.f32 %v3579, %v3824
      %v3971 = vadd.f32 %v3580, %v3829
      %v3972 = vadd.f32 %v3581, %v3834
      %v3973 = vadd.f32 %v3582, %v3839
      %v3974 = vadd.f32 %v3583, %v3844
      %v3975 = vadd.f32 %v3584, %v3849
      %v3976 = vadd.f32 %v3585, %v3854
      %v3977 = vadd.f32 %v3586, %v3859
      %v3978 = vadd.f32 %v3587, %v3864
      %v3979 = vadd.f32 %v3588, %v3869
      %v3980 = vadd.f32 %v3589, %v3874
      %v3981 = vadd.f32 %v3590, %v3879
      %v3982 = vadd.f32 %v3591, %v3884
      %v3983 = vadd.f32 %v3592, %v3889
      %v3984 = vadd.f32 %v3593, %v3894
      %v3985 = vadd.f32 %v3594, %v3899
      %v3986 = vadd.f32 %v3595, %v3904
      %v3987 = vadd.f32 %v3596, %v3909
      %v3988 = vadd.f32 %v3597, %v3914
      %v3989 = vadd.f32 %v3598, %v3919
      %v3990 = vadd.f32 %v3599, %v3924
      %v3991 = vadd.f32 %v3600, %v3929
      %v3992 = vadd.f32 %v3601, %v3934
      %v3993 = vadd.f32 %v3602, %v3939
      %v3994 = vadd.f32 %v3603, %v3944
      %v3995 = vadd.f32 %v3604, %v3949
      %v3996 = vadd.f32 %v3605, %v3954
      %v3997 = vadd.f32 %v3606, %v3959
      %v3998 = vadd.f32 %v3607, %v3964
      %v3999 = vld [vmem:[%s3608 + $0x1] sm:$0xff]
      %v4000 = vld [vmem:[%s3608 + $0x11] sm:$0xff]
      %v4001 = vld [vmem:[%s3608 + $0x21] sm:$0xff]
      %v4002 = vld [vmem:[%s3608 + $0x31] sm:$0xff]
      %v4003 = vld [vmem:[%s3608 + $0x41] sm:$0xff]
      %v4004 = vld [vmem:[%s3608 + $0x51] sm:$0xff]
      %v4005 = vld [vmem:[%s3608 + $0x61] sm:$0xff]
      %v4006 = vld [vmem:[%s3608 + $0x71] sm:$0xff]
      %v4007 = vld [vmem:[%s3608 + $0xa1] sm:$0xff]
      %v4008 = vld [vmem:[%s3608 + $0xb1] sm:$0xff]
      %v4009 = vld [vmem:[%s3608 + $0xc1] sm:$0xff]
      %v4010 = vld [vmem:[%s3608 + $0xd1] sm:$0xff]
      %v4011 = vld [vmem:[%s3608 + $0xe1] sm:$0xff]
      %v4012 = vld [vmem:[%s3608 + $0xf1] sm:$0xff]
      %v4013 = vld [vmem:[%s3608 + $0x101] sm:$0xff]
      %v4014 = vld [vmem:[%s3608 + $0x111] sm:$0xff]
      %v4015 = vld [vmem:[%s3608 + $0x141] sm:$0xff]
      %v4016 = vld [vmem:[%s3608 + $0x151] sm:$0xff]
      %v4017 = vld [vmem:[%s3608 + $0x161] sm:$0xff]
      %v4018 = vld [vmem:[%s3608 + $0x171] sm:$0xff]
      %v4019 = vld [vmem:[%s3608 + $0x181] sm:$0xff]
      %v4020 = vld [vmem:[%s3608 + $0x191] sm:$0xff]
      %v4021 = vld [vmem:[%s3608 + $0x1a1] sm:$0xff]
      %v4022 = vld [vmem:[%s3608 + $0x1b1] sm:$0xff]
      %v4023 = vld [vmem:[%s3608 + $0x1e1] sm:$0xff]
      %v4024 = vld [vmem:[%s3608 + $0x1f1] sm:$0xff]
      %v4025 = vld [vmem:[%s3608 + $0x201] sm:$0xff]
      %v4026 = vld [vmem:[%s3608 + $0x211] sm:$0xff]
      %v4027 = vld [vmem:[%s3608 + $0x221] sm:$0xff]
      %v4028 = vld [vmem:[%s3608 + $0x231] sm:$0xff]
      %v4029 = vld [vmem:[%s3608 + $0x241] sm:$0xff]
      %v4030 = vld [vmem:[%s3608 + $0x251] sm:$0xff]
      %s4031 = scalar_lea.vmem %s5, 14
      %v4032 = vld [vmem:[%s4031] sm:$0x3]
      %v4034 = vsel %vm451, %v3999, 0
      %v4037 = vsel %vm451, %v4000, 0
      %v4040 = vsel %vm451, %v4001, 0
      %v4043 = vsel %vm451, %v4002, 0
      %v4046 = vsel %vm451, %v4003, 0
      %v4049 = vsel %vm451, %v4004, 0
      %v4052 = vsel %vm451, %v4005, 0
      %v4055 = vsel %vm451, %v4006, 0
      %v4058 = vsel %vm451, %v4007, 0
      %v4061 = vsel %vm451, %v4008, 0
      %v4064 = vsel %vm451, %v4009, 0
      %v4067 = vsel %vm451, %v4010, 0
      %v4070 = vsel %vm451, %v4011, 0
      %v4073 = vsel %vm451, %v4012, 0
      %v4076 = vsel %vm451, %v4013, 0
      %v4079 = vsel %vm451, %v4014, 0
      %v4082 = vsel %vm451, %v4015, 0
      %v4085 = vsel %vm451, %v4016, 0
      %v4088 = vsel %vm451, %v4017, 0
      %v4091 = vsel %vm451, %v4018, 0
      %v4094 = vsel %vm451, %v4019, 0
      %v4097 = vsel %vm451, %v4020, 0
      %v4100 = vsel %vm451, %v4021, 0
      %v4103 = vsel %vm451, %v4022, 0
      %v4106 = vsel %vm451, %v4023, 0
      %v4109 = vsel %vm451, %v4024, 0
      %v4112 = vsel %vm451, %v4025, 0
      %v4115 = vsel %vm451, %v4026, 0
      %v4118 = vsel %vm451, %v4027, 0
      %v4121 = vsel %vm451, %v4028, 0
      %v4124 = vsel %vm451, %v4029, 0
      %v4127 = vsel %vm451, %v4030, 0
      %v4130 = vsel %vm1495, %v4032, 0
      %4132 = vmatprep.subr.mxu0 0.0
      %4133 = vmatpush1.msra.mxu0 0.0
      %4134 = vmatprep.subr.mxu0 0.0
      %4135 = vmatpush1.msra.mxu0 0.0
      %4136 = vmatprep.subr.mxu0 0.0
      %4137 = vmatpush1.msra.mxu0 0.0
      %4138 = vmatprep.subr.mxu0 0.0
      %4139 = vmatpush1.msra.mxu0 0.0
      %4140 = vmatprep.subr.mxu0 0.0
      %4141 = vmatpush1.msra.mxu0 0.0
      %4142 = vmatprep.subr.mxu0 0.0
      %4143 = vmatpush1.msra.mxu0 0.0
      %4144 = vmatprep.subr.mxu0 0.0
      %4145 = vmatpush1.msra.mxu0 0.0
      %4146 = vmatprep.subr.mxu0 0.0
      %4147 = vmatpush1.msra.mxu0 0.0
      %4148 = vmatprep.subr.mxu0 0.0
      %4149 = vmatpush1.msra.mxu0 0.0
      %4150 = vmatprep.subr.mxu0 0.0
      %4151 = vmatpush1.msra.mxu0 0.0
      %4152 = vmatprep.subr.mxu0 0.0
      %4153 = vmatpush1.msra.mxu0 0.0
      %4154 = vmatprep.subr.mxu0 0.0
      %4155 = vmatpush1.msra.mxu0 0.0
      %4156 = vmatprep.subr.mxu0 0.0
      %4157 = vmatpush1.msra.mxu0 0.0
      %4158 = vmatprep.subr.mxu0 0.0
      %4159 = vmatpush1.msra.mxu0 0.0
      %4160 = vmatprep.subr.mxu0 0.0
      %4161 = vmatpush1.msra.mxu0 0.0
      %4162 = vmatprep.subr.mxu0 0.0
      %4163 = vmatpush1.msra.mxu0 %v4130
      %4164 = vmatprep.subr.mxu0 0.0
      %4165 = vmatpush2.msra.mxu0 0.0
      %4166 = vmatprep.subr.mxu0 0.0
      %4167 = vmatpush2.msra.mxu0 0.0
      %4168 = vmatprep.subr.mxu0 0.0
      %4169 = vmatpush2.msra.mxu0 0.0
      %4170 = vmatprep.subr.mxu0 0.0
      %4171 = vmatpush2.msra.mxu0 0.0
      %4172 = vmatprep.subr.mxu0 0.0
      %4173 = vmatpush2.msra.mxu0 0.0
      %4174 = vmatprep.subr.mxu0 0.0
      %4175 = vmatpush2.msra.mxu0 0.0
      %4176 = vmatprep.subr.mxu0 0.0
      %4177 = vmatpush2.msra.mxu0 0.0
      %4178 = vmatprep.subr.mxu0 0.0
      %4179 = vmatpush2.msra.mxu0 0.0
      %4180 = vmatprep.subr.mxu0 0.0
      %4181 = vmatpush2.msra.mxu0 0.0
      %4182 = vmatprep.subr.mxu0 0.0
      %4183 = vmatpush2.msra.mxu0 0.0
      %4184 = vmatprep.subr.mxu0 0.0
      %4185 = vmatpush2.msra.mxu0 0.0
      %4186 = vmatprep.subr.mxu0 0.0
      %4187 = vmatpush2.msra.mxu0 0.0
      %4188 = vmatprep.subr.mxu0 0.0
      %4189 = vmatpush2.msra.mxu0 0.0
      %4190 = vmatprep.subr.mxu0 0.0
      %4191 = vmatpush2.msra.mxu0 0.0
      %4192 = vmatprep.subr.mxu0 0.0
      %4193 = vmatpush2.msra.mxu0 0.0
      %4194 = vmatprep.subr.mxu0 0.0
      %4195 = vmatpush2.msra.mxu0 0.0
      %4196 = vmatprep.mubr.f32.mxu0 0.0
      %4197 = vmatmul.mubr.f32.gmra.mxu0 %v4034
      %v4198 = vpop.f32.mrf.mxu0
      %v4199 = vadd.f32 0.0, %v4198
      %v4200 = vpop.f32.mrf.mxu0
      %4201 = vmatprep.mubr.f32.mxu0 0.0
      %4202 = vmatmul.mubr.f32.gmra.mxu0 %v4037
      %v4203 = vpop.f32.mrf.mxu0
      %v4204 = vadd.f32 0.0, %v4203
      %v4205 = vpop.f32.mrf.mxu0
      %4206 = vmatprep.mubr.f32.mxu0 0.0
      %4207 = vmatmul.mubr.f32.gmra.mxu0 %v4040
      %v4208 = vpop.f32.mrf.mxu0
      %v4209 = vadd.f32 0.0, %v4208
      %v4210 = vpop.f32.mrf.mxu0
      %4211 = vmatprep.mubr.f32.mxu0 0.0
      %4212 = vmatmul.mubr.f32.gmra.mxu0 %v4043
      %v4213 = vpop.f32.mrf.mxu0
      %v4214 = vadd.f32 0.0, %v4213
      %v4215 = vpop.f32.mrf.mxu0
      %4216 = vmatprep.mubr.f32.mxu0 0.0
      %4217 = vmatmul.mubr.f32.gmra.mxu0 %v4046
      %v4218 = vpop.f32.mrf.mxu0
      %v4219 = vadd.f32 0.0, %v4218
      %v4220 = vpop.f32.mrf.mxu0
      %4221 = vmatprep.mubr.f32.mxu0 0.0
      %4222 = vmatmul.mubr.f32.gmra.mxu0 %v4049
      %v4223 = vpop.f32.mrf.mxu0
      %v4224 = vadd.f32 0.0, %v4223
      %v4225 = vpop.f32.mrf.mxu0
      %4226 = vmatprep.mubr.f32.mxu0 0.0
      %4227 = vmatmul.mubr.f32.gmra.mxu0 %v4052
      %v4228 = vpop.f32.mrf.mxu0
      %v4229 = vadd.f32 0.0, %v4228
      %v4230 = vpop.f32.mrf.mxu0
      %4231 = vmatprep.mubr.f32.mxu0 0.0
      %4232 = vmatmul.mubr.f32.gmra.mxu0 %v4055
      %v4233 = vpop.f32.mrf.mxu0
      %v4234 = vadd.f32 0.0, %v4233
      %v4235 = vpop.f32.mrf.mxu0
      %4236 = vmatprep.mubr.f32.mxu0 0.0
      %4237 = vmatmul.mubr.f32.gmra.mxu0 %v4058
      %v4238 = vpop.f32.mrf.mxu0
      %v4239 = vadd.f32 0.0, %v4238
      %v4240 = vpop.f32.mrf.mxu0
      %4241 = vmatprep.mubr.f32.mxu0 0.0
      %4242 = vmatmul.mubr.f32.gmra.mxu0 %v4061
      %v4243 = vpop.f32.mrf.mxu0
      %v4244 = vadd.f32 0.0, %v4243
      %v4245 = vpop.f32.mrf.mxu0
      %4246 = vmatprep.mubr.f32.mxu0 0.0
      %4247 = vmatmul.mubr.f32.gmra.mxu0 %v4064
      %v4248 = vpop.f32.mrf.mxu0
      %v4249 = vadd.f32 0.0, %v4248
      %v4250 = vpop.f32.mrf.mxu0
      %4251 = vmatprep.mubr.f32.mxu0 0.0
      %4252 = vmatmul.mubr.f32.gmra.mxu0 %v4067
      %v4253 = vpop.f32.mrf.mxu0
      %v4254 = vadd.f32 0.0, %v4253
      %v4255 = vpop.f32.mrf.mxu0
      %4256 = vmatprep.mubr.f32.mxu0 0.0
      %4257 = vmatmul.mubr.f32.gmra.mxu0 %v4070
      %v4258 = vpop.f32.mrf.mxu0
      %v4259 = vadd.f32 0.0, %v4258
      %v4260 = vpop.f32.mrf.mxu0
      %4261 = vmatprep.mubr.f32.mxu0 0.0
      %4262 = vmatmul.mubr.f32.gmra.mxu0 %v4073
      %v4263 = vpop.f32.mrf.mxu0
      %v4264 = vadd.f32 0.0, %v4263
      %v4265 = vpop.f32.mrf.mxu0
      %4266 = vmatprep.mubr.f32.mxu0 0.0
      %4267 = vmatmul.mubr.f32.gmra.mxu0 %v4076
      %v4268 = vpop.f32.mrf.mxu0
      %v4269 = vadd.f32 0.0, %v4268
      %v4270 = vpop.f32.mrf.mxu0
      %4271 = vmatprep.mubr.f32.mxu0 0.0
      %4272 = vmatmul.mubr.f32.gmra.mxu0 %v4079
      %v4273 = vpop.f32.mrf.mxu0
      %v4274 = vadd.f32 0.0, %v4273
      %v4275 = vpop.f32.mrf.mxu0
      %4276 = vmatprep.mubr.f32.mxu0 0.0
      %4277 = vmatmul.mubr.f32.gmra.mxu0 %v4082
      %v4278 = vpop.f32.mrf.mxu0
      %v4279 = vadd.f32 0.0, %v4278
      %v4280 = vpop.f32.mrf.mxu0
      %4281 = vmatprep.mubr.f32.mxu0 0.0
      %4282 = vmatmul.mubr.f32.gmra.mxu0 %v4085
      %v4283 = vpop.f32.mrf.mxu0
      %v4284 = vadd.f32 0.0, %v4283
      %v4285 = vpop.f32.mrf.mxu0
      %4286 = vmatprep.mubr.f32.mxu0 0.0
      %4287 = vmatmul.mubr.f32.gmra.mxu0 %v4088
      %v4288 = vpop.f32.mrf.mxu0
      %v4289 = vadd.f32 0.0, %v4288
      %v4290 = vpop.f32.mrf.mxu0
      %4291 = vmatprep.mubr.f32.mxu0 0.0
      %4292 = vmatmul.mubr.f32.gmra.mxu0 %v4091
      %v4293 = vpop.f32.mrf.mxu0
      %v4294 = vadd.f32 0.0, %v4293
      %v4295 = vpop.f32.mrf.mxu0
      %4296 = vmatprep.mubr.f32.mxu0 0.0
      %4297 = vmatmul.mubr.f32.gmra.mxu0 %v4094
      %v4298 = vpop.f32.mrf.mxu0
      %v4299 = vadd.f32 0.0, %v4298
      %v4300 = vpop.f32.mrf.mxu0
      %4301 = vmatprep.mubr.f32.mxu0 0.0
      %4302 = vmatmul.mubr.f32.gmra.mxu0 %v4097
      %v4303 = vpop.f32.mrf.mxu0
      %v4304 = vadd.f32 0.0, %v4303
      %v4305 = vpop.f32.mrf.mxu0
      %4306 = vmatprep.mubr.f32.mxu0 0.0
      %4307 = vmatmul.mubr.f32.gmra.mxu0 %v4100
      %v4308 = vpop.f32.mrf.mxu0
      %v4309 = vadd.f32 0.0, %v4308
      %v4310 = vpop.f32.mrf.mxu0
      %4311 = vmatprep.mubr.f32.mxu0 0.0
      %4312 = vmatmul.mubr.f32.gmra.mxu0 %v4103
      %v4313 = vpop.f32.mrf.mxu0
      %v4314 = vadd.f32 0.0, %v4313
      %v4315 = vpop.f32.mrf.mxu0
      %4316 = vmatprep.mubr.f32.mxu0 0.0
      %4317 = vmatmul.mubr.f32.gmra.mxu0 %v4106
      %v4318 = vpop.f32.mrf.mxu0
      %v4319 = vadd.f32 0.0, %v4318
      %v4320 = vpop.f32.mrf.mxu0
      %4321 = vmatprep.mubr.f32.mxu0 0.0
      %4322 = vmatmul.mubr.f32.gmra.mxu0 %v4109
      %v4323 = vpop.f32.mrf.mxu0
      %v4324 = vadd.f32 0.0, %v4323
      %v4325 = vpop.f32.mrf.mxu0
      %4326 = vmatprep.mubr.f32.mxu0 0.0
      %4327 = vmatmul.mubr.f32.gmra.mxu0 %v4112
      %v4328 = vpop.f32.mrf.mxu0
      %v4329 = vadd.f32 0.0, %v4328
      %v4330 = vpop.f32.mrf.mxu0
      %4331 = vmatprep.mubr.f32.mxu0 0.0
      %4332 = vmatmul.mubr.f32.gmra.mxu0 %v4115
      %v4333 = vpop.f32.mrf.mxu0
      %v4334 = vadd.f32 0.0, %v4333
      %v4335 = vpop.f32.mrf.mxu0
      %4336 = vmatprep.mubr.f32.mxu0 0.0
      %4337 = vmatmul.mubr.f32.gmra.mxu0 %v4118
      %v4338 = vpop.f32.mrf.mxu0
      %v4339 = vadd.f32 0.0, %v4338
      %v4340 = vpop.f32.mrf.mxu0
      %4341 = vmatprep.mubr.f32.mxu0 0.0
      %4342 = vmatmul.mubr.f32.gmra.mxu0 %v4121
      %v4343 = vpop.f32.mrf.mxu0
      %v4344 = vadd.f32 0.0, %v4343
      %v4345 = vpop.f32.mrf.mxu0
      %4346 = vmatprep.mubr.f32.mxu0 0.0
      %4347 = vmatmul.mubr.f32.gmra.mxu0 %v4124
      %v4348 = vpop.f32.mrf.mxu0
      %v4349 = vadd.f32 0.0, %v4348
      %v4350 = vpop.f32.mrf.mxu0
      %4351 = vmatprep.mubr.f32.mxu0 0.0
      %4352 = vmatmul.mubr.f32.gmra.mxu0 %v4127
      %v4353 = vpop.f32.mrf.mxu0
      %v4354 = vadd.f32 0.0, %v4353
      %v4355 = vpop.f32.mrf.mxu0
      %4356 = vdwg.mxu0
      %v4357 = vadd.f32 %v3967, %v4199
      %v4358 = vadd.f32 %v3968, %v4204
      %v4359 = vadd.f32 %v3969, %v4209
      %v4360 = vadd.f32 %v3970, %v4214
      %v4361 = vadd.f32 %v3971, %v4219
      %v4362 = vadd.f32 %v3972, %v4224
      %v4363 = vadd.f32 %v3973, %v4229
      %v4364 = vadd.f32 %v3974, %v4234
      %v4365 = vadd.f32 %v3975, %v4239
      %v4366 = vadd.f32 %v3976, %v4244
      %v4367 = vadd.f32 %v3977, %v4249
      %v4368 = vadd.f32 %v3978, %v4254
      %v4369 = vadd.f32 %v3979, %v4259
      %v4370 = vadd.f32 %v3980, %v4264
      %v4371 = vadd.f32 %v3981, %v4269
      %v4372 = vadd.f32 %v3982, %v4274
      %v4373 = vadd.f32 %v3983, %v4279
      %v4374 = vadd.f32 %v3984, %v4284
      %v4375 = vadd.f32 %v3985, %v4289
      %v4376 = vadd.f32 %v3986, %v4294
      %v4377 = vadd.f32 %v3987, %v4299
      %v4378 = vadd.f32 %v3988, %v4304
      %v4379 = vadd.f32 %v3989, %v4309
      %v4380 = vadd.f32 %v3990, %v4314
      %v4381 = vadd.f32 %v3991, %v4319
      %v4382 = vadd.f32 %v3992, %v4324
      %v4383 = vadd.f32 %v3993, %v4329
      %v4384 = vadd.f32 %v3994, %v4334
      %v4385 = vadd.f32 %v3995, %v4339
      %v4386 = vadd.f32 %v3996, %v4344
      %v4387 = vadd.f32 %v3997, %v4349
      %v4388 = vadd.f32 %v3998, %v4354
      %v4389 = vld [vmem:[%s3608 + $0x2] sm:$0xff]
      %v4390 = vld [vmem:[%s3608 + $0x12] sm:$0xff]
      %v4391 = vld [vmem:[%s3608 + $0x22] sm:$0xff]
      %v4392 = vld [vmem:[%s3608 + $0x32] sm:$0xff]
      %v4393 = vld [vmem:[%s3608 + $0x42] sm:$0xff]
      %v4394 = vld [vmem:[%s3608 + $0x52] sm:$0xff]
      %v4395 = vld [vmem:[%s3608 + $0x62] sm:$0xff]
      %v4396 = vld [vmem:[%s3608 + $0x72] sm:$0xff]
      %v4397 = vld [vmem:[%s3608 + $0xa2] sm:$0xff]
      %v4398 = vld [vmem:[%s3608 + $0xb2] sm:$0xff]
      %v4399 = vld [vmem:[%s3608 + $0xc2] sm:$0xff]
      %v4400 = vld [vmem:[%s3608 + $0xd2] sm:$0xff]
      %v4401 = vld [vmem:[%s3608 + $0xe2] sm:$0xff]
      %v4402 = vld [vmem:[%s3608 + $0xf2] sm:$0xff]
      %v4403 = vld [vmem:[%s3608 + $0x102] sm:$0xff]
      %v4404 = vld [vmem:[%s3608 + $0x112] sm:$0xff]
      %v4405 = vld [vmem:[%s3608 + $0x142] sm:$0xff]
      %v4406 = vld [vmem:[%s3608 + $0x152] sm:$0xff]
      %v4407 = vld [vmem:[%s3608 + $0x162] sm:$0xff]
      %v4408 = vld [vmem:[%s3608 + $0x172] sm:$0xff]
      %v4409 = vld [vmem:[%s3608 + $0x182] sm:$0xff]
      %v4410 = vld [vmem:[%s3608 + $0x192] sm:$0xff]
      %v4411 = vld [vmem:[%s3608 + $0x1a2] sm:$0xff]
      %v4412 = vld [vmem:[%s3608 + $0x1b2] sm:$0xff]
      %v4413 = vld [vmem:[%s3608 + $0x1e2] sm:$0xff]
      %v4414 = vld [vmem:[%s3608 + $0x1f2] sm:$0xff]
      %v4415 = vld [vmem:[%s3608 + $0x202] sm:$0xff]
      %v4416 = vld [vmem:[%s3608 + $0x212] sm:$0xff]
      %v4417 = vld [vmem:[%s3608 + $0x222] sm:$0xff]
      %v4418 = vld [vmem:[%s3608 + $0x232] sm:$0xff]
      %v4419 = vld [vmem:[%s3608 + $0x242] sm:$0xff]
      %v4420 = vld [vmem:[%s3608 + $0x252] sm:$0xff]
      %s4421 = scalar_lea.vmem %s5, 16
      %v4422 = vld [vmem:[%s4421] sm:$0x3]
      %v4424 = vsel %vm451, %v4389, 0
      %v4427 = vsel %vm451, %v4390, 0
      %v4430 = vsel %vm451, %v4391, 0
      %v4433 = vsel %vm451, %v4392, 0
      %v4436 = vsel %vm451, %v4393, 0
      %v4439 = vsel %vm451, %v4394, 0
      %v4442 = vsel %vm451, %v4395, 0
      %v4445 = vsel %vm451, %v4396, 0
      %v4448 = vsel %vm451, %v4397, 0
      %v4451 = vsel %vm451, %v4398, 0
      %v4454 = vsel %vm451, %v4399, 0
      %v4457 = vsel %vm451, %v4400, 0
      %v4460 = vsel %vm451, %v4401, 0
      %v4463 = vsel %vm451, %v4402, 0
      %v4466 = vsel %vm451, %v4403, 0
      %v4469 = vsel %vm451, %v4404, 0
      %v4472 = vsel %vm451, %v4405, 0
      %v4475 = vsel %vm451, %v4406, 0
      %v4478 = vsel %vm451, %v4407, 0
      %v4481 = vsel %vm451, %v4408, 0
      %v4484 = vsel %vm451, %v4409, 0
      %v4487 = vsel %vm451, %v4410, 0
      %v4490 = vsel %vm451, %v4411, 0
      %v4493 = vsel %vm451, %v4412, 0
      %v4496 = vsel %vm451, %v4413, 0
      %v4499 = vsel %vm451, %v4414, 0
      %v4502 = vsel %vm451, %v4415, 0
      %v4505 = vsel %vm451, %v4416, 0
      %v4508 = vsel %vm451, %v4417, 0
      %v4511 = vsel %vm451, %v4418, 0
      %v4514 = vsel %vm451, %v4419, 0
      %v4517 = vsel %vm451, %v4420, 0
      %v4520 = vsel %vm1495, %v4422, 0
      %4522 = vmatprep.subr.mxu0 0.0
      %4523 = vmatpush1.msra.mxu0 0.0
      %4524 = vmatprep.subr.mxu0 0.0
      %4525 = vmatpush1.msra.mxu0 0.0
      %4526 = vmatprep.subr.mxu0 0.0
      %4527 = vmatpush1.msra.mxu0 0.0
      %4528 = vmatprep.subr.mxu0 0.0
      %4529 = vmatpush1.msra.mxu0 0.0
      %4530 = vmatprep.subr.mxu0 0.0
      %4531 = vmatpush1.msra.mxu0 0.0
      %4532 = vmatprep.subr.mxu0 0.0
      %4533 = vmatpush1.msra.mxu0 0.0
      %4534 = vmatprep.subr.mxu0 0.0
      %4535 = vmatpush1.msra.mxu0 0.0
      %4536 = vmatprep.subr.mxu0 0.0
      %4537 = vmatpush1.msra.mxu0 0.0
      %4538 = vmatprep.subr.mxu0 0.0
      %4539 = vmatpush1.msra.mxu0 0.0
      %4540 = vmatprep.subr.mxu0 0.0
      %4541 = vmatpush1.msra.mxu0 0.0
      %4542 = vmatprep.subr.mxu0 0.0
      %4543 = vmatpush1.msra.mxu0 0.0
      %4544 = vmatprep.subr.mxu0 0.0
      %4545 = vmatpush1.msra.mxu0 0.0
      %4546 = vmatprep.subr.mxu0 0.0
      %4547 = vmatpush1.msra.mxu0 0.0
      %4548 = vmatprep.subr.mxu0 0.0
      %4549 = vmatpush1.msra.mxu0 0.0
      %4550 = vmatprep.subr.mxu0 0.0
      %4551 = vmatpush1.msra.mxu0 0.0
      %4552 = vmatprep.subr.mxu0 0.0
      %4553 = vmatpush1.msra.mxu0 %v4520
      %4554 = vmatprep.subr.mxu0 0.0
      %4555 = vmatpush2.msra.mxu0 0.0
      %4556 = vmatprep.subr.mxu0 0.0
      %4557 = vmatpush2.msra.mxu0 0.0
      %4558 = vmatprep.subr.mxu0 0.0
      %4559 = vmatpush2.msra.mxu0 0.0
      %4560 = vmatprep.subr.mxu0 0.0
      %4561 = vmatpush2.msra.mxu0 0.0
      %4562 = vmatprep.subr.mxu0 0.0
      %4563 = vmatpush2.msra.mxu0 0.0
      %4564 = vmatprep.subr.mxu0 0.0
      %4565 = vmatpush2.msra.mxu0 0.0
      %4566 = vmatprep.subr.mxu0 0.0
      %4567 = vmatpush2.msra.mxu0 0.0
      %4568 = vmatprep.subr.mxu0 0.0
      %4569 = vmatpush2.msra.mxu0 0.0
      %4570 = vmatprep.subr.mxu0 0.0
      %4571 = vmatpush2.msra.mxu0 0.0
      %4572 = vmatprep.subr.mxu0 0.0
      %4573 = vmatpush2.msra.mxu0 0.0
      %4574 = vmatprep.subr.mxu0 0.0
      %4575 = vmatpush2.msra.mxu0 0.0
      %4576 = vmatprep.subr.mxu0 0.0
      %4577 = vmatpush2.msra.mxu0 0.0
      %4578 = vmatprep.subr.mxu0 0.0
      %4579 = vmatpush2.msra.mxu0 0.0
      %4580 = vmatprep.subr.mxu0 0.0
      %4581 = vmatpush2.msra.mxu0 0.0
      %4582 = vmatprep.subr.mxu0 0.0
      %4583 = vmatpush2.msra.mxu0 0.0
      %4584 = vmatprep.subr.mxu0 0.0
      %4585 = vmatpush2.msra.mxu0 0.0
      %4586 = vmatprep.mubr.f32.mxu0 0.0
      %4587 = vmatmul.mubr.f32.gmra.mxu0 %v4424
      %v4588 = vpop.f32.mrf.mxu0
      %v4589 = vadd.f32 0.0, %v4588
      %v4590 = vpop.f32.mrf.mxu0
      %4591 = vmatprep.mubr.f32.mxu0 0.0
      %4592 = vmatmul.mubr.f32.gmra.mxu0 %v4427
      %v4593 = vpop.f32.mrf.mxu0
      %v4594 = vadd.f32 0.0, %v4593
      %v4595 = vpop.f32.mrf.mxu0
      %4596 = vmatprep.mubr.f32.mxu0 0.0
      %4597 = vmatmul.mubr.f32.gmra.mxu0 %v4430
      %v4598 = vpop.f32.mrf.mxu0
      %v4599 = vadd.f32 0.0, %v4598
      %v4600 = vpop.f32.mrf.mxu0
      %4601 = vmatprep.mubr.f32.mxu0 0.0
      %4602 = vmatmul.mubr.f32.gmra.mxu0 %v4433
      %v4603 = vpop.f32.mrf.mxu0
      %v4604 = vadd.f32 0.0, %v4603
      %v4605 = vpop.f32.mrf.mxu0
      %4606 = vmatprep.mubr.f32.mxu0 0.0
      %4607 = vmatmul.mubr.f32.gmra.mxu0 %v4436
      %v4608 = vpop.f32.mrf.mxu0
      %v4609 = vadd.f32 0.0, %v4608
      %v4610 = vpop.f32.mrf.mxu0
      %4611 = vmatprep.mubr.f32.mxu0 0.0
      %4612 = vmatmul.mubr.f32.gmra.mxu0 %v4439
      %v4613 = vpop.f32.mrf.mxu0
      %v4614 = vadd.f32 0.0, %v4613
      %v4615 = vpop.f32.mrf.mxu0
      %4616 = vmatprep.mubr.f32.mxu0 0.0
      %4617 = vmatmul.mubr.f32.gmra.mxu0 %v4442
      %v4618 = vpop.f32.mrf.mxu0
      %v4619 = vadd.f32 0.0, %v4618
      %v4620 = vpop.f32.mrf.mxu0
      %4621 = vmatprep.mubr.f32.mxu0 0.0
      %4622 = vmatmul.mubr.f32.gmra.mxu0 %v4445
      %v4623 = vpop.f32.mrf.mxu0
      %v4624 = vadd.f32 0.0, %v4623
      %v4625 = vpop.f32.mrf.mxu0
      %4626 = vmatprep.mubr.f32.mxu0 0.0
      %4627 = vmatmul.mubr.f32.gmra.mxu0 %v4448
      %v4628 = vpop.f32.mrf.mxu0
      %v4629 = vadd.f32 0.0, %v4628
      %v4630 = vpop.f32.mrf.mxu0
      %4631 = vmatprep.mubr.f32.mxu0 0.0
      %4632 = vmatmul.mubr.f32.gmra.mxu0 %v4451
      %v4633 = vpop.f32.mrf.mxu0
      %v4634 = vadd.f32 0.0, %v4633
      %v4635 = vpop.f32.mrf.mxu0
      %4636 = vmatprep.mubr.f32.mxu0 0.0
      %4637 = vmatmul.mubr.f32.gmra.mxu0 %v4454
      %v4638 = vpop.f32.mrf.mxu0
      %v4639 = vadd.f32 0.0, %v4638
      %v4640 = vpop.f32.mrf.mxu0
      %4641 = vmatprep.mubr.f32.mxu0 0.0
      %4642 = vmatmul.mubr.f32.gmra.mxu0 %v4457
      %v4643 = vpop.f32.mrf.mxu0
      %v4644 = vadd.f32 0.0, %v4643
      %v4645 = vpop.f32.mrf.mxu0
      %4646 = vmatprep.mubr.f32.mxu0 0.0
      %4647 = vmatmul.mubr.f32.gmra.mxu0 %v4460
      %v4648 = vpop.f32.mrf.mxu0
      %v4649 = vadd.f32 0.0, %v4648
      %v4650 = vpop.f32.mrf.mxu0
      %4651 = vmatprep.mubr.f32.mxu0 0.0
      %4652 = vmatmul.mubr.f32.gmra.mxu0 %v4463
      %v4653 = vpop.f32.mrf.mxu0
      %v4654 = vadd.f32 0.0, %v4653
      %v4655 = vpop.f32.mrf.mxu0
      %4656 = vmatprep.mubr.f32.mxu0 0.0
      %4657 = vmatmul.mubr.f32.gmra.mxu0 %v4466
      %v4658 = vpop.f32.mrf.mxu0
      %v4659 = vadd.f32 0.0, %v4658
      %v4660 = vpop.f32.mrf.mxu0
      %4661 = vmatprep.mubr.f32.mxu0 0.0
      %4662 = vmatmul.mubr.f32.gmra.mxu0 %v4469
      %v4663 = vpop.f32.mrf.mxu0
      %v4664 = vadd.f32 0.0, %v4663
      %v4665 = vpop.f32.mrf.mxu0
      %4666 = vmatprep.mubr.f32.mxu0 0.0
      %4667 = vmatmul.mubr.f32.gmra.mxu0 %v4472
      %v4668 = vpop.f32.mrf.mxu0
      %v4669 = vadd.f32 0.0, %v4668
      %v4670 = vpop.f32.mrf.mxu0
      %4671 = vmatprep.mubr.f32.mxu0 0.0
      %4672 = vmatmul.mubr.f32.gmra.mxu0 %v4475
      %v4673 = vpop.f32.mrf.mxu0
      %v4674 = vadd.f32 0.0, %v4673
      %v4675 = vpop.f32.mrf.mxu0
      %4676 = vmatprep.mubr.f32.mxu0 0.0
      %4677 = vmatmul.mubr.f32.gmra.mxu0 %v4478
      %v4678 = vpop.f32.mrf.mxu0
      %v4679 = vadd.f32 0.0, %v4678
      %v4680 = vpop.f32.mrf.mxu0
      %4681 = vmatprep.mubr.f32.mxu0 0.0
      %4682 = vmatmul.mubr.f32.gmra.mxu0 %v4481
      %v4683 = vpop.f32.mrf.mxu0
      %v4684 = vadd.f32 0.0, %v4683
      %v4685 = vpop.f32.mrf.mxu0
      %4686 = vmatprep.mubr.f32.mxu0 0.0
      %4687 = vmatmul.mubr.f32.gmra.mxu0 %v4484
      %v4688 = vpop.f32.mrf.mxu0
      %v4689 = vadd.f32 0.0, %v4688
      %v4690 = vpop.f32.mrf.mxu0
      %4691 = vmatprep.mubr.f32.mxu0 0.0
      %4692 = vmatmul.mubr.f32.gmra.mxu0 %v4487
      %v4693 = vpop.f32.mrf.mxu0
      %v4694 = vadd.f32 0.0, %v4693
      %v4695 = vpop.f32.mrf.mxu0
      %4696 = vmatprep.mubr.f32.mxu0 0.0
      %4697 = vmatmul.mubr.f32.gmra.mxu0 %v4490
      %v4698 = vpop.f32.mrf.mxu0
      %v4699 = vadd.f32 0.0, %v4698
      %v4700 = vpop.f32.mrf.mxu0
      %4701 = vmatprep.mubr.f32.mxu0 0.0
      %4702 = vmatmul.mubr.f32.gmra.mxu0 %v4493
      %v4703 = vpop.f32.mrf.mxu0
      %v4704 = vadd.f32 0.0, %v4703
      %v4705 = vpop.f32.mrf.mxu0
      %4706 = vmatprep.mubr.f32.mxu0 0.0
      %4707 = vmatmul.mubr.f32.gmra.mxu0 %v4496
      %v4708 = vpop.f32.mrf.mxu0
      %v4709 = vadd.f32 0.0, %v4708
      %v4710 = vpop.f32.mrf.mxu0
      %4711 = vmatprep.mubr.f32.mxu0 0.0
      %4712 = vmatmul.mubr.f32.gmra.mxu0 %v4499
      %v4713 = vpop.f32.mrf.mxu0
      %v4714 = vadd.f32 0.0, %v4713
      %v4715 = vpop.f32.mrf.mxu0
      %4716 = vmatprep.mubr.f32.mxu0 0.0
      %4717 = vmatmul.mubr.f32.gmra.mxu0 %v4502
      %v4718 = vpop.f32.mrf.mxu0
      %v4719 = vadd.f32 0.0, %v4718
      %v4720 = vpop.f32.mrf.mxu0
      %4721 = vmatprep.mubr.f32.mxu0 0.0
      %4722 = vmatmul.mubr.f32.gmra.mxu0 %v4505
      %v4723 = vpop.f32.mrf.mxu0
      %v4724 = vadd.f32 0.0, %v4723
      %v4725 = vpop.f32.mrf.mxu0
      %4726 = vmatprep.mubr.f32.mxu0 0.0
      %4727 = vmatmul.mubr.f32.gmra.mxu0 %v4508
      %v4728 = vpop.f32.mrf.mxu0
      %v4729 = vadd.f32 0.0, %v4728
      %v4730 = vpop.f32.mrf.mxu0
      %4731 = vmatprep.mubr.f32.mxu0 0.0
      %4732 = vmatmul.mubr.f32.gmra.mxu0 %v4511
      %v4733 = vpop.f32.mrf.mxu0
      %v4734 = vadd.f32 0.0, %v4733
      %v4735 = vpop.f32.mrf.mxu0
      %4736 = vmatprep.mubr.f32.mxu0 0.0
      %4737 = vmatmul.mubr.f32.gmra.mxu0 %v4514
      %v4738 = vpop.f32.mrf.mxu0
      %v4739 = vadd.f32 0.0, %v4738
      %v4740 = vpop.f32.mrf.mxu0
      %4741 = vmatprep.mubr.f32.mxu0 0.0
      %4742 = vmatmul.mubr.f32.gmra.mxu0 %v4517
      %v4743 = vpop.f32.mrf.mxu0
      %v4744 = vadd.f32 0.0, %v4743
      %v4745 = vpop.f32.mrf.mxu0
      %4746 = vdwg.mxu0
      %v4747 = vadd.f32 %v4357, %v4589
      %v4748 = vadd.f32 %v4358, %v4594
      %v4749 = vadd.f32 %v4359, %v4599
      %v4750 = vadd.f32 %v4360, %v4604
      %v4751 = vadd.f32 %v4361, %v4609
      %v4752 = vadd.f32 %v4362, %v4614
      %v4753 = vadd.f32 %v4363, %v4619
      %v4754 = vadd.f32 %v4364, %v4624
      %v4755 = vadd.f32 %v4365, %v4629
      %v4756 = vadd.f32 %v4366, %v4634
      %v4757 = vadd.f32 %v4367, %v4639
      %v4758 = vadd.f32 %v4368, %v4644
      %v4759 = vadd.f32 %v4369, %v4649
      %v4760 = vadd.f32 %v4370, %v4654
      %v4761 = vadd.f32 %v4371, %v4659
      %v4762 = vadd.f32 %v4372, %v4664
      %v4763 = vadd.f32 %v4373, %v4669
      %v4764 = vadd.f32 %v4374, %v4674
      %v4765 = vadd.f32 %v4375, %v4679
      %v4766 = vadd.f32 %v4376, %v4684
      %v4767 = vadd.f32 %v4377, %v4689
      %v4768 = vadd.f32 %v4378, %v4694
      %v4769 = vadd.f32 %v4379, %v4699
      %v4770 = vadd.f32 %v4380, %v4704
      %v4771 = vadd.f32 %v4381, %v4709
      %v4772 = vadd.f32 %v4382, %v4714
      %v4773 = vadd.f32 %v4383, %v4719
      %v4774 = vadd.f32 %v4384, %v4724
      %v4775 = vadd.f32 %v4385, %v4729
      %v4776 = vadd.f32 %v4386, %v4734
      %v4777 = vadd.f32 %v4387, %v4739
      %v4778 = vadd.f32 %v4388, %v4744
      %s4779 = scalar_lea.vmem [#allocation2], 160
      %v4780 = vld [vmem:[%s4779] sm:$0xff]
      %v4781 = vld [vmem:[%s4779 + $0x10] sm:$0xff]
      %v4782 = vld [vmem:[%s4779 + $0x20] sm:$0xff]
      %v4783 = vld [vmem:[%s4779 + $0x30] sm:$0xff]
      %v4784 = vld [vmem:[%s4779 + $0x40] sm:$0xff]
      %v4785 = vld [vmem:[%s4779 + $0x50] sm:$0xff]
      %v4786 = vld [vmem:[%s4779 + $0x60] sm:$0xff]
      %v4787 = vld [vmem:[%s4779 + $0x70] sm:$0xff]
      %v4788 = vld [vmem:[%s4779 + $0xa0] sm:$0xff]
      %v4789 = vld [vmem:[%s4779 + $0xb0] sm:$0xff]
      %v4790 = vld [vmem:[%s4779 + $0xc0] sm:$0xff]
      %v4791 = vld [vmem:[%s4779 + $0xd0] sm:$0xff]
      %v4792 = vld [vmem:[%s4779 + $0xe0] sm:$0xff]
      %v4793 = vld [vmem:[%s4779 + $0xf0] sm:$0xff]
      %v4794 = vld [vmem:[%s4779 + $0x100] sm:$0xff]
      %v4795 = vld [vmem:[%s4779 + $0x110] sm:$0xff]
      %v4796 = vld [vmem:[%s4779 + $0x140] sm:$0xff]
      %v4797 = vld [vmem:[%s4779 + $0x150] sm:$0xff]
      %v4798 = vld [vmem:[%s4779 + $0x160] sm:$0xff]
      %v4799 = vld [vmem:[%s4779 + $0x170] sm:$0xff]
      %v4800 = vld [vmem:[%s4779 + $0x180] sm:$0xff]
      %v4801 = vld [vmem:[%s4779 + $0x190] sm:$0xff]
      %v4802 = vld [vmem:[%s4779 + $0x1a0] sm:$0xff]
      %v4803 = vld [vmem:[%s4779 + $0x1b0] sm:$0xff]
      %v4804 = vld [vmem:[%s4779 + $0x1e0] sm:$0xff]
      %v4805 = vld [vmem:[%s4779 + $0x1f0] sm:$0xff]
      %v4806 = vld [vmem:[%s4779 + $0x200] sm:$0xff]
      %v4807 = vld [vmem:[%s4779 + $0x210] sm:$0xff]
      %v4808 = vld [vmem:[%s4779 + $0x220] sm:$0xff]
      %v4809 = vld [vmem:[%s4779 + $0x230] sm:$0xff]
      %v4810 = vld [vmem:[%s4779 + $0x240] sm:$0xff]
      %v4811 = vld [vmem:[%s4779 + $0x250] sm:$0xff]
      %s4812 = scalar_lea.vmem %s5, 18
      %v4813 = vld [vmem:[%s4812] sm:$0x3]
      %v4815 = vsel %vm451, %v4780, 0
      %v4818 = vsel %vm451, %v4781, 0
      %v4821 = vsel %vm451, %v4782, 0
      %v4824 = vsel %vm451, %v4783, 0
      %v4827 = vsel %vm451, %v4784, 0
      %v4830 = vsel %vm451, %v4785, 0
      %v4833 = vsel %vm451, %v4786, 0
      %v4836 = vsel %vm451, %v4787, 0
      %v4839 = vsel %vm451, %v4788, 0
      %v4842 = vsel %vm451, %v4789, 0
      %v4845 = vsel %vm451, %v4790, 0
      %v4848 = vsel %vm451, %v4791, 0
      %v4851 = vsel %vm451, %v4792, 0
      %v4854 = vsel %vm451, %v4793, 0
      %v4857 = vsel %vm451, %v4794, 0
      %v4860 = vsel %vm451, %v4795, 0
      %v4863 = vsel %vm451, %v4796, 0
      %v4866 = vsel %vm451, %v4797, 0
      %v4869 = vsel %vm451, %v4798, 0
      %v4872 = vsel %vm451, %v4799, 0
      %v4875 = vsel %vm451, %v4800, 0
      %v4878 = vsel %vm451, %v4801, 0
      %v4881 = vsel %vm451, %v4802, 0
      %v4884 = vsel %vm451, %v4803, 0
      %v4887 = vsel %vm451, %v4804, 0
      %v4890 = vsel %vm451, %v4805, 0
      %v4893 = vsel %vm451, %v4806, 0
      %v4896 = vsel %vm451, %v4807, 0
      %v4899 = vsel %vm451, %v4808, 0
      %v4902 = vsel %vm451, %v4809, 0
      %v4905 = vsel %vm451, %v4810, 0
      %v4908 = vsel %vm451, %v4811, 0
      %v4911 = vsel %vm1495, %v4813, 0
      %4913 = vmatprep.subr.mxu0 0.0
      %4914 = vmatpush1.msra.mxu0 0.0
      %4915 = vmatprep.subr.mxu0 0.0
      %4916 = vmatpush1.msra.mxu0 0.0
      %4917 = vmatprep.subr.mxu0 0.0
      %4918 = vmatpush1.msra.mxu0 0.0
      %4919 = vmatprep.subr.mxu0 0.0
      %4920 = vmatpush1.msra.mxu0 0.0
      %4921 = vmatprep.subr.mxu0 0.0
      %4922 = vmatpush1.msra.mxu0 0.0
      %4923 = vmatprep.subr.mxu0 0.0
      %4924 = vmatpush1.msra.mxu0 0.0
      %4925 = vmatprep.subr.mxu0 0.0
      %4926 = vmatpush1.msra.mxu0 0.0
      %4927 = vmatprep.subr.mxu0 0.0
      %4928 = vmatpush1.msra.mxu0 0.0
      %4929 = vmatprep.subr.mxu0 0.0
      %4930 = vmatpush1.msra.mxu0 0.0
      %4931 = vmatprep.subr.mxu0 0.0
      %4932 = vmatpush1.msra.mxu0 0.0
      %4933 = vmatprep.subr.mxu0 0.0
      %4934 = vmatpush1.msra.mxu0 0.0
      %4935 = vmatprep.subr.mxu0 0.0
      %4936 = vmatpush1.msra.mxu0 0.0
      %4937 = vmatprep.subr.mxu0 0.0
      %4938 = vmatpush1.msra.mxu0 0.0
      %4939 = vmatprep.subr.mxu0 0.0
      %4940 = vmatpush1.msra.mxu0 0.0
      %4941 = vmatprep.subr.mxu0 0.0
      %4942 = vmatpush1.msra.mxu0 0.0
      %4943 = vmatprep.subr.mxu0 0.0
      %4944 = vmatpush1.msra.mxu0 %v4911
      %4945 = vmatprep.subr.mxu0 0.0
      %4946 = vmatpush2.msra.mxu0 0.0
      %4947 = vmatprep.subr.mxu0 0.0
      %4948 = vmatpush2.msra.mxu0 0.0
      %4949 = vmatprep.subr.mxu0 0.0
      %4950 = vmatpush2.msra.mxu0 0.0
      %4951 = vmatprep.subr.mxu0 0.0
      %4952 = vmatpush2.msra.mxu0 0.0
      %4953 = vmatprep.subr.mxu0 0.0
      %4954 = vmatpush2.msra.mxu0 0.0
      %4955 = vmatprep.subr.mxu0 0.0
      %4956 = vmatpush2.msra.mxu0 0.0
      %4957 = vmatprep.subr.mxu0 0.0
      %4958 = vmatpush2.msra.mxu0 0.0
      %4959 = vmatprep.subr.mxu0 0.0
      %4960 = vmatpush2.msra.mxu0 0.0
      %4961 = vmatprep.subr.mxu0 0.0
      %4962 = vmatpush2.msra.mxu0 0.0
      %4963 = vmatprep.subr.mxu0 0.0
      %4964 = vmatpush2.msra.mxu0 0.0
      %4965 = vmatprep.subr.mxu0 0.0
      %4966 = vmatpush2.msra.mxu0 0.0
      %4967 = vmatprep.subr.mxu0 0.0
      %4968 = vmatpush2.msra.mxu0 0.0
      %4969 = vmatprep.subr.mxu0 0.0
      %4970 = vmatpush2.msra.mxu0 0.0
      %4971 = vmatprep.subr.mxu0 0.0
      %4972 = vmatpush2.msra.mxu0 0.0
      %4973 = vmatprep.subr.mxu0 0.0
      %4974 = vmatpush2.msra.mxu0 0.0
      %4975 = vmatprep.subr.mxu0 0.0
      %4976 = vmatpush2.msra.mxu0 0.0
      %4977 = vmatprep.mubr.f32.mxu0 0.0
      %4978 = vmatmul.mubr.f32.gmra.mxu0 %v4815
      %v4979 = vpop.f32.mrf.mxu0
      %v4980 = vadd.f32 0.0, %v4979
      %v4981 = vpop.f32.mrf.mxu0
      %4982 = vmatprep.mubr.f32.mxu0 0.0
      %4983 = vmatmul.mubr.f32.gmra.mxu0 %v4818
      %v4984 = vpop.f32.mrf.mxu0
      %v4985 = vadd.f32 0.0, %v4984
      %v4986 = vpop.f32.mrf.mxu0
      %4987 = vmatprep.mubr.f32.mxu0 0.0
      %4988 = vmatmul.mubr.f32.gmra.mxu0 %v4821
      %v4989 = vpop.f32.mrf.mxu0
      %v4990 = vadd.f32 0.0, %v4989
      %v4991 = vpop.f32.mrf.mxu0
      %4992 = vmatprep.mubr.f32.mxu0 0.0
      %4993 = vmatmul.mubr.f32.gmra.mxu0 %v4824
      %v4994 = vpop.f32.mrf.mxu0
      %v4995 = vadd.f32 0.0, %v4994
      %v4996 = vpop.f32.mrf.mxu0
      %4997 = vmatprep.mubr.f32.mxu0 0.0
      %4998 = vmatmul.mubr.f32.gmra.mxu0 %v4827
      %v4999 = vpop.f32.mrf.mxu0
      %v5000 = vadd.f32 0.0, %v4999
      %v5001 = vpop.f32.mrf.mxu0
      %5002 = vmatprep.mubr.f32.mxu0 0.0
      %5003 = vmatmul.mubr.f32.gmra.mxu0 %v4830
      %v5004 = vpop.f32.mrf.mxu0
      %v5005 = vadd.f32 0.0, %v5004
      %v5006 = vpop.f32.mrf.mxu0
      %5007 = vmatprep.mubr.f32.mxu0 0.0
      %5008 = vmatmul.mubr.f32.gmra.mxu0 %v4833
      %v5009 = vpop.f32.mrf.mxu0
      %v5010 = vadd.f32 0.0, %v5009
      %v5011 = vpop.f32.mrf.mxu0
      %5012 = vmatprep.mubr.f32.mxu0 0.0
      %5013 = vmatmul.mubr.f32.gmra.mxu0 %v4836
      %v5014 = vpop.f32.mrf.mxu0
      %v5015 = vadd.f32 0.0, %v5014
      %v5016 = vpop.f32.mrf.mxu0
      %5017 = vmatprep.mubr.f32.mxu0 0.0
      %5018 = vmatmul.mubr.f32.gmra.mxu0 %v4839
      %v5019 = vpop.f32.mrf.mxu0
      %v5020 = vadd.f32 0.0, %v5019
      %v5021 = vpop.f32.mrf.mxu0
      %5022 = vmatprep.mubr.f32.mxu0 0.0
      %5023 = vmatmul.mubr.f32.gmra.mxu0 %v4842
      %v5024 = vpop.f32.mrf.mxu0
      %v5025 = vadd.f32 0.0, %v5024
      %v5026 = vpop.f32.mrf.mxu0
      %5027 = vmatprep.mubr.f32.mxu0 0.0
      %5028 = vmatmul.mubr.f32.gmra.mxu0 %v4845
      %v5029 = vpop.f32.mrf.mxu0
      %v5030 = vadd.f32 0.0, %v5029
      %v5031 = vpop.f32.mrf.mxu0
      %5032 = vmatprep.mubr.f32.mxu0 0.0
      %5033 = vmatmul.mubr.f32.gmra.mxu0 %v4848
      %v5034 = vpop.f32.mrf.mxu0
      %v5035 = vadd.f32 0.0, %v5034
      %v5036 = vpop.f32.mrf.mxu0
      %5037 = vmatprep.mubr.f32.mxu0 0.0
      %5038 = vmatmul.mubr.f32.gmra.mxu0 %v4851
      %v5039 = vpop.f32.mrf.mxu0
      %v5040 = vadd.f32 0.0, %v5039
      %v5041 = vpop.f32.mrf.mxu0
      %5042 = vmatprep.mubr.f32.mxu0 0.0
      %5043 = vmatmul.mubr.f32.gmra.mxu0 %v4854
      %v5044 = vpop.f32.mrf.mxu0
      %v5045 = vadd.f32 0.0, %v5044
      %v5046 = vpop.f32.mrf.mxu0
      %5047 = vmatprep.mubr.f32.mxu0 0.0
      %5048 = vmatmul.mubr.f32.gmra.mxu0 %v4857
      %v5049 = vpop.f32.mrf.mxu0
      %v5050 = vadd.f32 0.0, %v5049
      %v5051 = vpop.f32.mrf.mxu0
      %5052 = vmatprep.mubr.f32.mxu0 0.0
      %5053 = vmatmul.mubr.f32.gmra.mxu0 %v4860
      %v5054 = vpop.f32.mrf.mxu0
      %v5055 = vadd.f32 0.0, %v5054
      %v5056 = vpop.f32.mrf.mxu0
      %5057 = vmatprep.mubr.f32.mxu0 0.0
      %5058 = vmatmul.mubr.f32.gmra.mxu0 %v4863
      %v5059 = vpop.f32.mrf.mxu0
      %v5060 = vadd.f32 0.0, %v5059
      %v5061 = vpop.f32.mrf.mxu0
      %5062 = vmatprep.mubr.f32.mxu0 0.0
      %5063 = vmatmul.mubr.f32.gmra.mxu0 %v4866
      %v5064 = vpop.f32.mrf.mxu0
      %v5065 = vadd.f32 0.0, %v5064
      %v5066 = vpop.f32.mrf.mxu0
      %5067 = vmatprep.mubr.f32.mxu0 0.0
      %5068 = vmatmul.mubr.f32.gmra.mxu0 %v4869
      %v5069 = vpop.f32.mrf.mxu0
      %v5070 = vadd.f32 0.0, %v5069
      %v5071 = vpop.f32.mrf.mxu0
      %5072 = vmatprep.mubr.f32.mxu0 0.0
      %5073 = vmatmul.mubr.f32.gmra.mxu0 %v4872
      %v5074 = vpop.f32.mrf.mxu0
      %v5075 = vadd.f32 0.0, %v5074
      %v5076 = vpop.f32.mrf.mxu0
      %5077 = vmatprep.mubr.f32.mxu0 0.0
      %5078 = vmatmul.mubr.f32.gmra.mxu0 %v4875
      %v5079 = vpop.f32.mrf.mxu0
      %v5080 = vadd.f32 0.0, %v5079
      %v5081 = vpop.f32.mrf.mxu0
      %5082 = vmatprep.mubr.f32.mxu0 0.0
      %5083 = vmatmul.mubr.f32.gmra.mxu0 %v4878
      %v5084 = vpop.f32.mrf.mxu0
      %v5085 = vadd.f32 0.0, %v5084
      %v5086 = vpop.f32.mrf.mxu0
      %5087 = vmatprep.mubr.f32.mxu0 0.0
      %5088 = vmatmul.mubr.f32.gmra.mxu0 %v4881
      %v5089 = vpop.f32.mrf.mxu0
      %v5090 = vadd.f32 0.0, %v5089
      %v5091 = vpop.f32.mrf.mxu0
      %5092 = vmatprep.mubr.f32.mxu0 0.0
      %5093 = vmatmul.mubr.f32.gmra.mxu0 %v4884
      %v5094 = vpop.f32.mrf.mxu0
      %v5095 = vadd.f32 0.0, %v5094
      %v5096 = vpop.f32.mrf.mxu0
      %5097 = vmatprep.mubr.f32.mxu0 0.0
      %5098 = vmatmul.mubr.f32.gmra.mxu0 %v4887
      %v5099 = vpop.f32.mrf.mxu0
      %v5100 = vadd.f32 0.0, %v5099
      %v5101 = vpop.f32.mrf.mxu0
      %5102 = vmatprep.mubr.f32.mxu0 0.0
      %5103 = vmatmul.mubr.f32.gmra.mxu0 %v4890
      %v5104 = vpop.f32.mrf.mxu0
      %v5105 = vadd.f32 0.0, %v5104
      %v5106 = vpop.f32.mrf.mxu0
      %5107 = vmatprep.mubr.f32.mxu0 0.0
      %5108 = vmatmul.mubr.f32.gmra.mxu0 %v4893
      %v5109 = vpop.f32.mrf.mxu0
      %v5110 = vadd.f32 0.0, %v5109
      %v5111 = vpop.f32.mrf.mxu0
      %5112 = vmatprep.mubr.f32.mxu0 0.0
      %5113 = vmatmul.mubr.f32.gmra.mxu0 %v4896
      %v5114 = vpop.f32.mrf.mxu0
      %v5115 = vadd.f32 0.0, %v5114
      %v5116 = vpop.f32.mrf.mxu0
      %5117 = vmatprep.mubr.f32.mxu0 0.0
      %5118 = vmatmul.mubr.f32.gmra.mxu0 %v4899
      %v5119 = vpop.f32.mrf.mxu0
      %v5120 = vadd.f32 0.0, %v5119
      %v5121 = vpop.f32.mrf.mxu0
      %5122 = vmatprep.mubr.f32.mxu0 0.0
      %5123 = vmatmul.mubr.f32.gmra.mxu0 %v4902
      %v5124 = vpop.f32.mrf.mxu0
      %v5125 = vadd.f32 0.0, %v5124
      %v5126 = vpop.f32.mrf.mxu0
      %5127 = vmatprep.mubr.f32.mxu0 0.0
      %5128 = vmatmul.mubr.f32.gmra.mxu0 %v4905
      %v5129 = vpop.f32.mrf.mxu0
      %v5130 = vadd.f32 0.0, %v5129
      %v5131 = vpop.f32.mrf.mxu0
      %5132 = vmatprep.mubr.f32.mxu0 0.0
      %5133 = vmatmul.mubr.f32.gmra.mxu0 %v4908
      %v5134 = vpop.f32.mrf.mxu0
      %v5135 = vadd.f32 0.0, %v5134
      %v5136 = vpop.f32.mrf.mxu0
      %5137 = vdwg.mxu0
      %v5138 = vadd.f32 %v4747, %v4980
      %v5139 = vadd.f32 %v4748, %v4985
      %v5140 = vadd.f32 %v4749, %v4990
      %v5141 = vadd.f32 %v4750, %v4995
      %v5142 = vadd.f32 %v4751, %v5000
      %v5143 = vadd.f32 %v4752, %v5005
      %v5144 = vadd.f32 %v4753, %v5010
      %v5145 = vadd.f32 %v4754, %v5015
      %v5146 = vadd.f32 %v4755, %v5020
      %v5147 = vadd.f32 %v4756, %v5025
      %v5148 = vadd.f32 %v4757, %v5030
      %v5149 = vadd.f32 %v4758, %v5035
      %v5150 = vadd.f32 %v4759, %v5040
      %v5151 = vadd.f32 %v4760, %v5045
      %v5152 = vadd.f32 %v4761, %v5050
      %v5153 = vadd.f32 %v4762, %v5055
      %v5154 = vadd.f32 %v4763, %v5060
      %v5155 = vadd.f32 %v4764, %v5065
      %v5156 = vadd.f32 %v4765, %v5070
      %v5157 = vadd.f32 %v4766, %v5075
      %v5158 = vadd.f32 %v4767, %v5080
      %v5159 = vadd.f32 %v4768, %v5085
      %v5160 = vadd.f32 %v4769, %v5090
      %v5161 = vadd.f32 %v4770, %v5095
      %v5162 = vadd.f32 %v4771, %v5100
      %v5163 = vadd.f32 %v4772, %v5105
      %v5164 = vadd.f32 %v4773, %v5110
      %v5165 = vadd.f32 %v4774, %v5115
      %v5166 = vadd.f32 %v4775, %v5120
      %v5167 = vadd.f32 %v4776, %v5125
      %v5168 = vadd.f32 %v4777, %v5130
      %v5169 = vadd.f32 %v4778, %v5135
      %v5170 = vld [vmem:[%s4779 + $0x1] sm:$0xff]
      %v5171 = vld [vmem:[%s4779 + $0x11] sm:$0xff]
      %v5172 = vld [vmem:[%s4779 + $0x21] sm:$0xff]
      %v5173 = vld [vmem:[%s4779 + $0x31] sm:$0xff]
      %v5174 = vld [vmem:[%s4779 + $0x41] sm:$0xff]
      %v5175 = vld [vmem:[%s4779 + $0x51] sm:$0xff]
      %v5176 = vld [vmem:[%s4779 + $0x61] sm:$0xff]
      %v5177 = vld [vmem:[%s4779 + $0x71] sm:$0xff]
      %v5178 = vld [vmem:[%s4779 + $0xa1] sm:$0xff]
      %v5179 = vld [vmem:[%s4779 + $0xb1] sm:$0xff]
      %v5180 = vld [vmem:[%s4779 + $0xc1] sm:$0xff]
      %v5181 = vld [vmem:[%s4779 + $0xd1] sm:$0xff]
      %v5182 = vld [vmem:[%s4779 + $0xe1] sm:$0xff]
      %v5183 = vld [vmem:[%s4779 + $0xf1] sm:$0xff]
      %v5184 = vld [vmem:[%s4779 + $0x101] sm:$0xff]
      %v5185 = vld [vmem:[%s4779 + $0x111] sm:$0xff]
      %v5186 = vld [vmem:[%s4779 + $0x141] sm:$0xff]
      %v5187 = vld [vmem:[%s4779 + $0x151] sm:$0xff]
      %v5188 = vld [vmem:[%s4779 + $0x161] sm:$0xff]
      %v5189 = vld [vmem:[%s4779 + $0x171] sm:$0xff]
      %v5190 = vld [vmem:[%s4779 + $0x181] sm:$0xff]
      %v5191 = vld [vmem:[%s4779 + $0x191] sm:$0xff]
      %v5192 = vld [vmem:[%s4779 + $0x1a1] sm:$0xff]
      %v5193 = vld [vmem:[%s4779 + $0x1b1] sm:$0xff]
      %v5194 = vld [vmem:[%s4779 + $0x1e1] sm:$0xff]
      %v5195 = vld [vmem:[%s4779 + $0x1f1] sm:$0xff]
      %v5196 = vld [vmem:[%s4779 + $0x201] sm:$0xff]
      %v5197 = vld [vmem:[%s4779 + $0x211] sm:$0xff]
      %v5198 = vld [vmem:[%s4779 + $0x221] sm:$0xff]
      %v5199 = vld [vmem:[%s4779 + $0x231] sm:$0xff]
      %v5200 = vld [vmem:[%s4779 + $0x241] sm:$0xff]
      %v5201 = vld [vmem:[%s4779 + $0x251] sm:$0xff]
      %s5202 = scalar_lea.vmem %s5, 20
      %v5203 = vld [vmem:[%s5202] sm:$0x3]
      %v5205 = vsel %vm451, %v5170, 0
      %v5208 = vsel %vm451, %v5171, 0
      %v5211 = vsel %vm451, %v5172, 0
      %v5214 = vsel %vm451, %v5173, 0
      %v5217 = vsel %vm451, %v5174, 0
      %v5220 = vsel %vm451, %v5175, 0
      %v5223 = vsel %vm451, %v5176, 0
      %v5226 = vsel %vm451, %v5177, 0
      %v5229 = vsel %vm451, %v5178, 0
      %v5232 = vsel %vm451, %v5179, 0
      %v5235 = vsel %vm451, %v5180, 0
      %v5238 = vsel %vm451, %v5181, 0
      %v5241 = vsel %vm451, %v5182, 0
      %v5244 = vsel %vm451, %v5183, 0
      %v5247 = vsel %vm451, %v5184, 0
      %v5250 = vsel %vm451, %v5185, 0
      %v5253 = vsel %vm451, %v5186, 0
      %v5256 = vsel %vm451, %v5187, 0
      %v5259 = vsel %vm451, %v5188, 0
      %v5262 = vsel %vm451, %v5189, 0
      %v5265 = vsel %vm451, %v5190, 0
      %v5268 = vsel %vm451, %v5191, 0
      %v5271 = vsel %vm451, %v5192, 0
      %v5274 = vsel %vm451, %v5193, 0
      %v5277 = vsel %vm451, %v5194, 0
      %v5280 = vsel %vm451, %v5195, 0
      %v5283 = vsel %vm451, %v5196, 0
      %v5286 = vsel %vm451, %v5197, 0
      %v5289 = vsel %vm451, %v5198, 0
      %v5292 = vsel %vm451, %v5199, 0
      %v5295 = vsel %vm451, %v5200, 0
      %v5298 = vsel %vm451, %v5201, 0
      %v5301 = vsel %vm1495, %v5203, 0
      %5303 = vmatprep.subr.mxu0 0.0
      %5304 = vmatpush1.msra.mxu0 0.0
      %5305 = vmatprep.subr.mxu0 0.0
      %5306 = vmatpush1.msra.mxu0 0.0
      %5307 = vmatprep.subr.mxu0 0.0
      %5308 = vmatpush1.msra.mxu0 0.0
      %5309 = vmatprep.subr.mxu0 0.0
      %5310 = vmatpush1.msra.mxu0 0.0
      %5311 = vmatprep.subr.mxu0 0.0
      %5312 = vmatpush1.msra.mxu0 0.0
      %5313 = vmatprep.subr.mxu0 0.0
      %5314 = vmatpush1.msra.mxu0 0.0
      %5315 = vmatprep.subr.mxu0 0.0
      %5316 = vmatpush1.msra.mxu0 0.0
      %5317 = vmatprep.subr.mxu0 0.0
      %5318 = vmatpush1.msra.mxu0 0.0
      %5319 = vmatprep.subr.mxu0 0.0
      %5320 = vmatpush1.msra.mxu0 0.0
      %5321 = vmatprep.subr.mxu0 0.0
      %5322 = vmatpush1.msra.mxu0 0.0
      %5323 = vmatprep.subr.mxu0 0.0
      %5324 = vmatpush1.msra.mxu0 0.0
      %5325 = vmatprep.subr.mxu0 0.0
      %5326 = vmatpush1.msra.mxu0 0.0
      %5327 = vmatprep.subr.mxu0 0.0
      %5328 = vmatpush1.msra.mxu0 0.0
      %5329 = vmatprep.subr.mxu0 0.0
      %5330 = vmatpush1.msra.mxu0 0.0
      %5331 = vmatprep.subr.mxu0 0.0
      %5332 = vmatpush1.msra.mxu0 0.0
      %5333 = vmatprep.subr.mxu0 0.0
      %5334 = vmatpush1.msra.mxu0 %v5301
      %5335 = vmatprep.subr.mxu0 0.0
      %5336 = vmatpush2.msra.mxu0 0.0
      %5337 = vmatprep.subr.mxu0 0.0
      %5338 = vmatpush2.msra.mxu0 0.0
      %5339 = vmatprep.subr.mxu0 0.0
      %5340 = vmatpush2.msra.mxu0 0.0
      %5341 = vmatprep.subr.mxu0 0.0
      %5342 = vmatpush2.msra.mxu0 0.0
      %5343 = vmatprep.subr.mxu0 0.0
      %5344 = vmatpush2.msra.mxu0 0.0
      %5345 = vmatprep.subr.mxu0 0.0
      %5346 = vmatpush2.msra.mxu0 0.0
      %5347 = vmatprep.subr.mxu0 0.0
      %5348 = vmatpush2.msra.mxu0 0.0
      %5349 = vmatprep.subr.mxu0 0.0
      %5350 = vmatpush2.msra.mxu0 0.0
      %5351 = vmatprep.subr.mxu0 0.0
      %5352 = vmatpush2.msra.mxu0 0.0
      %5353 = vmatprep.subr.mxu0 0.0
      %5354 = vmatpush2.msra.mxu0 0.0
      %5355 = vmatprep.subr.mxu0 0.0
      %5356 = vmatpush2.msra.mxu0 0.0
      %5357 = vmatprep.subr.mxu0 0.0
      %5358 = vmatpush2.msra.mxu0 0.0
      %5359 = vmatprep.subr.mxu0 0.0
      %5360 = vmatpush2.msra.mxu0 0.0
      %5361 = vmatprep.subr.mxu0 0.0
      %5362 = vmatpush2.msra.mxu0 0.0
      %5363 = vmatprep.subr.mxu0 0.0
      %5364 = vmatpush2.msra.mxu0 0.0
      %5365 = vmatprep.subr.mxu0 0.0
      %5366 = vmatpush2.msra.mxu0 0.0
      %5367 = vmatprep.mubr.f32.mxu0 0.0
      %5368 = vmatmul.mubr.f32.gmra.mxu0 %v5205
      %v5369 = vpop.f32.mrf.mxu0
      %v5370 = vadd.f32 0.0, %v5369
      %v5371 = vpop.f32.mrf.mxu0
      %5372 = vmatprep.mubr.f32.mxu0 0.0
      %5373 = vmatmul.mubr.f32.gmra.mxu0 %v5208
      %v5374 = vpop.f32.mrf.mxu0
      %v5375 = vadd.f32 0.0, %v5374
      %v5376 = vpop.f32.mrf.mxu0
      %5377 = vmatprep.mubr.f32.mxu0 0.0
      %5378 = vmatmul.mubr.f32.gmra.mxu0 %v5211
      %v5379 = vpop.f32.mrf.mxu0
      %v5380 = vadd.f32 0.0, %v5379
      %v5381 = vpop.f32.mrf.mxu0
      %5382 = vmatprep.mubr.f32.mxu0 0.0
      %5383 = vmatmul.mubr.f32.gmra.mxu0 %v5214
      %v5384 = vpop.f32.mrf.mxu0
      %v5385 = vadd.f32 0.0, %v5384
      %v5386 = vpop.f32.mrf.mxu0
      %5387 = vmatprep.mubr.f32.mxu0 0.0
      %5388 = vmatmul.mubr.f32.gmra.mxu0 %v5217
      %v5389 = vpop.f32.mrf.mxu0
      %v5390 = vadd.f32 0.0, %v5389
      %v5391 = vpop.f32.mrf.mxu0
      %5392 = vmatprep.mubr.f32.mxu0 0.0
      %5393 = vmatmul.mubr.f32.gmra.mxu0 %v5220
      %v5394 = vpop.f32.mrf.mxu0
      %v5395 = vadd.f32 0.0, %v5394
      %v5396 = vpop.f32.mrf.mxu0
      %5397 = vmatprep.mubr.f32.mxu0 0.0
      %5398 = vmatmul.mubr.f32.gmra.mxu0 %v5223
      %v5399 = vpop.f32.mrf.mxu0
      %v5400 = vadd.f32 0.0, %v5399
      %v5401 = vpop.f32.mrf.mxu0
      %5402 = vmatprep.mubr.f32.mxu0 0.0
      %5403 = vmatmul.mubr.f32.gmra.mxu0 %v5226
      %v5404 = vpop.f32.mrf.mxu0
      %v5405 = vadd.f32 0.0, %v5404
      %v5406 = vpop.f32.mrf.mxu0
      %5407 = vmatprep.mubr.f32.mxu0 0.0
      %5408 = vmatmul.mubr.f32.gmra.mxu0 %v5229
      %v5409 = vpop.f32.mrf.mxu0
      %v5410 = vadd.f32 0.0, %v5409
      %v5411 = vpop.f32.mrf.mxu0
      %5412 = vmatprep.mubr.f32.mxu0 0.0
      %5413 = vmatmul.mubr.f32.gmra.mxu0 %v5232
      %v5414 = vpop.f32.mrf.mxu0
      %v5415 = vadd.f32 0.0, %v5414
      %v5416 = vpop.f32.mrf.mxu0
      %5417 = vmatprep.mubr.f32.mxu0 0.0
      %5418 = vmatmul.mubr.f32.gmra.mxu0 %v5235
      %v5419 = vpop.f32.mrf.mxu0
      %v5420 = vadd.f32 0.0, %v5419
      %v5421 = vpop.f32.mrf.mxu0
      %5422 = vmatprep.mubr.f32.mxu0 0.0
      %5423 = vmatmul.mubr.f32.gmra.mxu0 %v5238
      %v5424 = vpop.f32.mrf.mxu0
      %v5425 = vadd.f32 0.0, %v5424
      %v5426 = vpop.f32.mrf.mxu0
      %5427 = vmatprep.mubr.f32.mxu0 0.0
      %5428 = vmatmul.mubr.f32.gmra.mxu0 %v5241
      %v5429 = vpop.f32.mrf.mxu0
      %v5430 = vadd.f32 0.0, %v5429
      %v5431 = vpop.f32.mrf.mxu0
      %5432 = vmatprep.mubr.f32.mxu0 0.0
      %5433 = vmatmul.mubr.f32.gmra.mxu0 %v5244
      %v5434 = vpop.f32.mrf.mxu0
      %v5435 = vadd.f32 0.0, %v5434
      %v5436 = vpop.f32.mrf.mxu0
      %5437 = vmatprep.mubr.f32.mxu0 0.0
      %5438 = vmatmul.mubr.f32.gmra.mxu0 %v5247
      %v5439 = vpop.f32.mrf.mxu0
      %v5440 = vadd.f32 0.0, %v5439
      %v5441 = vpop.f32.mrf.mxu0
      %5442 = vmatprep.mubr.f32.mxu0 0.0
      %5443 = vmatmul.mubr.f32.gmra.mxu0 %v5250
      %v5444 = vpop.f32.mrf.mxu0
      %v5445 = vadd.f32 0.0, %v5444
      %v5446 = vpop.f32.mrf.mxu0
      %5447 = vmatprep.mubr.f32.mxu0 0.0
      %5448 = vmatmul.mubr.f32.gmra.mxu0 %v5253
      %v5449 = vpop.f32.mrf.mxu0
      %v5450 = vadd.f32 0.0, %v5449
      %v5451 = vpop.f32.mrf.mxu0
      %5452 = vmatprep.mubr.f32.mxu0 0.0
      %5453 = vmatmul.mubr.f32.gmra.mxu0 %v5256
      %v5454 = vpop.f32.mrf.mxu0
      %v5455 = vadd.f32 0.0, %v5454
      %v5456 = vpop.f32.mrf.mxu0
      %5457 = vmatprep.mubr.f32.mxu0 0.0
      %5458 = vmatmul.mubr.f32.gmra.mxu0 %v5259
      %v5459 = vpop.f32.mrf.mxu0
      %v5460 = vadd.f32 0.0, %v5459
      %v5461 = vpop.f32.mrf.mxu0
      %5462 = vmatprep.mubr.f32.mxu0 0.0
      %5463 = vmatmul.mubr.f32.gmra.mxu0 %v5262
      %v5464 = vpop.f32.mrf.mxu0
      %v5465 = vadd.f32 0.0, %v5464
      %v5466 = vpop.f32.mrf.mxu0
      %5467 = vmatprep.mubr.f32.mxu0 0.0
      %5468 = vmatmul.mubr.f32.gmra.mxu0 %v5265
      %v5469 = vpop.f32.mrf.mxu0
      %v5470 = vadd.f32 0.0, %v5469
      %v5471 = vpop.f32.mrf.mxu0
      %5472 = vmatprep.mubr.f32.mxu0 0.0
      %5473 = vmatmul.mubr.f32.gmra.mxu0 %v5268
      %v5474 = vpop.f32.mrf.mxu0
      %v5475 = vadd.f32 0.0, %v5474
      %v5476 = vpop.f32.mrf.mxu0
      %5477 = vmatprep.mubr.f32.mxu0 0.0
      %5478 = vmatmul.mubr.f32.gmra.mxu0 %v5271
      %v5479 = vpop.f32.mrf.mxu0
      %v5480 = vadd.f32 0.0, %v5479
      %v5481 = vpop.f32.mrf.mxu0
      %5482 = vmatprep.mubr.f32.mxu0 0.0
      %5483 = vmatmul.mubr.f32.gmra.mxu0 %v5274
      %v5484 = vpop.f32.mrf.mxu0
      %v5485 = vadd.f32 0.0, %v5484
      %v5486 = vpop.f32.mrf.mxu0
      %5487 = vmatprep.mubr.f32.mxu0 0.0
      %5488 = vmatmul.mubr.f32.gmra.mxu0 %v5277
      %v5489 = vpop.f32.mrf.mxu0
      %v5490 = vadd.f32 0.0, %v5489
      %v5491 = vpop.f32.mrf.mxu0
      %5492 = vmatprep.mubr.f32.mxu0 0.0
      %5493 = vmatmul.mubr.f32.gmra.mxu0 %v5280
      %v5494 = vpop.f32.mrf.mxu0
      %v5495 = vadd.f32 0.0, %v5494
      %v5496 = vpop.f32.mrf.mxu0
      %5497 = vmatprep.mubr.f32.mxu0 0.0
      %5498 = vmatmul.mubr.f32.gmra.mxu0 %v5283
      %v5499 = vpop.f32.mrf.mxu0
      %v5500 = vadd.f32 0.0, %v5499
      %v5501 = vpop.f32.mrf.mxu0
      %5502 = vmatprep.mubr.f32.mxu0 0.0
      %5503 = vmatmul.mubr.f32.gmra.mxu0 %v5286
      %v5504 = vpop.f32.mrf.mxu0
      %v5505 = vadd.f32 0.0, %v5504
      %v5506 = vpop.f32.mrf.mxu0
      %5507 = vmatprep.mubr.f32.mxu0 0.0
      %5508 = vmatmul.mubr.f32.gmra.mxu0 %v5289
      %v5509 = vpop.f32.mrf.mxu0
      %v5510 = vadd.f32 0.0, %v5509
      %v5511 = vpop.f32.mrf.mxu0
      %5512 = vmatprep.mubr.f32.mxu0 0.0
      %5513 = vmatmul.mubr.f32.gmra.mxu0 %v5292
      %v5514 = vpop.f32.mrf.mxu0
      %v5515 = vadd.f32 0.0, %v5514
      %v5516 = vpop.f32.mrf.mxu0
      %5517 = vmatprep.mubr.f32.mxu0 0.0
      %5518 = vmatmul.mubr.f32.gmra.mxu0 %v5295
      %v5519 = vpop.f32.mrf.mxu0
      %v5520 = vadd.f32 0.0, %v5519
      %v5521 = vpop.f32.mrf.mxu0
      %5522 = vmatprep.mubr.f32.mxu0 0.0
      %5523 = vmatmul.mubr.f32.gmra.mxu0 %v5298
      %v5524 = vpop.f32.mrf.mxu0
      %v5525 = vadd.f32 0.0, %v5524
      %v5526 = vpop.f32.mrf.mxu0
      %5527 = vdwg.mxu0
      %v5528 = vadd.f32 %v5138, %v5370
      %v5529 = vadd.f32 %v5139, %v5375
      %v5530 = vadd.f32 %v5140, %v5380
      %v5531 = vadd.f32 %v5141, %v5385
      %v5532 = vadd.f32 %v5142, %v5390
      %v5533 = vadd.f32 %v5143, %v5395
      %v5534 = vadd.f32 %v5144, %v5400
      %v5535 = vadd.f32 %v5145, %v5405
      %v5536 = vadd.f32 %v5146, %v5410
      %v5537 = vadd.f32 %v5147, %v5415
      %v5538 = vadd.f32 %v5148, %v5420
      %v5539 = vadd.f32 %v5149, %v5425
      %v5540 = vadd.f32 %v5150, %v5430
      %v5541 = vadd.f32 %v5151, %v5435
      %v5542 = vadd.f32 %v5152, %v5440
      %v5543 = vadd.f32 %v5153, %v5445
      %v5544 = vadd.f32 %v5154, %v5450
      %v5545 = vadd.f32 %v5155, %v5455
      %v5546 = vadd.f32 %v5156, %v5460
      %v5547 = vadd.f32 %v5157, %v5465
      %v5548 = vadd.f32 %v5158, %v5470
      %v5549 = vadd.f32 %v5159, %v5475
      %v5550 = vadd.f32 %v5160, %v5480
      %v5551 = vadd.f32 %v5161, %v5485
      %v5552 = vadd.f32 %v5162, %v5490
      %v5553 = vadd.f32 %v5163, %v5495
      %v5554 = vadd.f32 %v5164, %v5500
      %v5555 = vadd.f32 %v5165, %v5505
      %v5556 = vadd.f32 %v5166, %v5510
      %v5557 = vadd.f32 %v5167, %v5515
      %v5558 = vadd.f32 %v5168, %v5520
      %v5559 = vadd.f32 %v5169, %v5525
      %v5560 = vld [vmem:[%s4779 + $0x2] sm:$0xff]
      %v5561 = vld [vmem:[%s4779 + $0x12] sm:$0xff]
      %v5562 = vld [vmem:[%s4779 + $0x22] sm:$0xff]
      %v5563 = vld [vmem:[%s4779 + $0x32] sm:$0xff]
      %v5564 = vld [vmem:[%s4779 + $0x42] sm:$0xff]
      %v5565 = vld [vmem:[%s4779 + $0x52] sm:$0xff]
      %v5566 = vld [vmem:[%s4779 + $0x62] sm:$0xff]
      %v5567 = vld [vmem:[%s4779 + $0x72] sm:$0xff]
      %v5568 = vld [vmem:[%s4779 + $0xa2] sm:$0xff]
      %v5569 = vld [vmem:[%s4779 + $0xb2] sm:$0xff]
      %v5570 = vld [vmem:[%s4779 + $0xc2] sm:$0xff]
      %v5571 = vld [vmem:[%s4779 + $0xd2] sm:$0xff]
      %v5572 = vld [vmem:[%s4779 + $0xe2] sm:$0xff]
      %v5573 = vld [vmem:[%s4779 + $0xf2] sm:$0xff]
      %v5574 = vld [vmem:[%s4779 + $0x102] sm:$0xff]
      %v5575 = vld [vmem:[%s4779 + $0x112] sm:$0xff]
      %v5576 = vld [vmem:[%s4779 + $0x142] sm:$0xff]
      %v5577 = vld [vmem:[%s4779 + $0x152] sm:$0xff]
      %v5578 = vld [vmem:[%s4779 + $0x162] sm:$0xff]
      %v5579 = vld [vmem:[%s4779 + $0x172] sm:$0xff]
      %v5580 = vld [vmem:[%s4779 + $0x182] sm:$0xff]
      %v5581 = vld [vmem:[%s4779 + $0x192] sm:$0xff]
      %v5582 = vld [vmem:[%s4779 + $0x1a2] sm:$0xff]
      %v5583 = vld [vmem:[%s4779 + $0x1b2] sm:$0xff]
      %v5584 = vld [vmem:[%s4779 + $0x1e2] sm:$0xff]
      %v5585 = vld [vmem:[%s4779 + $0x1f2] sm:$0xff]
      %v5586 = vld [vmem:[%s4779 + $0x202] sm:$0xff]
      %v5587 = vld [vmem:[%s4779 + $0x212] sm:$0xff]
      %v5588 = vld [vmem:[%s4779 + $0x222] sm:$0xff]
      %v5589 = vld [vmem:[%s4779 + $0x232] sm:$0xff]
      %v5590 = vld [vmem:[%s4779 + $0x242] sm:$0xff]
      %v5591 = vld [vmem:[%s4779 + $0x252] sm:$0xff]
      %s5592 = scalar_lea.vmem %s5, 22
      %v5593 = vld [vmem:[%s5592] sm:$0x3]
      %v5595 = vsel %vm451, %v5560, 0
      %v5598 = vsel %vm451, %v5561, 0
      %v5601 = vsel %vm451, %v5562, 0
      %v5604 = vsel %vm451, %v5563, 0
      %v5607 = vsel %vm451, %v5564, 0
      %v5610 = vsel %vm451, %v5565, 0
      %v5613 = vsel %vm451, %v5566, 0
      %v5616 = vsel %vm451, %v5567, 0
      %v5619 = vsel %vm451, %v5568, 0
      %v5622 = vsel %vm451, %v5569, 0
      %v5625 = vsel %vm451, %v5570, 0
      %v5628 = vsel %vm451, %v5571, 0
      %v5631 = vsel %vm451, %v5572, 0
      %v5634 = vsel %vm451, %v5573, 0
      %v5637 = vsel %vm451, %v5574, 0
      %v5640 = vsel %vm451, %v5575, 0
      %v5643 = vsel %vm451, %v5576, 0
      %v5646 = vsel %vm451, %v5577, 0
      %v5649 = vsel %vm451, %v5578, 0
      %v5652 = vsel %vm451, %v5579, 0
      %v5655 = vsel %vm451, %v5580, 0
      %v5658 = vsel %vm451, %v5581, 0
      %v5661 = vsel %vm451, %v5582, 0
      %v5664 = vsel %vm451, %v5583, 0
      %v5667 = vsel %vm451, %v5584, 0
      %v5670 = vsel %vm451, %v5585, 0
      %v5673 = vsel %vm451, %v5586, 0
      %v5676 = vsel %vm451, %v5587, 0
      %v5679 = vsel %vm451, %v5588, 0
      %v5682 = vsel %vm451, %v5589, 0
      %v5685 = vsel %vm451, %v5590, 0
      %v5688 = vsel %vm451, %v5591, 0
      %v5691 = vsel %vm1495, %v5593, 0
      %5693 = vmatprep.subr.mxu0 0.0
      %5694 = vmatpush1.msra.mxu0 0.0
      %5695 = vmatprep.subr.mxu0 0.0
      %5696 = vmatpush1.msra.mxu0 0.0
      %5697 = vmatprep.subr.mxu0 0.0
      %5698 = vmatpush1.msra.mxu0 0.0
      %5699 = vmatprep.subr.mxu0 0.0
      %5700 = vmatpush1.msra.mxu0 0.0
      %5701 = vmatprep.subr.mxu0 0.0
      %5702 = vmatpush1.msra.mxu0 0.0
      %5703 = vmatprep.subr.mxu0 0.0
      %5704 = vmatpush1.msra.mxu0 0.0
      %5705 = vmatprep.subr.mxu0 0.0
      %5706 = vmatpush1.msra.mxu0 0.0
      %5707 = vmatprep.subr.mxu0 0.0
      %5708 = vmatpush1.msra.mxu0 0.0
      %5709 = vmatprep.subr.mxu0 0.0
      %5710 = vmatpush1.msra.mxu0 0.0
      %5711 = vmatprep.subr.mxu0 0.0
      %5712 = vmatpush1.msra.mxu0 0.0
      %5713 = vmatprep.subr.mxu0 0.0
      %5714 = vmatpush1.msra.mxu0 0.0
      %5715 = vmatprep.subr.mxu0 0.0
      %5716 = vmatpush1.msra.mxu0 0.0
      %5717 = vmatprep.subr.mxu0 0.0
      %5718 = vmatpush1.msra.mxu0 0.0
      %5719 = vmatprep.subr.mxu0 0.0
      %5720 = vmatpush1.msra.mxu0 0.0
      %5721 = vmatprep.subr.mxu0 0.0
      %5722 = vmatpush1.msra.mxu0 0.0
      %5723 = vmatprep.subr.mxu0 0.0
      %5724 = vmatpush1.msra.mxu0 %v5691
      %5725 = vmatprep.subr.mxu0 0.0
      %5726 = vmatpush2.msra.mxu0 0.0
      %5727 = vmatprep.subr.mxu0 0.0
      %5728 = vmatpush2.msra.mxu0 0.0
      %5729 = vmatprep.subr.mxu0 0.0
      %5730 = vmatpush2.msra.mxu0 0.0
      %5731 = vmatprep.subr.mxu0 0.0
      %5732 = vmatpush2.msra.mxu0 0.0
      %5733 = vmatprep.subr.mxu0 0.0
      %5734 = vmatpush2.msra.mxu0 0.0
      %5735 = vmatprep.subr.mxu0 0.0
      %5736 = vmatpush2.msra.mxu0 0.0
      %5737 = vmatprep.subr.mxu0 0.0
      %5738 = vmatpush2.msra.mxu0 0.0
      %5739 = vmatprep.subr.mxu0 0.0
      %5740 = vmatpush2.msra.mxu0 0.0
      %5741 = vmatprep.subr.mxu0 0.0
      %5742 = vmatpush2.msra.mxu0 0.0
      %5743 = vmatprep.subr.mxu0 0.0
      %5744 = vmatpush2.msra.mxu0 0.0
      %5745 = vmatprep.subr.mxu0 0.0
      %5746 = vmatpush2.msra.mxu0 0.0
      %5747 = vmatprep.subr.mxu0 0.0
      %5748 = vmatpush2.msra.mxu0 0.0
      %5749 = vmatprep.subr.mxu0 0.0
      %5750 = vmatpush2.msra.mxu0 0.0
      %5751 = vmatprep.subr.mxu0 0.0
      %5752 = vmatpush2.msra.mxu0 0.0
      %5753 = vmatprep.subr.mxu0 0.0
      %5754 = vmatpush2.msra.mxu0 0.0
      %5755 = vmatprep.subr.mxu0 0.0
      %5756 = vmatpush2.msra.mxu0 0.0
      %5757 = vmatprep.mubr.f32.mxu0 0.0
      %5758 = vmatmul.mubr.f32.gmra.mxu0 %v5595
      %v5759 = vpop.f32.mrf.mxu0
      %v5760 = vadd.f32 0.0, %v5759
      %v5761 = vpop.f32.mrf.mxu0
      %5762 = vmatprep.mubr.f32.mxu0 0.0
      %5763 = vmatmul.mubr.f32.gmra.mxu0 %v5598
      %v5764 = vpop.f32.mrf.mxu0
      %v5765 = vadd.f32 0.0, %v5764
      %v5766 = vpop.f32.mrf.mxu0
      %5767 = vmatprep.mubr.f32.mxu0 0.0
      %5768 = vmatmul.mubr.f32.gmra.mxu0 %v5601
      %v5769 = vpop.f32.mrf.mxu0
      %v5770 = vadd.f32 0.0, %v5769
      %v5771 = vpop.f32.mrf.mxu0
      %5772 = vmatprep.mubr.f32.mxu0 0.0
      %5773 = vmatmul.mubr.f32.gmra.mxu0 %v5604
      %v5774 = vpop.f32.mrf.mxu0
      %v5775 = vadd.f32 0.0, %v5774
      %v5776 = vpop.f32.mrf.mxu0
      %5777 = vmatprep.mubr.f32.mxu0 0.0
      %5778 = vmatmul.mubr.f32.gmra.mxu0 %v5607
      %v5779 = vpop.f32.mrf.mxu0
      %v5780 = vadd.f32 0.0, %v5779
      %v5781 = vpop.f32.mrf.mxu0
      %5782 = vmatprep.mubr.f32.mxu0 0.0
      %5783 = vmatmul.mubr.f32.gmra.mxu0 %v5610
      %v5784 = vpop.f32.mrf.mxu0
      %v5785 = vadd.f32 0.0, %v5784
      %v5786 = vpop.f32.mrf.mxu0
      %5787 = vmatprep.mubr.f32.mxu0 0.0
      %5788 = vmatmul.mubr.f32.gmra.mxu0 %v5613
      %v5789 = vpop.f32.mrf.mxu0
      %v5790 = vadd.f32 0.0, %v5789
      %v5791 = vpop.f32.mrf.mxu0
      %5792 = vmatprep.mubr.f32.mxu0 0.0
      %5793 = vmatmul.mubr.f32.gmra.mxu0 %v5616
      %v5794 = vpop.f32.mrf.mxu0
      %v5795 = vadd.f32 0.0, %v5794
      %v5796 = vpop.f32.mrf.mxu0
      %5797 = vmatprep.mubr.f32.mxu0 0.0
      %5798 = vmatmul.mubr.f32.gmra.mxu0 %v5619
      %v5799 = vpop.f32.mrf.mxu0
      %v5800 = vadd.f32 0.0, %v5799
      %v5801 = vpop.f32.mrf.mxu0
      %5802 = vmatprep.mubr.f32.mxu0 0.0
      %5803 = vmatmul.mubr.f32.gmra.mxu0 %v5622
      %v5804 = vpop.f32.mrf.mxu0
      %v5805 = vadd.f32 0.0, %v5804
      %v5806 = vpop.f32.mrf.mxu0
      %5807 = vmatprep.mubr.f32.mxu0 0.0
      %5808 = vmatmul.mubr.f32.gmra.mxu0 %v5625
      %v5809 = vpop.f32.mrf.mxu0
      %v5810 = vadd.f32 0.0, %v5809
      %v5811 = vpop.f32.mrf.mxu0
      %5812 = vmatprep.mubr.f32.mxu0 0.0
      %5813 = vmatmul.mubr.f32.gmra.mxu0 %v5628
      %v5814 = vpop.f32.mrf.mxu0
      %v5815 = vadd.f32 0.0, %v5814
      %v5816 = vpop.f32.mrf.mxu0
      %5817 = vmatprep.mubr.f32.mxu0 0.0
      %5818 = vmatmul.mubr.f32.gmra.mxu0 %v5631
      %v5819 = vpop.f32.mrf.mxu0
      %v5820 = vadd.f32 0.0, %v5819
      %v5821 = vpop.f32.mrf.mxu0
      %5822 = vmatprep.mubr.f32.mxu0 0.0
      %5823 = vmatmul.mubr.f32.gmra.mxu0 %v5634
      %v5824 = vpop.f32.mrf.mxu0
      %v5825 = vadd.f32 0.0, %v5824
      %v5826 = vpop.f32.mrf.mxu0
      %5827 = vmatprep.mubr.f32.mxu0 0.0
      %5828 = vmatmul.mubr.f32.gmra.mxu0 %v5637
      %v5829 = vpop.f32.mrf.mxu0
      %v5830 = vadd.f32 0.0, %v5829
      %v5831 = vpop.f32.mrf.mxu0
      %5832 = vmatprep.mubr.f32.mxu0 0.0
      %5833 = vmatmul.mubr.f32.gmra.mxu0 %v5640
      %v5834 = vpop.f32.mrf.mxu0
      %v5835 = vadd.f32 0.0, %v5834
      %v5836 = vpop.f32.mrf.mxu0
      %5837 = vmatprep.mubr.f32.mxu0 0.0
      %5838 = vmatmul.mubr.f32.gmra.mxu0 %v5643
      %v5839 = vpop.f32.mrf.mxu0
      %v5840 = vadd.f32 0.0, %v5839
      %v5841 = vpop.f32.mrf.mxu0
      %5842 = vmatprep.mubr.f32.mxu0 0.0
      %5843 = vmatmul.mubr.f32.gmra.mxu0 %v5646
      %v5844 = vpop.f32.mrf.mxu0
      %v5845 = vadd.f32 0.0, %v5844
      %v5846 = vpop.f32.mrf.mxu0
      %5847 = vmatprep.mubr.f32.mxu0 0.0
      %5848 = vmatmul.mubr.f32.gmra.mxu0 %v5649
      %v5849 = vpop.f32.mrf.mxu0
      %v5850 = vadd.f32 0.0, %v5849
      %v5851 = vpop.f32.mrf.mxu0
      %5852 = vmatprep.mubr.f32.mxu0 0.0
      %5853 = vmatmul.mubr.f32.gmra.mxu0 %v5652
      %v5854 = vpop.f32.mrf.mxu0
      %v5855 = vadd.f32 0.0, %v5854
      %v5856 = vpop.f32.mrf.mxu0
      %5857 = vmatprep.mubr.f32.mxu0 0.0
      %5858 = vmatmul.mubr.f32.gmra.mxu0 %v5655
      %v5859 = vpop.f32.mrf.mxu0
      %v5860 = vadd.f32 0.0, %v5859
      %v5861 = vpop.f32.mrf.mxu0
      %5862 = vmatprep.mubr.f32.mxu0 0.0
      %5863 = vmatmul.mubr.f32.gmra.mxu0 %v5658
      %v5864 = vpop.f32.mrf.mxu0
      %v5865 = vadd.f32 0.0, %v5864
      %v5866 = vpop.f32.mrf.mxu0
      %5867 = vmatprep.mubr.f32.mxu0 0.0
      %5868 = vmatmul.mubr.f32.gmra.mxu0 %v5661
      %v5869 = vpop.f32.mrf.mxu0
      %v5870 = vadd.f32 0.0, %v5869
      %v5871 = vpop.f32.mrf.mxu0
      %5872 = vmatprep.mubr.f32.mxu0 0.0
      %5873 = vmatmul.mubr.f32.gmra.mxu0 %v5664
      %v5874 = vpop.f32.mrf.mxu0
      %v5875 = vadd.f32 0.0, %v5874
      %v5876 = vpop.f32.mrf.mxu0
      %5877 = vmatprep.mubr.f32.mxu0 0.0
      %5878 = vmatmul.mubr.f32.gmra.mxu0 %v5667
      %v5879 = vpop.f32.mrf.mxu0
      %v5880 = vadd.f32 0.0, %v5879
      %v5881 = vpop.f32.mrf.mxu0
      %5882 = vmatprep.mubr.f32.mxu0 0.0
      %5883 = vmatmul.mubr.f32.gmra.mxu0 %v5670
      %v5884 = vpop.f32.mrf.mxu0
      %v5885 = vadd.f32 0.0, %v5884
      %v5886 = vpop.f32.mrf.mxu0
      %5887 = vmatprep.mubr.f32.mxu0 0.0
      %5888 = vmatmul.mubr.f32.gmra.mxu0 %v5673
      %v5889 = vpop.f32.mrf.mxu0
      %v5890 = vadd.f32 0.0, %v5889
      %v5891 = vpop.f32.mrf.mxu0
      %5892 = vmatprep.mubr.f32.mxu0 0.0
      %5893 = vmatmul.mubr.f32.gmra.mxu0 %v5676
      %v5894 = vpop.f32.mrf.mxu0
      %v5895 = vadd.f32 0.0, %v5894
      %v5896 = vpop.f32.mrf.mxu0
      %5897 = vmatprep.mubr.f32.mxu0 0.0
      %5898 = vmatmul.mubr.f32.gmra.mxu0 %v5679
      %v5899 = vpop.f32.mrf.mxu0
      %v5900 = vadd.f32 0.0, %v5899
      %v5901 = vpop.f32.mrf.mxu0
      %5902 = vmatprep.mubr.f32.mxu0 0.0
      %5903 = vmatmul.mubr.f32.gmra.mxu0 %v5682
      %v5904 = vpop.f32.mrf.mxu0
      %v5905 = vadd.f32 0.0, %v5904
      %v5906 = vpop.f32.mrf.mxu0
      %5907 = vmatprep.mubr.f32.mxu0 0.0
      %5908 = vmatmul.mubr.f32.gmra.mxu0 %v5685
      %v5909 = vpop.f32.mrf.mxu0
      %v5910 = vadd.f32 0.0, %v5909
      %v5911 = vpop.f32.mrf.mxu0
      %5912 = vmatprep.mubr.f32.mxu0 0.0
      %5913 = vmatmul.mubr.f32.gmra.mxu0 %v5688
      %v5914 = vpop.f32.mrf.mxu0
      %v5915 = vadd.f32 0.0, %v5914
      %v5916 = vpop.f32.mrf.mxu0
      %5917 = vdwg.mxu0
      %v5918 = vadd.f32 %v5528, %v5760
      %v5919 = vadd.f32 %v5529, %v5765
      %v5920 = vadd.f32 %v5530, %v5770
      %v5921 = vadd.f32 %v5531, %v5775
      %v5922 = vadd.f32 %v5532, %v5780
      %v5923 = vadd.f32 %v5533, %v5785
      %v5924 = vadd.f32 %v5534, %v5790
      %v5925 = vadd.f32 %v5535, %v5795
      %v5926 = vadd.f32 %v5536, %v5800
      %v5927 = vadd.f32 %v5537, %v5805
      %v5928 = vadd.f32 %v5538, %v5810
      %v5929 = vadd.f32 %v5539, %v5815
      %v5930 = vadd.f32 %v5540, %v5820
      %v5931 = vadd.f32 %v5541, %v5825
      %v5932 = vadd.f32 %v5542, %v5830
      %v5933 = vadd.f32 %v5543, %v5835
      %v5934 = vadd.f32 %v5544, %v5840
      %v5935 = vadd.f32 %v5545, %v5845
      %v5936 = vadd.f32 %v5546, %v5850
      %v5937 = vadd.f32 %v5547, %v5855
      %v5938 = vadd.f32 %v5548, %v5860
      %v5939 = vadd.f32 %v5549, %v5865
      %v5940 = vadd.f32 %v5550, %v5870
      %v5941 = vadd.f32 %v5551, %v5875
      %v5942 = vadd.f32 %v5552, %v5880
      %v5943 = vadd.f32 %v5553, %v5885
      %v5944 = vadd.f32 %v5554, %v5890
      %v5945 = vadd.f32 %v5555, %v5895
      %v5946 = vadd.f32 %v5556, %v5900
      %v5947 = vadd.f32 %v5557, %v5905
      %v5948 = vadd.f32 %v5558, %v5910
      %v5949 = vadd.f32 %v5559, %v5915
      %v5950 = vld [vmem:[%s969] sm:$0xff]
      %v5951 = vld [vmem:[%s969 + $0x10] sm:$0xff]
      %v5952 = vld [vmem:[%s969 + $0x20] sm:$0xff]
      %v5953 = vld [vmem:[%s969 + $0x30] sm:$0xff]
      %v5954 = vld [vmem:[%s969 + $0x40] sm:$0xff]
      %v5955 = vld [vmem:[%s969 + $0x50] sm:$0xff]
      %v5956 = vld [vmem:[%s969 + $0x60] sm:$0xff]
      %v5957 = vld [vmem:[%s969 + $0x70] sm:$0xff]
      %v5958 = vld [vmem:[%s969 + $0xa0] sm:$0xff]
      %v5959 = vld [vmem:[%s969 + $0xb0] sm:$0xff]
      %v5960 = vld [vmem:[%s969 + $0xc0] sm:$0xff]
      %v5961 = vld [vmem:[%s969 + $0xd0] sm:$0xff]
      %v5962 = vld [vmem:[%s969 + $0xe0] sm:$0xff]
      %v5963 = vld [vmem:[%s969 + $0xf0] sm:$0xff]
      %v5964 = vld [vmem:[%s969 + $0x100] sm:$0xff]
      %v5965 = vld [vmem:[%s969 + $0x110] sm:$0xff]
      %v5966 = vld [vmem:[%s969 + $0x140] sm:$0xff]
      %v5967 = vld [vmem:[%s969 + $0x150] sm:$0xff]
      %v5968 = vld [vmem:[%s969 + $0x160] sm:$0xff]
      %v5969 = vld [vmem:[%s969 + $0x170] sm:$0xff]
      %v5970 = vld [vmem:[%s969 + $0x180] sm:$0xff]
      %v5971 = vld [vmem:[%s969 + $0x190] sm:$0xff]
      %v5972 = vld [vmem:[%s969 + $0x1a0] sm:$0xff]
      %v5973 = vld [vmem:[%s969 + $0x1b0] sm:$0xff]
      %v5974 = vld [vmem:[%s969 + $0x1e0] sm:$0xff]
      %v5975 = vld [vmem:[%s969 + $0x1f0] sm:$0xff]
      %v5976 = vld [vmem:[%s969 + $0x200] sm:$0xff]
      %v5977 = vld [vmem:[%s969 + $0x210] sm:$0xff]
      %v5978 = vld [vmem:[%s969 + $0x220] sm:$0xff]
      %v5979 = vld [vmem:[%s969 + $0x230] sm:$0xff]
      %v5980 = vld [vmem:[%s969 + $0x240] sm:$0xff]
      %v5981 = vld [vmem:[%s969 + $0x250] sm:$0xff]
      %s5982 = scalar_lea.vmem %s5, 24
      %v5983 = vld [vmem:[%s5982] sm:$0x3]
      %v5985 = vsel %vm451, %v5950, 0
      %v5988 = vsel %vm451, %v5951, 0
      %v5991 = vsel %vm451, %v5952, 0
      %v5994 = vsel %vm451, %v5953, 0
      %v5997 = vsel %vm451, %v5954, 0
      %v6000 = vsel %vm451, %v5955, 0
      %v6003 = vsel %vm451, %v5956, 0
      %v6006 = vsel %vm451, %v5957, 0
      %v6009 = vsel %vm451, %v5958, 0
      %v6012 = vsel %vm451, %v5959, 0
      %v6015 = vsel %vm451, %v5960, 0
      %v6018 = vsel %vm451, %v5961, 0
      %v6021 = vsel %vm451, %v5962, 0
      %v6024 = vsel %vm451, %v5963, 0
      %v6027 = vsel %vm451, %v5964, 0
      %v6030 = vsel %vm451, %v5965, 0
      %v6033 = vsel %vm451, %v5966, 0
      %v6036 = vsel %vm451, %v5967, 0
      %v6039 = vsel %vm451, %v5968, 0
      %v6042 = vsel %vm451, %v5969, 0
      %v6045 = vsel %vm451, %v5970, 0
      %v6048 = vsel %vm451, %v5971, 0
      %v6051 = vsel %vm451, %v5972, 0
      %v6054 = vsel %vm451, %v5973, 0
      %v6057 = vsel %vm451, %v5974, 0
      %v6060 = vsel %vm451, %v5975, 0
      %v6063 = vsel %vm451, %v5976, 0
      %v6066 = vsel %vm451, %v5977, 0
      %v6069 = vsel %vm451, %v5978, 0
      %v6072 = vsel %vm451, %v5979, 0
      %v6075 = vsel %vm451, %v5980, 0
      %v6078 = vsel %vm451, %v5981, 0
      %v6081 = vsel %vm1495, %v5983, 0
      %6083 = vmatprep.subr.mxu0 0.0
      %6084 = vmatpush1.msra.mxu0 0.0
      %6085 = vmatprep.subr.mxu0 0.0
      %6086 = vmatpush1.msra.mxu0 0.0
      %6087 = vmatprep.subr.mxu0 0.0
      %6088 = vmatpush1.msra.mxu0 0.0
      %6089 = vmatprep.subr.mxu0 0.0
      %6090 = vmatpush1.msra.mxu0 0.0
      %6091 = vmatprep.subr.mxu0 0.0
      %6092 = vmatpush1.msra.mxu0 0.0
      %6093 = vmatprep.subr.mxu0 0.0
      %6094 = vmatpush1.msra.mxu0 0.0
      %6095 = vmatprep.subr.mxu0 0.0
      %6096 = vmatpush1.msra.mxu0 0.0
      %6097 = vmatprep.subr.mxu0 0.0
      %6098 = vmatpush1.msra.mxu0 0.0
      %6099 = vmatprep.subr.mxu0 0.0
      %6100 = vmatpush1.msra.mxu0 0.0
      %6101 = vmatprep.subr.mxu0 0.0
      %6102 = vmatpush1.msra.mxu0 0.0
      %6103 = vmatprep.subr.mxu0 0.0
      %6104 = vmatpush1.msra.mxu0 0.0
      %6105 = vmatprep.subr.mxu0 0.0
      %6106 = vmatpush1.msra.mxu0 0.0
      %6107 = vmatprep.subr.mxu0 0.0
      %6108 = vmatpush1.msra.mxu0 0.0
      %6109 = vmatprep.subr.mxu0 0.0
      %6110 = vmatpush1.msra.mxu0 0.0
      %6111 = vmatprep.subr.mxu0 0.0
      %6112 = vmatpush1.msra.mxu0 0.0
      %6113 = vmatprep.subr.mxu0 0.0
      %6114 = vmatpush1.msra.mxu0 %v6081
      %6115 = vmatprep.subr.mxu0 0.0
      %6116 = vmatpush2.msra.mxu0 0.0
      %6117 = vmatprep.subr.mxu0 0.0
      %6118 = vmatpush2.msra.mxu0 0.0
      %6119 = vmatprep.subr.mxu0 0.0
      %6120 = vmatpush2.msra.mxu0 0.0
      %6121 = vmatprep.subr.mxu0 0.0
      %6122 = vmatpush2.msra.mxu0 0.0
      %6123 = vmatprep.subr.mxu0 0.0
      %6124 = vmatpush2.msra.mxu0 0.0
      %6125 = vmatprep.subr.mxu0 0.0
      %6126 = vmatpush2.msra.mxu0 0.0
      %6127 = vmatprep.subr.mxu0 0.0
      %6128 = vmatpush2.msra.mxu0 0.0
      %6129 = vmatprep.subr.mxu0 0.0
      %6130 = vmatpush2.msra.mxu0 0.0
      %6131 = vmatprep.subr.mxu0 0.0
      %6132 = vmatpush2.msra.mxu0 0.0
      %6133 = vmatprep.subr.mxu0 0.0
      %6134 = vmatpush2.msra.mxu0 0.0
      %6135 = vmatprep.subr.mxu0 0.0
      %6136 = vmatpush2.msra.mxu0 0.0
      %6137 = vmatprep.subr.mxu0 0.0
      %6138 = vmatpush2.msra.mxu0 0.0
      %6139 = vmatprep.subr.mxu0 0.0
      %6140 = vmatpush2.msra.mxu0 0.0
      %6141 = vmatprep.subr.mxu0 0.0
      %6142 = vmatpush2.msra.mxu0 0.0
      %6143 = vmatprep.subr.mxu0 0.0
      %6144 = vmatpush2.msra.mxu0 0.0
      %6145 = vmatprep.subr.mxu0 0.0
      %6146 = vmatpush2.msra.mxu0 0.0
      %6147 = vmatprep.mubr.f32.mxu0 0.0
      %6148 = vmatmul.mubr.f32.gmra.mxu0 %v5985
      %v6149 = vpop.f32.mrf.mxu0
      %v6150 = vadd.f32 0.0, %v6149
      %v6151 = vpop.f32.mrf.mxu0
      %6152 = vmatprep.mubr.f32.mxu0 0.0
      %6153 = vmatmul.mubr.f32.gmra.mxu0 %v5988
      %v6154 = vpop.f32.mrf.mxu0
      %v6155 = vadd.f32 0.0, %v6154
      %v6156 = vpop.f32.mrf.mxu0
      %6157 = vmatprep.mubr.f32.mxu0 0.0
      %6158 = vmatmul.mubr.f32.gmra.mxu0 %v5991
      %v6159 = vpop.f32.mrf.mxu0
      %v6160 = vadd.f32 0.0, %v6159
      %v6161 = vpop.f32.mrf.mxu0
      %6162 = vmatprep.mubr.f32.mxu0 0.0
      %6163 = vmatmul.mubr.f32.gmra.mxu0 %v5994
      %v6164 = vpop.f32.mrf.mxu0
      %v6165 = vadd.f32 0.0, %v6164
      %v6166 = vpop.f32.mrf.mxu0
      %6167 = vmatprep.mubr.f32.mxu0 0.0
      %6168 = vmatmul.mubr.f32.gmra.mxu0 %v5997
      %v6169 = vpop.f32.mrf.mxu0
      %v6170 = vadd.f32 0.0, %v6169
      %v6171 = vpop.f32.mrf.mxu0
      %6172 = vmatprep.mubr.f32.mxu0 0.0
      %6173 = vmatmul.mubr.f32.gmra.mxu0 %v6000
      %v6174 = vpop.f32.mrf.mxu0
      %v6175 = vadd.f32 0.0, %v6174
      %v6176 = vpop.f32.mrf.mxu0
      %6177 = vmatprep.mubr.f32.mxu0 0.0
      %6178 = vmatmul.mubr.f32.gmra.mxu0 %v6003
      %v6179 = vpop.f32.mrf.mxu0
      %v6180 = vadd.f32 0.0, %v6179
      %v6181 = vpop.f32.mrf.mxu0
      %6182 = vmatprep.mubr.f32.mxu0 0.0
      %6183 = vmatmul.mubr.f32.gmra.mxu0 %v6006
      %v6184 = vpop.f32.mrf.mxu0
      %v6185 = vadd.f32 0.0, %v6184
      %v6186 = vpop.f32.mrf.mxu0
      %6187 = vmatprep.mubr.f32.mxu0 0.0
      %6188 = vmatmul.mubr.f32.gmra.mxu0 %v6009
      %v6189 = vpop.f32.mrf.mxu0
      %v6190 = vadd.f32 0.0, %v6189
      %v6191 = vpop.f32.mrf.mxu0
      %6192 = vmatprep.mubr.f32.mxu0 0.0
      %6193 = vmatmul.mubr.f32.gmra.mxu0 %v6012
      %v6194 = vpop.f32.mrf.mxu0
      %v6195 = vadd.f32 0.0, %v6194
      %v6196 = vpop.f32.mrf.mxu0
      %6197 = vmatprep.mubr.f32.mxu0 0.0
      %6198 = vmatmul.mubr.f32.gmra.mxu0 %v6015
      %v6199 = vpop.f32.mrf.mxu0
      %v6200 = vadd.f32 0.0, %v6199
      %v6201 = vpop.f32.mrf.mxu0
      %6202 = vmatprep.mubr.f32.mxu0 0.0
      %6203 = vmatmul.mubr.f32.gmra.mxu0 %v6018
      %v6204 = vpop.f32.mrf.mxu0
      %v6205 = vadd.f32 0.0, %v6204
      %v6206 = vpop.f32.mrf.mxu0
      %6207 = vmatprep.mubr.f32.mxu0 0.0
      %6208 = vmatmul.mubr.f32.gmra.mxu0 %v6021
      %v6209 = vpop.f32.mrf.mxu0
      %v6210 = vadd.f32 0.0, %v6209
      %v6211 = vpop.f32.mrf.mxu0
      %6212 = vmatprep.mubr.f32.mxu0 0.0
      %6213 = vmatmul.mubr.f32.gmra.mxu0 %v6024
      %v6214 = vpop.f32.mrf.mxu0
      %v6215 = vadd.f32 0.0, %v6214
      %v6216 = vpop.f32.mrf.mxu0
      %6217 = vmatprep.mubr.f32.mxu0 0.0
      %6218 = vmatmul.mubr.f32.gmra.mxu0 %v6027
      %v6219 = vpop.f32.mrf.mxu0
      %v6220 = vadd.f32 0.0, %v6219
      %v6221 = vpop.f32.mrf.mxu0
      %6222 = vmatprep.mubr.f32.mxu0 0.0
      %6223 = vmatmul.mubr.f32.gmra.mxu0 %v6030
      %v6224 = vpop.f32.mrf.mxu0
      %v6225 = vadd.f32 0.0, %v6224
      %v6226 = vpop.f32.mrf.mxu0
      %6227 = vmatprep.mubr.f32.mxu0 0.0
      %6228 = vmatmul.mubr.f32.gmra.mxu0 %v6033
      %v6229 = vpop.f32.mrf.mxu0
      %v6230 = vadd.f32 0.0, %v6229
      %v6231 = vpop.f32.mrf.mxu0
      %6232 = vmatprep.mubr.f32.mxu0 0.0
      %6233 = vmatmul.mubr.f32.gmra.mxu0 %v6036
      %v6234 = vpop.f32.mrf.mxu0
      %v6235 = vadd.f32 0.0, %v6234
      %v6236 = vpop.f32.mrf.mxu0
      %6237 = vmatprep.mubr.f32.mxu0 0.0
      %6238 = vmatmul.mubr.f32.gmra.mxu0 %v6039
      %v6239 = vpop.f32.mrf.mxu0
      %v6240 = vadd.f32 0.0, %v6239
      %v6241 = vpop.f32.mrf.mxu0
      %6242 = vmatprep.mubr.f32.mxu0 0.0
      %6243 = vmatmul.mubr.f32.gmra.mxu0 %v6042
      %v6244 = vpop.f32.mrf.mxu0
      %v6245 = vadd.f32 0.0, %v6244
      %v6246 = vpop.f32.mrf.mxu0
      %6247 = vmatprep.mubr.f32.mxu0 0.0
      %6248 = vmatmul.mubr.f32.gmra.mxu0 %v6045
      %v6249 = vpop.f32.mrf.mxu0
      %v6250 = vadd.f32 0.0, %v6249
      %v6251 = vpop.f32.mrf.mxu0
      %6252 = vmatprep.mubr.f32.mxu0 0.0
      %6253 = vmatmul.mubr.f32.gmra.mxu0 %v6048
      %v6254 = vpop.f32.mrf.mxu0
      %v6255 = vadd.f32 0.0, %v6254
      %v6256 = vpop.f32.mrf.mxu0
      %6257 = vmatprep.mubr.f32.mxu0 0.0
      %6258 = vmatmul.mubr.f32.gmra.mxu0 %v6051
      %v6259 = vpop.f32.mrf.mxu0
      %v6260 = vadd.f32 0.0, %v6259
      %v6261 = vpop.f32.mrf.mxu0
      %6262 = vmatprep.mubr.f32.mxu0 0.0
      %6263 = vmatmul.mubr.f32.gmra.mxu0 %v6054
      %v6264 = vpop.f32.mrf.mxu0
      %v6265 = vadd.f32 0.0, %v6264
      %v6266 = vpop.f32.mrf.mxu0
      %6267 = vmatprep.mubr.f32.mxu0 0.0
      %6268 = vmatmul.mubr.f32.gmra.mxu0 %v6057
      %v6269 = vpop.f32.mrf.mxu0
      %v6270 = vadd.f32 0.0, %v6269
      %v6271 = vpop.f32.mrf.mxu0
      %6272 = vmatprep.mubr.f32.mxu0 0.0
      %6273 = vmatmul.mubr.f32.gmra.mxu0 %v6060
      %v6274 = vpop.f32.mrf.mxu0
      %v6275 = vadd.f32 0.0, %v6274
      %v6276 = vpop.f32.mrf.mxu0
      %6277 = vmatprep.mubr.f32.mxu0 0.0
      %6278 = vmatmul.mubr.f32.gmra.mxu0 %v6063
      %v6279 = vpop.f32.mrf.mxu0
      %v6280 = vadd.f32 0.0, %v6279
      %v6281 = vpop.f32.mrf.mxu0
      %6282 = vmatprep.mubr.f32.mxu0 0.0
      %6283 = vmatmul.mubr.f32.gmra.mxu0 %v6066
      %v6284 = vpop.f32.mrf.mxu0
      %v6285 = vadd.f32 0.0, %v6284
      %v6286 = vpop.f32.mrf.mxu0
      %6287 = vmatprep.mubr.f32.mxu0 0.0
      %6288 = vmatmul.mubr.f32.gmra.mxu0 %v6069
      %v6289 = vpop.f32.mrf.mxu0
      %v6290 = vadd.f32 0.0, %v6289
      %v6291 = vpop.f32.mrf.mxu0
      %6292 = vmatprep.mubr.f32.mxu0 0.0
      %6293 = vmatmul.mubr.f32.gmra.mxu0 %v6072
      %v6294 = vpop.f32.mrf.mxu0
      %v6295 = vadd.f32 0.0, %v6294
      %v6296 = vpop.f32.mrf.mxu0
      %6297 = vmatprep.mubr.f32.mxu0 0.0
      %6298 = vmatmul.mubr.f32.gmra.mxu0 %v6075
      %v6299 = vpop.f32.mrf.mxu0
      %v6300 = vadd.f32 0.0, %v6299
      %v6301 = vpop.f32.mrf.mxu0
      %6302 = vmatprep.mubr.f32.mxu0 0.0
      %6303 = vmatmul.mubr.f32.gmra.mxu0 %v6078
      %v6304 = vpop.f32.mrf.mxu0
      %v6305 = vadd.f32 0.0, %v6304
      %v6306 = vpop.f32.mrf.mxu0
      %6307 = vdwg.mxu0
      %v6308 = vadd.f32 %v5918, %v6150
      %v6309 = vadd.f32 %v5919, %v6155
      %v6310 = vadd.f32 %v5920, %v6160
      %v6311 = vadd.f32 %v5921, %v6165
      %v6312 = vadd.f32 %v5922, %v6170
      %v6313 = vadd.f32 %v5923, %v6175
      %v6314 = vadd.f32 %v5924, %v6180
      %v6315 = vadd.f32 %v5925, %v6185
      %v6316 = vadd.f32 %v5926, %v6190
      %v6317 = vadd.f32 %v5927, %v6195
      %v6318 = vadd.f32 %v5928, %v6200
      %v6319 = vadd.f32 %v5929, %v6205
      %v6320 = vadd.f32 %v5930, %v6210
      %v6321 = vadd.f32 %v5931, %v6215
      %v6322 = vadd.f32 %v5932, %v6220
      %v6323 = vadd.f32 %v5933, %v6225
      %v6324 = vadd.f32 %v5934, %v6230
      %v6325 = vadd.f32 %v5935, %v6235
      %v6326 = vadd.f32 %v5936, %v6240
      %v6327 = vadd.f32 %v5937, %v6245
      %v6328 = vadd.f32 %v5938, %v6250
      %v6329 = vadd.f32 %v5939, %v6255
      %v6330 = vadd.f32 %v5940, %v6260
      %v6331 = vadd.f32 %v5941, %v6265
      %v6332 = vadd.f32 %v5942, %v6270
      %v6333 = vadd.f32 %v5943, %v6275
      %v6334 = vadd.f32 %v5944, %v6280
      %v6335 = vadd.f32 %v5945, %v6285
      %v6336 = vadd.f32 %v5946, %v6290
      %v6337 = vadd.f32 %v5947, %v6295
      %v6338 = vadd.f32 %v5948, %v6300
      %v6339 = vadd.f32 %v5949, %v6305
      %v6340 = vld [vmem:[%s969 + $0x1] sm:$0xff]
      %v6341 = vld [vmem:[%s969 + $0x11] sm:$0xff]
      %v6342 = vld [vmem:[%s969 + $0x21] sm:$0xff]
      %v6343 = vld [vmem:[%s969 + $0x31] sm:$0xff]
      %v6344 = vld [vmem:[%s969 + $0x41] sm:$0xff]
      %v6345 = vld [vmem:[%s969 + $0x51] sm:$0xff]
      %v6346 = vld [vmem:[%s969 + $0x61] sm:$0xff]
      %v6347 = vld [vmem:[%s969 + $0x71] sm:$0xff]
      %v6348 = vld [vmem:[%s969 + $0xa1] sm:$0xff]
      %v6349 = vld [vmem:[%s969 + $0xb1] sm:$0xff]
      %v6350 = vld [vmem:[%s969 + $0xc1] sm:$0xff]
      %v6351 = vld [vmem:[%s969 + $0xd1] sm:$0xff]
      %v6352 = vld [vmem:[%s969 + $0xe1] sm:$0xff]
      %v6353 = vld [vmem:[%s969 + $0xf1] sm:$0xff]
      %v6354 = vld [vmem:[%s969 + $0x101] sm:$0xff]
      %v6355 = vld [vmem:[%s969 + $0x111] sm:$0xff]
      %v6356 = vld [vmem:[%s969 + $0x141] sm:$0xff]
      %v6357 = vld [vmem:[%s969 + $0x151] sm:$0xff]
      %v6358 = vld [vmem:[%s969 + $0x161] sm:$0xff]
      %v6359 = vld [vmem:[%s969 + $0x171] sm:$0xff]
      %v6360 = vld [vmem:[%s969 + $0x181] sm:$0xff]
      %v6361 = vld [vmem:[%s969 + $0x191] sm:$0xff]
      %v6362 = vld [vmem:[%s969 + $0x1a1] sm:$0xff]
      %v6363 = vld [vmem:[%s969 + $0x1b1] sm:$0xff]
      %v6364 = vld [vmem:[%s969 + $0x1e1] sm:$0xff]
      %v6365 = vld [vmem:[%s969 + $0x1f1] sm:$0xff]
      %v6366 = vld [vmem:[%s969 + $0x201] sm:$0xff]
      %v6367 = vld [vmem:[%s969 + $0x211] sm:$0xff]
      %v6368 = vld [vmem:[%s969 + $0x221] sm:$0xff]
      %v6369 = vld [vmem:[%s969 + $0x231] sm:$0xff]
      %v6370 = vld [vmem:[%s969 + $0x241] sm:$0xff]
      %v6371 = vld [vmem:[%s969 + $0x251] sm:$0xff]
      %s6372 = scalar_lea.vmem %s5, 26
      %v6373 = vld [vmem:[%s6372] sm:$0x3]
      %v6375 = vsel %vm451, %v6340, 0
      %v6378 = vsel %vm451, %v6341, 0
      %v6381 = vsel %vm451, %v6342, 0
      %v6384 = vsel %vm451, %v6343, 0
      %v6387 = vsel %vm451, %v6344, 0
      %v6390 = vsel %vm451, %v6345, 0
      %v6393 = vsel %vm451, %v6346, 0
      %v6396 = vsel %vm451, %v6347, 0
      %v6399 = vsel %vm451, %v6348, 0
      %v6402 = vsel %vm451, %v6349, 0
      %v6405 = vsel %vm451, %v6350, 0
      %v6408 = vsel %vm451, %v6351, 0
      %v6411 = vsel %vm451, %v6352, 0
      %v6414 = vsel %vm451, %v6353, 0
      %v6417 = vsel %vm451, %v6354, 0
      %v6420 = vsel %vm451, %v6355, 0
      %v6423 = vsel %vm451, %v6356, 0
      %v6426 = vsel %vm451, %v6357, 0
      %v6429 = vsel %vm451, %v6358, 0
      %v6432 = vsel %vm451, %v6359, 0
      %v6435 = vsel %vm451, %v6360, 0
      %v6438 = vsel %vm451, %v6361, 0
      %v6441 = vsel %vm451, %v6362, 0
      %v6444 = vsel %vm451, %v6363, 0
      %v6447 = vsel %vm451, %v6364, 0
      %v6450 = vsel %vm451, %v6365, 0
      %v6453 = vsel %vm451, %v6366, 0
      %v6456 = vsel %vm451, %v6367, 0
      %v6459 = vsel %vm451, %v6368, 0
      %v6462 = vsel %vm451, %v6369, 0
      %v6465 = vsel %vm451, %v6370, 0
      %v6468 = vsel %vm451, %v6371, 0
      %v6471 = vsel %vm1495, %v6373, 0
      %6473 = vmatprep.subr.mxu0 0.0
      %6474 = vmatpush1.msra.mxu0 0.0
      %6475 = vmatprep.subr.mxu0 0.0
      %6476 = vmatpush1.msra.mxu0 0.0
      %6477 = vmatprep.subr.mxu0 0.0
      %6478 = vmatpush1.msra.mxu0 0.0
      %6479 = vmatprep.subr.mxu0 0.0
      %6480 = vmatpush1.msra.mxu0 0.0
      %6481 = vmatprep.subr.mxu0 0.0
      %6482 = vmatpush1.msra.mxu0 0.0
      %6483 = vmatprep.subr.mxu0 0.0
      %6484 = vmatpush1.msra.mxu0 0.0
      %6485 = vmatprep.subr.mxu0 0.0
      %6486 = vmatpush1.msra.mxu0 0.0
      %6487 = vmatprep.subr.mxu0 0.0
      %6488 = vmatpush1.msra.mxu0 0.0
      %6489 = vmatprep.subr.mxu0 0.0
      %6490 = vmatpush1.msra.mxu0 0.0
      %6491 = vmatprep.subr.mxu0 0.0
      %6492 = vmatpush1.msra.mxu0 0.0
      %6493 = vmatprep.subr.mxu0 0.0
      %6494 = vmatpush1.msra.mxu0 0.0
      %6495 = vmatprep.subr.mxu0 0.0
      %6496 = vmatpush1.msra.mxu0 0.0
      %6497 = vmatprep.subr.mxu0 0.0
      %6498 = vmatpush1.msra.mxu0 0.0
      %6499 = vmatprep.subr.mxu0 0.0
      %6500 = vmatpush1.msra.mxu0 0.0
      %6501 = vmatprep.subr.mxu0 0.0
      %6502 = vmatpush1.msra.mxu0 0.0
      %6503 = vmatprep.subr.mxu0 0.0
      %6504 = vmatpush1.msra.mxu0 %v6471
      %6505 = vmatprep.subr.mxu0 0.0
      %6506 = vmatpush2.msra.mxu0 0.0
      %6507 = vmatprep.subr.mxu0 0.0
      %6508 = vmatpush2.msra.mxu0 0.0
      %6509 = vmatprep.subr.mxu0 0.0
      %6510 = vmatpush2.msra.mxu0 0.0
      %6511 = vmatprep.subr.mxu0 0.0
      %6512 = vmatpush2.msra.mxu0 0.0
      %6513 = vmatprep.subr.mxu0 0.0
      %6514 = vmatpush2.msra.mxu0 0.0
      %6515 = vmatprep.subr.mxu0 0.0
      %6516 = vmatpush2.msra.mxu0 0.0
      %6517 = vmatprep.subr.mxu0 0.0
      %6518 = vmatpush2.msra.mxu0 0.0
      %6519 = vmatprep.subr.mxu0 0.0
      %6520 = vmatpush2.msra.mxu0 0.0
      %6521 = vmatprep.subr.mxu0 0.0
      %6522 = vmatpush2.msra.mxu0 0.0
      %6523 = vmatprep.subr.mxu0 0.0
      %6524 = vmatpush2.msra.mxu0 0.0
      %6525 = vmatprep.subr.mxu0 0.0
      %6526 = vmatpush2.msra.mxu0 0.0
      %6527 = vmatprep.subr.mxu0 0.0
      %6528 = vmatpush2.msra.mxu0 0.0
      %6529 = vmatprep.subr.mxu0 0.0
      %6530 = vmatpush2.msra.mxu0 0.0
      %6531 = vmatprep.subr.mxu0 0.0
      %6532 = vmatpush2.msra.mxu0 0.0
      %6533 = vmatprep.subr.mxu0 0.0
      %6534 = vmatpush2.msra.mxu0 0.0
      %6535 = vmatprep.subr.mxu0 0.0
      %6536 = vmatpush2.msra.mxu0 0.0
      %6537 = vmatprep.mubr.f32.mxu0 0.0
      %6538 = vmatmul.mubr.f32.gmra.mxu0 %v6375
      %v6539 = vpop.f32.mrf.mxu0
      %v6540 = vadd.f32 0.0, %v6539
      %v6541 = vpop.f32.mrf.mxu0
      %6542 = vmatprep.mubr.f32.mxu0 0.0
      %6543 = vmatmul.mubr.f32.gmra.mxu0 %v6378
      %v6544 = vpop.f32.mrf.mxu0
      %v6545 = vadd.f32 0.0, %v6544
      %v6546 = vpop.f32.mrf.mxu0
      %6547 = vmatprep.mubr.f32.mxu0 0.0
      %6548 = vmatmul.mubr.f32.gmra.mxu0 %v6381
      %v6549 = vpop.f32.mrf.mxu0
      %v6550 = vadd.f32 0.0, %v6549
      %v6551 = vpop.f32.mrf.mxu0
      %6552 = vmatprep.mubr.f32.mxu0 0.0
      %6553 = vmatmul.mubr.f32.gmra.mxu0 %v6384
      %v6554 = vpop.f32.mrf.mxu0
      %v6555 = vadd.f32 0.0, %v6554
      %v6556 = vpop.f32.mrf.mxu0
      %6557 = vmatprep.mubr.f32.mxu0 0.0
      %6558 = vmatmul.mubr.f32.gmra.mxu0 %v6387
      %v6559 = vpop.f32.mrf.mxu0
      %v6560 = vadd.f32 0.0, %v6559
      %v6561 = vpop.f32.mrf.mxu0
      %6562 = vmatprep.mubr.f32.mxu0 0.0
      %6563 = vmatmul.mubr.f32.gmra.mxu0 %v6390
      %v6564 = vpop.f32.mrf.mxu0
      %v6565 = vadd.f32 0.0, %v6564
      %v6566 = vpop.f32.mrf.mxu0
      %6567 = vmatprep.mubr.f32.mxu0 0.0
      %6568 = vmatmul.mubr.f32.gmra.mxu0 %v6393
      %v6569 = vpop.f32.mrf.mxu0
      %v6570 = vadd.f32 0.0, %v6569
      %v6571 = vpop.f32.mrf.mxu0
      %6572 = vmatprep.mubr.f32.mxu0 0.0
      %6573 = vmatmul.mubr.f32.gmra.mxu0 %v6396
      %v6574 = vpop.f32.mrf.mxu0
      %v6575 = vadd.f32 0.0, %v6574
      %v6576 = vpop.f32.mrf.mxu0
      %6577 = vmatprep.mubr.f32.mxu0 0.0
      %6578 = vmatmul.mubr.f32.gmra.mxu0 %v6399
      %v6579 = vpop.f32.mrf.mxu0
      %v6580 = vadd.f32 0.0, %v6579
      %v6581 = vpop.f32.mrf.mxu0
      %6582 = vmatprep.mubr.f32.mxu0 0.0
      %6583 = vmatmul.mubr.f32.gmra.mxu0 %v6402
      %v6584 = vpop.f32.mrf.mxu0
      %v6585 = vadd.f32 0.0, %v6584
      %v6586 = vpop.f32.mrf.mxu0
      %6587 = vmatprep.mubr.f32.mxu0 0.0
      %6588 = vmatmul.mubr.f32.gmra.mxu0 %v6405
      %v6589 = vpop.f32.mrf.mxu0
      %v6590 = vadd.f32 0.0, %v6589
      %v6591 = vpop.f32.mrf.mxu0
      %6592 = vmatprep.mubr.f32.mxu0 0.0
      %6593 = vmatmul.mubr.f32.gmra.mxu0 %v6408
      %v6594 = vpop.f32.mrf.mxu0
      %v6595 = vadd.f32 0.0, %v6594
      %v6596 = vpop.f32.mrf.mxu0
      %6597 = vmatprep.mubr.f32.mxu0 0.0
      %6598 = vmatmul.mubr.f32.gmra.mxu0 %v6411
      %v6599 = vpop.f32.mrf.mxu0
      %v6600 = vadd.f32 0.0, %v6599
      %v6601 = vpop.f32.mrf.mxu0
      %6602 = vmatprep.mubr.f32.mxu0 0.0
      %6603 = vmatmul.mubr.f32.gmra.mxu0 %v6414
      %v6604 = vpop.f32.mrf.mxu0
      %v6605 = vadd.f32 0.0, %v6604
      %v6606 = vpop.f32.mrf.mxu0
      %6607 = vmatprep.mubr.f32.mxu0 0.0
      %6608 = vmatmul.mubr.f32.gmra.mxu0 %v6417
      %v6609 = vpop.f32.mrf.mxu0
      %v6610 = vadd.f32 0.0, %v6609
      %v6611 = vpop.f32.mrf.mxu0
      %6612 = vmatprep.mubr.f32.mxu0 0.0
      %6613 = vmatmul.mubr.f32.gmra.mxu0 %v6420
      %v6614 = vpop.f32.mrf.mxu0
      %v6615 = vadd.f32 0.0, %v6614
      %v6616 = vpop.f32.mrf.mxu0
      %6617 = vmatprep.mubr.f32.mxu0 0.0
      %6618 = vmatmul.mubr.f32.gmra.mxu0 %v6423
      %v6619 = vpop.f32.mrf.mxu0
      %v6620 = vadd.f32 0.0, %v6619
      %v6621 = vpop.f32.mrf.mxu0
      %6622 = vmatprep.mubr.f32.mxu0 0.0
      %6623 = vmatmul.mubr.f32.gmra.mxu0 %v6426
      %v6624 = vpop.f32.mrf.mxu0
      %v6625 = vadd.f32 0.0, %v6624
      %v6626 = vpop.f32.mrf.mxu0
      %6627 = vmatprep.mubr.f32.mxu0 0.0
      %6628 = vmatmul.mubr.f32.gmra.mxu0 %v6429
      %v6629 = vpop.f32.mrf.mxu0
      %v6630 = vadd.f32 0.0, %v6629
      %v6631 = vpop.f32.mrf.mxu0
      %6632 = vmatprep.mubr.f32.mxu0 0.0
      %6633 = vmatmul.mubr.f32.gmra.mxu0 %v6432
      %v6634 = vpop.f32.mrf.mxu0
      %v6635 = vadd.f32 0.0, %v6634
      %v6636 = vpop.f32.mrf.mxu0
      %6637 = vmatprep.mubr.f32.mxu0 0.0
      %6638 = vmatmul.mubr.f32.gmra.mxu0 %v6435
      %v6639 = vpop.f32.mrf.mxu0
      %v6640 = vadd.f32 0.0, %v6639
      %v6641 = vpop.f32.mrf.mxu0
      %6642 = vmatprep.mubr.f32.mxu0 0.0
      %6643 = vmatmul.mubr.f32.gmra.mxu0 %v6438
      %v6644 = vpop.f32.mrf.mxu0
      %v6645 = vadd.f32 0.0, %v6644
      %v6646 = vpop.f32.mrf.mxu0
      %6647 = vmatprep.mubr.f32.mxu0 0.0
      %6648 = vmatmul.mubr.f32.gmra.mxu0 %v6441
      %v6649 = vpop.f32.mrf.mxu0
      %v6650 = vadd.f32 0.0, %v6649
      %v6651 = vpop.f32.mrf.mxu0
      %6652 = vmatprep.mubr.f32.mxu0 0.0
      %6653 = vmatmul.mubr.f32.gmra.mxu0 %v6444
      %v6654 = vpop.f32.mrf.mxu0
      %v6655 = vadd.f32 0.0, %v6654
      %v6656 = vpop.f32.mrf.mxu0
      %6657 = vmatprep.mubr.f32.mxu0 0.0
      %6658 = vmatmul.mubr.f32.gmra.mxu0 %v6447
      %v6659 = vpop.f32.mrf.mxu0
      %v6660 = vadd.f32 0.0, %v6659
      %v6661 = vpop.f32.mrf.mxu0
      %6662 = vmatprep.mubr.f32.mxu0 0.0
      %6663 = vmatmul.mubr.f32.gmra.mxu0 %v6450
      %v6664 = vpop.f32.mrf.mxu0
      %v6665 = vadd.f32 0.0, %v6664
      %v6666 = vpop.f32.mrf.mxu0
      %6667 = vmatprep.mubr.f32.mxu0 0.0
      %6668 = vmatmul.mubr.f32.gmra.mxu0 %v6453
      %v6669 = vpop.f32.mrf.mxu0
      %v6670 = vadd.f32 0.0, %v6669
      %v6671 = vpop.f32.mrf.mxu0
      %6672 = vmatprep.mubr.f32.mxu0 0.0
      %6673 = vmatmul.mubr.f32.gmra.mxu0 %v6456
      %v6674 = vpop.f32.mrf.mxu0
      %v6675 = vadd.f32 0.0, %v6674
      %v6676 = vpop.f32.mrf.mxu0
      %6677 = vmatprep.mubr.f32.mxu0 0.0
      %6678 = vmatmul.mubr.f32.gmra.mxu0 %v6459
      %v6679 = vpop.f32.mrf.mxu0
      %v6680 = vadd.f32 0.0, %v6679
      %v6681 = vpop.f32.mrf.mxu0
      %6682 = vmatprep.mubr.f32.mxu0 0.0
      %6683 = vmatmul.mubr.f32.gmra.mxu0 %v6462
      %v6684 = vpop.f32.mrf.mxu0
      %v6685 = vadd.f32 0.0, %v6684
      %v6686 = vpop.f32.mrf.mxu0
      %6687 = vmatprep.mubr.f32.mxu0 0.0
      %6688 = vmatmul.mubr.f32.gmra.mxu0 %v6465
      %v6689 = vpop.f32.mrf.mxu0
      %v6690 = vadd.f32 0.0, %v6689
      %v6691 = vpop.f32.mrf.mxu0
      %6692 = vmatprep.mubr.f32.mxu0 0.0
      %6693 = vmatmul.mubr.f32.gmra.mxu0 %v6468
      %v6694 = vpop.f32.mrf.mxu0
      %v6695 = vadd.f32 0.0, %v6694
      %v6696 = vpop.f32.mrf.mxu0
      %6697 = vdwg.mxu0
      %v6698 = vadd.f32 %v6308, %v6540
      %v6699 = vadd.f32 %v6309, %v6545
      %v6700 = vadd.f32 %v6310, %v6550
      %v6701 = vadd.f32 %v6311, %v6555
      %v6702 = vadd.f32 %v6312, %v6560
      %v6703 = vadd.f32 %v6313, %v6565
      %v6704 = vadd.f32 %v6314, %v6570
      %v6705 = vadd.f32 %v6315, %v6575
      %v6706 = vadd.f32 %v6316, %v6580
      %v6707 = vadd.f32 %v6317, %v6585
      %v6708 = vadd.f32 %v6318, %v6590
      %v6709 = vadd.f32 %v6319, %v6595
      %v6710 = vadd.f32 %v6320, %v6600
      %v6711 = vadd.f32 %v6321, %v6605
      %v6712 = vadd.f32 %v6322, %v6610
      %v6713 = vadd.f32 %v6323, %v6615
      %v6714 = vadd.f32 %v6324, %v6620
      %v6715 = vadd.f32 %v6325, %v6625
      %v6716 = vadd.f32 %v6326, %v6630
      %v6717 = vadd.f32 %v6327, %v6635
      %v6718 = vadd.f32 %v6328, %v6640
      %v6719 = vadd.f32 %v6329, %v6645
      %v6720 = vadd.f32 %v6330, %v6650
      %v6721 = vadd.f32 %v6331, %v6655
      %v6722 = vadd.f32 %v6332, %v6660
      %v6723 = vadd.f32 %v6333, %v6665
      %v6724 = vadd.f32 %v6334, %v6670
      %v6725 = vadd.f32 %v6335, %v6675
      %v6726 = vadd.f32 %v6336, %v6680
      %v6727 = vadd.f32 %v6337, %v6685
      %v6728 = vadd.f32 %v6338, %v6690
      %v6729 = vadd.f32 %v6339, %v6695
      %v6730 = vld [vmem:[%s969 + $0x2] sm:$0xff]
      %v6731 = vld [vmem:[%s969 + $0x12] sm:$0xff]
      %v6732 = vld [vmem:[%s969 + $0x22] sm:$0xff]
      %v6733 = vld [vmem:[%s969 + $0x32] sm:$0xff]
      %v6734 = vld [vmem:[%s969 + $0x42] sm:$0xff]
      %v6735 = vld [vmem:[%s969 + $0x52] sm:$0xff]
      %v6736 = vld [vmem:[%s969 + $0x62] sm:$0xff]
      %v6737 = vld [vmem:[%s969 + $0x72] sm:$0xff]
      %v6738 = vld [vmem:[%s969 + $0xa2] sm:$0xff]
      %v6739 = vld [vmem:[%s969 + $0xb2] sm:$0xff]
      %v6740 = vld [vmem:[%s969 + $0xc2] sm:$0xff]
      %v6741 = vld [vmem:[%s969 + $0xd2] sm:$0xff]
      %v6742 = vld [vmem:[%s969 + $0xe2] sm:$0xff]
      %v6743 = vld [vmem:[%s969 + $0xf2] sm:$0xff]
      %v6744 = vld [vmem:[%s969 + $0x102] sm:$0xff]
      %v6745 = vld [vmem:[%s969 + $0x112] sm:$0xff]
      %v6746 = vld [vmem:[%s969 + $0x142] sm:$0xff]
      %v6747 = vld [vmem:[%s969 + $0x152] sm:$0xff]
      %v6748 = vld [vmem:[%s969 + $0x162] sm:$0xff]
      %v6749 = vld [vmem:[%s969 + $0x172] sm:$0xff]
      %v6750 = vld [vmem:[%s969 + $0x182] sm:$0xff]
      %v6751 = vld [vmem:[%s969 + $0x192] sm:$0xff]
      %v6752 = vld [vmem:[%s969 + $0x1a2] sm:$0xff]
      %v6753 = vld [vmem:[%s969 + $0x1b2] sm:$0xff]
      %v6754 = vld [vmem:[%s969 + $0x1e2] sm:$0xff]
      %v6755 = vld [vmem:[%s969 + $0x1f2] sm:$0xff]
      %v6756 = vld [vmem:[%s969 + $0x202] sm:$0xff]
      %v6757 = vld [vmem:[%s969 + $0x212] sm:$0xff]
      %v6758 = vld [vmem:[%s969 + $0x222] sm:$0xff]
      %v6759 = vld [vmem:[%s969 + $0x232] sm:$0xff]
      %v6760 = vld [vmem:[%s969 + $0x242] sm:$0xff]
      %v6761 = vld [vmem:[%s969 + $0x252] sm:$0xff]
      %s6762 = scalar_lea.vmem %s5, 28
      %v6763 = vld [vmem:[%s6762] sm:$0x3]
      %v6765 = vsel %vm451, %v6730, 0
      %v6768 = vsel %vm451, %v6731, 0
      %v6771 = vsel %vm451, %v6732, 0
      %v6774 = vsel %vm451, %v6733, 0
      %v6777 = vsel %vm451, %v6734, 0
      %v6780 = vsel %vm451, %v6735, 0
      %v6783 = vsel %vm451, %v6736, 0
      %v6786 = vsel %vm451, %v6737, 0
      %v6789 = vsel %vm451, %v6738, 0
      %v6792 = vsel %vm451, %v6739, 0
      %v6795 = vsel %vm451, %v6740, 0
      %v6798 = vsel %vm451, %v6741, 0
      %v6801 = vsel %vm451, %v6742, 0
      %v6804 = vsel %vm451, %v6743, 0
      %v6807 = vsel %vm451, %v6744, 0
      %v6810 = vsel %vm451, %v6745, 0
      %v6813 = vsel %vm451, %v6746, 0
      %v6816 = vsel %vm451, %v6747, 0
      %v6819 = vsel %vm451, %v6748, 0
      %v6822 = vsel %vm451, %v6749, 0
      %v6825 = vsel %vm451, %v6750, 0
      %v6828 = vsel %vm451, %v6751, 0
      %v6831 = vsel %vm451, %v6752, 0
      %v6834 = vsel %vm451, %v6753, 0
      %v6837 = vsel %vm451, %v6754, 0
      %v6840 = vsel %vm451, %v6755, 0
      %v6843 = vsel %vm451, %v6756, 0
      %v6846 = vsel %vm451, %v6757, 0
      %v6849 = vsel %vm451, %v6758, 0
      %v6852 = vsel %vm451, %v6759, 0
      %v6855 = vsel %vm451, %v6760, 0
      %v6858 = vsel %vm451, %v6761, 0
      %v6861 = vsel %vm1495, %v6763, 0
      %6863 = vmatprep.subr.mxu0 0.0
      %6864 = vmatpush1.msra.mxu0 0.0
      %6865 = vmatprep.subr.mxu0 0.0
      %6866 = vmatpush1.msra.mxu0 0.0
      %6867 = vmatprep.subr.mxu0 0.0
      %6868 = vmatpush1.msra.mxu0 0.0
      %6869 = vmatprep.subr.mxu0 0.0
      %6870 = vmatpush1.msra.mxu0 0.0
      %6871 = vmatprep.subr.mxu0 0.0
      %6872 = vmatpush1.msra.mxu0 0.0
      %6873 = vmatprep.subr.mxu0 0.0
      %6874 = vmatpush1.msra.mxu0 0.0
      %6875 = vmatprep.subr.mxu0 0.0
      %6876 = vmatpush1.msra.mxu0 0.0
      %6877 = vmatprep.subr.mxu0 0.0
      %6878 = vmatpush1.msra.mxu0 0.0
      %6879 = vmatprep.subr.mxu0 0.0
      %6880 = vmatpush1.msra.mxu0 0.0
      %6881 = vmatprep.subr.mxu0 0.0
      %6882 = vmatpush1.msra.mxu0 0.0
      %6883 = vmatprep.subr.mxu0 0.0
      %6884 = vmatpush1.msra.mxu0 0.0
      %6885 = vmatprep.subr.mxu0 0.0
      %6886 = vmatpush1.msra.mxu0 0.0
      %6887 = vmatprep.subr.mxu0 0.0
      %6888 = vmatpush1.msra.mxu0 0.0
      %6889 = vmatprep.subr.mxu0 0.0
      %6890 = vmatpush1.msra.mxu0 0.0
      %6891 = vmatprep.subr.mxu0 0.0
      %6892 = vmatpush1.msra.mxu0 0.0
      %6893 = vmatprep.subr.mxu0 0.0
      %6894 = vmatpush1.msra.mxu0 %v6861
      %6895 = vmatprep.subr.mxu0 0.0
      %6896 = vmatpush2.msra.mxu0 0.0
      %6897 = vmatprep.subr.mxu0 0.0
      %6898 = vmatpush2.msra.mxu0 0.0
      %6899 = vmatprep.subr.mxu0 0.0
      %6900 = vmatpush2.msra.mxu0 0.0
      %6901 = vmatprep.subr.mxu0 0.0
      %6902 = vmatpush2.msra.mxu0 0.0
      %6903 = vmatprep.subr.mxu0 0.0
      %6904 = vmatpush2.msra.mxu0 0.0
      %6905 = vmatprep.subr.mxu0 0.0
      %6906 = vmatpush2.msra.mxu0 0.0
      %6907 = vmatprep.subr.mxu0 0.0
      %6908 = vmatpush2.msra.mxu0 0.0
      %6909 = vmatprep.subr.mxu0 0.0
      %6910 = vmatpush2.msra.mxu0 0.0
      %6911 = vmatprep.subr.mxu0 0.0
      %6912 = vmatpush2.msra.mxu0 0.0
      %6913 = vmatprep.subr.mxu0 0.0
      %6914 = vmatpush2.msra.mxu0 0.0
      %6915 = vmatprep.subr.mxu0 0.0
      %6916 = vmatpush2.msra.mxu0 0.0
      %6917 = vmatprep.subr.mxu0 0.0
      %6918 = vmatpush2.msra.mxu0 0.0
      %6919 = vmatprep.subr.mxu0 0.0
      %6920 = vmatpush2.msra.mxu0 0.0
      %6921 = vmatprep.subr.mxu0 0.0
      %6922 = vmatpush2.msra.mxu0 0.0
      %6923 = vmatprep.subr.mxu0 0.0
      %6924 = vmatpush2.msra.mxu0 0.0
      %6925 = vmatprep.subr.mxu0 0.0
      %6926 = vmatpush2.msra.mxu0 0.0
      %6927 = vmatprep.mubr.f32.mxu0 0.0
      %6928 = vmatmul.mubr.f32.gmra.mxu0 %v6765
      %v6929 = vpop.f32.mrf.mxu0
      %v6930 = vadd.f32 0.0, %v6929
      %v6931 = vpop.f32.mrf.mxu0
      %6932 = vmatprep.mubr.f32.mxu0 0.0
      %6933 = vmatmul.mubr.f32.gmra.mxu0 %v6768
      %v6934 = vpop.f32.mrf.mxu0
      %v6935 = vadd.f32 0.0, %v6934
      %v6936 = vpop.f32.mrf.mxu0
      %6937 = vmatprep.mubr.f32.mxu0 0.0
      %6938 = vmatmul.mubr.f32.gmra.mxu0 %v6771
      %v6939 = vpop.f32.mrf.mxu0
      %v6940 = vadd.f32 0.0, %v6939
      %v6941 = vpop.f32.mrf.mxu0
      %6942 = vmatprep.mubr.f32.mxu0 0.0
      %6943 = vmatmul.mubr.f32.gmra.mxu0 %v6774
      %v6944 = vpop.f32.mrf.mxu0
      %v6945 = vadd.f32 0.0, %v6944
      %v6946 = vpop.f32.mrf.mxu0
      %6947 = vmatprep.mubr.f32.mxu0 0.0
      %6948 = vmatmul.mubr.f32.gmra.mxu0 %v6777
      %v6949 = vpop.f32.mrf.mxu0
      %v6950 = vadd.f32 0.0, %v6949
      %v6951 = vpop.f32.mrf.mxu0
      %6952 = vmatprep.mubr.f32.mxu0 0.0
      %6953 = vmatmul.mubr.f32.gmra.mxu0 %v6780
      %v6954 = vpop.f32.mrf.mxu0
      %v6955 = vadd.f32 0.0, %v6954
      %v6956 = vpop.f32.mrf.mxu0
      %6957 = vmatprep.mubr.f32.mxu0 0.0
      %6958 = vmatmul.mubr.f32.gmra.mxu0 %v6783
      %v6959 = vpop.f32.mrf.mxu0
      %v6960 = vadd.f32 0.0, %v6959
      %v6961 = vpop.f32.mrf.mxu0
      %6962 = vmatprep.mubr.f32.mxu0 0.0
      %6963 = vmatmul.mubr.f32.gmra.mxu0 %v6786
      %v6964 = vpop.f32.mrf.mxu0
      %v6965 = vadd.f32 0.0, %v6964
      %v6966 = vpop.f32.mrf.mxu0
      %6967 = vmatprep.mubr.f32.mxu0 0.0
      %6968 = vmatmul.mubr.f32.gmra.mxu0 %v6789
      %v6969 = vpop.f32.mrf.mxu0
      %v6970 = vadd.f32 0.0, %v6969
      %v6971 = vpop.f32.mrf.mxu0
      %6972 = vmatprep.mubr.f32.mxu0 0.0
      %6973 = vmatmul.mubr.f32.gmra.mxu0 %v6792
      %v6974 = vpop.f32.mrf.mxu0
      %v6975 = vadd.f32 0.0, %v6974
      %v6976 = vpop.f32.mrf.mxu0
      %6977 = vmatprep.mubr.f32.mxu0 0.0
      %6978 = vmatmul.mubr.f32.gmra.mxu0 %v6795
      %v6979 = vpop.f32.mrf.mxu0
      %v6980 = vadd.f32 0.0, %v6979
      %v6981 = vpop.f32.mrf.mxu0
      %6982 = vmatprep.mubr.f32.mxu0 0.0
      %6983 = vmatmul.mubr.f32.gmra.mxu0 %v6798
      %v6984 = vpop.f32.mrf.mxu0
      %v6985 = vadd.f32 0.0, %v6984
      %v6986 = vpop.f32.mrf.mxu0
      %6987 = vmatprep.mubr.f32.mxu0 0.0
      %6988 = vmatmul.mubr.f32.gmra.mxu0 %v6801
      %v6989 = vpop.f32.mrf.mxu0
      %v6990 = vadd.f32 0.0, %v6989
      %v6991 = vpop.f32.mrf.mxu0
      %6992 = vmatprep.mubr.f32.mxu0 0.0
      %6993 = vmatmul.mubr.f32.gmra.mxu0 %v6804
      %v6994 = vpop.f32.mrf.mxu0
      %v6995 = vadd.f32 0.0, %v6994
      %v6996 = vpop.f32.mrf.mxu0
      %6997 = vmatprep.mubr.f32.mxu0 0.0
      %6998 = vmatmul.mubr.f32.gmra.mxu0 %v6807
      %v6999 = vpop.f32.mrf.mxu0
      %v7000 = vadd.f32 0.0, %v6999
      %v7001 = vpop.f32.mrf.mxu0
      %7002 = vmatprep.mubr.f32.mxu0 0.0
      %7003 = vmatmul.mubr.f32.gmra.mxu0 %v6810
      %v7004 = vpop.f32.mrf.mxu0
      %v7005 = vadd.f32 0.0, %v7004
      %v7006 = vpop.f32.mrf.mxu0
      %7007 = vmatprep.mubr.f32.mxu0 0.0
      %7008 = vmatmul.mubr.f32.gmra.mxu0 %v6813
      %v7009 = vpop.f32.mrf.mxu0
      %v7010 = vadd.f32 0.0, %v7009
      %v7011 = vpop.f32.mrf.mxu0
      %7012 = vmatprep.mubr.f32.mxu0 0.0
      %7013 = vmatmul.mubr.f32.gmra.mxu0 %v6816
      %v7014 = vpop.f32.mrf.mxu0
      %v7015 = vadd.f32 0.0, %v7014
      %v7016 = vpop.f32.mrf.mxu0
      %7017 = vmatprep.mubr.f32.mxu0 0.0
      %7018 = vmatmul.mubr.f32.gmra.mxu0 %v6819
      %v7019 = vpop.f32.mrf.mxu0
      %v7020 = vadd.f32 0.0, %v7019
      %v7021 = vpop.f32.mrf.mxu0
      %7022 = vmatprep.mubr.f32.mxu0 0.0
      %7023 = vmatmul.mubr.f32.gmra.mxu0 %v6822
      %v7024 = vpop.f32.mrf.mxu0
      %v7025 = vadd.f32 0.0, %v7024
      %v7026 = vpop.f32.mrf.mxu0
      %7027 = vmatprep.mubr.f32.mxu0 0.0
      %7028 = vmatmul.mubr.f32.gmra.mxu0 %v6825
      %v7029 = vpop.f32.mrf.mxu0
      %v7030 = vadd.f32 0.0, %v7029
      %v7031 = vpop.f32.mrf.mxu0
      %7032 = vmatprep.mubr.f32.mxu0 0.0
      %7033 = vmatmul.mubr.f32.gmra.mxu0 %v6828
      %v7034 = vpop.f32.mrf.mxu0
      %v7035 = vadd.f32 0.0, %v7034
      %v7036 = vpop.f32.mrf.mxu0
      %7037 = vmatprep.mubr.f32.mxu0 0.0
      %7038 = vmatmul.mubr.f32.gmra.mxu0 %v6831
      %v7039 = vpop.f32.mrf.mxu0
      %v7040 = vadd.f32 0.0, %v7039
      %v7041 = vpop.f32.mrf.mxu0
      %7042 = vmatprep.mubr.f32.mxu0 0.0
      %7043 = vmatmul.mubr.f32.gmra.mxu0 %v6834
      %v7044 = vpop.f32.mrf.mxu0
      %v7045 = vadd.f32 0.0, %v7044
      %v7046 = vpop.f32.mrf.mxu0
      %7047 = vmatprep.mubr.f32.mxu0 0.0
      %7048 = vmatmul.mubr.f32.gmra.mxu0 %v6837
      %v7049 = vpop.f32.mrf.mxu0
      %v7050 = vadd.f32 0.0, %v7049
      %v7051 = vpop.f32.mrf.mxu0
      %7052 = vmatprep.mubr.f32.mxu0 0.0
      %7053 = vmatmul.mubr.f32.gmra.mxu0 %v6840
      %v7054 = vpop.f32.mrf.mxu0
      %v7055 = vadd.f32 0.0, %v7054
      %v7056 = vpop.f32.mrf.mxu0
      %7057 = vmatprep.mubr.f32.mxu0 0.0
      %7058 = vmatmul.mubr.f32.gmra.mxu0 %v6843
      %v7059 = vpop.f32.mrf.mxu0
      %v7060 = vadd.f32 0.0, %v7059
      %v7061 = vpop.f32.mrf.mxu0
      %7062 = vmatprep.mubr.f32.mxu0 0.0
      %7063 = vmatmul.mubr.f32.gmra.mxu0 %v6846
      %v7064 = vpop.f32.mrf.mxu0
      %v7065 = vadd.f32 0.0, %v7064
      %v7066 = vpop.f32.mrf.mxu0
      %7067 = vmatprep.mubr.f32.mxu0 0.0
      %7068 = vmatmul.mubr.f32.gmra.mxu0 %v6849
      %v7069 = vpop.f32.mrf.mxu0
      %v7070 = vadd.f32 0.0, %v7069
      %v7071 = vpop.f32.mrf.mxu0
      %7072 = vmatprep.mubr.f32.mxu0 0.0
      %7073 = vmatmul.mubr.f32.gmra.mxu0 %v6852
      %v7074 = vpop.f32.mrf.mxu0
      %v7075 = vadd.f32 0.0, %v7074
      %v7076 = vpop.f32.mrf.mxu0
      %7077 = vmatprep.mubr.f32.mxu0 0.0
      %7078 = vmatmul.mubr.f32.gmra.mxu0 %v6855
      %v7079 = vpop.f32.mrf.mxu0
      %v7080 = vadd.f32 0.0, %v7079
      %v7081 = vpop.f32.mrf.mxu0
      %7082 = vmatprep.mubr.f32.mxu0 0.0
      %7083 = vmatmul.mubr.f32.gmra.mxu0 %v6858
      %v7084 = vpop.f32.mrf.mxu0
      %v7085 = vadd.f32 0.0, %v7084
      %v7086 = vpop.f32.mrf.mxu0
      %7087 = vdwg.mxu0
      %v7088 = vadd.f32 %v6698, %v6930
      %v7089 = vadd.f32 %v6699, %v6935
      %v7090 = vadd.f32 %v6700, %v6940
      %v7091 = vadd.f32 %v6701, %v6945
      %v7092 = vadd.f32 %v6702, %v6950
      %v7093 = vadd.f32 %v6703, %v6955
      %v7094 = vadd.f32 %v6704, %v6960
      %v7095 = vadd.f32 %v6705, %v6965
      %v7096 = vadd.f32 %v6706, %v6970
      %v7097 = vadd.f32 %v6707, %v6975
      %v7098 = vadd.f32 %v6708, %v6980
      %v7099 = vadd.f32 %v6709, %v6985
      %v7100 = vadd.f32 %v6710, %v6990
      %v7101 = vadd.f32 %v6711, %v6995
      %v7102 = vadd.f32 %v6712, %v7000
      %v7103 = vadd.f32 %v6713, %v7005
      %v7104 = vadd.f32 %v6714, %v7010
      %v7105 = vadd.f32 %v6715, %v7015
      %v7106 = vadd.f32 %v6716, %v7020
      %v7107 = vadd.f32 %v6717, %v7025
      %v7108 = vadd.f32 %v6718, %v7030
      %v7109 = vadd.f32 %v6719, %v7035
      %v7110 = vadd.f32 %v6720, %v7040
      %v7111 = vadd.f32 %v6721, %v7045
      %v7112 = vadd.f32 %v6722, %v7050
      %v7113 = vadd.f32 %v6723, %v7055
      %v7114 = vadd.f32 %v6724, %v7060
      %v7115 = vadd.f32 %v6725, %v7065
      %v7116 = vadd.f32 %v6726, %v7070
      %v7117 = vadd.f32 %v6727, %v7075
      %v7118 = vadd.f32 %v6728, %v7080
      %v7119 = vadd.f32 %v6729, %v7085
      %s7120 = scalar_lea.vmem [#allocation2], 192
      %v7121 = vld [vmem:[%s7120] sm:$0xff]
      %v7122 = vld [vmem:[%s7120 + $0x10] sm:$0xff]
      %v7123 = vld [vmem:[%s7120 + $0x20] sm:$0xff]
      %v7124 = vld [vmem:[%s7120 + $0x30] sm:$0xff]
      %v7125 = vld [vmem:[%s7120 + $0x40] sm:$0xff]
      %v7126 = vld [vmem:[%s7120 + $0x50] sm:$0xff]
      %v7127 = vld [vmem:[%s7120 + $0x60] sm:$0xff]
      %v7128 = vld [vmem:[%s7120 + $0x70] sm:$0xff]
      %v7129 = vld [vmem:[%s7120 + $0xa0] sm:$0xff]
      %v7130 = vld [vmem:[%s7120 + $0xb0] sm:$0xff]
      %v7131 = vld [vmem:[%s7120 + $0xc0] sm:$0xff]
      %v7132 = vld [vmem:[%s7120 + $0xd0] sm:$0xff]
      %v7133 = vld [vmem:[%s7120 + $0xe0] sm:$0xff]
      %v7134 = vld [vmem:[%s7120 + $0xf0] sm:$0xff]
      %v7135 = vld [vmem:[%s7120 + $0x100] sm:$0xff]
      %v7136 = vld [vmem:[%s7120 + $0x110] sm:$0xff]
      %v7137 = vld [vmem:[%s7120 + $0x140] sm:$0xff]
      %v7138 = vld [vmem:[%s7120 + $0x150] sm:$0xff]
      %v7139 = vld [vmem:[%s7120 + $0x160] sm:$0xff]
      %v7140 = vld [vmem:[%s7120 + $0x170] sm:$0xff]
      %v7141 = vld [vmem:[%s7120 + $0x180] sm:$0xff]
      %v7142 = vld [vmem:[%s7120 + $0x190] sm:$0xff]
      %v7143 = vld [vmem:[%s7120 + $0x1a0] sm:$0xff]
      %v7144 = vld [vmem:[%s7120 + $0x1b0] sm:$0xff]
      %v7145 = vld [vmem:[%s7120 + $0x1e0] sm:$0xff]
      %v7146 = vld [vmem:[%s7120 + $0x1f0] sm:$0xff]
      %v7147 = vld [vmem:[%s7120 + $0x200] sm:$0xff]
      %v7148 = vld [vmem:[%s7120 + $0x210] sm:$0xff]
      %v7149 = vld [vmem:[%s7120 + $0x220] sm:$0xff]
      %v7150 = vld [vmem:[%s7120 + $0x230] sm:$0xff]
      %v7151 = vld [vmem:[%s7120 + $0x240] sm:$0xff]
      %v7152 = vld [vmem:[%s7120 + $0x250] sm:$0xff]
      %s7153 = scalar_lea.vmem %s5, 30
      %v7154 = vld [vmem:[%s7153] sm:$0x3]
      %v7156 = vsel %vm451, %v7121, 0
      %v7159 = vsel %vm451, %v7122, 0
      %v7162 = vsel %vm451, %v7123, 0
      %v7165 = vsel %vm451, %v7124, 0
      %v7168 = vsel %vm451, %v7125, 0
      %v7171 = vsel %vm451, %v7126, 0
      %v7174 = vsel %vm451, %v7127, 0
      %v7177 = vsel %vm451, %v7128, 0
      %v7180 = vsel %vm451, %v7129, 0
      %v7183 = vsel %vm451, %v7130, 0
      %v7186 = vsel %vm451, %v7131, 0
      %v7189 = vsel %vm451, %v7132, 0
      %v7192 = vsel %vm451, %v7133, 0
      %v7195 = vsel %vm451, %v7134, 0
      %v7198 = vsel %vm451, %v7135, 0
      %v7201 = vsel %vm451, %v7136, 0
      %v7204 = vsel %vm451, %v7137, 0
      %v7207 = vsel %vm451, %v7138, 0
      %v7210 = vsel %vm451, %v7139, 0
      %v7213 = vsel %vm451, %v7140, 0
      %v7216 = vsel %vm451, %v7141, 0
      %v7219 = vsel %vm451, %v7142, 0
      %v7222 = vsel %vm451, %v7143, 0
      %v7225 = vsel %vm451, %v7144, 0
      %v7228 = vsel %vm451, %v7145, 0
      %v7231 = vsel %vm451, %v7146, 0
      %v7234 = vsel %vm451, %v7147, 0
      %v7237 = vsel %vm451, %v7148, 0
      %v7240 = vsel %vm451, %v7149, 0
      %v7243 = vsel %vm451, %v7150, 0
      %v7246 = vsel %vm451, %v7151, 0
      %v7249 = vsel %vm451, %v7152, 0
      %v7252 = vsel %vm1495, %v7154, 0
      %7254 = vmatprep.subr.mxu0 0.0
      %7255 = vmatpush1.msra.mxu0 0.0
      %7256 = vmatprep.subr.mxu0 0.0
      %7257 = vmatpush1.msra.mxu0 0.0
      %7258 = vmatprep.subr.mxu0 0.0
      %7259 = vmatpush1.msra.mxu0 0.0
      %7260 = vmatprep.subr.mxu0 0.0
      %7261 = vmatpush1.msra.mxu0 0.0
      %7262 = vmatprep.subr.mxu0 0.0
      %7263 = vmatpush1.msra.mxu0 0.0
      %7264 = vmatprep.subr.mxu0 0.0
      %7265 = vmatpush1.msra.mxu0 0.0
      %7266 = vmatprep.subr.mxu0 0.0
      %7267 = vmatpush1.msra.mxu0 0.0
      %7268 = vmatprep.subr.mxu0 0.0
      %7269 = vmatpush1.msra.mxu0 0.0
      %7270 = vmatprep.subr.mxu0 0.0
      %7271 = vmatpush1.msra.mxu0 0.0
      %7272 = vmatprep.subr.mxu0 0.0
      %7273 = vmatpush1.msra.mxu0 0.0
      %7274 = vmatprep.subr.mxu0 0.0
      %7275 = vmatpush1.msra.mxu0 0.0
      %7276 = vmatprep.subr.mxu0 0.0
      %7277 = vmatpush1.msra.mxu0 0.0
      %7278 = vmatprep.subr.mxu0 0.0
      %7279 = vmatpush1.msra.mxu0 0.0
      %7280 = vmatprep.subr.mxu0 0.0
      %7281 = vmatpush1.msra.mxu0 0.0
      %7282 = vmatprep.subr.mxu0 0.0
      %7283 = vmatpush1.msra.mxu0 0.0
      %7284 = vmatprep.subr.mxu0 0.0
      %7285 = vmatpush1.msra.mxu0 %v7252
      %7286 = vmatprep.subr.mxu0 0.0
      %7287 = vmatpush2.msra.mxu0 0.0
      %7288 = vmatprep.subr.mxu0 0.0
      %7289 = vmatpush2.msra.mxu0 0.0
      %7290 = vmatprep.subr.mxu0 0.0
      %7291 = vmatpush2.msra.mxu0 0.0
      %7292 = vmatprep.subr.mxu0 0.0
      %7293 = vmatpush2.msra.mxu0 0.0
      %7294 = vmatprep.subr.mxu0 0.0
      %7295 = vmatpush2.msra.mxu0 0.0
      %7296 = vmatprep.subr.mxu0 0.0
      %7297 = vmatpush2.msra.mxu0 0.0
      %7298 = vmatprep.subr.mxu0 0.0
      %7299 = vmatpush2.msra.mxu0 0.0
      %7300 = vmatprep.subr.mxu0 0.0
      %7301 = vmatpush2.msra.mxu0 0.0
      %7302 = vmatprep.subr.mxu0 0.0
      %7303 = vmatpush2.msra.mxu0 0.0
      %7304 = vmatprep.subr.mxu0 0.0
      %7305 = vmatpush2.msra.mxu0 0.0
      %7306 = vmatprep.subr.mxu0 0.0
      %7307 = vmatpush2.msra.mxu0 0.0
      %7308 = vmatprep.subr.mxu0 0.0
      %7309 = vmatpush2.msra.mxu0 0.0
      %7310 = vmatprep.subr.mxu0 0.0
      %7311 = vmatpush2.msra.mxu0 0.0
      %7312 = vmatprep.subr.mxu0 0.0
      %7313 = vmatpush2.msra.mxu0 0.0
      %7314 = vmatprep.subr.mxu0 0.0
      %7315 = vmatpush2.msra.mxu0 0.0
      %7316 = vmatprep.subr.mxu0 0.0
      %7317 = vmatpush2.msra.mxu0 0.0
      %7318 = vmatprep.mubr.f32.mxu0 0.0
      %7319 = vmatmul.mubr.f32.gmra.mxu0 %v7156
      %v7320 = vpop.f32.mrf.mxu0
      %v7321 = vadd.f32 0.0, %v7320
      %v7322 = vpop.f32.mrf.mxu0
      %7323 = vmatprep.mubr.f32.mxu0 0.0
      %7324 = vmatmul.mubr.f32.gmra.mxu0 %v7159
      %v7325 = vpop.f32.mrf.mxu0
      %v7326 = vadd.f32 0.0, %v7325
      %v7327 = vpop.f32.mrf.mxu0
      %7328 = vmatprep.mubr.f32.mxu0 0.0
      %7329 = vmatmul.mubr.f32.gmra.mxu0 %v7162
      %v7330 = vpop.f32.mrf.mxu0
      %v7331 = vadd.f32 0.0, %v7330
      %v7332 = vpop.f32.mrf.mxu0
      %7333 = vmatprep.mubr.f32.mxu0 0.0
      %7334 = vmatmul.mubr.f32.gmra.mxu0 %v7165
      %v7335 = vpop.f32.mrf.mxu0
      %v7336 = vadd.f32 0.0, %v7335
      %v7337 = vpop.f32.mrf.mxu0
      %7338 = vmatprep.mubr.f32.mxu0 0.0
      %7339 = vmatmul.mubr.f32.gmra.mxu0 %v7168
      %v7340 = vpop.f32.mrf.mxu0
      %v7341 = vadd.f32 0.0, %v7340
      %v7342 = vpop.f32.mrf.mxu0
      %7343 = vmatprep.mubr.f32.mxu0 0.0
      %7344 = vmatmul.mubr.f32.gmra.mxu0 %v7171
      %v7345 = vpop.f32.mrf.mxu0
      %v7346 = vadd.f32 0.0, %v7345
      %v7347 = vpop.f32.mrf.mxu0
      %7348 = vmatprep.mubr.f32.mxu0 0.0
      %7349 = vmatmul.mubr.f32.gmra.mxu0 %v7174
      %v7350 = vpop.f32.mrf.mxu0
      %v7351 = vadd.f32 0.0, %v7350
      %v7352 = vpop.f32.mrf.mxu0
      %7353 = vmatprep.mubr.f32.mxu0 0.0
      %7354 = vmatmul.mubr.f32.gmra.mxu0 %v7177
      %v7355 = vpop.f32.mrf.mxu0
      %v7356 = vadd.f32 0.0, %v7355
      %v7357 = vpop.f32.mrf.mxu0
      %7358 = vmatprep.mubr.f32.mxu0 0.0
      %7359 = vmatmul.mubr.f32.gmra.mxu0 %v7180
      %v7360 = vpop.f32.mrf.mxu0
      %v7361 = vadd.f32 0.0, %v7360
      %v7362 = vpop.f32.mrf.mxu0
      %7363 = vmatprep.mubr.f32.mxu0 0.0
      %7364 = vmatmul.mubr.f32.gmra.mxu0 %v7183
      %v7365 = vpop.f32.mrf.mxu0
      %v7366 = vadd.f32 0.0, %v7365
      %v7367 = vpop.f32.mrf.mxu0
      %7368 = vmatprep.mubr.f32.mxu0 0.0
      %7369 = vmatmul.mubr.f32.gmra.mxu0 %v7186
      %v7370 = vpop.f32.mrf.mxu0
      %v7371 = vadd.f32 0.0, %v7370
      %v7372 = vpop.f32.mrf.mxu0
      %7373 = vmatprep.mubr.f32.mxu0 0.0
      %7374 = vmatmul.mubr.f32.gmra.mxu0 %v7189
      %v7375 = vpop.f32.mrf.mxu0
      %v7376 = vadd.f32 0.0, %v7375
      %v7377 = vpop.f32.mrf.mxu0
      %7378 = vmatprep.mubr.f32.mxu0 0.0
      %7379 = vmatmul.mubr.f32.gmra.mxu0 %v7192
      %v7380 = vpop.f32.mrf.mxu0
      %v7381 = vadd.f32 0.0, %v7380
      %v7382 = vpop.f32.mrf.mxu0
      %7383 = vmatprep.mubr.f32.mxu0 0.0
      %7384 = vmatmul.mubr.f32.gmra.mxu0 %v7195
      %v7385 = vpop.f32.mrf.mxu0
      %v7386 = vadd.f32 0.0, %v7385
      %v7387 = vpop.f32.mrf.mxu0
      %7388 = vmatprep.mubr.f32.mxu0 0.0
      %7389 = vmatmul.mubr.f32.gmra.mxu0 %v7198
      %v7390 = vpop.f32.mrf.mxu0
      %v7391 = vadd.f32 0.0, %v7390
      %v7392 = vpop.f32.mrf.mxu0
      %7393 = vmatprep.mubr.f32.mxu0 0.0
      %7394 = vmatmul.mubr.f32.gmra.mxu0 %v7201
      %v7395 = vpop.f32.mrf.mxu0
      %v7396 = vadd.f32 0.0, %v7395
      %v7397 = vpop.f32.mrf.mxu0
      %7398 = vmatprep.mubr.f32.mxu0 0.0
      %7399 = vmatmul.mubr.f32.gmra.mxu0 %v7204
      %v7400 = vpop.f32.mrf.mxu0
      %v7401 = vadd.f32 0.0, %v7400
      %v7402 = vpop.f32.mrf.mxu0
      %7403 = vmatprep.mubr.f32.mxu0 0.0
      %7404 = vmatmul.mubr.f32.gmra.mxu0 %v7207
      %v7405 = vpop.f32.mrf.mxu0
      %v7406 = vadd.f32 0.0, %v7405
      %v7407 = vpop.f32.mrf.mxu0
      %7408 = vmatprep.mubr.f32.mxu0 0.0
      %7409 = vmatmul.mubr.f32.gmra.mxu0 %v7210
      %v7410 = vpop.f32.mrf.mxu0
      %v7411 = vadd.f32 0.0, %v7410
      %v7412 = vpop.f32.mrf.mxu0
      %7413 = vmatprep.mubr.f32.mxu0 0.0
      %7414 = vmatmul.mubr.f32.gmra.mxu0 %v7213
      %v7415 = vpop.f32.mrf.mxu0
      %v7416 = vadd.f32 0.0, %v7415
      %v7417 = vpop.f32.mrf.mxu0
      %7418 = vmatprep.mubr.f32.mxu0 0.0
      %7419 = vmatmul.mubr.f32.gmra.mxu0 %v7216
      %v7420 = vpop.f32.mrf.mxu0
      %v7421 = vadd.f32 0.0, %v7420
      %v7422 = vpop.f32.mrf.mxu0
      %7423 = vmatprep.mubr.f32.mxu0 0.0
      %7424 = vmatmul.mubr.f32.gmra.mxu0 %v7219
      %v7425 = vpop.f32.mrf.mxu0
      %v7426 = vadd.f32 0.0, %v7425
      %v7427 = vpop.f32.mrf.mxu0
      %7428 = vmatprep.mubr.f32.mxu0 0.0
      %7429 = vmatmul.mubr.f32.gmra.mxu0 %v7222
      %v7430 = vpop.f32.mrf.mxu0
      %v7431 = vadd.f32 0.0, %v7430
      %v7432 = vpop.f32.mrf.mxu0
      %7433 = vmatprep.mubr.f32.mxu0 0.0
      %7434 = vmatmul.mubr.f32.gmra.mxu0 %v7225
      %v7435 = vpop.f32.mrf.mxu0
      %v7436 = vadd.f32 0.0, %v7435
      %v7437 = vpop.f32.mrf.mxu0
      %7438 = vmatprep.mubr.f32.mxu0 0.0
      %7439 = vmatmul.mubr.f32.gmra.mxu0 %v7228
      %v7440 = vpop.f32.mrf.mxu0
      %v7441 = vadd.f32 0.0, %v7440
      %v7442 = vpop.f32.mrf.mxu0
      %7443 = vmatprep.mubr.f32.mxu0 0.0
      %7444 = vmatmul.mubr.f32.gmra.mxu0 %v7231
      %v7445 = vpop.f32.mrf.mxu0
      %v7446 = vadd.f32 0.0, %v7445
      %v7447 = vpop.f32.mrf.mxu0
      %7448 = vmatprep.mubr.f32.mxu0 0.0
      %7449 = vmatmul.mubr.f32.gmra.mxu0 %v7234
      %v7450 = vpop.f32.mrf.mxu0
      %v7451 = vadd.f32 0.0, %v7450
      %v7452 = vpop.f32.mrf.mxu0
      %7453 = vmatprep.mubr.f32.mxu0 0.0
      %7454 = vmatmul.mubr.f32.gmra.mxu0 %v7237
      %v7455 = vpop.f32.mrf.mxu0
      %v7456 = vadd.f32 0.0, %v7455
      %v7457 = vpop.f32.mrf.mxu0
      %7458 = vmatprep.mubr.f32.mxu0 0.0
      %7459 = vmatmul.mubr.f32.gmra.mxu0 %v7240
      %v7460 = vpop.f32.mrf.mxu0
      %v7461 = vadd.f32 0.0, %v7460
      %v7462 = vpop.f32.mrf.mxu0
      %7463 = vmatprep.mubr.f32.mxu0 0.0
      %7464 = vmatmul.mubr.f32.gmra.mxu0 %v7243
      %v7465 = vpop.f32.mrf.mxu0
      %v7466 = vadd.f32 0.0, %v7465
      %v7467 = vpop.f32.mrf.mxu0
      %7468 = vmatprep.mubr.f32.mxu0 0.0
      %7469 = vmatmul.mubr.f32.gmra.mxu0 %v7246
      %v7470 = vpop.f32.mrf.mxu0
      %v7471 = vadd.f32 0.0, %v7470
      %v7472 = vpop.f32.mrf.mxu0
      %7473 = vmatprep.mubr.f32.mxu0 0.0
      %7474 = vmatmul.mubr.f32.gmra.mxu0 %v7249
      %v7475 = vpop.f32.mrf.mxu0
      %v7476 = vadd.f32 0.0, %v7475
      %v7477 = vpop.f32.mrf.mxu0
      %7478 = vdwg.mxu0
      %v7479 = vadd.f32 %v7088, %v7321
      %v7480 = vadd.f32 %v7089, %v7326
      %v7481 = vadd.f32 %v7090, %v7331
      %v7482 = vadd.f32 %v7091, %v7336
      %v7483 = vadd.f32 %v7092, %v7341
      %v7484 = vadd.f32 %v7093, %v7346
      %v7485 = vadd.f32 %v7094, %v7351
      %v7486 = vadd.f32 %v7095, %v7356
      %v7487 = vadd.f32 %v7096, %v7361
      %v7488 = vadd.f32 %v7097, %v7366
      %v7489 = vadd.f32 %v7098, %v7371
      %v7490 = vadd.f32 %v7099, %v7376
      %v7491 = vadd.f32 %v7100, %v7381
      %v7492 = vadd.f32 %v7101, %v7386
      %v7493 = vadd.f32 %v7102, %v7391
      %v7494 = vadd.f32 %v7103, %v7396
      %v7495 = vadd.f32 %v7104, %v7401
      %v7496 = vadd.f32 %v7105, %v7406
      %v7497 = vadd.f32 %v7106, %v7411
      %v7498 = vadd.f32 %v7107, %v7416
      %v7499 = vadd.f32 %v7108, %v7421
      %v7500 = vadd.f32 %v7109, %v7426
      %v7501 = vadd.f32 %v7110, %v7431
      %v7502 = vadd.f32 %v7111, %v7436
      %v7503 = vadd.f32 %v7112, %v7441
      %v7504 = vadd.f32 %v7113, %v7446
      %v7505 = vadd.f32 %v7114, %v7451
      %v7506 = vadd.f32 %v7115, %v7456
      %v7507 = vadd.f32 %v7116, %v7461
      %v7508 = vadd.f32 %v7117, %v7466
      %v7509 = vadd.f32 %v7118, %v7471
      %v7510 = vadd.f32 %v7119, %v7476
      %v7511 = vld [vmem:[%s7120 + $0x1] sm:$0xff]
      %v7512 = vld [vmem:[%s7120 + $0x11] sm:$0xff]
      %v7513 = vld [vmem:[%s7120 + $0x21] sm:$0xff]
      %v7514 = vld [vmem:[%s7120 + $0x31] sm:$0xff]
      %v7515 = vld [vmem:[%s7120 + $0x41] sm:$0xff]
      %v7516 = vld [vmem:[%s7120 + $0x51] sm:$0xff]
      %v7517 = vld [vmem:[%s7120 + $0x61] sm:$0xff]
      %v7518 = vld [vmem:[%s7120 + $0x71] sm:$0xff]
      %v7519 = vld [vmem:[%s7120 + $0xa1] sm:$0xff]
      %v7520 = vld [vmem:[%s7120 + $0xb1] sm:$0xff]
      %v7521 = vld [vmem:[%s7120 + $0xc1] sm:$0xff]
      %v7522 = vld [vmem:[%s7120 + $0xd1] sm:$0xff]
      %v7523 = vld [vmem:[%s7120 + $0xe1] sm:$0xff]
      %v7524 = vld [vmem:[%s7120 + $0xf1] sm:$0xff]
      %v7525 = vld [vmem:[%s7120 + $0x101] sm:$0xff]
      %v7526 = vld [vmem:[%s7120 + $0x111] sm:$0xff]
      %v7527 = vld [vmem:[%s7120 + $0x141] sm:$0xff]
      %v7528 = vld [vmem:[%s7120 + $0x151] sm:$0xff]
      %v7529 = vld [vmem:[%s7120 + $0x161] sm:$0xff]
      %v7530 = vld [vmem:[%s7120 + $0x171] sm:$0xff]
      %v7531 = vld [vmem:[%s7120 + $0x181] sm:$0xff]
      %v7532 = vld [vmem:[%s7120 + $0x191] sm:$0xff]
      %v7533 = vld [vmem:[%s7120 + $0x1a1] sm:$0xff]
      %v7534 = vld [vmem:[%s7120 + $0x1b1] sm:$0xff]
      %v7535 = vld [vmem:[%s7120 + $0x1e1] sm:$0xff]
      %v7536 = vld [vmem:[%s7120 + $0x1f1] sm:$0xff]
      %v7537 = vld [vmem:[%s7120 + $0x201] sm:$0xff]
      %v7538 = vld [vmem:[%s7120 + $0x211] sm:$0xff]
      %v7539 = vld [vmem:[%s7120 + $0x221] sm:$0xff]
      %v7540 = vld [vmem:[%s7120 + $0x231] sm:$0xff]
      %v7541 = vld [vmem:[%s7120 + $0x241] sm:$0xff]
      %v7542 = vld [vmem:[%s7120 + $0x251] sm:$0xff]
      %s7543 = scalar_lea.vmem %s5, 32
      %v7544 = vld [vmem:[%s7543] sm:$0x3]
      %v7546 = vsel %vm451, %v7511, 0
      %v7549 = vsel %vm451, %v7512, 0
      %v7552 = vsel %vm451, %v7513, 0
      %v7555 = vsel %vm451, %v7514, 0
      %v7558 = vsel %vm451, %v7515, 0
      %v7561 = vsel %vm451, %v7516, 0
      %v7564 = vsel %vm451, %v7517, 0
      %v7567 = vsel %vm451, %v7518, 0
      %v7570 = vsel %vm451, %v7519, 0
      %v7573 = vsel %vm451, %v7520, 0
      %v7576 = vsel %vm451, %v7521, 0
      %v7579 = vsel %vm451, %v7522, 0
      %v7582 = vsel %vm451, %v7523, 0
      %v7585 = vsel %vm451, %v7524, 0
      %v7588 = vsel %vm451, %v7525, 0
      %v7591 = vsel %vm451, %v7526, 0
      %v7594 = vsel %vm451, %v7527, 0
      %v7597 = vsel %vm451, %v7528, 0
      %v7600 = vsel %vm451, %v7529, 0
      %v7603 = vsel %vm451, %v7530, 0
      %v7606 = vsel %vm451, %v7531, 0
      %v7609 = vsel %vm451, %v7532, 0
      %v7612 = vsel %vm451, %v7533, 0
      %v7615 = vsel %vm451, %v7534, 0
      %v7618 = vsel %vm451, %v7535, 0
      %v7621 = vsel %vm451, %v7536, 0
      %v7624 = vsel %vm451, %v7537, 0
      %v7627 = vsel %vm451, %v7538, 0
      %v7630 = vsel %vm451, %v7539, 0
      %v7633 = vsel %vm451, %v7540, 0
      %v7636 = vsel %vm451, %v7541, 0
      %v7639 = vsel %vm451, %v7542, 0
      %v7642 = vsel %vm1495, %v7544, 0
      %7644 = vmatprep.subr.mxu0 0.0
      %7645 = vmatpush1.msra.mxu0 0.0
      %7646 = vmatprep.subr.mxu0 0.0
      %7647 = vmatpush1.msra.mxu0 0.0
      %7648 = vmatprep.subr.mxu0 0.0
      %7649 = vmatpush1.msra.mxu0 0.0
      %7650 = vmatprep.subr.mxu0 0.0
      %7651 = vmatpush1.msra.mxu0 0.0
      %7652 = vmatprep.subr.mxu0 0.0
      %7653 = vmatpush1.msra.mxu0 0.0
      %7654 = vmatprep.subr.mxu0 0.0
      %7655 = vmatpush1.msra.mxu0 0.0
      %7656 = vmatprep.subr.mxu0 0.0
      %7657 = vmatpush1.msra.mxu0 0.0
      %7658 = vmatprep.subr.mxu0 0.0
      %7659 = vmatpush1.msra.mxu0 0.0
      %7660 = vmatprep.subr.mxu0 0.0
      %7661 = vmatpush1.msra.mxu0 0.0
      %7662 = vmatprep.subr.mxu0 0.0
      %7663 = vmatpush1.msra.mxu0 0.0
      %7664 = vmatprep.subr.mxu0 0.0
      %7665 = vmatpush1.msra.mxu0 0.0
      %7666 = vmatprep.subr.mxu0 0.0
      %7667 = vmatpush1.msra.mxu0 0.0
      %7668 = vmatprep.subr.mxu0 0.0
      %7669 = vmatpush1.msra.mxu0 0.0
      %7670 = vmatprep.subr.mxu0 0.0
      %7671 = vmatpush1.msra.mxu0 0.0
      %7672 = vmatprep.subr.mxu0 0.0
      %7673 = vmatpush1.msra.mxu0 0.0
      %7674 = vmatprep.subr.mxu0 0.0
      %7675 = vmatpush1.msra.mxu0 %v7642
      %7676 = vmatprep.subr.mxu0 0.0
      %7677 = vmatpush2.msra.mxu0 0.0
      %7678 = vmatprep.subr.mxu0 0.0
      %7679 = vmatpush2.msra.mxu0 0.0
      %7680 = vmatprep.subr.mxu0 0.0
      %7681 = vmatpush2.msra.mxu0 0.0
      %7682 = vmatprep.subr.mxu0 0.0
      %7683 = vmatpush2.msra.mxu0 0.0
      %7684 = vmatprep.subr.mxu0 0.0
      %7685 = vmatpush2.msra.mxu0 0.0
      %7686 = vmatprep.subr.mxu0 0.0
      %7687 = vmatpush2.msra.mxu0 0.0
      %7688 = vmatprep.subr.mxu0 0.0
      %7689 = vmatpush2.msra.mxu0 0.0
      %7690 = vmatprep.subr.mxu0 0.0
      %7691 = vmatpush2.msra.mxu0 0.0
      %7692 = vmatprep.subr.mxu0 0.0
      %7693 = vmatpush2.msra.mxu0 0.0
      %7694 = vmatprep.subr.mxu0 0.0
      %7695 = vmatpush2.msra.mxu0 0.0
      %7696 = vmatprep.subr.mxu0 0.0
      %7697 = vmatpush2.msra.mxu0 0.0
      %7698 = vmatprep.subr.mxu0 0.0
      %7699 = vmatpush2.msra.mxu0 0.0
      %7700 = vmatprep.subr.mxu0 0.0
      %7701 = vmatpush2.msra.mxu0 0.0
      %7702 = vmatprep.subr.mxu0 0.0
      %7703 = vmatpush2.msra.mxu0 0.0
      %7704 = vmatprep.subr.mxu0 0.0
      %7705 = vmatpush2.msra.mxu0 0.0
      %7706 = vmatprep.subr.mxu0 0.0
      %7707 = vmatpush2.msra.mxu0 0.0
      %7708 = vmatprep.mubr.f32.mxu0 0.0
      %7709 = vmatmul.mubr.f32.gmra.mxu0 %v7546
      %v7710 = vpop.f32.mrf.mxu0
      %v7711 = vadd.f32 0.0, %v7710
      %v7712 = vpop.f32.mrf.mxu0
      %7713 = vmatprep.mubr.f32.mxu0 0.0
      %7714 = vmatmul.mubr.f32.gmra.mxu0 %v7549
      %v7715 = vpop.f32.mrf.mxu0
      %v7716 = vadd.f32 0.0, %v7715
      %v7717 = vpop.f32.mrf.mxu0
      %7718 = vmatprep.mubr.f32.mxu0 0.0
      %7719 = vmatmul.mubr.f32.gmra.mxu0 %v7552
      %v7720 = vpop.f32.mrf.mxu0
      %v7721 = vadd.f32 0.0, %v7720
      %v7722 = vpop.f32.mrf.mxu0
      %7723 = vmatprep.mubr.f32.mxu0 0.0
      %7724 = vmatmul.mubr.f32.gmra.mxu0 %v7555
      %v7725 = vpop.f32.mrf.mxu0
      %v7726 = vadd.f32 0.0, %v7725
      %v7727 = vpop.f32.mrf.mxu0
      %7728 = vmatprep.mubr.f32.mxu0 0.0
      %7729 = vmatmul.mubr.f32.gmra.mxu0 %v7558
      %v7730 = vpop.f32.mrf.mxu0
      %v7731 = vadd.f32 0.0, %v7730
      %v7732 = vpop.f32.mrf.mxu0
      %7733 = vmatprep.mubr.f32.mxu0 0.0
      %7734 = vmatmul.mubr.f32.gmra.mxu0 %v7561
      %v7735 = vpop.f32.mrf.mxu0
      %v7736 = vadd.f32 0.0, %v7735
      %v7737 = vpop.f32.mrf.mxu0
      %7738 = vmatprep.mubr.f32.mxu0 0.0
      %7739 = vmatmul.mubr.f32.gmra.mxu0 %v7564
      %v7740 = vpop.f32.mrf.mxu0
      %v7741 = vadd.f32 0.0, %v7740
      %v7742 = vpop.f32.mrf.mxu0
      %7743 = vmatprep.mubr.f32.mxu0 0.0
      %7744 = vmatmul.mubr.f32.gmra.mxu0 %v7567
      %v7745 = vpop.f32.mrf.mxu0
      %v7746 = vadd.f32 0.0, %v7745
      %v7747 = vpop.f32.mrf.mxu0
      %7748 = vmatprep.mubr.f32.mxu0 0.0
      %7749 = vmatmul.mubr.f32.gmra.mxu0 %v7570
      %v7750 = vpop.f32.mrf.mxu0
      %v7751 = vadd.f32 0.0, %v7750
      %v7752 = vpop.f32.mrf.mxu0
      %7753 = vmatprep.mubr.f32.mxu0 0.0
      %7754 = vmatmul.mubr.f32.gmra.mxu0 %v7573
      %v7755 = vpop.f32.mrf.mxu0
      %v7756 = vadd.f32 0.0, %v7755
      %v7757 = vpop.f32.mrf.mxu0
      %7758 = vmatprep.mubr.f32.mxu0 0.0
      %7759 = vmatmul.mubr.f32.gmra.mxu0 %v7576
      %v7760 = vpop.f32.mrf.mxu0
      %v7761 = vadd.f32 0.0, %v7760
      %v7762 = vpop.f32.mrf.mxu0
      %7763 = vmatprep.mubr.f32.mxu0 0.0
      %7764 = vmatmul.mubr.f32.gmra.mxu0 %v7579
      %v7765 = vpop.f32.mrf.mxu0
      %v7766 = vadd.f32 0.0, %v7765
      %v7767 = vpop.f32.mrf.mxu0
      %7768 = vmatprep.mubr.f32.mxu0 0.0
      %7769 = vmatmul.mubr.f32.gmra.mxu0 %v7582
      %v7770 = vpop.f32.mrf.mxu0
      %v7771 = vadd.f32 0.0, %v7770
      %v7772 = vpop.f32.mrf.mxu0
      %7773 = vmatprep.mubr.f32.mxu0 0.0
      %7774 = vmatmul.mubr.f32.gmra.mxu0 %v7585
      %v7775 = vpop.f32.mrf.mxu0
      %v7776 = vadd.f32 0.0, %v7775
      %v7777 = vpop.f32.mrf.mxu0
      %7778 = vmatprep.mubr.f32.mxu0 0.0
      %7779 = vmatmul.mubr.f32.gmra.mxu0 %v7588
      %v7780 = vpop.f32.mrf.mxu0
      %v7781 = vadd.f32 0.0, %v7780
      %v7782 = vpop.f32.mrf.mxu0
      %7783 = vmatprep.mubr.f32.mxu0 0.0
      %7784 = vmatmul.mubr.f32.gmra.mxu0 %v7591
      %v7785 = vpop.f32.mrf.mxu0
      %v7786 = vadd.f32 0.0, %v7785
      %v7787 = vpop.f32.mrf.mxu0
      %7788 = vmatprep.mubr.f32.mxu0 0.0
      %7789 = vmatmul.mubr.f32.gmra.mxu0 %v7594
      %v7790 = vpop.f32.mrf.mxu0
      %v7791 = vadd.f32 0.0, %v7790
      %v7792 = vpop.f32.mrf.mxu0
      %7793 = vmatprep.mubr.f32.mxu0 0.0
      %7794 = vmatmul.mubr.f32.gmra.mxu0 %v7597
      %v7795 = vpop.f32.mrf.mxu0
      %v7796 = vadd.f32 0.0, %v7795
      %v7797 = vpop.f32.mrf.mxu0
      %7798 = vmatprep.mubr.f32.mxu0 0.0
      %7799 = vmatmul.mubr.f32.gmra.mxu0 %v7600
      %v7800 = vpop.f32.mrf.mxu0
      %v7801 = vadd.f32 0.0, %v7800
      %v7802 = vpop.f32.mrf.mxu0
      %7803 = vmatprep.mubr.f32.mxu0 0.0
      %7804 = vmatmul.mubr.f32.gmra.mxu0 %v7603
      %v7805 = vpop.f32.mrf.mxu0
      %v7806 = vadd.f32 0.0, %v7805
      %v7807 = vpop.f32.mrf.mxu0
      %7808 = vmatprep.mubr.f32.mxu0 0.0
      %7809 = vmatmul.mubr.f32.gmra.mxu0 %v7606
      %v7810 = vpop.f32.mrf.mxu0
      %v7811 = vadd.f32 0.0, %v7810
      %v7812 = vpop.f32.mrf.mxu0
      %7813 = vmatprep.mubr.f32.mxu0 0.0
      %7814 = vmatmul.mubr.f32.gmra.mxu0 %v7609
      %v7815 = vpop.f32.mrf.mxu0
      %v7816 = vadd.f32 0.0, %v7815
      %v7817 = vpop.f32.mrf.mxu0
      %7818 = vmatprep.mubr.f32.mxu0 0.0
      %7819 = vmatmul.mubr.f32.gmra.mxu0 %v7612
      %v7820 = vpop.f32.mrf.mxu0
      %v7821 = vadd.f32 0.0, %v7820
      %v7822 = vpop.f32.mrf.mxu0
      %7823 = vmatprep.mubr.f32.mxu0 0.0
      %7824 = vmatmul.mubr.f32.gmra.mxu0 %v7615
      %v7825 = vpop.f32.mrf.mxu0
      %v7826 = vadd.f32 0.0, %v7825
      %v7827 = vpop.f32.mrf.mxu0
      %7828 = vmatprep.mubr.f32.mxu0 0.0
      %7829 = vmatmul.mubr.f32.gmra.mxu0 %v7618
      %v7830 = vpop.f32.mrf.mxu0
      %v7831 = vadd.f32 0.0, %v7830
      %v7832 = vpop.f32.mrf.mxu0
      %7833 = vmatprep.mubr.f32.mxu0 0.0
      %7834 = vmatmul.mubr.f32.gmra.mxu0 %v7621
      %v7835 = vpop.f32.mrf.mxu0
      %v7836 = vadd.f32 0.0, %v7835
      %v7837 = vpop.f32.mrf.mxu0
      %7838 = vmatprep.mubr.f32.mxu0 0.0
      %7839 = vmatmul.mubr.f32.gmra.mxu0 %v7624
      %v7840 = vpop.f32.mrf.mxu0
      %v7841 = vadd.f32 0.0, %v7840
      %v7842 = vpop.f32.mrf.mxu0
      %7843 = vmatprep.mubr.f32.mxu0 0.0
      %7844 = vmatmul.mubr.f32.gmra.mxu0 %v7627
      %v7845 = vpop.f32.mrf.mxu0
      %v7846 = vadd.f32 0.0, %v7845
      %v7847 = vpop.f32.mrf.mxu0
      %7848 = vmatprep.mubr.f32.mxu0 0.0
      %7849 = vmatmul.mubr.f32.gmra.mxu0 %v7630
      %v7850 = vpop.f32.mrf.mxu0
      %v7851 = vadd.f32 0.0, %v7850
      %v7852 = vpop.f32.mrf.mxu0
      %7853 = vmatprep.mubr.f32.mxu0 0.0
      %7854 = vmatmul.mubr.f32.gmra.mxu0 %v7633
      %v7855 = vpop.f32.mrf.mxu0
      %v7856 = vadd.f32 0.0, %v7855
      %v7857 = vpop.f32.mrf.mxu0
      %7858 = vmatprep.mubr.f32.mxu0 0.0
      %7859 = vmatmul.mubr.f32.gmra.mxu0 %v7636
      %v7860 = vpop.f32.mrf.mxu0
      %v7861 = vadd.f32 0.0, %v7860
      %v7862 = vpop.f32.mrf.mxu0
      %7863 = vmatprep.mubr.f32.mxu0 0.0
      %7864 = vmatmul.mubr.f32.gmra.mxu0 %v7639
      %v7865 = vpop.f32.mrf.mxu0
      %v7866 = vadd.f32 0.0, %v7865
      %v7867 = vpop.f32.mrf.mxu0
      %7868 = vdwg.mxu0
      %v7869 = vadd.f32 %v7479, %v7711
      %v7870 = vadd.f32 %v7480, %v7716
      %v7871 = vadd.f32 %v7481, %v7721
      %v7872 = vadd.f32 %v7482, %v7726
      %v7873 = vadd.f32 %v7483, %v7731
      %v7874 = vadd.f32 %v7484, %v7736
      %v7875 = vadd.f32 %v7485, %v7741
      %v7876 = vadd.f32 %v7486, %v7746
      %v7877 = vadd.f32 %v7487, %v7751
      %v7878 = vadd.f32 %v7488, %v7756
      %v7879 = vadd.f32 %v7489, %v7761
      %v7880 = vadd.f32 %v7490, %v7766
      %v7881 = vadd.f32 %v7491, %v7771
      %v7882 = vadd.f32 %v7492, %v7776
      %v7883 = vadd.f32 %v7493, %v7781
      %v7884 = vadd.f32 %v7494, %v7786
      %v7885 = vadd.f32 %v7495, %v7791
      %v7886 = vadd.f32 %v7496, %v7796
      %v7887 = vadd.f32 %v7497, %v7801
      %v7888 = vadd.f32 %v7498, %v7806
      %v7889 = vadd.f32 %v7499, %v7811
      %v7890 = vadd.f32 %v7500, %v7816
      %v7891 = vadd.f32 %v7501, %v7821
      %v7892 = vadd.f32 %v7502, %v7826
      %v7893 = vadd.f32 %v7503, %v7831
      %v7894 = vadd.f32 %v7504, %v7836
      %v7895 = vadd.f32 %v7505, %v7841
      %v7896 = vadd.f32 %v7506, %v7846
      %v7897 = vadd.f32 %v7507, %v7851
      %v7898 = vadd.f32 %v7508, %v7856
      %v7899 = vadd.f32 %v7509, %v7861
      %v7900 = vadd.f32 %v7510, %v7866
      %v7901 = vld [vmem:[%s7120 + $0x2] sm:$0xff]
      %v7902 = vld [vmem:[%s7120 + $0x12] sm:$0xff]
      %v7903 = vld [vmem:[%s7120 + $0x22] sm:$0xff]
      %v7904 = vld [vmem:[%s7120 + $0x32] sm:$0xff]
      %v7905 = vld [vmem:[%s7120 + $0x42] sm:$0xff]
      %v7906 = vld [vmem:[%s7120 + $0x52] sm:$0xff]
      %v7907 = vld [vmem:[%s7120 + $0x62] sm:$0xff]
      %v7908 = vld [vmem:[%s7120 + $0x72] sm:$0xff]
      %v7909 = vld [vmem:[%s7120 + $0xa2] sm:$0xff]
      %v7910 = vld [vmem:[%s7120 + $0xb2] sm:$0xff]
      %v7911 = vld [vmem:[%s7120 + $0xc2] sm:$0xff]
      %v7912 = vld [vmem:[%s7120 + $0xd2] sm:$0xff]
      %v7913 = vld [vmem:[%s7120 + $0xe2] sm:$0xff]
      %v7914 = vld [vmem:[%s7120 + $0xf2] sm:$0xff]
      %v7915 = vld [vmem:[%s7120 + $0x102] sm:$0xff]
      %v7916 = vld [vmem:[%s7120 + $0x112] sm:$0xff]
      %v7917 = vld [vmem:[%s7120 + $0x142] sm:$0xff]
      %v7918 = vld [vmem:[%s7120 + $0x152] sm:$0xff]
      %v7919 = vld [vmem:[%s7120 + $0x162] sm:$0xff]
      %v7920 = vld [vmem:[%s7120 + $0x172] sm:$0xff]
      %v7921 = vld [vmem:[%s7120 + $0x182] sm:$0xff]
      %v7922 = vld [vmem:[%s7120 + $0x192] sm:$0xff]
      %v7923 = vld [vmem:[%s7120 + $0x1a2] sm:$0xff]
      %v7924 = vld [vmem:[%s7120 + $0x1b2] sm:$0xff]
      %v7925 = vld [vmem:[%s7120 + $0x1e2] sm:$0xff]
      %v7926 = vld [vmem:[%s7120 + $0x1f2] sm:$0xff]
      %v7927 = vld [vmem:[%s7120 + $0x202] sm:$0xff]
      %v7928 = vld [vmem:[%s7120 + $0x212] sm:$0xff]
      %v7929 = vld [vmem:[%s7120 + $0x222] sm:$0xff]
      %v7930 = vld [vmem:[%s7120 + $0x232] sm:$0xff]
      %v7931 = vld [vmem:[%s7120 + $0x242] sm:$0xff]
      %v7932 = vld [vmem:[%s7120 + $0x252] sm:$0xff]
      %s7933 = scalar_lea.vmem %s5, 34
      %v7934 = vld [vmem:[%s7933] sm:$0x3]
      %v7936 = vsel %vm451, %v7901, 0
      %v7939 = vsel %vm451, %v7902, 0
      %v7942 = vsel %vm451, %v7903, 0
      %v7945 = vsel %vm451, %v7904, 0
      %v7948 = vsel %vm451, %v7905, 0
      %v7951 = vsel %vm451, %v7906, 0
      %v7954 = vsel %vm451, %v7907, 0
      %v7957 = vsel %vm451, %v7908, 0
      %v7960 = vsel %vm451, %v7909, 0
      %v7963 = vsel %vm451, %v7910, 0
      %v7966 = vsel %vm451, %v7911, 0
      %v7969 = vsel %vm451, %v7912, 0
      %v7972 = vsel %vm451, %v7913, 0
      %v7975 = vsel %vm451, %v7914, 0
      %v7978 = vsel %vm451, %v7915, 0
      %v7981 = vsel %vm451, %v7916, 0
      %v7984 = vsel %vm451, %v7917, 0
      %v7987 = vsel %vm451, %v7918, 0
      %v7990 = vsel %vm451, %v7919, 0
      %v7993 = vsel %vm451, %v7920, 0
      %v7996 = vsel %vm451, %v7921, 0
      %v7999 = vsel %vm451, %v7922, 0
      %v8002 = vsel %vm451, %v7923, 0
      %v8005 = vsel %vm451, %v7924, 0
      %v8008 = vsel %vm451, %v7925, 0
      %v8011 = vsel %vm451, %v7926, 0
      %v8014 = vsel %vm451, %v7927, 0
      %v8017 = vsel %vm451, %v7928, 0
      %v8020 = vsel %vm451, %v7929, 0
      %v8023 = vsel %vm451, %v7930, 0
      %v8026 = vsel %vm451, %v7931, 0
      %v8029 = vsel %vm451, %v7932, 0
      %v8032 = vsel %vm1495, %v7934, 0
      %8034 = vmatprep.subr.mxu0 0.0
      %8035 = vmatpush1.msra.mxu0 0.0
      %8036 = vmatprep.subr.mxu0 0.0
      %8037 = vmatpush1.msra.mxu0 0.0
      %8038 = vmatprep.subr.mxu0 0.0
      %8039 = vmatpush1.msra.mxu0 0.0
      %8040 = vmatprep.subr.mxu0 0.0
      %8041 = vmatpush1.msra.mxu0 0.0
      %8042 = vmatprep.subr.mxu0 0.0
      %8043 = vmatpush1.msra.mxu0 0.0
      %8044 = vmatprep.subr.mxu0 0.0
      %8045 = vmatpush1.msra.mxu0 0.0
      %8046 = vmatprep.subr.mxu0 0.0
      %8047 = vmatpush1.msra.mxu0 0.0
      %8048 = vmatprep.subr.mxu0 0.0
      %8049 = vmatpush1.msra.mxu0 0.0
      %8050 = vmatprep.subr.mxu0 0.0
      %8051 = vmatpush1.msra.mxu0 0.0
      %8052 = vmatprep.subr.mxu0 0.0
      %8053 = vmatpush1.msra.mxu0 0.0
      %8054 = vmatprep.subr.mxu0 0.0
      %8055 = vmatpush1.msra.mxu0 0.0
      %8056 = vmatprep.subr.mxu0 0.0
      %8057 = vmatpush1.msra.mxu0 0.0
      %8058 = vmatprep.subr.mxu0 0.0
      %8059 = vmatpush1.msra.mxu0 0.0
      %8060 = vmatprep.subr.mxu0 0.0
      %8061 = vmatpush1.msra.mxu0 0.0
      %8062 = vmatprep.subr.mxu0 0.0
      %8063 = vmatpush1.msra.mxu0 0.0
      %8064 = vmatprep.subr.mxu0 0.0
      %8065 = vmatpush1.msra.mxu0 %v8032
      %8066 = vmatprep.subr.mxu0 0.0
      %8067 = vmatpush2.msra.mxu0 0.0
      %8068 = vmatprep.subr.mxu0 0.0
      %8069 = vmatpush2.msra.mxu0 0.0
      %8070 = vmatprep.subr.mxu0 0.0
      %8071 = vmatpush2.msra.mxu0 0.0
      %8072 = vmatprep.subr.mxu0 0.0
      %8073 = vmatpush2.msra.mxu0 0.0
      %8074 = vmatprep.subr.mxu0 0.0
      %8075 = vmatpush2.msra.mxu0 0.0
      %8076 = vmatprep.subr.mxu0 0.0
      %8077 = vmatpush2.msra.mxu0 0.0
      %8078 = vmatprep.subr.mxu0 0.0
      %8079 = vmatpush2.msra.mxu0 0.0
      %8080 = vmatprep.subr.mxu0 0.0
      %8081 = vmatpush2.msra.mxu0 0.0
      %8082 = vmatprep.subr.mxu0 0.0
      %8083 = vmatpush2.msra.mxu0 0.0
      %8084 = vmatprep.subr.mxu0 0.0
      %8085 = vmatpush2.msra.mxu0 0.0
      %8086 = vmatprep.subr.mxu0 0.0
      %8087 = vmatpush2.msra.mxu0 0.0
      %8088 = vmatprep.subr.mxu0 0.0
      %8089 = vmatpush2.msra.mxu0 0.0
      %8090 = vmatprep.subr.mxu0 0.0
      %8091 = vmatpush2.msra.mxu0 0.0
      %8092 = vmatprep.subr.mxu0 0.0
      %8093 = vmatpush2.msra.mxu0 0.0
      %8094 = vmatprep.subr.mxu0 0.0
      %8095 = vmatpush2.msra.mxu0 0.0
      %8096 = vmatprep.subr.mxu0 0.0
      %8097 = vmatpush2.msra.mxu0 0.0
      %8098 = vmatprep.mubr.f32.mxu0 0.0
      %8099 = vmatmul.mubr.f32.gmra.mxu0 %v7936
      %v8100 = vpop.f32.mrf.mxu0
      %v8101 = vadd.f32 0.0, %v8100
      %v8102 = vpop.f32.mrf.mxu0
      %8103 = vmatprep.mubr.f32.mxu0 0.0
      %8104 = vmatmul.mubr.f32.gmra.mxu0 %v7939
      %v8105 = vpop.f32.mrf.mxu0
      %v8106 = vadd.f32 0.0, %v8105
      %v8107 = vpop.f32.mrf.mxu0
      %8108 = vmatprep.mubr.f32.mxu0 0.0
      %8109 = vmatmul.mubr.f32.gmra.mxu0 %v7942
      %v8110 = vpop.f32.mrf.mxu0
      %v8111 = vadd.f32 0.0, %v8110
      %v8112 = vpop.f32.mrf.mxu0
      %8113 = vmatprep.mubr.f32.mxu0 0.0
      %8114 = vmatmul.mubr.f32.gmra.mxu0 %v7945
      %v8115 = vpop.f32.mrf.mxu0
      %v8116 = vadd.f32 0.0, %v8115
      %v8117 = vpop.f32.mrf.mxu0
      %8118 = vmatprep.mubr.f32.mxu0 0.0
      %8119 = vmatmul.mubr.f32.gmra.mxu0 %v7948
      %v8120 = vpop.f32.mrf.mxu0
      %v8121 = vadd.f32 0.0, %v8120
      %v8122 = vpop.f32.mrf.mxu0
      %8123 = vmatprep.mubr.f32.mxu0 0.0
      %8124 = vmatmul.mubr.f32.gmra.mxu0 %v7951
      %v8125 = vpop.f32.mrf.mxu0
      %v8126 = vadd.f32 0.0, %v8125
      %v8127 = vpop.f32.mrf.mxu0
      %8128 = vmatprep.mubr.f32.mxu0 0.0
      %8129 = vmatmul.mubr.f32.gmra.mxu0 %v7954
      %v8130 = vpop.f32.mrf.mxu0
      %v8131 = vadd.f32 0.0, %v8130
      %v8132 = vpop.f32.mrf.mxu0
      %8133 = vmatprep.mubr.f32.mxu0 0.0
      %8134 = vmatmul.mubr.f32.gmra.mxu0 %v7957
      %v8135 = vpop.f32.mrf.mxu0
      %v8136 = vadd.f32 0.0, %v8135
      %v8137 = vpop.f32.mrf.mxu0
      %8138 = vmatprep.mubr.f32.mxu0 0.0
      %8139 = vmatmul.mubr.f32.gmra.mxu0 %v7960
      %v8140 = vpop.f32.mrf.mxu0
      %v8141 = vadd.f32 0.0, %v8140
      %v8142 = vpop.f32.mrf.mxu0
      %8143 = vmatprep.mubr.f32.mxu0 0.0
      %8144 = vmatmul.mubr.f32.gmra.mxu0 %v7963
      %v8145 = vpop.f32.mrf.mxu0
      %v8146 = vadd.f32 0.0, %v8145
      %v8147 = vpop.f32.mrf.mxu0
      %8148 = vmatprep.mubr.f32.mxu0 0.0
      %8149 = vmatmul.mubr.f32.gmra.mxu0 %v7966
      %v8150 = vpop.f32.mrf.mxu0
      %v8151 = vadd.f32 0.0, %v8150
      %v8152 = vpop.f32.mrf.mxu0
      %8153 = vmatprep.mubr.f32.mxu0 0.0
      %8154 = vmatmul.mubr.f32.gmra.mxu0 %v7969
      %v8155 = vpop.f32.mrf.mxu0
      %v8156 = vadd.f32 0.0, %v8155
      %v8157 = vpop.f32.mrf.mxu0
      %8158 = vmatprep.mubr.f32.mxu0 0.0
      %8159 = vmatmul.mubr.f32.gmra.mxu0 %v7972
      %v8160 = vpop.f32.mrf.mxu0
      %v8161 = vadd.f32 0.0, %v8160
      %v8162 = vpop.f32.mrf.mxu0
      %8163 = vmatprep.mubr.f32.mxu0 0.0
      %8164 = vmatmul.mubr.f32.gmra.mxu0 %v7975
      %v8165 = vpop.f32.mrf.mxu0
      %v8166 = vadd.f32 0.0, %v8165
      %v8167 = vpop.f32.mrf.mxu0
      %8168 = vmatprep.mubr.f32.mxu0 0.0
      %8169 = vmatmul.mubr.f32.gmra.mxu0 %v7978
      %v8170 = vpop.f32.mrf.mxu0
      %v8171 = vadd.f32 0.0, %v8170
      %v8172 = vpop.f32.mrf.mxu0
      %8173 = vmatprep.mubr.f32.mxu0 0.0
      %8174 = vmatmul.mubr.f32.gmra.mxu0 %v7981
      %v8175 = vpop.f32.mrf.mxu0
      %v8176 = vadd.f32 0.0, %v8175
      %v8177 = vpop.f32.mrf.mxu0
      %8178 = vmatprep.mubr.f32.mxu0 0.0
      %8179 = vmatmul.mubr.f32.gmra.mxu0 %v7984
      %v8180 = vpop.f32.mrf.mxu0
      %v8181 = vadd.f32 0.0, %v8180
      %v8182 = vpop.f32.mrf.mxu0
      %8183 = vmatprep.mubr.f32.mxu0 0.0
      %8184 = vmatmul.mubr.f32.gmra.mxu0 %v7987
      %v8185 = vpop.f32.mrf.mxu0
      %v8186 = vadd.f32 0.0, %v8185
      %v8187 = vpop.f32.mrf.mxu0
      %8188 = vmatprep.mubr.f32.mxu0 0.0
      %8189 = vmatmul.mubr.f32.gmra.mxu0 %v7990
      %v8190 = vpop.f32.mrf.mxu0
      %v8191 = vadd.f32 0.0, %v8190
      %v8192 = vpop.f32.mrf.mxu0
      %8193 = vmatprep.mubr.f32.mxu0 0.0
      %8194 = vmatmul.mubr.f32.gmra.mxu0 %v7993
      %v8195 = vpop.f32.mrf.mxu0
      %v8196 = vadd.f32 0.0, %v8195
      %v8197 = vpop.f32.mrf.mxu0
      %8198 = vmatprep.mubr.f32.mxu0 0.0
      %8199 = vmatmul.mubr.f32.gmra.mxu0 %v7996
      %v8200 = vpop.f32.mrf.mxu0
      %v8201 = vadd.f32 0.0, %v8200
      %v8202 = vpop.f32.mrf.mxu0
      %8203 = vmatprep.mubr.f32.mxu0 0.0
      %8204 = vmatmul.mubr.f32.gmra.mxu0 %v7999
      %v8205 = vpop.f32.mrf.mxu0
      %v8206 = vadd.f32 0.0, %v8205
      %v8207 = vpop.f32.mrf.mxu0
      %8208 = vmatprep.mubr.f32.mxu0 0.0
      %8209 = vmatmul.mubr.f32.gmra.mxu0 %v8002
      %v8210 = vpop.f32.mrf.mxu0
      %v8211 = vadd.f32 0.0, %v8210
      %v8212 = vpop.f32.mrf.mxu0
      %8213 = vmatprep.mubr.f32.mxu0 0.0
      %8214 = vmatmul.mubr.f32.gmra.mxu0 %v8005
      %v8215 = vpop.f32.mrf.mxu0
      %v8216 = vadd.f32 0.0, %v8215
      %v8217 = vpop.f32.mrf.mxu0
      %8218 = vmatprep.mubr.f32.mxu0 0.0
      %8219 = vmatmul.mubr.f32.gmra.mxu0 %v8008
      %v8220 = vpop.f32.mrf.mxu0
      %v8221 = vadd.f32 0.0, %v8220
      %v8222 = vpop.f32.mrf.mxu0
      %8223 = vmatprep.mubr.f32.mxu0 0.0
      %8224 = vmatmul.mubr.f32.gmra.mxu0 %v8011
      %v8225 = vpop.f32.mrf.mxu0
      %v8226 = vadd.f32 0.0, %v8225
      %v8227 = vpop.f32.mrf.mxu0
      %8228 = vmatprep.mubr.f32.mxu0 0.0
      %8229 = vmatmul.mubr.f32.gmra.mxu0 %v8014
      %v8230 = vpop.f32.mrf.mxu0
      %v8231 = vadd.f32 0.0, %v8230
      %v8232 = vpop.f32.mrf.mxu0
      %8233 = vmatprep.mubr.f32.mxu0 0.0
      %8234 = vmatmul.mubr.f32.gmra.mxu0 %v8017
      %v8235 = vpop.f32.mrf.mxu0
      %v8236 = vadd.f32 0.0, %v8235
      %v8237 = vpop.f32.mrf.mxu0
      %8238 = vmatprep.mubr.f32.mxu0 0.0
      %8239 = vmatmul.mubr.f32.gmra.mxu0 %v8020
      %v8240 = vpop.f32.mrf.mxu0
      %v8241 = vadd.f32 0.0, %v8240
      %v8242 = vpop.f32.mrf.mxu0
      %8243 = vmatprep.mubr.f32.mxu0 0.0
      %8244 = vmatmul.mubr.f32.gmra.mxu0 %v8023
      %v8245 = vpop.f32.mrf.mxu0
      %v8246 = vadd.f32 0.0, %v8245
      %v8247 = vpop.f32.mrf.mxu0
      %8248 = vmatprep.mubr.f32.mxu0 0.0
      %8249 = vmatmul.mubr.f32.gmra.mxu0 %v8026
      %v8250 = vpop.f32.mrf.mxu0
      %v8251 = vadd.f32 0.0, %v8250
      %v8252 = vpop.f32.mrf.mxu0
      %8253 = vmatprep.mubr.f32.mxu0 0.0
      %8254 = vmatmul.mubr.f32.gmra.mxu0 %v8029
      %v8255 = vpop.f32.mrf.mxu0
      %v8256 = vadd.f32 0.0, %v8255
      %v8257 = vpop.f32.mrf.mxu0
      %8258 = vdwg.mxu0
      %v8259 = vadd.f32 %v7869, %v8101
      %v8260 = vadd.f32 %v7870, %v8106
      %v8261 = vadd.f32 %v7871, %v8111
      %v8262 = vadd.f32 %v7872, %v8116
      %v8263 = vadd.f32 %v7873, %v8121
      %v8264 = vadd.f32 %v7874, %v8126
      %v8265 = vadd.f32 %v7875, %v8131
      %v8266 = vadd.f32 %v7876, %v8136
      %v8267 = vadd.f32 %v7877, %v8141
      %v8268 = vadd.f32 %v7878, %v8146
      %v8269 = vadd.f32 %v7879, %v8151
      %v8270 = vadd.f32 %v7880, %v8156
      %v8271 = vadd.f32 %v7881, %v8161
      %v8272 = vadd.f32 %v7882, %v8166
      %v8273 = vadd.f32 %v7883, %v8171
      %v8274 = vadd.f32 %v7884, %v8176
      %v8275 = vadd.f32 %v7885, %v8181
      %v8276 = vadd.f32 %v7886, %v8186
      %v8277 = vadd.f32 %v7887, %v8191
      %v8278 = vadd.f32 %v7888, %v8196
      %v8279 = vadd.f32 %v7889, %v8201
      %v8280 = vadd.f32 %v7890, %v8206
      %v8281 = vadd.f32 %v7891, %v8211
      %v8282 = vadd.f32 %v7892, %v8216
      %v8283 = vadd.f32 %v7893, %v8221
      %v8284 = vadd.f32 %v7894, %v8226
      %v8285 = vadd.f32 %v7895, %v8231
      %v8286 = vadd.f32 %v7896, %v8236
      %v8287 = vadd.f32 %v7897, %v8241
      %v8288 = vadd.f32 %v7898, %v8246
      %v8289 = vadd.f32 %v7899, %v8251
      %v8290 = vadd.f32 %v7900, %v8256
      %s8291 = scalar_lea.vmem [#allocation2], 320
      %v8292 = vld [vmem:[%s8291] sm:$0xff]
      %v8293 = vld [vmem:[%s8291 + $0x10] sm:$0xff]
      %v8294 = vld [vmem:[%s8291 + $0x20] sm:$0xff]
      %v8295 = vld [vmem:[%s8291 + $0x30] sm:$0xff]
      %v8296 = vld [vmem:[%s8291 + $0x40] sm:$0xff]
      %v8297 = vld [vmem:[%s8291 + $0x50] sm:$0xff]
      %v8298 = vld [vmem:[%s8291 + $0x60] sm:$0xff]
      %v8299 = vld [vmem:[%s8291 + $0x70] sm:$0xff]
      %v8300 = vld [vmem:[%s8291 + $0xa0] sm:$0xff]
      %v8301 = vld [vmem:[%s8291 + $0xb0] sm:$0xff]
      %v8302 = vld [vmem:[%s8291 + $0xc0] sm:$0xff]
      %v8303 = vld [vmem:[%s8291 + $0xd0] sm:$0xff]
      %v8304 = vld [vmem:[%s8291 + $0xe0] sm:$0xff]
      %v8305 = vld [vmem:[%s8291 + $0xf0] sm:$0xff]
      %v8306 = vld [vmem:[%s8291 + $0x100] sm:$0xff]
      %v8307 = vld [vmem:[%s8291 + $0x110] sm:$0xff]
      %v8308 = vld [vmem:[%s8291 + $0x140] sm:$0xff]
      %v8309 = vld [vmem:[%s8291 + $0x150] sm:$0xff]
      %v8310 = vld [vmem:[%s8291 + $0x160] sm:$0xff]
      %v8311 = vld [vmem:[%s8291 + $0x170] sm:$0xff]
      %v8312 = vld [vmem:[%s8291 + $0x180] sm:$0xff]
      %v8313 = vld [vmem:[%s8291 + $0x190] sm:$0xff]
      %v8314 = vld [vmem:[%s8291 + $0x1a0] sm:$0xff]
      %v8315 = vld [vmem:[%s8291 + $0x1b0] sm:$0xff]
      %v8316 = vld [vmem:[%s8291 + $0x1e0] sm:$0xff]
      %v8317 = vld [vmem:[%s8291 + $0x1f0] sm:$0xff]
      %v8318 = vld [vmem:[%s8291 + $0x200] sm:$0xff]
      %v8319 = vld [vmem:[%s8291 + $0x210] sm:$0xff]
      %v8320 = vld [vmem:[%s8291 + $0x220] sm:$0xff]
      %v8321 = vld [vmem:[%s8291 + $0x230] sm:$0xff]
      %v8322 = vld [vmem:[%s8291 + $0x240] sm:$0xff]
      %v8323 = vld [vmem:[%s8291 + $0x250] sm:$0xff]
      %s8324 = scalar_lea.vmem %s5, 36
      %v8325 = vld [vmem:[%s8324] sm:$0x3]
      %v8327 = vsel %vm451, %v8292, 0
      %v8330 = vsel %vm451, %v8293, 0
      %v8333 = vsel %vm451, %v8294, 0
      %v8336 = vsel %vm451, %v8295, 0
      %v8339 = vsel %vm451, %v8296, 0
      %v8342 = vsel %vm451, %v8297, 0
      %v8345 = vsel %vm451, %v8298, 0
      %v8348 = vsel %vm451, %v8299, 0
      %v8351 = vsel %vm451, %v8300, 0
      %v8354 = vsel %vm451, %v8301, 0
      %v8357 = vsel %vm451, %v8302, 0
      %v8360 = vsel %vm451, %v8303, 0
      %v8363 = vsel %vm451, %v8304, 0
      %v8366 = vsel %vm451, %v8305, 0
      %v8369 = vsel %vm451, %v8306, 0
      %v8372 = vsel %vm451, %v8307, 0
      %v8375 = vsel %vm451, %v8308, 0
      %v8378 = vsel %vm451, %v8309, 0
      %v8381 = vsel %vm451, %v8310, 0
      %v8384 = vsel %vm451, %v8311, 0
      %v8387 = vsel %vm451, %v8312, 0
      %v8390 = vsel %vm451, %v8313, 0
      %v8393 = vsel %vm451, %v8314, 0
      %v8396 = vsel %vm451, %v8315, 0
      %v8399 = vsel %vm451, %v8316, 0
      %v8402 = vsel %vm451, %v8317, 0
      %v8405 = vsel %vm451, %v8318, 0
      %v8408 = vsel %vm451, %v8319, 0
      %v8411 = vsel %vm451, %v8320, 0
      %v8414 = vsel %vm451, %v8321, 0
      %v8417 = vsel %vm451, %v8322, 0
      %v8420 = vsel %vm451, %v8323, 0
      %v8423 = vsel %vm1495, %v8325, 0
      %8425 = vmatprep.subr.mxu0 0.0
      %8426 = vmatpush1.msra.mxu0 0.0
      %8427 = vmatprep.subr.mxu0 0.0
      %8428 = vmatpush1.msra.mxu0 0.0
      %8429 = vmatprep.subr.mxu0 0.0
      %8430 = vmatpush1.msra.mxu0 0.0
      %8431 = vmatprep.subr.mxu0 0.0
      %8432 = vmatpush1.msra.mxu0 0.0
      %8433 = vmatprep.subr.mxu0 0.0
      %8434 = vmatpush1.msra.mxu0 0.0
      %8435 = vmatprep.subr.mxu0 0.0
      %8436 = vmatpush1.msra.mxu0 0.0
      %8437 = vmatprep.subr.mxu0 0.0
      %8438 = vmatpush1.msra.mxu0 0.0
      %8439 = vmatprep.subr.mxu0 0.0
      %8440 = vmatpush1.msra.mxu0 0.0
      %8441 = vmatprep.subr.mxu0 0.0
      %8442 = vmatpush1.msra.mxu0 0.0
      %8443 = vmatprep.subr.mxu0 0.0
      %8444 = vmatpush1.msra.mxu0 0.0
      %8445 = vmatprep.subr.mxu0 0.0
      %8446 = vmatpush1.msra.mxu0 0.0
      %8447 = vmatprep.subr.mxu0 0.0
      %8448 = vmatpush1.msra.mxu0 0.0
      %8449 = vmatprep.subr.mxu0 0.0
      %8450 = vmatpush1.msra.mxu0 0.0
      %8451 = vmatprep.subr.mxu0 0.0
      %8452 = vmatpush1.msra.mxu0 0.0
      %8453 = vmatprep.subr.mxu0 0.0
      %8454 = vmatpush1.msra.mxu0 0.0
      %8455 = vmatprep.subr.mxu0 0.0
      %8456 = vmatpush1.msra.mxu0 %v8423
      %8457 = vmatprep.subr.mxu0 0.0
      %8458 = vmatpush2.msra.mxu0 0.0
      %8459 = vmatprep.subr.mxu0 0.0
      %8460 = vmatpush2.msra.mxu0 0.0
      %8461 = vmatprep.subr.mxu0 0.0
      %8462 = vmatpush2.msra.mxu0 0.0
      %8463 = vmatprep.subr.mxu0 0.0
      %8464 = vmatpush2.msra.mxu0 0.0
      %8465 = vmatprep.subr.mxu0 0.0
      %8466 = vmatpush2.msra.mxu0 0.0
      %8467 = vmatprep.subr.mxu0 0.0
      %8468 = vmatpush2.msra.mxu0 0.0
      %8469 = vmatprep.subr.mxu0 0.0
      %8470 = vmatpush2.msra.mxu0 0.0
      %8471 = vmatprep.subr.mxu0 0.0
      %8472 = vmatpush2.msra.mxu0 0.0
      %8473 = vmatprep.subr.mxu0 0.0
      %8474 = vmatpush2.msra.mxu0 0.0
      %8475 = vmatprep.subr.mxu0 0.0
      %8476 = vmatpush2.msra.mxu0 0.0
      %8477 = vmatprep.subr.mxu0 0.0
      %8478 = vmatpush2.msra.mxu0 0.0
      %8479 = vmatprep.subr.mxu0 0.0
      %8480 = vmatpush2.msra.mxu0 0.0
      %8481 = vmatprep.subr.mxu0 0.0
      %8482 = vmatpush2.msra.mxu0 0.0
      %8483 = vmatprep.subr.mxu0 0.0
      %8484 = vmatpush2.msra.mxu0 0.0
      %8485 = vmatprep.subr.mxu0 0.0
      %8486 = vmatpush2.msra.mxu0 0.0
      %8487 = vmatprep.subr.mxu0 0.0
      %8488 = vmatpush2.msra.mxu0 0.0
      %8489 = vmatprep.mubr.f32.mxu0 0.0
      %8490 = vmatmul.mubr.f32.gmra.mxu0 %v8327
      %v8491 = vpop.f32.mrf.mxu0
      %v8492 = vadd.f32 0.0, %v8491
      %v8493 = vpop.f32.mrf.mxu0
      %8494 = vmatprep.mubr.f32.mxu0 0.0
      %8495 = vmatmul.mubr.f32.gmra.mxu0 %v8330
      %v8496 = vpop.f32.mrf.mxu0
      %v8497 = vadd.f32 0.0, %v8496
      %v8498 = vpop.f32.mrf.mxu0
      %8499 = vmatprep.mubr.f32.mxu0 0.0
      %8500 = vmatmul.mubr.f32.gmra.mxu0 %v8333
      %v8501 = vpop.f32.mrf.mxu0
      %v8502 = vadd.f32 0.0, %v8501
      %v8503 = vpop.f32.mrf.mxu0
      %8504 = vmatprep.mubr.f32.mxu0 0.0
      %8505 = vmatmul.mubr.f32.gmra.mxu0 %v8336
      %v8506 = vpop.f32.mrf.mxu0
      %v8507 = vadd.f32 0.0, %v8506
      %v8508 = vpop.f32.mrf.mxu0
      %8509 = vmatprep.mubr.f32.mxu0 0.0
      %8510 = vmatmul.mubr.f32.gmra.mxu0 %v8339
      %v8511 = vpop.f32.mrf.mxu0
      %v8512 = vadd.f32 0.0, %v8511
      %v8513 = vpop.f32.mrf.mxu0
      %8514 = vmatprep.mubr.f32.mxu0 0.0
      %8515 = vmatmul.mubr.f32.gmra.mxu0 %v8342
      %v8516 = vpop.f32.mrf.mxu0
      %v8517 = vadd.f32 0.0, %v8516
      %v8518 = vpop.f32.mrf.mxu0
      %8519 = vmatprep.mubr.f32.mxu0 0.0
      %8520 = vmatmul.mubr.f32.gmra.mxu0 %v8345
      %v8521 = vpop.f32.mrf.mxu0
      %v8522 = vadd.f32 0.0, %v8521
      %v8523 = vpop.f32.mrf.mxu0
      %8524 = vmatprep.mubr.f32.mxu0 0.0
      %8525 = vmatmul.mubr.f32.gmra.mxu0 %v8348
      %v8526 = vpop.f32.mrf.mxu0
      %v8527 = vadd.f32 0.0, %v8526
      %v8528 = vpop.f32.mrf.mxu0
      %8529 = vmatprep.mubr.f32.mxu0 0.0
      %8530 = vmatmul.mubr.f32.gmra.mxu0 %v8351
      %v8531 = vpop.f32.mrf.mxu0
      %v8532 = vadd.f32 0.0, %v8531
      %v8533 = vpop.f32.mrf.mxu0
      %8534 = vmatprep.mubr.f32.mxu0 0.0
      %8535 = vmatmul.mubr.f32.gmra.mxu0 %v8354
      %v8536 = vpop.f32.mrf.mxu0
      %v8537 = vadd.f32 0.0, %v8536
      %v8538 = vpop.f32.mrf.mxu0
      %8539 = vmatprep.mubr.f32.mxu0 0.0
      %8540 = vmatmul.mubr.f32.gmra.mxu0 %v8357
      %v8541 = vpop.f32.mrf.mxu0
      %v8542 = vadd.f32 0.0, %v8541
      %v8543 = vpop.f32.mrf.mxu0
      %8544 = vmatprep.mubr.f32.mxu0 0.0
      %8545 = vmatmul.mubr.f32.gmra.mxu0 %v8360
      %v8546 = vpop.f32.mrf.mxu0
      %v8547 = vadd.f32 0.0, %v8546
      %v8548 = vpop.f32.mrf.mxu0
      %8549 = vmatprep.mubr.f32.mxu0 0.0
      %8550 = vmatmul.mubr.f32.gmra.mxu0 %v8363
      %v8551 = vpop.f32.mrf.mxu0
      %v8552 = vadd.f32 0.0, %v8551
      %v8553 = vpop.f32.mrf.mxu0
      %8554 = vmatprep.mubr.f32.mxu0 0.0
      %8555 = vmatmul.mubr.f32.gmra.mxu0 %v8366
      %v8556 = vpop.f32.mrf.mxu0
      %v8557 = vadd.f32 0.0, %v8556
      %v8558 = vpop.f32.mrf.mxu0
      %8559 = vmatprep.mubr.f32.mxu0 0.0
      %8560 = vmatmul.mubr.f32.gmra.mxu0 %v8369
      %v8561 = vpop.f32.mrf.mxu0
      %v8562 = vadd.f32 0.0, %v8561
      %v8563 = vpop.f32.mrf.mxu0
      %8564 = vmatprep.mubr.f32.mxu0 0.0
      %8565 = vmatmul.mubr.f32.gmra.mxu0 %v8372
      %v8566 = vpop.f32.mrf.mxu0
      %v8567 = vadd.f32 0.0, %v8566
      %v8568 = vpop.f32.mrf.mxu0
      %8569 = vmatprep.mubr.f32.mxu0 0.0
      %8570 = vmatmul.mubr.f32.gmra.mxu0 %v8375
      %v8571 = vpop.f32.mrf.mxu0
      %v8572 = vadd.f32 0.0, %v8571
      %v8573 = vpop.f32.mrf.mxu0
      %8574 = vmatprep.mubr.f32.mxu0 0.0
      %8575 = vmatmul.mubr.f32.gmra.mxu0 %v8378
      %v8576 = vpop.f32.mrf.mxu0
      %v8577 = vadd.f32 0.0, %v8576
      %v8578 = vpop.f32.mrf.mxu0
      %8579 = vmatprep.mubr.f32.mxu0 0.0
      %8580 = vmatmul.mubr.f32.gmra.mxu0 %v8381
      %v8581 = vpop.f32.mrf.mxu0
      %v8582 = vadd.f32 0.0, %v8581
      %v8583 = vpop.f32.mrf.mxu0
      %8584 = vmatprep.mubr.f32.mxu0 0.0
      %8585 = vmatmul.mubr.f32.gmra.mxu0 %v8384
      %v8586 = vpop.f32.mrf.mxu0
      %v8587 = vadd.f32 0.0, %v8586
      %v8588 = vpop.f32.mrf.mxu0
      %8589 = vmatprep.mubr.f32.mxu0 0.0
      %8590 = vmatmul.mubr.f32.gmra.mxu0 %v8387
      %v8591 = vpop.f32.mrf.mxu0
      %v8592 = vadd.f32 0.0, %v8591
      %v8593 = vpop.f32.mrf.mxu0
      %8594 = vmatprep.mubr.f32.mxu0 0.0
      %8595 = vmatmul.mubr.f32.gmra.mxu0 %v8390
      %v8596 = vpop.f32.mrf.mxu0
      %v8597 = vadd.f32 0.0, %v8596
      %v8598 = vpop.f32.mrf.mxu0
      %8599 = vmatprep.mubr.f32.mxu0 0.0
      %8600 = vmatmul.mubr.f32.gmra.mxu0 %v8393
      %v8601 = vpop.f32.mrf.mxu0
      %v8602 = vadd.f32 0.0, %v8601
      %v8603 = vpop.f32.mrf.mxu0
      %8604 = vmatprep.mubr.f32.mxu0 0.0
      %8605 = vmatmul.mubr.f32.gmra.mxu0 %v8396
      %v8606 = vpop.f32.mrf.mxu0
      %v8607 = vadd.f32 0.0, %v8606
      %v8608 = vpop.f32.mrf.mxu0
      %8609 = vmatprep.mubr.f32.mxu0 0.0
      %8610 = vmatmul.mubr.f32.gmra.mxu0 %v8399
      %v8611 = vpop.f32.mrf.mxu0
      %v8612 = vadd.f32 0.0, %v8611
      %v8613 = vpop.f32.mrf.mxu0
      %8614 = vmatprep.mubr.f32.mxu0 0.0
      %8615 = vmatmul.mubr.f32.gmra.mxu0 %v8402
      %v8616 = vpop.f32.mrf.mxu0
      %v8617 = vadd.f32 0.0, %v8616
      %v8618 = vpop.f32.mrf.mxu0
      %8619 = vmatprep.mubr.f32.mxu0 0.0
      %8620 = vmatmul.mubr.f32.gmra.mxu0 %v8405
      %v8621 = vpop.f32.mrf.mxu0
      %v8622 = vadd.f32 0.0, %v8621
      %v8623 = vpop.f32.mrf.mxu0
      %8624 = vmatprep.mubr.f32.mxu0 0.0
      %8625 = vmatmul.mubr.f32.gmra.mxu0 %v8408
      %v8626 = vpop.f32.mrf.mxu0
      %v8627 = vadd.f32 0.0, %v8626
      %v8628 = vpop.f32.mrf.mxu0
      %8629 = vmatprep.mubr.f32.mxu0 0.0
      %8630 = vmatmul.mubr.f32.gmra.mxu0 %v8411
      %v8631 = vpop.f32.mrf.mxu0
      %v8632 = vadd.f32 0.0, %v8631
      %v8633 = vpop.f32.mrf.mxu0
      %8634 = vmatprep.mubr.f32.mxu0 0.0
      %8635 = vmatmul.mubr.f32.gmra.mxu0 %v8414
      %v8636 = vpop.f32.mrf.mxu0
      %v8637 = vadd.f32 0.0, %v8636
      %v8638 = vpop.f32.mrf.mxu0
      %8639 = vmatprep.mubr.f32.mxu0 0.0
      %8640 = vmatmul.mubr.f32.gmra.mxu0 %v8417
      %v8641 = vpop.f32.mrf.mxu0
      %v8642 = vadd.f32 0.0, %v8641
      %v8643 = vpop.f32.mrf.mxu0
      %8644 = vmatprep.mubr.f32.mxu0 0.0
      %8645 = vmatmul.mubr.f32.gmra.mxu0 %v8420
      %v8646 = vpop.f32.mrf.mxu0
      %v8647 = vadd.f32 0.0, %v8646
      %v8648 = vpop.f32.mrf.mxu0
      %8649 = vdwg.mxu0
      %v8650 = vadd.f32 %v8259, %v8492
      %v8651 = vadd.f32 %v8260, %v8497
      %v8652 = vadd.f32 %v8261, %v8502
      %v8653 = vadd.f32 %v8262, %v8507
      %v8654 = vadd.f32 %v8263, %v8512
      %v8655 = vadd.f32 %v8264, %v8517
      %v8656 = vadd.f32 %v8265, %v8522
      %v8657 = vadd.f32 %v8266, %v8527
      %v8658 = vadd.f32 %v8267, %v8532
      %v8659 = vadd.f32 %v8268, %v8537
      %v8660 = vadd.f32 %v8269, %v8542
      %v8661 = vadd.f32 %v8270, %v8547
      %v8662 = vadd.f32 %v8271, %v8552
      %v8663 = vadd.f32 %v8272, %v8557
      %v8664 = vadd.f32 %v8273, %v8562
      %v8665 = vadd.f32 %v8274, %v8567
      %v8666 = vadd.f32 %v8275, %v8572
      %v8667 = vadd.f32 %v8276, %v8577
      %v8668 = vadd.f32 %v8277, %v8582
      %v8669 = vadd.f32 %v8278, %v8587
      %v8670 = vadd.f32 %v8279, %v8592
      %v8671 = vadd.f32 %v8280, %v8597
      %v8672 = vadd.f32 %v8281, %v8602
      %v8673 = vadd.f32 %v8282, %v8607
      %v8674 = vadd.f32 %v8283, %v8612
      %v8675 = vadd.f32 %v8284, %v8617
      %v8676 = vadd.f32 %v8285, %v8622
      %v8677 = vadd.f32 %v8286, %v8627
      %v8678 = vadd.f32 %v8287, %v8632
      %v8679 = vadd.f32 %v8288, %v8637
      %v8680 = vadd.f32 %v8289, %v8642
      %v8681 = vadd.f32 %v8290, %v8647
      %v8682 = vld [vmem:[%s8291 + $0x1] sm:$0xff]
      %v8683 = vld [vmem:[%s8291 + $0x11] sm:$0xff]
      %v8684 = vld [vmem:[%s8291 + $0x21] sm:$0xff]
      %v8685 = vld [vmem:[%s8291 + $0x31] sm:$0xff]
      %v8686 = vld [vmem:[%s8291 + $0x41] sm:$0xff]
      %v8687 = vld [vmem:[%s8291 + $0x51] sm:$0xff]
      %v8688 = vld [vmem:[%s8291 + $0x61] sm:$0xff]
      %v8689 = vld [vmem:[%s8291 + $0x71] sm:$0xff]
      %v8690 = vld [vmem:[%s8291 + $0xa1] sm:$0xff]
      %v8691 = vld [vmem:[%s8291 + $0xb1] sm:$0xff]
      %v8692 = vld [vmem:[%s8291 + $0xc1] sm:$0xff]
      %v8693 = vld [vmem:[%s8291 + $0xd1] sm:$0xff]
      %v8694 = vld [vmem:[%s8291 + $0xe1] sm:$0xff]
      %v8695 = vld [vmem:[%s8291 + $0xf1] sm:$0xff]
      %v8696 = vld [vmem:[%s8291 + $0x101] sm:$0xff]
      %v8697 = vld [vmem:[%s8291 + $0x111] sm:$0xff]
      %v8698 = vld [vmem:[%s8291 + $0x141] sm:$0xff]
      %v8699 = vld [vmem:[%s8291 + $0x151] sm:$0xff]
      %v8700 = vld [vmem:[%s8291 + $0x161] sm:$0xff]
      %v8701 = vld [vmem:[%s8291 + $0x171] sm:$0xff]
      %v8702 = vld [vmem:[%s8291 + $0x181] sm:$0xff]
      %v8703 = vld [vmem:[%s8291 + $0x191] sm:$0xff]
      %v8704 = vld [vmem:[%s8291 + $0x1a1] sm:$0xff]
      %v8705 = vld [vmem:[%s8291 + $0x1b1] sm:$0xff]
      %v8706 = vld [vmem:[%s8291 + $0x1e1] sm:$0xff]
      %v8707 = vld [vmem:[%s8291 + $0x1f1] sm:$0xff]
      %v8708 = vld [vmem:[%s8291 + $0x201] sm:$0xff]
      %v8709 = vld [vmem:[%s8291 + $0x211] sm:$0xff]
      %v8710 = vld [vmem:[%s8291 + $0x221] sm:$0xff]
      %v8711 = vld [vmem:[%s8291 + $0x231] sm:$0xff]
      %v8712 = vld [vmem:[%s8291 + $0x241] sm:$0xff]
      %v8713 = vld [vmem:[%s8291 + $0x251] sm:$0xff]
      %s8714 = scalar_lea.vmem %s5, 38
      %v8715 = vld [vmem:[%s8714] sm:$0x3]
      %v8717 = vsel %vm451, %v8682, 0
      %v8720 = vsel %vm451, %v8683, 0
      %v8723 = vsel %vm451, %v8684, 0
      %v8726 = vsel %vm451, %v8685, 0
      %v8729 = vsel %vm451, %v8686, 0
      %v8732 = vsel %vm451, %v8687, 0
      %v8735 = vsel %vm451, %v8688, 0
      %v8738 = vsel %vm451, %v8689, 0
      %v8741 = vsel %vm451, %v8690, 0
      %v8744 = vsel %vm451, %v8691, 0
      %v8747 = vsel %vm451, %v8692, 0
      %v8750 = vsel %vm451, %v8693, 0
      %v8753 = vsel %vm451, %v8694, 0
      %v8756 = vsel %vm451, %v8695, 0
      %v8759 = vsel %vm451, %v8696, 0
      %v8762 = vsel %vm451, %v8697, 0
      %v8765 = vsel %vm451, %v8698, 0
      %v8768 = vsel %vm451, %v8699, 0
      %v8771 = vsel %vm451, %v8700, 0
      %v8774 = vsel %vm451, %v8701, 0
      %v8777 = vsel %vm451, %v8702, 0
      %v8780 = vsel %vm451, %v8703, 0
      %v8783 = vsel %vm451, %v8704, 0
      %v8786 = vsel %vm451, %v8705, 0
      %v8789 = vsel %vm451, %v8706, 0
      %v8792 = vsel %vm451, %v8707, 0
      %v8795 = vsel %vm451, %v8708, 0
      %v8798 = vsel %vm451, %v8709, 0
      %v8801 = vsel %vm451, %v8710, 0
      %v8804 = vsel %vm451, %v8711, 0
      %v8807 = vsel %vm451, %v8712, 0
      %v8810 = vsel %vm451, %v8713, 0
      %v8813 = vsel %vm1495, %v8715, 0
      %8815 = vmatprep.subr.mxu0 0.0
      %8816 = vmatpush1.msra.mxu0 0.0
      %8817 = vmatprep.subr.mxu0 0.0
      %8818 = vmatpush1.msra.mxu0 0.0
      %8819 = vmatprep.subr.mxu0 0.0
      %8820 = vmatpush1.msra.mxu0 0.0
      %8821 = vmatprep.subr.mxu0 0.0
      %8822 = vmatpush1.msra.mxu0 0.0
      %8823 = vmatprep.subr.mxu0 0.0
      %8824 = vmatpush1.msra.mxu0 0.0
      %8825 = vmatprep.subr.mxu0 0.0
      %8826 = vmatpush1.msra.mxu0 0.0
      %8827 = vmatprep.subr.mxu0 0.0
      %8828 = vmatpush1.msra.mxu0 0.0
      %8829 = vmatprep.subr.mxu0 0.0
      %8830 = vmatpush1.msra.mxu0 0.0
      %8831 = vmatprep.subr.mxu0 0.0
      %8832 = vmatpush1.msra.mxu0 0.0
      %8833 = vmatprep.subr.mxu0 0.0
      %8834 = vmatpush1.msra.mxu0 0.0
      %8835 = vmatprep.subr.mxu0 0.0
      %8836 = vmatpush1.msra.mxu0 0.0
      %8837 = vmatprep.subr.mxu0 0.0
      %8838 = vmatpush1.msra.mxu0 0.0
      %8839 = vmatprep.subr.mxu0 0.0
      %8840 = vmatpush1.msra.mxu0 0.0
      %8841 = vmatprep.subr.mxu0 0.0
      %8842 = vmatpush1.msra.mxu0 0.0
      %8843 = vmatprep.subr.mxu0 0.0
      %8844 = vmatpush1.msra.mxu0 0.0
      %8845 = vmatprep.subr.mxu0 0.0
      %8846 = vmatpush1.msra.mxu0 %v8813
      %8847 = vmatprep.subr.mxu0 0.0
      %8848 = vmatpush2.msra.mxu0 0.0
      %8849 = vmatprep.subr.mxu0 0.0
      %8850 = vmatpush2.msra.mxu0 0.0
      %8851 = vmatprep.subr.mxu0 0.0
      %8852 = vmatpush2.msra.mxu0 0.0
      %8853 = vmatprep.subr.mxu0 0.0
      %8854 = vmatpush2.msra.mxu0 0.0
      %8855 = vmatprep.subr.mxu0 0.0
      %8856 = vmatpush2.msra.mxu0 0.0
      %8857 = vmatprep.subr.mxu0 0.0
      %8858 = vmatpush2.msra.mxu0 0.0
      %8859 = vmatprep.subr.mxu0 0.0
      %8860 = vmatpush2.msra.mxu0 0.0
      %8861 = vmatprep.subr.mxu0 0.0
      %8862 = vmatpush2.msra.mxu0 0.0
      %8863 = vmatprep.subr.mxu0 0.0
      %8864 = vmatpush2.msra.mxu0 0.0
      %8865 = vmatprep.subr.mxu0 0.0
      %8866 = vmatpush2.msra.mxu0 0.0
      %8867 = vmatprep.subr.mxu0 0.0
      %8868 = vmatpush2.msra.mxu0 0.0
      %8869 = vmatprep.subr.mxu0 0.0
      %8870 = vmatpush2.msra.mxu0 0.0
      %8871 = vmatprep.subr.mxu0 0.0
      %8872 = vmatpush2.msra.mxu0 0.0
      %8873 = vmatprep.subr.mxu0 0.0
      %8874 = vmatpush2.msra.mxu0 0.0
      %8875 = vmatprep.subr.mxu0 0.0
      %8876 = vmatpush2.msra.mxu0 0.0
      %8877 = vmatprep.subr.mxu0 0.0
      %8878 = vmatpush2.msra.mxu0 0.0
      %8879 = vmatprep.mubr.f32.mxu0 0.0
      %8880 = vmatmul.mubr.f32.gmra.mxu0 %v8717
      %v8881 = vpop.f32.mrf.mxu0
      %v8882 = vadd.f32 0.0, %v8881
      %v8883 = vpop.f32.mrf.mxu0
      %8884 = vmatprep.mubr.f32.mxu0 0.0
      %8885 = vmatmul.mubr.f32.gmra.mxu0 %v8720
      %v8886 = vpop.f32.mrf.mxu0
      %v8887 = vadd.f32 0.0, %v8886
      %v8888 = vpop.f32.mrf.mxu0
      %8889 = vmatprep.mubr.f32.mxu0 0.0
      %8890 = vmatmul.mubr.f32.gmra.mxu0 %v8723
      %v8891 = vpop.f32.mrf.mxu0
      %v8892 = vadd.f32 0.0, %v8891
      %v8893 = vpop.f32.mrf.mxu0
      %8894 = vmatprep.mubr.f32.mxu0 0.0
      %8895 = vmatmul.mubr.f32.gmra.mxu0 %v8726
      %v8896 = vpop.f32.mrf.mxu0
      %v8897 = vadd.f32 0.0, %v8896
      %v8898 = vpop.f32.mrf.mxu0
      %8899 = vmatprep.mubr.f32.mxu0 0.0
      %8900 = vmatmul.mubr.f32.gmra.mxu0 %v8729
      %v8901 = vpop.f32.mrf.mxu0
      %v8902 = vadd.f32 0.0, %v8901
      %v8903 = vpop.f32.mrf.mxu0
      %8904 = vmatprep.mubr.f32.mxu0 0.0
      %8905 = vmatmul.mubr.f32.gmra.mxu0 %v8732
      %v8906 = vpop.f32.mrf.mxu0
      %v8907 = vadd.f32 0.0, %v8906
      %v8908 = vpop.f32.mrf.mxu0
      %8909 = vmatprep.mubr.f32.mxu0 0.0
      %8910 = vmatmul.mubr.f32.gmra.mxu0 %v8735
      %v8911 = vpop.f32.mrf.mxu0
      %v8912 = vadd.f32 0.0, %v8911
      %v8913 = vpop.f32.mrf.mxu0
      %8914 = vmatprep.mubr.f32.mxu0 0.0
      %8915 = vmatmul.mubr.f32.gmra.mxu0 %v8738
      %v8916 = vpop.f32.mrf.mxu0
      %v8917 = vadd.f32 0.0, %v8916
      %v8918 = vpop.f32.mrf.mxu0
      %8919 = vmatprep.mubr.f32.mxu0 0.0
      %8920 = vmatmul.mubr.f32.gmra.mxu0 %v8741
      %v8921 = vpop.f32.mrf.mxu0
      %v8922 = vadd.f32 0.0, %v8921
      %v8923 = vpop.f32.mrf.mxu0
      %8924 = vmatprep.mubr.f32.mxu0 0.0
      %8925 = vmatmul.mubr.f32.gmra.mxu0 %v8744
      %v8926 = vpop.f32.mrf.mxu0
      %v8927 = vadd.f32 0.0, %v8926
      %v8928 = vpop.f32.mrf.mxu0
      %8929 = vmatprep.mubr.f32.mxu0 0.0
      %8930 = vmatmul.mubr.f32.gmra.mxu0 %v8747
      %v8931 = vpop.f32.mrf.mxu0
      %v8932 = vadd.f32 0.0, %v8931
      %v8933 = vpop.f32.mrf.mxu0
      %8934 = vmatprep.mubr.f32.mxu0 0.0
      %8935 = vmatmul.mubr.f32.gmra.mxu0 %v8750
      %v8936 = vpop.f32.mrf.mxu0
      %v8937 = vadd.f32 0.0, %v8936
      %v8938 = vpop.f32.mrf.mxu0
      %8939 = vmatprep.mubr.f32.mxu0 0.0
      %8940 = vmatmul.mubr.f32.gmra.mxu0 %v8753
      %v8941 = vpop.f32.mrf.mxu0
      %v8942 = vadd.f32 0.0, %v8941
      %v8943 = vpop.f32.mrf.mxu0
      %8944 = vmatprep.mubr.f32.mxu0 0.0
      %8945 = vmatmul.mubr.f32.gmra.mxu0 %v8756
      %v8946 = vpop.f32.mrf.mxu0
      %v8947 = vadd.f32 0.0, %v8946
      %v8948 = vpop.f32.mrf.mxu0
      %8949 = vmatprep.mubr.f32.mxu0 0.0
      %8950 = vmatmul.mubr.f32.gmra.mxu0 %v8759
      %v8951 = vpop.f32.mrf.mxu0
      %v8952 = vadd.f32 0.0, %v8951
      %v8953 = vpop.f32.mrf.mxu0
      %8954 = vmatprep.mubr.f32.mxu0 0.0
      %8955 = vmatmul.mubr.f32.gmra.mxu0 %v8762
      %v8956 = vpop.f32.mrf.mxu0
      %v8957 = vadd.f32 0.0, %v8956
      %v8958 = vpop.f32.mrf.mxu0
      %8959 = vmatprep.mubr.f32.mxu0 0.0
      %8960 = vmatmul.mubr.f32.gmra.mxu0 %v8765
      %v8961 = vpop.f32.mrf.mxu0
      %v8962 = vadd.f32 0.0, %v8961
      %v8963 = vpop.f32.mrf.mxu0
      %8964 = vmatprep.mubr.f32.mxu0 0.0
      %8965 = vmatmul.mubr.f32.gmra.mxu0 %v8768
      %v8966 = vpop.f32.mrf.mxu0
      %v8967 = vadd.f32 0.0, %v8966
      %v8968 = vpop.f32.mrf.mxu0
      %8969 = vmatprep.mubr.f32.mxu0 0.0
      %8970 = vmatmul.mubr.f32.gmra.mxu0 %v8771
      %v8971 = vpop.f32.mrf.mxu0
      %v8972 = vadd.f32 0.0, %v8971
      %v8973 = vpop.f32.mrf.mxu0
      %8974 = vmatprep.mubr.f32.mxu0 0.0
      %8975 = vmatmul.mubr.f32.gmra.mxu0 %v8774
      %v8976 = vpop.f32.mrf.mxu0
      %v8977 = vadd.f32 0.0, %v8976
      %v8978 = vpop.f32.mrf.mxu0
      %8979 = vmatprep.mubr.f32.mxu0 0.0
      %8980 = vmatmul.mubr.f32.gmra.mxu0 %v8777
      %v8981 = vpop.f32.mrf.mxu0
      %v8982 = vadd.f32 0.0, %v8981
      %v8983 = vpop.f32.mrf.mxu0
      %8984 = vmatprep.mubr.f32.mxu0 0.0
      %8985 = vmatmul.mubr.f32.gmra.mxu0 %v8780
      %v8986 = vpop.f32.mrf.mxu0
      %v8987 = vadd.f32 0.0, %v8986
      %v8988 = vpop.f32.mrf.mxu0
      %8989 = vmatprep.mubr.f32.mxu0 0.0
      %8990 = vmatmul.mubr.f32.gmra.mxu0 %v8783
      %v8991 = vpop.f32.mrf.mxu0
      %v8992 = vadd.f32 0.0, %v8991
      %v8993 = vpop.f32.mrf.mxu0
      %8994 = vmatprep.mubr.f32.mxu0 0.0
      %8995 = vmatmul.mubr.f32.gmra.mxu0 %v8786
      %v8996 = vpop.f32.mrf.mxu0
      %v8997 = vadd.f32 0.0, %v8996
      %v8998 = vpop.f32.mrf.mxu0
      %8999 = vmatprep.mubr.f32.mxu0 0.0
      %9000 = vmatmul.mubr.f32.gmra.mxu0 %v8789
      %v9001 = vpop.f32.mrf.mxu0
      %v9002 = vadd.f32 0.0, %v9001
      %v9003 = vpop.f32.mrf.mxu0
      %9004 = vmatprep.mubr.f32.mxu0 0.0
      %9005 = vmatmul.mubr.f32.gmra.mxu0 %v8792
      %v9006 = vpop.f32.mrf.mxu0
      %v9007 = vadd.f32 0.0, %v9006
      %v9008 = vpop.f32.mrf.mxu0
      %9009 = vmatprep.mubr.f32.mxu0 0.0
      %9010 = vmatmul.mubr.f32.gmra.mxu0 %v8795
      %v9011 = vpop.f32.mrf.mxu0
      %v9012 = vadd.f32 0.0, %v9011
      %v9013 = vpop.f32.mrf.mxu0
      %9014 = vmatprep.mubr.f32.mxu0 0.0
      %9015 = vmatmul.mubr.f32.gmra.mxu0 %v8798
      %v9016 = vpop.f32.mrf.mxu0
      %v9017 = vadd.f32 0.0, %v9016
      %v9018 = vpop.f32.mrf.mxu0
      %9019 = vmatprep.mubr.f32.mxu0 0.0
      %9020 = vmatmul.mubr.f32.gmra.mxu0 %v8801
      %v9021 = vpop.f32.mrf.mxu0
      %v9022 = vadd.f32 0.0, %v9021
      %v9023 = vpop.f32.mrf.mxu0
      %9024 = vmatprep.mubr.f32.mxu0 0.0
      %9025 = vmatmul.mubr.f32.gmra.mxu0 %v8804
      %v9026 = vpop.f32.mrf.mxu0
      %v9027 = vadd.f32 0.0, %v9026
      %v9028 = vpop.f32.mrf.mxu0
      %9029 = vmatprep.mubr.f32.mxu0 0.0
      %9030 = vmatmul.mubr.f32.gmra.mxu0 %v8807
      %v9031 = vpop.f32.mrf.mxu0
      %v9032 = vadd.f32 0.0, %v9031
      %v9033 = vpop.f32.mrf.mxu0
      %9034 = vmatprep.mubr.f32.mxu0 0.0
      %9035 = vmatmul.mubr.f32.gmra.mxu0 %v8810
      %v9036 = vpop.f32.mrf.mxu0
      %v9037 = vadd.f32 0.0, %v9036
      %v9038 = vpop.f32.mrf.mxu0
      %9039 = vdwg.mxu0
      %v9040 = vadd.f32 %v8650, %v8882
      %v9041 = vadd.f32 %v8651, %v8887
      %v9042 = vadd.f32 %v8652, %v8892
      %v9043 = vadd.f32 %v8653, %v8897
      %v9044 = vadd.f32 %v8654, %v8902
      %v9045 = vadd.f32 %v8655, %v8907
      %v9046 = vadd.f32 %v8656, %v8912
      %v9047 = vadd.f32 %v8657, %v8917
      %v9048 = vadd.f32 %v8658, %v8922
      %v9049 = vadd.f32 %v8659, %v8927
      %v9050 = vadd.f32 %v8660, %v8932
      %v9051 = vadd.f32 %v8661, %v8937
      %v9052 = vadd.f32 %v8662, %v8942
      %v9053 = vadd.f32 %v8663, %v8947
      %v9054 = vadd.f32 %v8664, %v8952
      %v9055 = vadd.f32 %v8665, %v8957
      %v9056 = vadd.f32 %v8666, %v8962
      %v9057 = vadd.f32 %v8667, %v8967
      %v9058 = vadd.f32 %v8668, %v8972
      %v9059 = vadd.f32 %v8669, %v8977
      %v9060 = vadd.f32 %v8670, %v8982
      %v9061 = vadd.f32 %v8671, %v8987
      %v9062 = vadd.f32 %v8672, %v8992
      %v9063 = vadd.f32 %v8673, %v8997
      %v9064 = vadd.f32 %v8674, %v9002
      %v9065 = vadd.f32 %v8675, %v9007
      %v9066 = vadd.f32 %v8676, %v9012
      %v9067 = vadd.f32 %v8677, %v9017
      %v9068 = vadd.f32 %v8678, %v9022
      %v9069 = vadd.f32 %v8679, %v9027
      %v9070 = vadd.f32 %v8680, %v9032
      %v9071 = vadd.f32 %v8681, %v9037
      %v9072 = vld [vmem:[%s8291 + $0x2] sm:$0xff]
      %v9073 = vld [vmem:[%s8291 + $0x12] sm:$0xff]
      %v9074 = vld [vmem:[%s8291 + $0x22] sm:$0xff]
      %v9075 = vld [vmem:[%s8291 + $0x32] sm:$0xff]
      %v9076 = vld [vmem:[%s8291 + $0x42] sm:$0xff]
      %v9077 = vld [vmem:[%s8291 + $0x52] sm:$0xff]
      %v9078 = vld [vmem:[%s8291 + $0x62] sm:$0xff]
      %v9079 = vld [vmem:[%s8291 + $0x72] sm:$0xff]
      %v9080 = vld [vmem:[%s8291 + $0xa2] sm:$0xff]
      %v9081 = vld [vmem:[%s8291 + $0xb2] sm:$0xff]
      %v9082 = vld [vmem:[%s8291 + $0xc2] sm:$0xff]
      %v9083 = vld [vmem:[%s8291 + $0xd2] sm:$0xff]
      %v9084 = vld [vmem:[%s8291 + $0xe2] sm:$0xff]
      %v9085 = vld [vmem:[%s8291 + $0xf2] sm:$0xff]
      %v9086 = vld [vmem:[%s8291 + $0x102] sm:$0xff]
      %v9087 = vld [vmem:[%s8291 + $0x112] sm:$0xff]
      %v9088 = vld [vmem:[%s8291 + $0x142] sm:$0xff]
      %v9089 = vld [vmem:[%s8291 + $0x152] sm:$0xff]
      %v9090 = vld [vmem:[%s8291 + $0x162] sm:$0xff]
      %v9091 = vld [vmem:[%s8291 + $0x172] sm:$0xff]
      %v9092 = vld [vmem:[%s8291 + $0x182] sm:$0xff]
      %v9093 = vld [vmem:[%s8291 + $0x192] sm:$0xff]
      %v9094 = vld [vmem:[%s8291 + $0x1a2] sm:$0xff]
      %v9095 = vld [vmem:[%s8291 + $0x1b2] sm:$0xff]
      %v9096 = vld [vmem:[%s8291 + $0x1e2] sm:$0xff]
      %v9097 = vld [vmem:[%s8291 + $0x1f2] sm:$0xff]
      %v9098 = vld [vmem:[%s8291 + $0x202] sm:$0xff]
      %v9099 = vld [vmem:[%s8291 + $0x212] sm:$0xff]
      %v9100 = vld [vmem:[%s8291 + $0x222] sm:$0xff]
      %v9101 = vld [vmem:[%s8291 + $0x232] sm:$0xff]
      %v9102 = vld [vmem:[%s8291 + $0x242] sm:$0xff]
      %v9103 = vld [vmem:[%s8291 + $0x252] sm:$0xff]
      %s9104 = scalar_lea.vmem %s5, 40
      %v9105 = vld [vmem:[%s9104] sm:$0x3]
      %v9107 = vsel %vm451, %v9072, 0
      %v9110 = vsel %vm451, %v9073, 0
      %v9113 = vsel %vm451, %v9074, 0
      %v9116 = vsel %vm451, %v9075, 0
      %v9119 = vsel %vm451, %v9076, 0
      %v9122 = vsel %vm451, %v9077, 0
      %v9125 = vsel %vm451, %v9078, 0
      %v9128 = vsel %vm451, %v9079, 0
      %v9131 = vsel %vm451, %v9080, 0
      %v9134 = vsel %vm451, %v9081, 0
      %v9137 = vsel %vm451, %v9082, 0
      %v9140 = vsel %vm451, %v9083, 0
      %v9143 = vsel %vm451, %v9084, 0
      %v9146 = vsel %vm451, %v9085, 0
      %v9149 = vsel %vm451, %v9086, 0
      %v9152 = vsel %vm451, %v9087, 0
      %v9155 = vsel %vm451, %v9088, 0
      %v9158 = vsel %vm451, %v9089, 0
      %v9161 = vsel %vm451, %v9090, 0
      %v9164 = vsel %vm451, %v9091, 0
      %v9167 = vsel %vm451, %v9092, 0
      %v9170 = vsel %vm451, %v9093, 0
      %v9173 = vsel %vm451, %v9094, 0
      %v9176 = vsel %vm451, %v9095, 0
      %v9179 = vsel %vm451, %v9096, 0
      %v9182 = vsel %vm451, %v9097, 0
      %v9185 = vsel %vm451, %v9098, 0
      %v9188 = vsel %vm451, %v9099, 0
      %v9191 = vsel %vm451, %v9100, 0
      %v9194 = vsel %vm451, %v9101, 0
      %v9197 = vsel %vm451, %v9102, 0
      %v9200 = vsel %vm451, %v9103, 0
      %v9203 = vsel %vm1495, %v9105, 0
      %9205 = vmatprep.subr.mxu0 0.0
      %9206 = vmatpush1.msra.mxu0 0.0
      %9207 = vmatprep.subr.mxu0 0.0
      %9208 = vmatpush1.msra.mxu0 0.0
      %9209 = vmatprep.subr.mxu0 0.0
      %9210 = vmatpush1.msra.mxu0 0.0
      %9211 = vmatprep.subr.mxu0 0.0
      %9212 = vmatpush1.msra.mxu0 0.0
      %9213 = vmatprep.subr.mxu0 0.0
      %9214 = vmatpush1.msra.mxu0 0.0
      %9215 = vmatprep.subr.mxu0 0.0
      %9216 = vmatpush1.msra.mxu0 0.0
      %9217 = vmatprep.subr.mxu0 0.0
      %9218 = vmatpush1.msra.mxu0 0.0
      %9219 = vmatprep.subr.mxu0 0.0
      %9220 = vmatpush1.msra.mxu0 0.0
      %9221 = vmatprep.subr.mxu0 0.0
      %9222 = vmatpush1.msra.mxu0 0.0
      %9223 = vmatprep.subr.mxu0 0.0
      %9224 = vmatpush1.msra.mxu0 0.0
      %9225 = vmatprep.subr.mxu0 0.0
      %9226 = vmatpush1.msra.mxu0 0.0
      %9227 = vmatprep.subr.mxu0 0.0
      %9228 = vmatpush1.msra.mxu0 0.0
      %9229 = vmatprep.subr.mxu0 0.0
      %9230 = vmatpush1.msra.mxu0 0.0
      %9231 = vmatprep.subr.mxu0 0.0
      %9232 = vmatpush1.msra.mxu0 0.0
      %9233 = vmatprep.subr.mxu0 0.0
      %9234 = vmatpush1.msra.mxu0 0.0
      %9235 = vmatprep.subr.mxu0 0.0
      %9236 = vmatpush1.msra.mxu0 %v9203
      %9237 = vmatprep.subr.mxu0 0.0
      %9238 = vmatpush2.msra.mxu0 0.0
      %9239 = vmatprep.subr.mxu0 0.0
      %9240 = vmatpush2.msra.mxu0 0.0
      %9241 = vmatprep.subr.mxu0 0.0
      %9242 = vmatpush2.msra.mxu0 0.0
      %9243 = vmatprep.subr.mxu0 0.0
      %9244 = vmatpush2.msra.mxu0 0.0
      %9245 = vmatprep.subr.mxu0 0.0
      %9246 = vmatpush2.msra.mxu0 0.0
      %9247 = vmatprep.subr.mxu0 0.0
      %9248 = vmatpush2.msra.mxu0 0.0
      %9249 = vmatprep.subr.mxu0 0.0
      %9250 = vmatpush2.msra.mxu0 0.0
      %9251 = vmatprep.subr.mxu0 0.0
      %9252 = vmatpush2.msra.mxu0 0.0
      %9253 = vmatprep.subr.mxu0 0.0
      %9254 = vmatpush2.msra.mxu0 0.0
      %9255 = vmatprep.subr.mxu0 0.0
      %9256 = vmatpush2.msra.mxu0 0.0
      %9257 = vmatprep.subr.mxu0 0.0
      %9258 = vmatpush2.msra.mxu0 0.0
      %9259 = vmatprep.subr.mxu0 0.0
      %9260 = vmatpush2.msra.mxu0 0.0
      %9261 = vmatprep.subr.mxu0 0.0
      %9262 = vmatpush2.msra.mxu0 0.0
      %9263 = vmatprep.subr.mxu0 0.0
      %9264 = vmatpush2.msra.mxu0 0.0
      %9265 = vmatprep.subr.mxu0 0.0
      %9266 = vmatpush2.msra.mxu0 0.0
      %9267 = vmatprep.subr.mxu0 0.0
      %9268 = vmatpush2.msra.mxu0 0.0
      %9269 = vmatprep.mubr.f32.mxu0 0.0
      %9270 = vmatmul.mubr.f32.gmra.mxu0 %v9107
      %v9271 = vpop.f32.mrf.mxu0
      %v9272 = vadd.f32 0.0, %v9271
      %v9273 = vpop.f32.mrf.mxu0
      %9274 = vmatprep.mubr.f32.mxu0 0.0
      %9275 = vmatmul.mubr.f32.gmra.mxu0 %v9110
      %v9276 = vpop.f32.mrf.mxu0
      %v9277 = vadd.f32 0.0, %v9276
      %v9278 = vpop.f32.mrf.mxu0
      %9279 = vmatprep.mubr.f32.mxu0 0.0
      %9280 = vmatmul.mubr.f32.gmra.mxu0 %v9113
      %v9281 = vpop.f32.mrf.mxu0
      %v9282 = vadd.f32 0.0, %v9281
      %v9283 = vpop.f32.mrf.mxu0
      %9284 = vmatprep.mubr.f32.mxu0 0.0
      %9285 = vmatmul.mubr.f32.gmra.mxu0 %v9116
      %v9286 = vpop.f32.mrf.mxu0
      %v9287 = vadd.f32 0.0, %v9286
      %v9288 = vpop.f32.mrf.mxu0
      %9289 = vmatprep.mubr.f32.mxu0 0.0
      %9290 = vmatmul.mubr.f32.gmra.mxu0 %v9119
      %v9291 = vpop.f32.mrf.mxu0
      %v9292 = vadd.f32 0.0, %v9291
      %v9293 = vpop.f32.mrf.mxu0
      %9294 = vmatprep.mubr.f32.mxu0 0.0
      %9295 = vmatmul.mubr.f32.gmra.mxu0 %v9122
      %v9296 = vpop.f32.mrf.mxu0
      %v9297 = vadd.f32 0.0, %v9296
      %v9298 = vpop.f32.mrf.mxu0
      %9299 = vmatprep.mubr.f32.mxu0 0.0
      %9300 = vmatmul.mubr.f32.gmra.mxu0 %v9125
      %v9301 = vpop.f32.mrf.mxu0
      %v9302 = vadd.f32 0.0, %v9301
      %v9303 = vpop.f32.mrf.mxu0
      %9304 = vmatprep.mubr.f32.mxu0 0.0
      %9305 = vmatmul.mubr.f32.gmra.mxu0 %v9128
      %v9306 = vpop.f32.mrf.mxu0
      %v9307 = vadd.f32 0.0, %v9306
      %v9308 = vpop.f32.mrf.mxu0
      %9309 = vmatprep.mubr.f32.mxu0 0.0
      %9310 = vmatmul.mubr.f32.gmra.mxu0 %v9131
      %v9311 = vpop.f32.mrf.mxu0
      %v9312 = vadd.f32 0.0, %v9311
      %v9313 = vpop.f32.mrf.mxu0
      %9314 = vmatprep.mubr.f32.mxu0 0.0
      %9315 = vmatmul.mubr.f32.gmra.mxu0 %v9134
      %v9316 = vpop.f32.mrf.mxu0
      %v9317 = vadd.f32 0.0, %v9316
      %v9318 = vpop.f32.mrf.mxu0
      %9319 = vmatprep.mubr.f32.mxu0 0.0
      %9320 = vmatmul.mubr.f32.gmra.mxu0 %v9137
      %v9321 = vpop.f32.mrf.mxu0
      %v9322 = vadd.f32 0.0, %v9321
      %v9323 = vpop.f32.mrf.mxu0
      %9324 = vmatprep.mubr.f32.mxu0 0.0
      %9325 = vmatmul.mubr.f32.gmra.mxu0 %v9140
      %v9326 = vpop.f32.mrf.mxu0
      %v9327 = vadd.f32 0.0, %v9326
      %v9328 = vpop.f32.mrf.mxu0
      %9329 = vmatprep.mubr.f32.mxu0 0.0
      %9330 = vmatmul.mubr.f32.gmra.mxu0 %v9143
      %v9331 = vpop.f32.mrf.mxu0
      %v9332 = vadd.f32 0.0, %v9331
      %v9333 = vpop.f32.mrf.mxu0
      %9334 = vmatprep.mubr.f32.mxu0 0.0
      %9335 = vmatmul.mubr.f32.gmra.mxu0 %v9146
      %v9336 = vpop.f32.mrf.mxu0
      %v9337 = vadd.f32 0.0, %v9336
      %v9338 = vpop.f32.mrf.mxu0
      %9339 = vmatprep.mubr.f32.mxu0 0.0
      %9340 = vmatmul.mubr.f32.gmra.mxu0 %v9149
      %v9341 = vpop.f32.mrf.mxu0
      %v9342 = vadd.f32 0.0, %v9341
      %v9343 = vpop.f32.mrf.mxu0
      %9344 = vmatprep.mubr.f32.mxu0 0.0
      %9345 = vmatmul.mubr.f32.gmra.mxu0 %v9152
      %v9346 = vpop.f32.mrf.mxu0
      %v9347 = vadd.f32 0.0, %v9346
      %v9348 = vpop.f32.mrf.mxu0
      %9349 = vmatprep.mubr.f32.mxu0 0.0
      %9350 = vmatmul.mubr.f32.gmra.mxu0 %v9155
      %v9351 = vpop.f32.mrf.mxu0
      %v9352 = vadd.f32 0.0, %v9351
      %v9353 = vpop.f32.mrf.mxu0
      %9354 = vmatprep.mubr.f32.mxu0 0.0
      %9355 = vmatmul.mubr.f32.gmra.mxu0 %v9158
      %v9356 = vpop.f32.mrf.mxu0
      %v9357 = vadd.f32 0.0, %v9356
      %v9358 = vpop.f32.mrf.mxu0
      %9359 = vmatprep.mubr.f32.mxu0 0.0
      %9360 = vmatmul.mubr.f32.gmra.mxu0 %v9161
      %v9361 = vpop.f32.mrf.mxu0
      %v9362 = vadd.f32 0.0, %v9361
      %v9363 = vpop.f32.mrf.mxu0
      %9364 = vmatprep.mubr.f32.mxu0 0.0
      %9365 = vmatmul.mubr.f32.gmra.mxu0 %v9164
      %v9366 = vpop.f32.mrf.mxu0
      %v9367 = vadd.f32 0.0, %v9366
      %v9368 = vpop.f32.mrf.mxu0
      %9369 = vmatprep.mubr.f32.mxu0 0.0
      %9370 = vmatmul.mubr.f32.gmra.mxu0 %v9167
      %v9371 = vpop.f32.mrf.mxu0
      %v9372 = vadd.f32 0.0, %v9371
      %v9373 = vpop.f32.mrf.mxu0
      %9374 = vmatprep.mubr.f32.mxu0 0.0
      %9375 = vmatmul.mubr.f32.gmra.mxu0 %v9170
      %v9376 = vpop.f32.mrf.mxu0
      %v9377 = vadd.f32 0.0, %v9376
      %v9378 = vpop.f32.mrf.mxu0
      %9379 = vmatprep.mubr.f32.mxu0 0.0
      %9380 = vmatmul.mubr.f32.gmra.mxu0 %v9173
      %v9381 = vpop.f32.mrf.mxu0
      %v9382 = vadd.f32 0.0, %v9381
      %v9383 = vpop.f32.mrf.mxu0
      %9384 = vmatprep.mubr.f32.mxu0 0.0
      %9385 = vmatmul.mubr.f32.gmra.mxu0 %v9176
      %v9386 = vpop.f32.mrf.mxu0
      %v9387 = vadd.f32 0.0, %v9386
      %v9388 = vpop.f32.mrf.mxu0
      %9389 = vmatprep.mubr.f32.mxu0 0.0
      %9390 = vmatmul.mubr.f32.gmra.mxu0 %v9179
      %v9391 = vpop.f32.mrf.mxu0
      %v9392 = vadd.f32 0.0, %v9391
      %v9393 = vpop.f32.mrf.mxu0
      %9394 = vmatprep.mubr.f32.mxu0 0.0
      %9395 = vmatmul.mubr.f32.gmra.mxu0 %v9182
      %v9396 = vpop.f32.mrf.mxu0
      %v9397 = vadd.f32 0.0, %v9396
      %v9398 = vpop.f32.mrf.mxu0
      %9399 = vmatprep.mubr.f32.mxu0 0.0
      %9400 = vmatmul.mubr.f32.gmra.mxu0 %v9185
      %v9401 = vpop.f32.mrf.mxu0
      %v9402 = vadd.f32 0.0, %v9401
      %v9403 = vpop.f32.mrf.mxu0
      %9404 = vmatprep.mubr.f32.mxu0 0.0
      %9405 = vmatmul.mubr.f32.gmra.mxu0 %v9188
      %v9406 = vpop.f32.mrf.mxu0
      %v9407 = vadd.f32 0.0, %v9406
      %v9408 = vpop.f32.mrf.mxu0
      %9409 = vmatprep.mubr.f32.mxu0 0.0
      %9410 = vmatmul.mubr.f32.gmra.mxu0 %v9191
      %v9411 = vpop.f32.mrf.mxu0
      %v9412 = vadd.f32 0.0, %v9411
      %v9413 = vpop.f32.mrf.mxu0
      %9414 = vmatprep.mubr.f32.mxu0 0.0
      %9415 = vmatmul.mubr.f32.gmra.mxu0 %v9194
      %v9416 = vpop.f32.mrf.mxu0
      %v9417 = vadd.f32 0.0, %v9416
      %v9418 = vpop.f32.mrf.mxu0
      %9419 = vmatprep.mubr.f32.mxu0 0.0
      %9420 = vmatmul.mubr.f32.gmra.mxu0 %v9197
      %v9421 = vpop.f32.mrf.mxu0
      %v9422 = vadd.f32 0.0, %v9421
      %v9423 = vpop.f32.mrf.mxu0
      %9424 = vmatprep.mubr.f32.mxu0 0.0
      %9425 = vmatmul.mubr.f32.gmra.mxu0 %v9200
      %v9426 = vpop.f32.mrf.mxu0
      %v9427 = vadd.f32 0.0, %v9426
      %v9428 = vpop.f32.mrf.mxu0
      %9429 = vdwg.mxu0
      %v9430 = vadd.f32 %v9040, %v9272
      %v9431 = vadd.f32 %v9041, %v9277
      %v9432 = vadd.f32 %v9042, %v9282
      %v9433 = vadd.f32 %v9043, %v9287
      %v9434 = vadd.f32 %v9044, %v9292
      %v9435 = vadd.f32 %v9045, %v9297
      %v9436 = vadd.f32 %v9046, %v9302
      %v9437 = vadd.f32 %v9047, %v9307
      %v9438 = vadd.f32 %v9048, %v9312
      %v9439 = vadd.f32 %v9049, %v9317
      %v9440 = vadd.f32 %v9050, %v9322
      %v9441 = vadd.f32 %v9051, %v9327
      %v9442 = vadd.f32 %v9052, %v9332
      %v9443 = vadd.f32 %v9053, %v9337
      %v9444 = vadd.f32 %v9054, %v9342
      %v9445 = vadd.f32 %v9055, %v9347
      %v9446 = vadd.f32 %v9056, %v9352
      %v9447 = vadd.f32 %v9057, %v9357
      %v9448 = vadd.f32 %v9058, %v9362
      %v9449 = vadd.f32 %v9059, %v9367
      %v9450 = vadd.f32 %v9060, %v9372
      %v9451 = vadd.f32 %v9061, %v9377
      %v9452 = vadd.f32 %v9062, %v9382
      %v9453 = vadd.f32 %v9063, %v9387
      %v9454 = vadd.f32 %v9064, %v9392
      %v9455 = vadd.f32 %v9065, %v9397
      %v9456 = vadd.f32 %v9066, %v9402
      %v9457 = vadd.f32 %v9067, %v9407
      %v9458 = vadd.f32 %v9068, %v9412
      %v9459 = vadd.f32 %v9069, %v9417
      %v9460 = vadd.f32 %v9070, %v9422
      %v9461 = vadd.f32 %v9071, %v9427
      %s9462 = scalar_lea.vmem [#allocation2], 336
      %v9463 = vld [vmem:[%s9462] sm:$0xff]
      %v9464 = vld [vmem:[%s9462 + $0x10] sm:$0xff]
      %v9465 = vld [vmem:[%s9462 + $0x20] sm:$0xff]
      %v9466 = vld [vmem:[%s9462 + $0x30] sm:$0xff]
      %v9467 = vld [vmem:[%s9462 + $0x40] sm:$0xff]
      %v9468 = vld [vmem:[%s9462 + $0x50] sm:$0xff]
      %v9469 = vld [vmem:[%s9462 + $0x60] sm:$0xff]
      %v9470 = vld [vmem:[%s9462 + $0x70] sm:$0xff]
      %v9471 = vld [vmem:[%s9462 + $0xa0] sm:$0xff]
      %v9472 = vld [vmem:[%s9462 + $0xb0] sm:$0xff]
      %v9473 = vld [vmem:[%s9462 + $0xc0] sm:$0xff]
      %v9474 = vld [vmem:[%s9462 + $0xd0] sm:$0xff]
      %v9475 = vld [vmem:[%s9462 + $0xe0] sm:$0xff]
      %v9476 = vld [vmem:[%s9462 + $0xf0] sm:$0xff]
      %v9477 = vld [vmem:[%s9462 + $0x100] sm:$0xff]
      %v9478 = vld [vmem:[%s9462 + $0x110] sm:$0xff]
      %v9479 = vld [vmem:[%s9462 + $0x140] sm:$0xff]
      %v9480 = vld [vmem:[%s9462 + $0x150] sm:$0xff]
      %v9481 = vld [vmem:[%s9462 + $0x160] sm:$0xff]
      %v9482 = vld [vmem:[%s9462 + $0x170] sm:$0xff]
      %v9483 = vld [vmem:[%s9462 + $0x180] sm:$0xff]
      %v9484 = vld [vmem:[%s9462 + $0x190] sm:$0xff]
      %v9485 = vld [vmem:[%s9462 + $0x1a0] sm:$0xff]
      %v9486 = vld [vmem:[%s9462 + $0x1b0] sm:$0xff]
      %v9487 = vld [vmem:[%s9462 + $0x1e0] sm:$0xff]
      %v9488 = vld [vmem:[%s9462 + $0x1f0] sm:$0xff]
      %v9489 = vld [vmem:[%s9462 + $0x200] sm:$0xff]
      %v9490 = vld [vmem:[%s9462 + $0x210] sm:$0xff]
      %v9491 = vld [vmem:[%s9462 + $0x220] sm:$0xff]
      %v9492 = vld [vmem:[%s9462 + $0x230] sm:$0xff]
      %v9493 = vld [vmem:[%s9462 + $0x240] sm:$0xff]
      %v9494 = vld [vmem:[%s9462 + $0x250] sm:$0xff]
      %s9495 = scalar_lea.vmem %s5, 42
      %v9496 = vld [vmem:[%s9495] sm:$0x3]
      %v9498 = vsel %vm451, %v9463, 0
      %v9501 = vsel %vm451, %v9464, 0
      %v9504 = vsel %vm451, %v9465, 0
      %v9507 = vsel %vm451, %v9466, 0
      %v9510 = vsel %vm451, %v9467, 0
      %v9513 = vsel %vm451, %v9468, 0
      %v9516 = vsel %vm451, %v9469, 0
      %v9519 = vsel %vm451, %v9470, 0
      %v9522 = vsel %vm451, %v9471, 0
      %v9525 = vsel %vm451, %v9472, 0
      %v9528 = vsel %vm451, %v9473, 0
      %v9531 = vsel %vm451, %v9474, 0
      %v9534 = vsel %vm451, %v9475, 0
      %v9537 = vsel %vm451, %v9476, 0
      %v9540 = vsel %vm451, %v9477, 0
      %v9543 = vsel %vm451, %v9478, 0
      %v9546 = vsel %vm451, %v9479, 0
      %v9549 = vsel %vm451, %v9480, 0
      %v9552 = vsel %vm451, %v9481, 0
      %v9555 = vsel %vm451, %v9482, 0
      %v9558 = vsel %vm451, %v9483, 0
      %v9561 = vsel %vm451, %v9484, 0
      %v9564 = vsel %vm451, %v9485, 0
      %v9567 = vsel %vm451, %v9486, 0
      %v9570 = vsel %vm451, %v9487, 0
      %v9573 = vsel %vm451, %v9488, 0
      %v9576 = vsel %vm451, %v9489, 0
      %v9579 = vsel %vm451, %v9490, 0
      %v9582 = vsel %vm451, %v9491, 0
      %v9585 = vsel %vm451, %v9492, 0
      %v9588 = vsel %vm451, %v9493, 0
      %v9591 = vsel %vm451, %v9494, 0
      %v9594 = vsel %vm1495, %v9496, 0
      %9596 = vmatprep.subr.mxu0 0.0
      %9597 = vmatpush1.msra.mxu0 0.0
      %9598 = vmatprep.subr.mxu0 0.0
      %9599 = vmatpush1.msra.mxu0 0.0
      %9600 = vmatprep.subr.mxu0 0.0
      %9601 = vmatpush1.msra.mxu0 0.0
      %9602 = vmatprep.subr.mxu0 0.0
      %9603 = vmatpush1.msra.mxu0 0.0
      %9604 = vmatprep.subr.mxu0 0.0
      %9605 = vmatpush1.msra.mxu0 0.0
      %9606 = vmatprep.subr.mxu0 0.0
      %9607 = vmatpush1.msra.mxu0 0.0
      %9608 = vmatprep.subr.mxu0 0.0
      %9609 = vmatpush1.msra.mxu0 0.0
      %9610 = vmatprep.subr.mxu0 0.0
      %9611 = vmatpush1.msra.mxu0 0.0
      %9612 = vmatprep.subr.mxu0 0.0
      %9613 = vmatpush1.msra.mxu0 0.0
      %9614 = vmatprep.subr.mxu0 0.0
      %9615 = vmatpush1.msra.mxu0 0.0
      %9616 = vmatprep.subr.mxu0 0.0
      %9617 = vmatpush1.msra.mxu0 0.0
      %9618 = vmatprep.subr.mxu0 0.0
      %9619 = vmatpush1.msra.mxu0 0.0
      %9620 = vmatprep.subr.mxu0 0.0
      %9621 = vmatpush1.msra.mxu0 0.0
      %9622 = vmatprep.subr.mxu0 0.0
      %9623 = vmatpush1.msra.mxu0 0.0
      %9624 = vmatprep.subr.mxu0 0.0
      %9625 = vmatpush1.msra.mxu0 0.0
      %9626 = vmatprep.subr.mxu0 0.0
      %9627 = vmatpush1.msra.mxu0 %v9594
      %9628 = vmatprep.subr.mxu0 0.0
      %9629 = vmatpush2.msra.mxu0 0.0
      %9630 = vmatprep.subr.mxu0 0.0
      %9631 = vmatpush2.msra.mxu0 0.0
      %9632 = vmatprep.subr.mxu0 0.0
      %9633 = vmatpush2.msra.mxu0 0.0
      %9634 = vmatprep.subr.mxu0 0.0
      %9635 = vmatpush2.msra.mxu0 0.0
      %9636 = vmatprep.subr.mxu0 0.0
      %9637 = vmatpush2.msra.mxu0 0.0
      %9638 = vmatprep.subr.mxu0 0.0
      %9639 = vmatpush2.msra.mxu0 0.0
      %9640 = vmatprep.subr.mxu0 0.0
      %9641 = vmatpush2.msra.mxu0 0.0
      %9642 = vmatprep.subr.mxu0 0.0
      %9643 = vmatpush2.msra.mxu0 0.0
      %9644 = vmatprep.subr.mxu0 0.0
      %9645 = vmatpush2.msra.mxu0 0.0
      %9646 = vmatprep.subr.mxu0 0.0
      %9647 = vmatpush2.msra.mxu0 0.0
      %9648 = vmatprep.subr.mxu0 0.0
      %9649 = vmatpush2.msra.mxu0 0.0
      %9650 = vmatprep.subr.mxu0 0.0
      %9651 = vmatpush2.msra.mxu0 0.0
      %9652 = vmatprep.subr.mxu0 0.0
      %9653 = vmatpush2.msra.mxu0 0.0
      %9654 = vmatprep.subr.mxu0 0.0
      %9655 = vmatpush2.msra.mxu0 0.0
      %9656 = vmatprep.subr.mxu0 0.0
      %9657 = vmatpush2.msra.mxu0 0.0
      %9658 = vmatprep.subr.mxu0 0.0
      %9659 = vmatpush2.msra.mxu0 0.0
      %9660 = vmatprep.mubr.f32.mxu0 0.0
      %9661 = vmatmul.mubr.f32.gmra.mxu0 %v9498
      %v9662 = vpop.f32.mrf.mxu0
      %v9663 = vadd.f32 0.0, %v9662
      %v9664 = vpop.f32.mrf.mxu0
      %9665 = vmatprep.mubr.f32.mxu0 0.0
      %9666 = vmatmul.mubr.f32.gmra.mxu0 %v9501
      %v9667 = vpop.f32.mrf.mxu0
      %v9668 = vadd.f32 0.0, %v9667
      %v9669 = vpop.f32.mrf.mxu0
      %9670 = vmatprep.mubr.f32.mxu0 0.0
      %9671 = vmatmul.mubr.f32.gmra.mxu0 %v9504
      %v9672 = vpop.f32.mrf.mxu0
      %v9673 = vadd.f32 0.0, %v9672
      %v9674 = vpop.f32.mrf.mxu0
      %9675 = vmatprep.mubr.f32.mxu0 0.0
      %9676 = vmatmul.mubr.f32.gmra.mxu0 %v9507
      %v9677 = vpop.f32.mrf.mxu0
      %v9678 = vadd.f32 0.0, %v9677
      %v9679 = vpop.f32.mrf.mxu0
      %9680 = vmatprep.mubr.f32.mxu0 0.0
      %9681 = vmatmul.mubr.f32.gmra.mxu0 %v9510
      %v9682 = vpop.f32.mrf.mxu0
      %v9683 = vadd.f32 0.0, %v9682
      %v9684 = vpop.f32.mrf.mxu0
      %9685 = vmatprep.mubr.f32.mxu0 0.0
      %9686 = vmatmul.mubr.f32.gmra.mxu0 %v9513
      %v9687 = vpop.f32.mrf.mxu0
      %v9688 = vadd.f32 0.0, %v9687
      %v9689 = vpop.f32.mrf.mxu0
      %9690 = vmatprep.mubr.f32.mxu0 0.0
      %9691 = vmatmul.mubr.f32.gmra.mxu0 %v9516
      %v9692 = vpop.f32.mrf.mxu0
      %v9693 = vadd.f32 0.0, %v9692
      %v9694 = vpop.f32.mrf.mxu0
      %9695 = vmatprep.mubr.f32.mxu0 0.0
      %9696 = vmatmul.mubr.f32.gmra.mxu0 %v9519
      %v9697 = vpop.f32.mrf.mxu0
      %v9698 = vadd.f32 0.0, %v9697
      %v9699 = vpop.f32.mrf.mxu0
      %9700 = vmatprep.mubr.f32.mxu0 0.0
      %9701 = vmatmul.mubr.f32.gmra.mxu0 %v9522
      %v9702 = vpop.f32.mrf.mxu0
      %v9703 = vadd.f32 0.0, %v9702
      %v9704 = vpop.f32.mrf.mxu0
      %9705 = vmatprep.mubr.f32.mxu0 0.0
      %9706 = vmatmul.mubr.f32.gmra.mxu0 %v9525
      %v9707 = vpop.f32.mrf.mxu0
      %v9708 = vadd.f32 0.0, %v9707
      %v9709 = vpop.f32.mrf.mxu0
      %9710 = vmatprep.mubr.f32.mxu0 0.0
      %9711 = vmatmul.mubr.f32.gmra.mxu0 %v9528
      %v9712 = vpop.f32.mrf.mxu0
      %v9713 = vadd.f32 0.0, %v9712
      %v9714 = vpop.f32.mrf.mxu0
      %9715 = vmatprep.mubr.f32.mxu0 0.0
      %9716 = vmatmul.mubr.f32.gmra.mxu0 %v9531
      %v9717 = vpop.f32.mrf.mxu0
      %v9718 = vadd.f32 0.0, %v9717
      %v9719 = vpop.f32.mrf.mxu0
      %9720 = vmatprep.mubr.f32.mxu0 0.0
      %9721 = vmatmul.mubr.f32.gmra.mxu0 %v9534
      %v9722 = vpop.f32.mrf.mxu0
      %v9723 = vadd.f32 0.0, %v9722
      %v9724 = vpop.f32.mrf.mxu0
      %9725 = vmatprep.mubr.f32.mxu0 0.0
      %9726 = vmatmul.mubr.f32.gmra.mxu0 %v9537
      %v9727 = vpop.f32.mrf.mxu0
      %v9728 = vadd.f32 0.0, %v9727
      %v9729 = vpop.f32.mrf.mxu0
      %9730 = vmatprep.mubr.f32.mxu0 0.0
      %9731 = vmatmul.mubr.f32.gmra.mxu0 %v9540
      %v9732 = vpop.f32.mrf.mxu0
      %v9733 = vadd.f32 0.0, %v9732
      %v9734 = vpop.f32.mrf.mxu0
      %9735 = vmatprep.mubr.f32.mxu0 0.0
      %9736 = vmatmul.mubr.f32.gmra.mxu0 %v9543
      %v9737 = vpop.f32.mrf.mxu0
      %v9738 = vadd.f32 0.0, %v9737
      %v9739 = vpop.f32.mrf.mxu0
      %9740 = vmatprep.mubr.f32.mxu0 0.0
      %9741 = vmatmul.mubr.f32.gmra.mxu0 %v9546
      %v9742 = vpop.f32.mrf.mxu0
      %v9743 = vadd.f32 0.0, %v9742
      %v9744 = vpop.f32.mrf.mxu0
      %9745 = vmatprep.mubr.f32.mxu0 0.0
      %9746 = vmatmul.mubr.f32.gmra.mxu0 %v9549
      %v9747 = vpop.f32.mrf.mxu0
      %v9748 = vadd.f32 0.0, %v9747
      %v9749 = vpop.f32.mrf.mxu0
      %9750 = vmatprep.mubr.f32.mxu0 0.0
      %9751 = vmatmul.mubr.f32.gmra.mxu0 %v9552
      %v9752 = vpop.f32.mrf.mxu0
      %v9753 = vadd.f32 0.0, %v9752
      %v9754 = vpop.f32.mrf.mxu0
      %9755 = vmatprep.mubr.f32.mxu0 0.0
      %9756 = vmatmul.mubr.f32.gmra.mxu0 %v9555
      %v9757 = vpop.f32.mrf.mxu0
      %v9758 = vadd.f32 0.0, %v9757
      %v9759 = vpop.f32.mrf.mxu0
      %9760 = vmatprep.mubr.f32.mxu0 0.0
      %9761 = vmatmul.mubr.f32.gmra.mxu0 %v9558
      %v9762 = vpop.f32.mrf.mxu0
      %v9763 = vadd.f32 0.0, %v9762
      %v9764 = vpop.f32.mrf.mxu0
      %9765 = vmatprep.mubr.f32.mxu0 0.0
      %9766 = vmatmul.mubr.f32.gmra.mxu0 %v9561
      %v9767 = vpop.f32.mrf.mxu0
      %v9768 = vadd.f32 0.0, %v9767
      %v9769 = vpop.f32.mrf.mxu0
      %9770 = vmatprep.mubr.f32.mxu0 0.0
      %9771 = vmatmul.mubr.f32.gmra.mxu0 %v9564
      %v9772 = vpop.f32.mrf.mxu0
      %v9773 = vadd.f32 0.0, %v9772
      %v9774 = vpop.f32.mrf.mxu0
      %9775 = vmatprep.mubr.f32.mxu0 0.0
      %9776 = vmatmul.mubr.f32.gmra.mxu0 %v9567
      %v9777 = vpop.f32.mrf.mxu0
      %v9778 = vadd.f32 0.0, %v9777
      %v9779 = vpop.f32.mrf.mxu0
      %9780 = vmatprep.mubr.f32.mxu0 0.0
      %9781 = vmatmul.mubr.f32.gmra.mxu0 %v9570
      %v9782 = vpop.f32.mrf.mxu0
      %v9783 = vadd.f32 0.0, %v9782
      %v9784 = vpop.f32.mrf.mxu0
      %9785 = vmatprep.mubr.f32.mxu0 0.0
      %9786 = vmatmul.mubr.f32.gmra.mxu0 %v9573
      %v9787 = vpop.f32.mrf.mxu0
      %v9788 = vadd.f32 0.0, %v9787
      %v9789 = vpop.f32.mrf.mxu0
      %9790 = vmatprep.mubr.f32.mxu0 0.0
      %9791 = vmatmul.mubr.f32.gmra.mxu0 %v9576
      %v9792 = vpop.f32.mrf.mxu0
      %v9793 = vadd.f32 0.0, %v9792
      %v9794 = vpop.f32.mrf.mxu0
      %9795 = vmatprep.mubr.f32.mxu0 0.0
      %9796 = vmatmul.mubr.f32.gmra.mxu0 %v9579
      %v9797 = vpop.f32.mrf.mxu0
      %v9798 = vadd.f32 0.0, %v9797
      %v9799 = vpop.f32.mrf.mxu0
      %9800 = vmatprep.mubr.f32.mxu0 0.0
      %9801 = vmatmul.mubr.f32.gmra.mxu0 %v9582
      %v9802 = vpop.f32.mrf.mxu0
      %v9803 = vadd.f32 0.0, %v9802
      %v9804 = vpop.f32.mrf.mxu0
      %9805 = vmatprep.mubr.f32.mxu0 0.0
      %9806 = vmatmul.mubr.f32.gmra.mxu0 %v9585
      %v9807 = vpop.f32.mrf.mxu0
      %v9808 = vadd.f32 0.0, %v9807
      %v9809 = vpop.f32.mrf.mxu0
      %9810 = vmatprep.mubr.f32.mxu0 0.0
      %9811 = vmatmul.mubr.f32.gmra.mxu0 %v9588
      %v9812 = vpop.f32.mrf.mxu0
      %v9813 = vadd.f32 0.0, %v9812
      %v9814 = vpop.f32.mrf.mxu0
      %9815 = vmatprep.mubr.f32.mxu0 0.0
      %9816 = vmatmul.mubr.f32.gmra.mxu0 %v9591
      %v9817 = vpop.f32.mrf.mxu0
      %v9818 = vadd.f32 0.0, %v9817
      %v9819 = vpop.f32.mrf.mxu0
      %9820 = vdwg.mxu0
      %v9821 = vadd.f32 %v9430, %v9663
      %v9822 = vadd.f32 %v9431, %v9668
      %v9823 = vadd.f32 %v9432, %v9673
      %v9824 = vadd.f32 %v9433, %v9678
      %v9825 = vadd.f32 %v9434, %v9683
      %v9826 = vadd.f32 %v9435, %v9688
      %v9827 = vadd.f32 %v9436, %v9693
      %v9828 = vadd.f32 %v9437, %v9698
      %v9829 = vadd.f32 %v9438, %v9703
      %v9830 = vadd.f32 %v9439, %v9708
      %v9831 = vadd.f32 %v9440, %v9713
      %v9832 = vadd.f32 %v9441, %v9718
      %v9833 = vadd.f32 %v9442, %v9723
      %v9834 = vadd.f32 %v9443, %v9728
      %v9835 = vadd.f32 %v9444, %v9733
      %v9836 = vadd.f32 %v9445, %v9738
      %v9837 = vadd.f32 %v9446, %v9743
      %v9838 = vadd.f32 %v9447, %v9748
      %v9839 = vadd.f32 %v9448, %v9753
      %v9840 = vadd.f32 %v9449, %v9758
      %v9841 = vadd.f32 %v9450, %v9763
      %v9842 = vadd.f32 %v9451, %v9768
      %v9843 = vadd.f32 %v9452, %v9773
      %v9844 = vadd.f32 %v9453, %v9778
      %v9845 = vadd.f32 %v9454, %v9783
      %v9846 = vadd.f32 %v9455, %v9788
      %v9847 = vadd.f32 %v9456, %v9793
      %v9848 = vadd.f32 %v9457, %v9798
      %v9849 = vadd.f32 %v9458, %v9803
      %v9850 = vadd.f32 %v9459, %v9808
      %v9851 = vadd.f32 %v9460, %v9813
      %v9852 = vadd.f32 %v9461, %v9818
      %v9853 = vld [vmem:[%s9462 + $0x1] sm:$0xff]
      %v9854 = vld [vmem:[%s9462 + $0x11] sm:$0xff]
      %v9855 = vld [vmem:[%s9462 + $0x21] sm:$0xff]
      %v9856 = vld [vmem:[%s9462 + $0x31] sm:$0xff]
      %v9857 = vld [vmem:[%s9462 + $0x41] sm:$0xff]
      %v9858 = vld [vmem:[%s9462 + $0x51] sm:$0xff]
      %v9859 = vld [vmem:[%s9462 + $0x61] sm:$0xff]
      %v9860 = vld [vmem:[%s9462 + $0x71] sm:$0xff]
      %v9861 = vld [vmem:[%s9462 + $0xa1] sm:$0xff]
      %v9862 = vld [vmem:[%s9462 + $0xb1] sm:$0xff]
      %v9863 = vld [vmem:[%s9462 + $0xc1] sm:$0xff]
      %v9864 = vld [vmem:[%s9462 + $0xd1] sm:$0xff]
      %v9865 = vld [vmem:[%s9462 + $0xe1] sm:$0xff]
      %v9866 = vld [vmem:[%s9462 + $0xf1] sm:$0xff]
      %v9867 = vld [vmem:[%s9462 + $0x101] sm:$0xff]
      %v9868 = vld [vmem:[%s9462 + $0x111] sm:$0xff]
      %v9869 = vld [vmem:[%s9462 + $0x141] sm:$0xff]
      %v9870 = vld [vmem:[%s9462 + $0x151] sm:$0xff]
      %v9871 = vld [vmem:[%s9462 + $0x161] sm:$0xff]
      %v9872 = vld [vmem:[%s9462 + $0x171] sm:$0xff]
      %v9873 = vld [vmem:[%s9462 + $0x181] sm:$0xff]
      %v9874 = vld [vmem:[%s9462 + $0x191] sm:$0xff]
      %v9875 = vld [vmem:[%s9462 + $0x1a1] sm:$0xff]
      %v9876 = vld [vmem:[%s9462 + $0x1b1] sm:$0xff]
      %v9877 = vld [vmem:[%s9462 + $0x1e1] sm:$0xff]
      %v9878 = vld [vmem:[%s9462 + $0x1f1] sm:$0xff]
      %v9879 = vld [vmem:[%s9462 + $0x201] sm:$0xff]
      %v9880 = vld [vmem:[%s9462 + $0x211] sm:$0xff]
      %v9881 = vld [vmem:[%s9462 + $0x221] sm:$0xff]
      %v9882 = vld [vmem:[%s9462 + $0x231] sm:$0xff]
      %v9883 = vld [vmem:[%s9462 + $0x241] sm:$0xff]
      %v9884 = vld [vmem:[%s9462 + $0x251] sm:$0xff]
      %s9885 = scalar_lea.vmem %s5, 44
      %v9886 = vld [vmem:[%s9885] sm:$0x3]
      %v9888 = vsel %vm451, %v9853, 0
      %v9891 = vsel %vm451, %v9854, 0
      %v9894 = vsel %vm451, %v9855, 0
      %v9897 = vsel %vm451, %v9856, 0
      %v9900 = vsel %vm451, %v9857, 0
      %v9903 = vsel %vm451, %v9858, 0
      %v9906 = vsel %vm451, %v9859, 0
      %v9909 = vsel %vm451, %v9860, 0
      %v9912 = vsel %vm451, %v9861, 0
      %v9915 = vsel %vm451, %v9862, 0
      %v9918 = vsel %vm451, %v9863, 0
      %v9921 = vsel %vm451, %v9864, 0
      %v9924 = vsel %vm451, %v9865, 0
      %v9927 = vsel %vm451, %v9866, 0
      %v9930 = vsel %vm451, %v9867, 0
      %v9933 = vsel %vm451, %v9868, 0
      %v9936 = vsel %vm451, %v9869, 0
      %v9939 = vsel %vm451, %v9870, 0
      %v9942 = vsel %vm451, %v9871, 0
      %v9945 = vsel %vm451, %v9872, 0
      %v9948 = vsel %vm451, %v9873, 0
      %v9951 = vsel %vm451, %v9874, 0
      %v9954 = vsel %vm451, %v9875, 0
      %v9957 = vsel %vm451, %v9876, 0
      %v9960 = vsel %vm451, %v9877, 0
      %v9963 = vsel %vm451, %v9878, 0
      %v9966 = vsel %vm451, %v9879, 0
      %v9969 = vsel %vm451, %v9880, 0
      %v9972 = vsel %vm451, %v9881, 0
      %v9975 = vsel %vm451, %v9882, 0
      %v9978 = vsel %vm451, %v9883, 0
      %v9981 = vsel %vm451, %v9884, 0
      %v9984 = vsel %vm1495, %v9886, 0
      %9986 = vmatprep.subr.mxu0 0.0
      %9987 = vmatpush1.msra.mxu0 0.0
      %9988 = vmatprep.subr.mxu0 0.0
      %9989 = vmatpush1.msra.mxu0 0.0
      %9990 = vmatprep.subr.mxu0 0.0
      %9991 = vmatpush1.msra.mxu0 0.0
      %9992 = vmatprep.subr.mxu0 0.0
      %9993 = vmatpush1.msra.mxu0 0.0
      %9994 = vmatprep.subr.mxu0 0.0
      %9995 = vmatpush1.msra.mxu0 0.0
      %9996 = vmatprep.subr.mxu0 0.0
      %9997 = vmatpush1.msra.mxu0 0.0
      %9998 = vmatprep.subr.mxu0 0.0
      %9999 = vmatpush1.msra.mxu0 0.0
      %10000 = vmatprep.subr.mxu0 0.0
      %10001 = vmatpush1.msra.mxu0 0.0
      %10002 = vmatprep.subr.mxu0 0.0
      %10003 = vmatpush1.msra.mxu0 0.0
      %10004 = vmatprep.subr.mxu0 0.0
      %10005 = vmatpush1.msra.mxu0 0.0
      %10006 = vmatprep.subr.mxu0 0.0
      %10007 = vmatpush1.msra.mxu0 0.0
      %10008 = vmatprep.subr.mxu0 0.0
      %10009 = vmatpush1.msra.mxu0 0.0
      %10010 = vmatprep.subr.mxu0 0.0
      %10011 = vmatpush1.msra.mxu0 0.0
      %10012 = vmatprep.subr.mxu0 0.0
      %10013 = vmatpush1.msra.mxu0 0.0
      %10014 = vmatprep.subr.mxu0 0.0
      %10015 = vmatpush1.msra.mxu0 0.0
      %10016 = vmatprep.subr.mxu0 0.0
      %10017 = vmatpush1.msra.mxu0 %v9984
      %10018 = vmatprep.subr.mxu0 0.0
      %10019 = vmatpush2.msra.mxu0 0.0
      %10020 = vmatprep.subr.mxu0 0.0
      %10021 = vmatpush2.msra.mxu0 0.0
      %10022 = vmatprep.subr.mxu0 0.0
      %10023 = vmatpush2.msra.mxu0 0.0
      %10024 = vmatprep.subr.mxu0 0.0
      %10025 = vmatpush2.msra.mxu0 0.0
      %10026 = vmatprep.subr.mxu0 0.0
      %10027 = vmatpush2.msra.mxu0 0.0
      %10028 = vmatprep.subr.mxu0 0.0
      %10029 = vmatpush2.msra.mxu0 0.0
      %10030 = vmatprep.subr.mxu0 0.0
      %10031 = vmatpush2.msra.mxu0 0.0
      %10032 = vmatprep.subr.mxu0 0.0
      %10033 = vmatpush2.msra.mxu0 0.0
      %10034 = vmatprep.subr.mxu0 0.0
      %10035 = vmatpush2.msra.mxu0 0.0
      %10036 = vmatprep.subr.mxu0 0.0
      %10037 = vmatpush2.msra.mxu0 0.0
      %10038 = vmatprep.subr.mxu0 0.0
      %10039 = vmatpush2.msra.mxu0 0.0
      %10040 = vmatprep.subr.mxu0 0.0
      %10041 = vmatpush2.msra.mxu0 0.0
      %10042 = vmatprep.subr.mxu0 0.0
      %10043 = vmatpush2.msra.mxu0 0.0
      %10044 = vmatprep.subr.mxu0 0.0
      %10045 = vmatpush2.msra.mxu0 0.0
      %10046 = vmatprep.subr.mxu0 0.0
      %10047 = vmatpush2.msra.mxu0 0.0
      %10048 = vmatprep.subr.mxu0 0.0
      %10049 = vmatpush2.msra.mxu0 0.0
      %10050 = vmatprep.mubr.f32.mxu0 0.0
      %10051 = vmatmul.mubr.f32.gmra.mxu0 %v9888
      %v10052 = vpop.f32.mrf.mxu0
      %v10053 = vadd.f32 0.0, %v10052
      %v10054 = vpop.f32.mrf.mxu0
      %10055 = vmatprep.mubr.f32.mxu0 0.0
      %10056 = vmatmul.mubr.f32.gmra.mxu0 %v9891
      %v10057 = vpop.f32.mrf.mxu0
      %v10058 = vadd.f32 0.0, %v10057
      %v10059 = vpop.f32.mrf.mxu0
      %10060 = vmatprep.mubr.f32.mxu0 0.0
      %10061 = vmatmul.mubr.f32.gmra.mxu0 %v9894
      %v10062 = vpop.f32.mrf.mxu0
      %v10063 = vadd.f32 0.0, %v10062
      %v10064 = vpop.f32.mrf.mxu0
      %10065 = vmatprep.mubr.f32.mxu0 0.0
      %10066 = vmatmul.mubr.f32.gmra.mxu0 %v9897
      %v10067 = vpop.f32.mrf.mxu0
      %v10068 = vadd.f32 0.0, %v10067
      %v10069 = vpop.f32.mrf.mxu0
      %10070 = vmatprep.mubr.f32.mxu0 0.0
      %10071 = vmatmul.mubr.f32.gmra.mxu0 %v9900
      %v10072 = vpop.f32.mrf.mxu0
      %v10073 = vadd.f32 0.0, %v10072
      %v10074 = vpop.f32.mrf.mxu0
      %10075 = vmatprep.mubr.f32.mxu0 0.0
      %10076 = vmatmul.mubr.f32.gmra.mxu0 %v9903
      %v10077 = vpop.f32.mrf.mxu0
      %v10078 = vadd.f32 0.0, %v10077
      %v10079 = vpop.f32.mrf.mxu0
      %10080 = vmatprep.mubr.f32.mxu0 0.0
      %10081 = vmatmul.mubr.f32.gmra.mxu0 %v9906
      %v10082 = vpop.f32.mrf.mxu0
      %v10083 = vadd.f32 0.0, %v10082
      %v10084 = vpop.f32.mrf.mxu0
      %10085 = vmatprep.mubr.f32.mxu0 0.0
      %10086 = vmatmul.mubr.f32.gmra.mxu0 %v9909
      %v10087 = vpop.f32.mrf.mxu0
      %v10088 = vadd.f32 0.0, %v10087
      %v10089 = vpop.f32.mrf.mxu0
      %10090 = vmatprep.mubr.f32.mxu0 0.0
      %10091 = vmatmul.mubr.f32.gmra.mxu0 %v9912
      %v10092 = vpop.f32.mrf.mxu0
      %v10093 = vadd.f32 0.0, %v10092
      %v10094 = vpop.f32.mrf.mxu0
      %10095 = vmatprep.mubr.f32.mxu0 0.0
      %10096 = vmatmul.mubr.f32.gmra.mxu0 %v9915
      %v10097 = vpop.f32.mrf.mxu0
      %v10098 = vadd.f32 0.0, %v10097
      %v10099 = vpop.f32.mrf.mxu0
      %10100 = vmatprep.mubr.f32.mxu0 0.0
      %10101 = vmatmul.mubr.f32.gmra.mxu0 %v9918
      %v10102 = vpop.f32.mrf.mxu0
      %v10103 = vadd.f32 0.0, %v10102
      %v10104 = vpop.f32.mrf.mxu0
      %10105 = vmatprep.mubr.f32.mxu0 0.0
      %10106 = vmatmul.mubr.f32.gmra.mxu0 %v9921
      %v10107 = vpop.f32.mrf.mxu0
      %v10108 = vadd.f32 0.0, %v10107
      %v10109 = vpop.f32.mrf.mxu0
      %10110 = vmatprep.mubr.f32.mxu0 0.0
      %10111 = vmatmul.mubr.f32.gmra.mxu0 %v9924
      %v10112 = vpop.f32.mrf.mxu0
      %v10113 = vadd.f32 0.0, %v10112
      %v10114 = vpop.f32.mrf.mxu0
      %10115 = vmatprep.mubr.f32.mxu0 0.0
      %10116 = vmatmul.mubr.f32.gmra.mxu0 %v9927
      %v10117 = vpop.f32.mrf.mxu0
      %v10118 = vadd.f32 0.0, %v10117
      %v10119 = vpop.f32.mrf.mxu0
      %10120 = vmatprep.mubr.f32.mxu0 0.0
      %10121 = vmatmul.mubr.f32.gmra.mxu0 %v9930
      %v10122 = vpop.f32.mrf.mxu0
      %v10123 = vadd.f32 0.0, %v10122
      %v10124 = vpop.f32.mrf.mxu0
      %10125 = vmatprep.mubr.f32.mxu0 0.0
      %10126 = vmatmul.mubr.f32.gmra.mxu0 %v9933
      %v10127 = vpop.f32.mrf.mxu0
      %v10128 = vadd.f32 0.0, %v10127
      %v10129 = vpop.f32.mrf.mxu0
      %10130 = vmatprep.mubr.f32.mxu0 0.0
      %10131 = vmatmul.mubr.f32.gmra.mxu0 %v9936
      %v10132 = vpop.f32.mrf.mxu0
      %v10133 = vadd.f32 0.0, %v10132
      %v10134 = vpop.f32.mrf.mxu0
      %10135 = vmatprep.mubr.f32.mxu0 0.0
      %10136 = vmatmul.mubr.f32.gmra.mxu0 %v9939
      %v10137 = vpop.f32.mrf.mxu0
      %v10138 = vadd.f32 0.0, %v10137
      %v10139 = vpop.f32.mrf.mxu0
      %10140 = vmatprep.mubr.f32.mxu0 0.0
      %10141 = vmatmul.mubr.f32.gmra.mxu0 %v9942
      %v10142 = vpop.f32.mrf.mxu0
      %v10143 = vadd.f32 0.0, %v10142
      %v10144 = vpop.f32.mrf.mxu0
      %10145 = vmatprep.mubr.f32.mxu0 0.0
      %10146 = vmatmul.mubr.f32.gmra.mxu0 %v9945
      %v10147 = vpop.f32.mrf.mxu0
      %v10148 = vadd.f32 0.0, %v10147
      %v10149 = vpop.f32.mrf.mxu0
      %10150 = vmatprep.mubr.f32.mxu0 0.0
      %10151 = vmatmul.mubr.f32.gmra.mxu0 %v9948
      %v10152 = vpop.f32.mrf.mxu0
      %v10153 = vadd.f32 0.0, %v10152
      %v10154 = vpop.f32.mrf.mxu0
      %10155 = vmatprep.mubr.f32.mxu0 0.0
      %10156 = vmatmul.mubr.f32.gmra.mxu0 %v9951
      %v10157 = vpop.f32.mrf.mxu0
      %v10158 = vadd.f32 0.0, %v10157
      %v10159 = vpop.f32.mrf.mxu0
      %10160 = vmatprep.mubr.f32.mxu0 0.0
      %10161 = vmatmul.mubr.f32.gmra.mxu0 %v9954
      %v10162 = vpop.f32.mrf.mxu0
      %v10163 = vadd.f32 0.0, %v10162
      %v10164 = vpop.f32.mrf.mxu0
      %10165 = vmatprep.mubr.f32.mxu0 0.0
      %10166 = vmatmul.mubr.f32.gmra.mxu0 %v9957
      %v10167 = vpop.f32.mrf.mxu0
      %v10168 = vadd.f32 0.0, %v10167
      %v10169 = vpop.f32.mrf.mxu0
      %10170 = vmatprep.mubr.f32.mxu0 0.0
      %10171 = vmatmul.mubr.f32.gmra.mxu0 %v9960
      %v10172 = vpop.f32.mrf.mxu0
      %v10173 = vadd.f32 0.0, %v10172
      %v10174 = vpop.f32.mrf.mxu0
      %10175 = vmatprep.mubr.f32.mxu0 0.0
      %10176 = vmatmul.mubr.f32.gmra.mxu0 %v9963
      %v10177 = vpop.f32.mrf.mxu0
      %v10178 = vadd.f32 0.0, %v10177
      %v10179 = vpop.f32.mrf.mxu0
      %10180 = vmatprep.mubr.f32.mxu0 0.0
      %10181 = vmatmul.mubr.f32.gmra.mxu0 %v9966
      %v10182 = vpop.f32.mrf.mxu0
      %v10183 = vadd.f32 0.0, %v10182
      %v10184 = vpop.f32.mrf.mxu0
      %10185 = vmatprep.mubr.f32.mxu0 0.0
      %10186 = vmatmul.mubr.f32.gmra.mxu0 %v9969
      %v10187 = vpop.f32.mrf.mxu0
      %v10188 = vadd.f32 0.0, %v10187
      %v10189 = vpop.f32.mrf.mxu0
      %10190 = vmatprep.mubr.f32.mxu0 0.0
      %10191 = vmatmul.mubr.f32.gmra.mxu0 %v9972
      %v10192 = vpop.f32.mrf.mxu0
      %v10193 = vadd.f32 0.0, %v10192
      %v10194 = vpop.f32.mrf.mxu0
      %10195 = vmatprep.mubr.f32.mxu0 0.0
      %10196 = vmatmul.mubr.f32.gmra.mxu0 %v9975
      %v10197 = vpop.f32.mrf.mxu0
      %v10198 = vadd.f32 0.0, %v10197
      %v10199 = vpop.f32.mrf.mxu0
      %10200 = vmatprep.mubr.f32.mxu0 0.0
      %10201 = vmatmul.mubr.f32.gmra.mxu0 %v9978
      %v10202 = vpop.f32.mrf.mxu0
      %v10203 = vadd.f32 0.0, %v10202
      %v10204 = vpop.f32.mrf.mxu0
      %10205 = vmatprep.mubr.f32.mxu0 0.0
      %10206 = vmatmul.mubr.f32.gmra.mxu0 %v9981
      %v10207 = vpop.f32.mrf.mxu0
      %v10208 = vadd.f32 0.0, %v10207
      %v10209 = vpop.f32.mrf.mxu0
      %10210 = vdwg.mxu0
      %v10211 = vadd.f32 %v9821, %v10053
      %v10212 = vadd.f32 %v9822, %v10058
      %v10213 = vadd.f32 %v9823, %v10063
      %v10214 = vadd.f32 %v9824, %v10068
      %v10215 = vadd.f32 %v9825, %v10073
      %v10216 = vadd.f32 %v9826, %v10078
      %v10217 = vadd.f32 %v9827, %v10083
      %v10218 = vadd.f32 %v9828, %v10088
      %v10219 = vadd.f32 %v9829, %v10093
      %v10220 = vadd.f32 %v9830, %v10098
      %v10221 = vadd.f32 %v9831, %v10103
      %v10222 = vadd.f32 %v9832, %v10108
      %v10223 = vadd.f32 %v9833, %v10113
      %v10224 = vadd.f32 %v9834, %v10118
      %v10225 = vadd.f32 %v9835, %v10123
      %v10226 = vadd.f32 %v9836, %v10128
      %v10227 = vadd.f32 %v9837, %v10133
      %v10228 = vadd.f32 %v9838, %v10138
      %v10229 = vadd.f32 %v9839, %v10143
      %v10230 = vadd.f32 %v9840, %v10148
      %v10231 = vadd.f32 %v9841, %v10153
      %v10232 = vadd.f32 %v9842, %v10158
      %v10233 = vadd.f32 %v9843, %v10163
      %v10234 = vadd.f32 %v9844, %v10168
      %v10235 = vadd.f32 %v9845, %v10173
      %v10236 = vadd.f32 %v9846, %v10178
      %v10237 = vadd.f32 %v9847, %v10183
      %v10238 = vadd.f32 %v9848, %v10188
      %v10239 = vadd.f32 %v9849, %v10193
      %v10240 = vadd.f32 %v9850, %v10198
      %v10241 = vadd.f32 %v9851, %v10203
      %v10242 = vadd.f32 %v9852, %v10208
      %v10243 = vld [vmem:[%s9462 + $0x2] sm:$0xff]
      %v10244 = vld [vmem:[%s9462 + $0x12] sm:$0xff]
      %v10245 = vld [vmem:[%s9462 + $0x22] sm:$0xff]
      %v10246 = vld [vmem:[%s9462 + $0x32] sm:$0xff]
      %v10247 = vld [vmem:[%s9462 + $0x42] sm:$0xff]
      %v10248 = vld [vmem:[%s9462 + $0x52] sm:$0xff]
      %v10249 = vld [vmem:[%s9462 + $0x62] sm:$0xff]
      %v10250 = vld [vmem:[%s9462 + $0x72] sm:$0xff]
      %v10251 = vld [vmem:[%s9462 + $0xa2] sm:$0xff]
      %v10252 = vld [vmem:[%s9462 + $0xb2] sm:$0xff]
      %v10253 = vld [vmem:[%s9462 + $0xc2] sm:$0xff]
      %v10254 = vld [vmem:[%s9462 + $0xd2] sm:$0xff]
      %v10255 = vld [vmem:[%s9462 + $0xe2] sm:$0xff]
      %v10256 = vld [vmem:[%s9462 + $0xf2] sm:$0xff]
      %v10257 = vld [vmem:[%s9462 + $0x102] sm:$0xff]
      %v10258 = vld [vmem:[%s9462 + $0x112] sm:$0xff]
      %v10259 = vld [vmem:[%s9462 + $0x142] sm:$0xff]
      %v10260 = vld [vmem:[%s9462 + $0x152] sm:$0xff]
      %v10261 = vld [vmem:[%s9462 + $0x162] sm:$0xff]
      %v10262 = vld [vmem:[%s9462 + $0x172] sm:$0xff]
      %v10263 = vld [vmem:[%s9462 + $0x182] sm:$0xff]
      %v10264 = vld [vmem:[%s9462 + $0x192] sm:$0xff]
      %v10265 = vld [vmem:[%s9462 + $0x1a2] sm:$0xff]
      %v10266 = vld [vmem:[%s9462 + $0x1b2] sm:$0xff]
      %v10267 = vld [vmem:[%s9462 + $0x1e2] sm:$0xff]
      %v10268 = vld [vmem:[%s9462 + $0x1f2] sm:$0xff]
      %v10269 = vld [vmem:[%s9462 + $0x202] sm:$0xff]
      %v10270 = vld [vmem:[%s9462 + $0x212] sm:$0xff]
      %v10271 = vld [vmem:[%s9462 + $0x222] sm:$0xff]
      %v10272 = vld [vmem:[%s9462 + $0x232] sm:$0xff]
      %v10273 = vld [vmem:[%s9462 + $0x242] sm:$0xff]
      %v10274 = vld [vmem:[%s9462 + $0x252] sm:$0xff]
      %s10275 = scalar_lea.vmem %s5, 46
      %v10276 = vld [vmem:[%s10275] sm:$0x3]
      %v10278 = vsel %vm451, %v10243, 0
      %v10281 = vsel %vm451, %v10244, 0
      %v10284 = vsel %vm451, %v10245, 0
      %v10287 = vsel %vm451, %v10246, 0
      %v10290 = vsel %vm451, %v10247, 0
      %v10293 = vsel %vm451, %v10248, 0
      %v10296 = vsel %vm451, %v10249, 0
      %v10299 = vsel %vm451, %v10250, 0
      %v10302 = vsel %vm451, %v10251, 0
      %v10305 = vsel %vm451, %v10252, 0
      %v10308 = vsel %vm451, %v10253, 0
      %v10311 = vsel %vm451, %v10254, 0
      %v10314 = vsel %vm451, %v10255, 0
      %v10317 = vsel %vm451, %v10256, 0
      %v10320 = vsel %vm451, %v10257, 0
      %v10323 = vsel %vm451, %v10258, 0
      %v10326 = vsel %vm451, %v10259, 0
      %v10329 = vsel %vm451, %v10260, 0
      %v10332 = vsel %vm451, %v10261, 0
      %v10335 = vsel %vm451, %v10262, 0
      %v10338 = vsel %vm451, %v10263, 0
      %v10341 = vsel %vm451, %v10264, 0
      %v10344 = vsel %vm451, %v10265, 0
      %v10347 = vsel %vm451, %v10266, 0
      %v10350 = vsel %vm451, %v10267, 0
      %v10353 = vsel %vm451, %v10268, 0
      %v10356 = vsel %vm451, %v10269, 0
      %v10359 = vsel %vm451, %v10270, 0
      %v10362 = vsel %vm451, %v10271, 0
      %v10365 = vsel %vm451, %v10272, 0
      %v10368 = vsel %vm451, %v10273, 0
      %v10371 = vsel %vm451, %v10274, 0
      %v10374 = vsel %vm1495, %v10276, 0
      %10376 = vmatprep.subr.mxu0 0.0
      %10377 = vmatpush1.msra.mxu0 0.0
      %10378 = vmatprep.subr.mxu0 0.0
      %10379 = vmatpush1.msra.mxu0 0.0
      %10380 = vmatprep.subr.mxu0 0.0
      %10381 = vmatpush1.msra.mxu0 0.0
      %10382 = vmatprep.subr.mxu0 0.0
      %10383 = vmatpush1.msra.mxu0 0.0
      %10384 = vmatprep.subr.mxu0 0.0
      %10385 = vmatpush1.msra.mxu0 0.0
      %10386 = vmatprep.subr.mxu0 0.0
      %10387 = vmatpush1.msra.mxu0 0.0
      %10388 = vmatprep.subr.mxu0 0.0
      %10389 = vmatpush1.msra.mxu0 0.0
      %10390 = vmatprep.subr.mxu0 0.0
      %10391 = vmatpush1.msra.mxu0 0.0
      %10392 = vmatprep.subr.mxu0 0.0
      %10393 = vmatpush1.msra.mxu0 0.0
      %10394 = vmatprep.subr.mxu0 0.0
      %10395 = vmatpush1.msra.mxu0 0.0
      %10396 = vmatprep.subr.mxu0 0.0
      %10397 = vmatpush1.msra.mxu0 0.0
      %10398 = vmatprep.subr.mxu0 0.0
      %10399 = vmatpush1.msra.mxu0 0.0
      %10400 = vmatprep.subr.mxu0 0.0
      %10401 = vmatpush1.msra.mxu0 0.0
      %10402 = vmatprep.subr.mxu0 0.0
      %10403 = vmatpush1.msra.mxu0 0.0
      %10404 = vmatprep.subr.mxu0 0.0
      %10405 = vmatpush1.msra.mxu0 0.0
      %10406 = vmatprep.subr.mxu0 0.0
      %10407 = vmatpush1.msra.mxu0 %v10374
      %10408 = vmatprep.subr.mxu0 0.0
      %10409 = vmatpush2.msra.mxu0 0.0
      %10410 = vmatprep.subr.mxu0 0.0
      %10411 = vmatpush2.msra.mxu0 0.0
      %10412 = vmatprep.subr.mxu0 0.0
      %10413 = vmatpush2.msra.mxu0 0.0
      %10414 = vmatprep.subr.mxu0 0.0
      %10415 = vmatpush2.msra.mxu0 0.0
      %10416 = vmatprep.subr.mxu0 0.0
      %10417 = vmatpush2.msra.mxu0 0.0
      %10418 = vmatprep.subr.mxu0 0.0
      %10419 = vmatpush2.msra.mxu0 0.0
      %10420 = vmatprep.subr.mxu0 0.0
      %10421 = vmatpush2.msra.mxu0 0.0
      %10422 = vmatprep.subr.mxu0 0.0
      %10423 = vmatpush2.msra.mxu0 0.0
      %10424 = vmatprep.subr.mxu0 0.0
      %10425 = vmatpush2.msra.mxu0 0.0
      %10426 = vmatprep.subr.mxu0 0.0
      %10427 = vmatpush2.msra.mxu0 0.0
      %10428 = vmatprep.subr.mxu0 0.0
      %10429 = vmatpush2.msra.mxu0 0.0
      %10430 = vmatprep.subr.mxu0 0.0
      %10431 = vmatpush2.msra.mxu0 0.0
      %10432 = vmatprep.subr.mxu0 0.0
      %10433 = vmatpush2.msra.mxu0 0.0
      %10434 = vmatprep.subr.mxu0 0.0
      %10435 = vmatpush2.msra.mxu0 0.0
      %10436 = vmatprep.subr.mxu0 0.0
      %10437 = vmatpush2.msra.mxu0 0.0
      %10438 = vmatprep.subr.mxu0 0.0
      %10439 = vmatpush2.msra.mxu0 0.0
      %10440 = vmatprep.mubr.f32.mxu0 0.0
      %10441 = vmatmul.mubr.f32.gmra.mxu0 %v10278
      %v10442 = vpop.f32.mrf.mxu0
      %v10443 = vadd.f32 0.0, %v10442
      %v10444 = vpop.f32.mrf.mxu0
      %10445 = vmatprep.mubr.f32.mxu0 0.0
      %10446 = vmatmul.mubr.f32.gmra.mxu0 %v10281
      %v10447 = vpop.f32.mrf.mxu0
      %v10448 = vadd.f32 0.0, %v10447
      %v10449 = vpop.f32.mrf.mxu0
      %10450 = vmatprep.mubr.f32.mxu0 0.0
      %10451 = vmatmul.mubr.f32.gmra.mxu0 %v10284
      %v10452 = vpop.f32.mrf.mxu0
      %v10453 = vadd.f32 0.0, %v10452
      %v10454 = vpop.f32.mrf.mxu0
      %10455 = vmatprep.mubr.f32.mxu0 0.0
      %10456 = vmatmul.mubr.f32.gmra.mxu0 %v10287
      %v10457 = vpop.f32.mrf.mxu0
      %v10458 = vadd.f32 0.0, %v10457
      %v10459 = vpop.f32.mrf.mxu0
      %10460 = vmatprep.mubr.f32.mxu0 0.0
      %10461 = vmatmul.mubr.f32.gmra.mxu0 %v10290
      %v10462 = vpop.f32.mrf.mxu0
      %v10463 = vadd.f32 0.0, %v10462
      %v10464 = vpop.f32.mrf.mxu0
      %10465 = vmatprep.mubr.f32.mxu0 0.0
      %10466 = vmatmul.mubr.f32.gmra.mxu0 %v10293
      %v10467 = vpop.f32.mrf.mxu0
      %v10468 = vadd.f32 0.0, %v10467
      %v10469 = vpop.f32.mrf.mxu0
      %10470 = vmatprep.mubr.f32.mxu0 0.0
      %10471 = vmatmul.mubr.f32.gmra.mxu0 %v10296
      %v10472 = vpop.f32.mrf.mxu0
      %v10473 = vadd.f32 0.0, %v10472
      %v10474 = vpop.f32.mrf.mxu0
      %10475 = vmatprep.mubr.f32.mxu0 0.0
      %10476 = vmatmul.mubr.f32.gmra.mxu0 %v10299
      %v10477 = vpop.f32.mrf.mxu0
      %v10478 = vadd.f32 0.0, %v10477
      %v10479 = vpop.f32.mrf.mxu0
      %10480 = vmatprep.mubr.f32.mxu0 0.0
      %10481 = vmatmul.mubr.f32.gmra.mxu0 %v10302
      %v10482 = vpop.f32.mrf.mxu0
      %v10483 = vadd.f32 0.0, %v10482
      %v10484 = vpop.f32.mrf.mxu0
      %10485 = vmatprep.mubr.f32.mxu0 0.0
      %10486 = vmatmul.mubr.f32.gmra.mxu0 %v10305
      %v10487 = vpop.f32.mrf.mxu0
      %v10488 = vadd.f32 0.0, %v10487
      %v10489 = vpop.f32.mrf.mxu0
      %10490 = vmatprep.mubr.f32.mxu0 0.0
      %10491 = vmatmul.mubr.f32.gmra.mxu0 %v10308
      %v10492 = vpop.f32.mrf.mxu0
      %v10493 = vadd.f32 0.0, %v10492
      %v10494 = vpop.f32.mrf.mxu0
      %10495 = vmatprep.mubr.f32.mxu0 0.0
      %10496 = vmatmul.mubr.f32.gmra.mxu0 %v10311
      %v10497 = vpop.f32.mrf.mxu0
      %v10498 = vadd.f32 0.0, %v10497
      %v10499 = vpop.f32.mrf.mxu0
      %10500 = vmatprep.mubr.f32.mxu0 0.0
      %10501 = vmatmul.mubr.f32.gmra.mxu0 %v10314
      %v10502 = vpop.f32.mrf.mxu0
      %v10503 = vadd.f32 0.0, %v10502
      %v10504 = vpop.f32.mrf.mxu0
      %10505 = vmatprep.mubr.f32.mxu0 0.0
      %10506 = vmatmul.mubr.f32.gmra.mxu0 %v10317
      %v10507 = vpop.f32.mrf.mxu0
      %v10508 = vadd.f32 0.0, %v10507
      %v10509 = vpop.f32.mrf.mxu0
      %10510 = vmatprep.mubr.f32.mxu0 0.0
      %10511 = vmatmul.mubr.f32.gmra.mxu0 %v10320
      %v10512 = vpop.f32.mrf.mxu0
      %v10513 = vadd.f32 0.0, %v10512
      %v10514 = vpop.f32.mrf.mxu0
      %10515 = vmatprep.mubr.f32.mxu0 0.0
      %10516 = vmatmul.mubr.f32.gmra.mxu0 %v10323
      %v10517 = vpop.f32.mrf.mxu0
      %v10518 = vadd.f32 0.0, %v10517
      %v10519 = vpop.f32.mrf.mxu0
      %10520 = vmatprep.mubr.f32.mxu0 0.0
      %10521 = vmatmul.mubr.f32.gmra.mxu0 %v10326
      %v10522 = vpop.f32.mrf.mxu0
      %v10523 = vadd.f32 0.0, %v10522
      %v10524 = vpop.f32.mrf.mxu0
      %10525 = vmatprep.mubr.f32.mxu0 0.0
      %10526 = vmatmul.mubr.f32.gmra.mxu0 %v10329
      %v10527 = vpop.f32.mrf.mxu0
      %v10528 = vadd.f32 0.0, %v10527
      %v10529 = vpop.f32.mrf.mxu0
      %10530 = vmatprep.mubr.f32.mxu0 0.0
      %10531 = vmatmul.mubr.f32.gmra.mxu0 %v10332
      %v10532 = vpop.f32.mrf.mxu0
      %v10533 = vadd.f32 0.0, %v10532
      %v10534 = vpop.f32.mrf.mxu0
      %10535 = vmatprep.mubr.f32.mxu0 0.0
      %10536 = vmatmul.mubr.f32.gmra.mxu0 %v10335
      %v10537 = vpop.f32.mrf.mxu0
      %v10538 = vadd.f32 0.0, %v10537
      %v10539 = vpop.f32.mrf.mxu0
      %10540 = vmatprep.mubr.f32.mxu0 0.0
      %10541 = vmatmul.mubr.f32.gmra.mxu0 %v10338
      %v10542 = vpop.f32.mrf.mxu0
      %v10543 = vadd.f32 0.0, %v10542
      %v10544 = vpop.f32.mrf.mxu0
      %10545 = vmatprep.mubr.f32.mxu0 0.0
      %10546 = vmatmul.mubr.f32.gmra.mxu0 %v10341
      %v10547 = vpop.f32.mrf.mxu0
      %v10548 = vadd.f32 0.0, %v10547
      %v10549 = vpop.f32.mrf.mxu0
      %10550 = vmatprep.mubr.f32.mxu0 0.0
      %10551 = vmatmul.mubr.f32.gmra.mxu0 %v10344
      %v10552 = vpop.f32.mrf.mxu0
      %v10553 = vadd.f32 0.0, %v10552
      %v10554 = vpop.f32.mrf.mxu0
      %10555 = vmatprep.mubr.f32.mxu0 0.0
      %10556 = vmatmul.mubr.f32.gmra.mxu0 %v10347
      %v10557 = vpop.f32.mrf.mxu0
      %v10558 = vadd.f32 0.0, %v10557
      %v10559 = vpop.f32.mrf.mxu0
      %10560 = vmatprep.mubr.f32.mxu0 0.0
      %10561 = vmatmul.mubr.f32.gmra.mxu0 %v10350
      %v10562 = vpop.f32.mrf.mxu0
      %v10563 = vadd.f32 0.0, %v10562
      %v10564 = vpop.f32.mrf.mxu0
      %10565 = vmatprep.mubr.f32.mxu0 0.0
      %10566 = vmatmul.mubr.f32.gmra.mxu0 %v10353
      %v10567 = vpop.f32.mrf.mxu0
      %v10568 = vadd.f32 0.0, %v10567
      %v10569 = vpop.f32.mrf.mxu0
      %10570 = vmatprep.mubr.f32.mxu0 0.0
      %10571 = vmatmul.mubr.f32.gmra.mxu0 %v10356
      %v10572 = vpop.f32.mrf.mxu0
      %v10573 = vadd.f32 0.0, %v10572
      %v10574 = vpop.f32.mrf.mxu0
      %10575 = vmatprep.mubr.f32.mxu0 0.0
      %10576 = vmatmul.mubr.f32.gmra.mxu0 %v10359
      %v10577 = vpop.f32.mrf.mxu0
      %v10578 = vadd.f32 0.0, %v10577
      %v10579 = vpop.f32.mrf.mxu0
      %10580 = vmatprep.mubr.f32.mxu0 0.0
      %10581 = vmatmul.mubr.f32.gmra.mxu0 %v10362
      %v10582 = vpop.f32.mrf.mxu0
      %v10583 = vadd.f32 0.0, %v10582
      %v10584 = vpop.f32.mrf.mxu0
      %10585 = vmatprep.mubr.f32.mxu0 0.0
      %10586 = vmatmul.mubr.f32.gmra.mxu0 %v10365
      %v10587 = vpop.f32.mrf.mxu0
      %v10588 = vadd.f32 0.0, %v10587
      %v10589 = vpop.f32.mrf.mxu0
      %10590 = vmatprep.mubr.f32.mxu0 0.0
      %10591 = vmatmul.mubr.f32.gmra.mxu0 %v10368
      %v10592 = vpop.f32.mrf.mxu0
      %v10593 = vadd.f32 0.0, %v10592
      %v10594 = vpop.f32.mrf.mxu0
      %10595 = vmatprep.mubr.f32.mxu0 0.0
      %10596 = vmatmul.mubr.f32.gmra.mxu0 %v10371
      %v10597 = vpop.f32.mrf.mxu0
      %v10598 = vadd.f32 0.0, %v10597
      %v10599 = vpop.f32.mrf.mxu0
      %10600 = vdwg.mxu0
      %v10601 = vadd.f32 %v10211, %v10443
      %v10602 = vadd.f32 %v10212, %v10448
      %v10603 = vadd.f32 %v10213, %v10453
      %v10604 = vadd.f32 %v10214, %v10458
      %v10605 = vadd.f32 %v10215, %v10463
      %v10606 = vadd.f32 %v10216, %v10468
      %v10607 = vadd.f32 %v10217, %v10473
      %v10608 = vadd.f32 %v10218, %v10478
      %v10609 = vadd.f32 %v10219, %v10483
      %v10610 = vadd.f32 %v10220, %v10488
      %v10611 = vadd.f32 %v10221, %v10493
      %v10612 = vadd.f32 %v10222, %v10498
      %v10613 = vadd.f32 %v10223, %v10503
      %v10614 = vadd.f32 %v10224, %v10508
      %v10615 = vadd.f32 %v10225, %v10513
      %v10616 = vadd.f32 %v10226, %v10518
      %v10617 = vadd.f32 %v10227, %v10523
      %v10618 = vadd.f32 %v10228, %v10528
      %v10619 = vadd.f32 %v10229, %v10533
      %v10620 = vadd.f32 %v10230, %v10538
      %v10621 = vadd.f32 %v10231, %v10543
      %v10622 = vadd.f32 %v10232, %v10548
      %v10623 = vadd.f32 %v10233, %v10553
      %v10624 = vadd.f32 %v10234, %v10558
      %v10625 = vadd.f32 %v10235, %v10563
      %v10626 = vadd.f32 %v10236, %v10568
      %v10627 = vadd.f32 %v10237, %v10573
      %v10628 = vadd.f32 %v10238, %v10578
      %v10629 = vadd.f32 %v10239, %v10583
      %v10630 = vadd.f32 %v10240, %v10588
      %v10631 = vadd.f32 %v10241, %v10593
      %v10632 = vadd.f32 %v10242, %v10598
      %s10633 = scalar_lea.vmem [#allocation2], 352
      %v10634 = vld [vmem:[%s10633] sm:$0xff]
      %v10635 = vld [vmem:[%s10633 + $0x10] sm:$0xff]
      %v10636 = vld [vmem:[%s10633 + $0x20] sm:$0xff]
      %v10637 = vld [vmem:[%s10633 + $0x30] sm:$0xff]
      %v10638 = vld [vmem:[%s10633 + $0x40] sm:$0xff]
      %v10639 = vld [vmem:[%s10633 + $0x50] sm:$0xff]
      %v10640 = vld [vmem:[%s10633 + $0x60] sm:$0xff]
      %v10641 = vld [vmem:[%s10633 + $0x70] sm:$0xff]
      %v10642 = vld [vmem:[%s10633 + $0xa0] sm:$0xff]
      %v10643 = vld [vmem:[%s10633 + $0xb0] sm:$0xff]
      %v10644 = vld [vmem:[%s10633 + $0xc0] sm:$0xff]
      %v10645 = vld [vmem:[%s10633 + $0xd0] sm:$0xff]
      %v10646 = vld [vmem:[%s10633 + $0xe0] sm:$0xff]
      %v10647 = vld [vmem:[%s10633 + $0xf0] sm:$0xff]
      %v10648 = vld [vmem:[%s10633 + $0x100] sm:$0xff]
      %v10649 = vld [vmem:[%s10633 + $0x110] sm:$0xff]
      %v10650 = vld [vmem:[%s10633 + $0x140] sm:$0xff]
      %v10651 = vld [vmem:[%s10633 + $0x150] sm:$0xff]
      %v10652 = vld [vmem:[%s10633 + $0x160] sm:$0xff]
      %v10653 = vld [vmem:[%s10633 + $0x170] sm:$0xff]
      %v10654 = vld [vmem:[%s10633 + $0x180] sm:$0xff]
      %v10655 = vld [vmem:[%s10633 + $0x190] sm:$0xff]
      %v10656 = vld [vmem:[%s10633 + $0x1a0] sm:$0xff]
      %v10657 = vld [vmem:[%s10633 + $0x1b0] sm:$0xff]
      %v10658 = vld [vmem:[%s10633 + $0x1e0] sm:$0xff]
      %v10659 = vld [vmem:[%s10633 + $0x1f0] sm:$0xff]
      %v10660 = vld [vmem:[%s10633 + $0x200] sm:$0xff]
      %v10661 = vld [vmem:[%s10633 + $0x210] sm:$0xff]
      %v10662 = vld [vmem:[%s10633 + $0x220] sm:$0xff]
      %v10663 = vld [vmem:[%s10633 + $0x230] sm:$0xff]
      %v10664 = vld [vmem:[%s10633 + $0x240] sm:$0xff]
      %v10665 = vld [vmem:[%s10633 + $0x250] sm:$0xff]
      %s10666 = scalar_lea.vmem %s5, 48
      %v10667 = vld [vmem:[%s10666] sm:$0x3]
      %v10669 = vsel %vm451, %v10634, 0
      %v10672 = vsel %vm451, %v10635, 0
      %v10675 = vsel %vm451, %v10636, 0
      %v10678 = vsel %vm451, %v10637, 0
      %v10681 = vsel %vm451, %v10638, 0
      %v10684 = vsel %vm451, %v10639, 0
      %v10687 = vsel %vm451, %v10640, 0
      %v10690 = vsel %vm451, %v10641, 0
      %v10693 = vsel %vm451, %v10642, 0
      %v10696 = vsel %vm451, %v10643, 0
      %v10699 = vsel %vm451, %v10644, 0
      %v10702 = vsel %vm451, %v10645, 0
      %v10705 = vsel %vm451, %v10646, 0
      %v10708 = vsel %vm451, %v10647, 0
      %v10711 = vsel %vm451, %v10648, 0
      %v10714 = vsel %vm451, %v10649, 0
      %v10717 = vsel %vm451, %v10650, 0
      %v10720 = vsel %vm451, %v10651, 0
      %v10723 = vsel %vm451, %v10652, 0
      %v10726 = vsel %vm451, %v10653, 0
      %v10729 = vsel %vm451, %v10654, 0
      %v10732 = vsel %vm451, %v10655, 0
      %v10735 = vsel %vm451, %v10656, 0
      %v10738 = vsel %vm451, %v10657, 0
      %v10741 = vsel %vm451, %v10658, 0
      %v10744 = vsel %vm451, %v10659, 0
      %v10747 = vsel %vm451, %v10660, 0
      %v10750 = vsel %vm451, %v10661, 0
      %v10753 = vsel %vm451, %v10662, 0
      %v10756 = vsel %vm451, %v10663, 0
      %v10759 = vsel %vm451, %v10664, 0
      %v10762 = vsel %vm451, %v10665, 0
      %v10765 = vsel %vm1495, %v10667, 0
      %10767 = vmatprep.subr.mxu0 0.0
      %10768 = vmatpush1.msra.mxu0 0.0
      %10769 = vmatprep.subr.mxu0 0.0
      %10770 = vmatpush1.msra.mxu0 0.0
      %10771 = vmatprep.subr.mxu0 0.0
      %10772 = vmatpush1.msra.mxu0 0.0
      %10773 = vmatprep.subr.mxu0 0.0
      %10774 = vmatpush1.msra.mxu0 0.0
      %10775 = vmatprep.subr.mxu0 0.0
      %10776 = vmatpush1.msra.mxu0 0.0
      %10777 = vmatprep.subr.mxu0 0.0
      %10778 = vmatpush1.msra.mxu0 0.0
      %10779 = vmatprep.subr.mxu0 0.0
      %10780 = vmatpush1.msra.mxu0 0.0
      %10781 = vmatprep.subr.mxu0 0.0
      %10782 = vmatpush1.msra.mxu0 0.0
      %10783 = vmatprep.subr.mxu0 0.0
      %10784 = vmatpush1.msra.mxu0 0.0
      %10785 = vmatprep.subr.mxu0 0.0
      %10786 = vmatpush1.msra.mxu0 0.0
      %10787 = vmatprep.subr.mxu0 0.0
      %10788 = vmatpush1.msra.mxu0 0.0
      %10789 = vmatprep.subr.mxu0 0.0
      %10790 = vmatpush1.msra.mxu0 0.0
      %10791 = vmatprep.subr.mxu0 0.0
      %10792 = vmatpush1.msra.mxu0 0.0
      %10793 = vmatprep.subr.mxu0 0.0
      %10794 = vmatpush1.msra.mxu0 0.0
      %10795 = vmatprep.subr.mxu0 0.0
      %10796 = vmatpush1.msra.mxu0 0.0
      %10797 = vmatprep.subr.mxu0 0.0
      %10798 = vmatpush1.msra.mxu0 %v10765
      %10799 = vmatprep.subr.mxu0 0.0
      %10800 = vmatpush2.msra.mxu0 0.0
      %10801 = vmatprep.subr.mxu0 0.0
      %10802 = vmatpush2.msra.mxu0 0.0
      %10803 = vmatprep.subr.mxu0 0.0
      %10804 = vmatpush2.msra.mxu0 0.0
      %10805 = vmatprep.subr.mxu0 0.0
      %10806 = vmatpush2.msra.mxu0 0.0
      %10807 = vmatprep.subr.mxu0 0.0
      %10808 = vmatpush2.msra.mxu0 0.0
      %10809 = vmatprep.subr.mxu0 0.0
      %10810 = vmatpush2.msra.mxu0 0.0
      %10811 = vmatprep.subr.mxu0 0.0
      %10812 = vmatpush2.msra.mxu0 0.0
      %10813 = vmatprep.subr.mxu0 0.0
      %10814 = vmatpush2.msra.mxu0 0.0
      %10815 = vmatprep.subr.mxu0 0.0
      %10816 = vmatpush2.msra.mxu0 0.0
      %10817 = vmatprep.subr.mxu0 0.0
      %10818 = vmatpush2.msra.mxu0 0.0
      %10819 = vmatprep.subr.mxu0 0.0
      %10820 = vmatpush2.msra.mxu0 0.0
      %10821 = vmatprep.subr.mxu0 0.0
      %10822 = vmatpush2.msra.mxu0 0.0
      %10823 = vmatprep.subr.mxu0 0.0
      %10824 = vmatpush2.msra.mxu0 0.0
      %10825 = vmatprep.subr.mxu0 0.0
      %10826 = vmatpush2.msra.mxu0 0.0
      %10827 = vmatprep.subr.mxu0 0.0
      %10828 = vmatpush2.msra.mxu0 0.0
      %10829 = vmatprep.subr.mxu0 0.0
      %10830 = vmatpush2.msra.mxu0 0.0
      %10831 = vmatprep.mubr.f32.mxu0 0.0
      %10832 = vmatmul.mubr.f32.gmra.mxu0 %v10669
      %v10833 = vpop.f32.mrf.mxu0
      %v10834 = vadd.f32 0.0, %v10833
      %v10835 = vpop.f32.mrf.mxu0
      %10836 = vmatprep.mubr.f32.mxu0 0.0
      %10837 = vmatmul.mubr.f32.gmra.mxu0 %v10672
      %v10838 = vpop.f32.mrf.mxu0
      %v10839 = vadd.f32 0.0, %v10838
      %v10840 = vpop.f32.mrf.mxu0
      %10841 = vmatprep.mubr.f32.mxu0 0.0
      %10842 = vmatmul.mubr.f32.gmra.mxu0 %v10675
      %v10843 = vpop.f32.mrf.mxu0
      %v10844 = vadd.f32 0.0, %v10843
      %v10845 = vpop.f32.mrf.mxu0
      %10846 = vmatprep.mubr.f32.mxu0 0.0
      %10847 = vmatmul.mubr.f32.gmra.mxu0 %v10678
      %v10848 = vpop.f32.mrf.mxu0
      %v10849 = vadd.f32 0.0, %v10848
      %v10850 = vpop.f32.mrf.mxu0
      %10851 = vmatprep.mubr.f32.mxu0 0.0
      %10852 = vmatmul.mubr.f32.gmra.mxu0 %v10681
      %v10853 = vpop.f32.mrf.mxu0
      %v10854 = vadd.f32 0.0, %v10853
      %v10855 = vpop.f32.mrf.mxu0
      %10856 = vmatprep.mubr.f32.mxu0 0.0
      %10857 = vmatmul.mubr.f32.gmra.mxu0 %v10684
      %v10858 = vpop.f32.mrf.mxu0
      %v10859 = vadd.f32 0.0, %v10858
      %v10860 = vpop.f32.mrf.mxu0
      %10861 = vmatprep.mubr.f32.mxu0 0.0
      %10862 = vmatmul.mubr.f32.gmra.mxu0 %v10687
      %v10863 = vpop.f32.mrf.mxu0
      %v10864 = vadd.f32 0.0, %v10863
      %v10865 = vpop.f32.mrf.mxu0
      %10866 = vmatprep.mubr.f32.mxu0 0.0
      %10867 = vmatmul.mubr.f32.gmra.mxu0 %v10690
      %v10868 = vpop.f32.mrf.mxu0
      %v10869 = vadd.f32 0.0, %v10868
      %v10870 = vpop.f32.mrf.mxu0
      %10871 = vmatprep.mubr.f32.mxu0 0.0
      %10872 = vmatmul.mubr.f32.gmra.mxu0 %v10693
      %v10873 = vpop.f32.mrf.mxu0
      %v10874 = vadd.f32 0.0, %v10873
      %v10875 = vpop.f32.mrf.mxu0
      %10876 = vmatprep.mubr.f32.mxu0 0.0
      %10877 = vmatmul.mubr.f32.gmra.mxu0 %v10696
      %v10878 = vpop.f32.mrf.mxu0
      %v10879 = vadd.f32 0.0, %v10878
      %v10880 = vpop.f32.mrf.mxu0
      %10881 = vmatprep.mubr.f32.mxu0 0.0
      %10882 = vmatmul.mubr.f32.gmra.mxu0 %v10699
      %v10883 = vpop.f32.mrf.mxu0
      %v10884 = vadd.f32 0.0, %v10883
      %v10885 = vpop.f32.mrf.mxu0
      %10886 = vmatprep.mubr.f32.mxu0 0.0
      %10887 = vmatmul.mubr.f32.gmra.mxu0 %v10702
      %v10888 = vpop.f32.mrf.mxu0
      %v10889 = vadd.f32 0.0, %v10888
      %v10890 = vpop.f32.mrf.mxu0
      %10891 = vmatprep.mubr.f32.mxu0 0.0
      %10892 = vmatmul.mubr.f32.gmra.mxu0 %v10705
      %v10893 = vpop.f32.mrf.mxu0
      %v10894 = vadd.f32 0.0, %v10893
      %v10895 = vpop.f32.mrf.mxu0
      %10896 = vmatprep.mubr.f32.mxu0 0.0
      %10897 = vmatmul.mubr.f32.gmra.mxu0 %v10708
      %v10898 = vpop.f32.mrf.mxu0
      %v10899 = vadd.f32 0.0, %v10898
      %v10900 = vpop.f32.mrf.mxu0
      %10901 = vmatprep.mubr.f32.mxu0 0.0
      %10902 = vmatmul.mubr.f32.gmra.mxu0 %v10711
      %v10903 = vpop.f32.mrf.mxu0
      %v10904 = vadd.f32 0.0, %v10903
      %v10905 = vpop.f32.mrf.mxu0
      %10906 = vmatprep.mubr.f32.mxu0 0.0
      %10907 = vmatmul.mubr.f32.gmra.mxu0 %v10714
      %v10908 = vpop.f32.mrf.mxu0
      %v10909 = vadd.f32 0.0, %v10908
      %v10910 = vpop.f32.mrf.mxu0
      %10911 = vmatprep.mubr.f32.mxu0 0.0
      %10912 = vmatmul.mubr.f32.gmra.mxu0 %v10717
      %v10913 = vpop.f32.mrf.mxu0
      %v10914 = vadd.f32 0.0, %v10913
      %v10915 = vpop.f32.mrf.mxu0
      %10916 = vmatprep.mubr.f32.mxu0 0.0
      %10917 = vmatmul.mubr.f32.gmra.mxu0 %v10720
      %v10918 = vpop.f32.mrf.mxu0
      %v10919 = vadd.f32 0.0, %v10918
      %v10920 = vpop.f32.mrf.mxu0
      %10921 = vmatprep.mubr.f32.mxu0 0.0
      %10922 = vmatmul.mubr.f32.gmra.mxu0 %v10723
      %v10923 = vpop.f32.mrf.mxu0
      %v10924 = vadd.f32 0.0, %v10923
      %v10925 = vpop.f32.mrf.mxu0
      %10926 = vmatprep.mubr.f32.mxu0 0.0
      %10927 = vmatmul.mubr.f32.gmra.mxu0 %v10726
      %v10928 = vpop.f32.mrf.mxu0
      %v10929 = vadd.f32 0.0, %v10928
      %v10930 = vpop.f32.mrf.mxu0
      %10931 = vmatprep.mubr.f32.mxu0 0.0
      %10932 = vmatmul.mubr.f32.gmra.mxu0 %v10729
      %v10933 = vpop.f32.mrf.mxu0
      %v10934 = vadd.f32 0.0, %v10933
      %v10935 = vpop.f32.mrf.mxu0
      %10936 = vmatprep.mubr.f32.mxu0 0.0
      %10937 = vmatmul.mubr.f32.gmra.mxu0 %v10732
      %v10938 = vpop.f32.mrf.mxu0
      %v10939 = vadd.f32 0.0, %v10938
      %v10940 = vpop.f32.mrf.mxu0
      %10941 = vmatprep.mubr.f32.mxu0 0.0
      %10942 = vmatmul.mubr.f32.gmra.mxu0 %v10735
      %v10943 = vpop.f32.mrf.mxu0
      %v10944 = vadd.f32 0.0, %v10943
      %v10945 = vpop.f32.mrf.mxu0
      %10946 = vmatprep.mubr.f32.mxu0 0.0
      %10947 = vmatmul.mubr.f32.gmra.mxu0 %v10738
      %v10948 = vpop.f32.mrf.mxu0
      %v10949 = vadd.f32 0.0, %v10948
      %v10950 = vpop.f32.mrf.mxu0
      %10951 = vmatprep.mubr.f32.mxu0 0.0
      %10952 = vmatmul.mubr.f32.gmra.mxu0 %v10741
      %v10953 = vpop.f32.mrf.mxu0
      %v10954 = vadd.f32 0.0, %v10953
      %v10955 = vpop.f32.mrf.mxu0
      %10956 = vmatprep.mubr.f32.mxu0 0.0
      %10957 = vmatmul.mubr.f32.gmra.mxu0 %v10744
      %v10958 = vpop.f32.mrf.mxu0
      %v10959 = vadd.f32 0.0, %v10958
      %v10960 = vpop.f32.mrf.mxu0
      %10961 = vmatprep.mubr.f32.mxu0 0.0
      %10962 = vmatmul.mubr.f32.gmra.mxu0 %v10747
      %v10963 = vpop.f32.mrf.mxu0
      %v10964 = vadd.f32 0.0, %v10963
      %v10965 = vpop.f32.mrf.mxu0
      %10966 = vmatprep.mubr.f32.mxu0 0.0
      %10967 = vmatmul.mubr.f32.gmra.mxu0 %v10750
      %v10968 = vpop.f32.mrf.mxu0
      %v10969 = vadd.f32 0.0, %v10968
      %v10970 = vpop.f32.mrf.mxu0
      %10971 = vmatprep.mubr.f32.mxu0 0.0
      %10972 = vmatmul.mubr.f32.gmra.mxu0 %v10753
      %v10973 = vpop.f32.mrf.mxu0
      %v10974 = vadd.f32 0.0, %v10973
      %v10975 = vpop.f32.mrf.mxu0
      %10976 = vmatprep.mubr.f32.mxu0 0.0
      %10977 = vmatmul.mubr.f32.gmra.mxu0 %v10756
      %v10978 = vpop.f32.mrf.mxu0
      %v10979 = vadd.f32 0.0, %v10978
      %v10980 = vpop.f32.mrf.mxu0
      %10981 = vmatprep.mubr.f32.mxu0 0.0
      %10982 = vmatmul.mubr.f32.gmra.mxu0 %v10759
      %v10983 = vpop.f32.mrf.mxu0
      %v10984 = vadd.f32 0.0, %v10983
      %v10985 = vpop.f32.mrf.mxu0
      %10986 = vmatprep.mubr.f32.mxu0 0.0
      %10987 = vmatmul.mubr.f32.gmra.mxu0 %v10762
      %v10988 = vpop.f32.mrf.mxu0
      %v10989 = vadd.f32 0.0, %v10988
      %v10990 = vpop.f32.mrf.mxu0
      %10991 = vdwg.mxu0
      %v10992 = vadd.f32 %v10601, %v10834
      %v10993 = vadd.f32 %v10602, %v10839
      %v10994 = vadd.f32 %v10603, %v10844
      %v10995 = vadd.f32 %v10604, %v10849
      %v10996 = vadd.f32 %v10605, %v10854
      %v10997 = vadd.f32 %v10606, %v10859
      %v10998 = vadd.f32 %v10607, %v10864
      %v10999 = vadd.f32 %v10608, %v10869
      %v11000 = vadd.f32 %v10609, %v10874
      %v11001 = vadd.f32 %v10610, %v10879
      %v11002 = vadd.f32 %v10611, %v10884
      %v11003 = vadd.f32 %v10612, %v10889
      %v11004 = vadd.f32 %v10613, %v10894
      %v11005 = vadd.f32 %v10614, %v10899
      %v11006 = vadd.f32 %v10615, %v10904
      %v11007 = vadd.f32 %v10616, %v10909
      %v11008 = vadd.f32 %v10617, %v10914
      %v11009 = vadd.f32 %v10618, %v10919
      %v11010 = vadd.f32 %v10619, %v10924
      %v11011 = vadd.f32 %v10620, %v10929
      %v11012 = vadd.f32 %v10621, %v10934
      %v11013 = vadd.f32 %v10622, %v10939
      %v11014 = vadd.f32 %v10623, %v10944
      %v11015 = vadd.f32 %v10624, %v10949
      %v11016 = vadd.f32 %v10625, %v10954
      %v11017 = vadd.f32 %v10626, %v10959
      %v11018 = vadd.f32 %v10627, %v10964
      %v11019 = vadd.f32 %v10628, %v10969
      %v11020 = vadd.f32 %v10629, %v10974
      %v11021 = vadd.f32 %v10630, %v10979
      %v11022 = vadd.f32 %v10631, %v10984
      %v11023 = vadd.f32 %v10632, %v10989
      %v11024 = vld [vmem:[%s10633 + $0x1] sm:$0xff]
      %v11025 = vld [vmem:[%s10633 + $0x11] sm:$0xff]
      %v11026 = vld [vmem:[%s10633 + $0x21] sm:$0xff]
      %v11027 = vld [vmem:[%s10633 + $0x31] sm:$0xff]
      %v11028 = vld [vmem:[%s10633 + $0x41] sm:$0xff]
      %v11029 = vld [vmem:[%s10633 + $0x51] sm:$0xff]
      %v11030 = vld [vmem:[%s10633 + $0x61] sm:$0xff]
      %v11031 = vld [vmem:[%s10633 + $0x71] sm:$0xff]
      %v11032 = vld [vmem:[%s10633 + $0xa1] sm:$0xff]
      %v11033 = vld [vmem:[%s10633 + $0xb1] sm:$0xff]
      %v11034 = vld [vmem:[%s10633 + $0xc1] sm:$0xff]
      %v11035 = vld [vmem:[%s10633 + $0xd1] sm:$0xff]
      %v11036 = vld [vmem:[%s10633 + $0xe1] sm:$0xff]
      %v11037 = vld [vmem:[%s10633 + $0xf1] sm:$0xff]
      %v11038 = vld [vmem:[%s10633 + $0x101] sm:$0xff]
      %v11039 = vld [vmem:[%s10633 + $0x111] sm:$0xff]
      %v11040 = vld [vmem:[%s10633 + $0x141] sm:$0xff]
      %v11041 = vld [vmem:[%s10633 + $0x151] sm:$0xff]
      %v11042 = vld [vmem:[%s10633 + $0x161] sm:$0xff]
      %v11043 = vld [vmem:[%s10633 + $0x171] sm:$0xff]
      %v11044 = vld [vmem:[%s10633 + $0x181] sm:$0xff]
      %v11045 = vld [vmem:[%s10633 + $0x191] sm:$0xff]
      %v11046 = vld [vmem:[%s10633 + $0x1a1] sm:$0xff]
      %v11047 = vld [vmem:[%s10633 + $0x1b1] sm:$0xff]
      %v11048 = vld [vmem:[%s10633 + $0x1e1] sm:$0xff]
      %v11049 = vld [vmem:[%s10633 + $0x1f1] sm:$0xff]
      %v11050 = vld [vmem:[%s10633 + $0x201] sm:$0xff]
      %v11051 = vld [vmem:[%s10633 + $0x211] sm:$0xff]
      %v11052 = vld [vmem:[%s10633 + $0x221] sm:$0xff]
      %v11053 = vld [vmem:[%s10633 + $0x231] sm:$0xff]
      %v11054 = vld [vmem:[%s10633 + $0x241] sm:$0xff]
      %v11055 = vld [vmem:[%s10633 + $0x251] sm:$0xff]
      %s11056 = scalar_lea.vmem %s5, 50
      %v11057 = vld [vmem:[%s11056] sm:$0x3]
      %v11059 = vsel %vm451, %v11024, 0
      %v11062 = vsel %vm451, %v11025, 0
      %v11065 = vsel %vm451, %v11026, 0
      %v11068 = vsel %vm451, %v11027, 0
      %v11071 = vsel %vm451, %v11028, 0
      %v11074 = vsel %vm451, %v11029, 0
      %v11077 = vsel %vm451, %v11030, 0
      %v11080 = vsel %vm451, %v11031, 0
      %v11083 = vsel %vm451, %v11032, 0
      %v11086 = vsel %vm451, %v11033, 0
      %v11089 = vsel %vm451, %v11034, 0
      %v11092 = vsel %vm451, %v11035, 0
      %v11095 = vsel %vm451, %v11036, 0
      %v11098 = vsel %vm451, %v11037, 0
      %v11101 = vsel %vm451, %v11038, 0
      %v11104 = vsel %vm451, %v11039, 0
      %v11107 = vsel %vm451, %v11040, 0
      %v11110 = vsel %vm451, %v11041, 0
      %v11113 = vsel %vm451, %v11042, 0
      %v11116 = vsel %vm451, %v11043, 0
      %v11119 = vsel %vm451, %v11044, 0
      %v11122 = vsel %vm451, %v11045, 0
      %v11125 = vsel %vm451, %v11046, 0
      %v11128 = vsel %vm451, %v11047, 0
      %v11131 = vsel %vm451, %v11048, 0
      %v11134 = vsel %vm451, %v11049, 0
      %v11137 = vsel %vm451, %v11050, 0
      %v11140 = vsel %vm451, %v11051, 0
      %v11143 = vsel %vm451, %v11052, 0
      %v11146 = vsel %vm451, %v11053, 0
      %v11149 = vsel %vm451, %v11054, 0
      %v11152 = vsel %vm451, %v11055, 0
      %v11155 = vsel %vm1495, %v11057, 0
      %11157 = vmatprep.subr.mxu0 0.0
      %11158 = vmatpush1.msra.mxu0 0.0
      %11159 = vmatprep.subr.mxu0 0.0
      %11160 = vmatpush1.msra.mxu0 0.0
      %11161 = vmatprep.subr.mxu0 0.0
      %11162 = vmatpush1.msra.mxu0 0.0
      %11163 = vmatprep.subr.mxu0 0.0
      %11164 = vmatpush1.msra.mxu0 0.0
      %11165 = vmatprep.subr.mxu0 0.0
      %11166 = vmatpush1.msra.mxu0 0.0
      %11167 = vmatprep.subr.mxu0 0.0
      %11168 = vmatpush1.msra.mxu0 0.0
      %11169 = vmatprep.subr.mxu0 0.0
      %11170 = vmatpush1.msra.mxu0 0.0
      %11171 = vmatprep.subr.mxu0 0.0
      %11172 = vmatpush1.msra.mxu0 0.0
      %11173 = vmatprep.subr.mxu0 0.0
      %11174 = vmatpush1.msra.mxu0 0.0
      %11175 = vmatprep.subr.mxu0 0.0
      %11176 = vmatpush1.msra.mxu0 0.0
      %11177 = vmatprep.subr.mxu0 0.0
      %11178 = vmatpush1.msra.mxu0 0.0
      %11179 = vmatprep.subr.mxu0 0.0
      %11180 = vmatpush1.msra.mxu0 0.0
      %11181 = vmatprep.subr.mxu0 0.0
      %11182 = vmatpush1.msra.mxu0 0.0
      %11183 = vmatprep.subr.mxu0 0.0
      %11184 = vmatpush1.msra.mxu0 0.0
      %11185 = vmatprep.subr.mxu0 0.0
      %11186 = vmatpush1.msra.mxu0 0.0
      %11187 = vmatprep.subr.mxu0 0.0
      %11188 = vmatpush1.msra.mxu0 %v11155
      %11189 = vmatprep.subr.mxu0 0.0
      %11190 = vmatpush2.msra.mxu0 0.0
      %11191 = vmatprep.subr.mxu0 0.0
      %11192 = vmatpush2.msra.mxu0 0.0
      %11193 = vmatprep.subr.mxu0 0.0
      %11194 = vmatpush2.msra.mxu0 0.0
      %11195 = vmatprep.subr.mxu0 0.0
      %11196 = vmatpush2.msra.mxu0 0.0
      %11197 = vmatprep.subr.mxu0 0.0
      %11198 = vmatpush2.msra.mxu0 0.0
      %11199 = vmatprep.subr.mxu0 0.0
      %11200 = vmatpush2.msra.mxu0 0.0
      %11201 = vmatprep.subr.mxu0 0.0
      %11202 = vmatpush2.msra.mxu0 0.0
      %11203 = vmatprep.subr.mxu0 0.0
      %11204 = vmatpush2.msra.mxu0 0.0
      %11205 = vmatprep.subr.mxu0 0.0
      %11206 = vmatpush2.msra.mxu0 0.0
      %11207 = vmatprep.subr.mxu0 0.0
      %11208 = vmatpush2.msra.mxu0 0.0
      %11209 = vmatprep.subr.mxu0 0.0
      %11210 = vmatpush2.msra.mxu0 0.0
      %11211 = vmatprep.subr.mxu0 0.0
      %11212 = vmatpush2.msra.mxu0 0.0
      %11213 = vmatprep.subr.mxu0 0.0
      %11214 = vmatpush2.msra.mxu0 0.0
      %11215 = vmatprep.subr.mxu0 0.0
      %11216 = vmatpush2.msra.mxu0 0.0
      %11217 = vmatprep.subr.mxu0 0.0
      %11218 = vmatpush2.msra.mxu0 0.0
      %11219 = vmatprep.subr.mxu0 0.0
      %11220 = vmatpush2.msra.mxu0 0.0
      %11221 = vmatprep.mubr.f32.mxu0 0.0
      %11222 = vmatmul.mubr.f32.gmra.mxu0 %v11059
      %v11223 = vpop.f32.mrf.mxu0
      %v11224 = vadd.f32 0.0, %v11223
      %v11225 = vpop.f32.mrf.mxu0
      %11226 = vmatprep.mubr.f32.mxu0 0.0
      %11227 = vmatmul.mubr.f32.gmra.mxu0 %v11062
      %v11228 = vpop.f32.mrf.mxu0
      %v11229 = vadd.f32 0.0, %v11228
      %v11230 = vpop.f32.mrf.mxu0
      %11231 = vmatprep.mubr.f32.mxu0 0.0
      %11232 = vmatmul.mubr.f32.gmra.mxu0 %v11065
      %v11233 = vpop.f32.mrf.mxu0
      %v11234 = vadd.f32 0.0, %v11233
      %v11235 = vpop.f32.mrf.mxu0
      %11236 = vmatprep.mubr.f32.mxu0 0.0
      %11237 = vmatmul.mubr.f32.gmra.mxu0 %v11068
      %v11238 = vpop.f32.mrf.mxu0
      %v11239 = vadd.f32 0.0, %v11238
      %v11240 = vpop.f32.mrf.mxu0
      %11241 = vmatprep.mubr.f32.mxu0 0.0
      %11242 = vmatmul.mubr.f32.gmra.mxu0 %v11071
      %v11243 = vpop.f32.mrf.mxu0
      %v11244 = vadd.f32 0.0, %v11243
      %v11245 = vpop.f32.mrf.mxu0
      %11246 = vmatprep.mubr.f32.mxu0 0.0
      %11247 = vmatmul.mubr.f32.gmra.mxu0 %v11074
      %v11248 = vpop.f32.mrf.mxu0
      %v11249 = vadd.f32 0.0, %v11248
      %v11250 = vpop.f32.mrf.mxu0
      %11251 = vmatprep.mubr.f32.mxu0 0.0
      %11252 = vmatmul.mubr.f32.gmra.mxu0 %v11077
      %v11253 = vpop.f32.mrf.mxu0
      %v11254 = vadd.f32 0.0, %v11253
      %v11255 = vpop.f32.mrf.mxu0
      %11256 = vmatprep.mubr.f32.mxu0 0.0
      %11257 = vmatmul.mubr.f32.gmra.mxu0 %v11080
      %v11258 = vpop.f32.mrf.mxu0
      %v11259 = vadd.f32 0.0, %v11258
      %v11260 = vpop.f32.mrf.mxu0
      %11261 = vmatprep.mubr.f32.mxu0 0.0
      %11262 = vmatmul.mubr.f32.gmra.mxu0 %v11083
      %v11263 = vpop.f32.mrf.mxu0
      %v11264 = vadd.f32 0.0, %v11263
      %v11265 = vpop.f32.mrf.mxu0
      %11266 = vmatprep.mubr.f32.mxu0 0.0
      %11267 = vmatmul.mubr.f32.gmra.mxu0 %v11086
      %v11268 = vpop.f32.mrf.mxu0
      %v11269 = vadd.f32 0.0, %v11268
      %v11270 = vpop.f32.mrf.mxu0
      %11271 = vmatprep.mubr.f32.mxu0 0.0
      %11272 = vmatmul.mubr.f32.gmra.mxu0 %v11089
      %v11273 = vpop.f32.mrf.mxu0
      %v11274 = vadd.f32 0.0, %v11273
      %v11275 = vpop.f32.mrf.mxu0
      %11276 = vmatprep.mubr.f32.mxu0 0.0
      %11277 = vmatmul.mubr.f32.gmra.mxu0 %v11092
      %v11278 = vpop.f32.mrf.mxu0
      %v11279 = vadd.f32 0.0, %v11278
      %v11280 = vpop.f32.mrf.mxu0
      %11281 = vmatprep.mubr.f32.mxu0 0.0
      %11282 = vmatmul.mubr.f32.gmra.mxu0 %v11095
      %v11283 = vpop.f32.mrf.mxu0
      %v11284 = vadd.f32 0.0, %v11283
      %v11285 = vpop.f32.mrf.mxu0
      %11286 = vmatprep.mubr.f32.mxu0 0.0
      %11287 = vmatmul.mubr.f32.gmra.mxu0 %v11098
      %v11288 = vpop.f32.mrf.mxu0
      %v11289 = vadd.f32 0.0, %v11288
      %v11290 = vpop.f32.mrf.mxu0
      %11291 = vmatprep.mubr.f32.mxu0 0.0
      %11292 = vmatmul.mubr.f32.gmra.mxu0 %v11101
      %v11293 = vpop.f32.mrf.mxu0
      %v11294 = vadd.f32 0.0, %v11293
      %v11295 = vpop.f32.mrf.mxu0
      %11296 = vmatprep.mubr.f32.mxu0 0.0
      %11297 = vmatmul.mubr.f32.gmra.mxu0 %v11104
      %v11298 = vpop.f32.mrf.mxu0
      %v11299 = vadd.f32 0.0, %v11298
      %v11300 = vpop.f32.mrf.mxu0
      %11301 = vmatprep.mubr.f32.mxu0 0.0
      %11302 = vmatmul.mubr.f32.gmra.mxu0 %v11107
      %v11303 = vpop.f32.mrf.mxu0
      %v11304 = vadd.f32 0.0, %v11303
      %v11305 = vpop.f32.mrf.mxu0
      %11306 = vmatprep.mubr.f32.mxu0 0.0
      %11307 = vmatmul.mubr.f32.gmra.mxu0 %v11110
      %v11308 = vpop.f32.mrf.mxu0
      %v11309 = vadd.f32 0.0, %v11308
      %v11310 = vpop.f32.mrf.mxu0
      %11311 = vmatprep.mubr.f32.mxu0 0.0
      %11312 = vmatmul.mubr.f32.gmra.mxu0 %v11113
      %v11313 = vpop.f32.mrf.mxu0
      %v11314 = vadd.f32 0.0, %v11313
      %v11315 = vpop.f32.mrf.mxu0
      %11316 = vmatprep.mubr.f32.mxu0 0.0
      %11317 = vmatmul.mubr.f32.gmra.mxu0 %v11116
      %v11318 = vpop.f32.mrf.mxu0
      %v11319 = vadd.f32 0.0, %v11318
      %v11320 = vpop.f32.mrf.mxu0
      %11321 = vmatprep.mubr.f32.mxu0 0.0
      %11322 = vmatmul.mubr.f32.gmra.mxu0 %v11119
      %v11323 = vpop.f32.mrf.mxu0
      %v11324 = vadd.f32 0.0, %v11323
      %v11325 = vpop.f32.mrf.mxu0
      %11326 = vmatprep.mubr.f32.mxu0 0.0
      %11327 = vmatmul.mubr.f32.gmra.mxu0 %v11122
      %v11328 = vpop.f32.mrf.mxu0
      %v11329 = vadd.f32 0.0, %v11328
      %v11330 = vpop.f32.mrf.mxu0
      %11331 = vmatprep.mubr.f32.mxu0 0.0
      %11332 = vmatmul.mubr.f32.gmra.mxu0 %v11125
      %v11333 = vpop.f32.mrf.mxu0
      %v11334 = vadd.f32 0.0, %v11333
      %v11335 = vpop.f32.mrf.mxu0
      %11336 = vmatprep.mubr.f32.mxu0 0.0
      %11337 = vmatmul.mubr.f32.gmra.mxu0 %v11128
      %v11338 = vpop.f32.mrf.mxu0
      %v11339 = vadd.f32 0.0, %v11338
      %v11340 = vpop.f32.mrf.mxu0
      %11341 = vmatprep.mubr.f32.mxu0 0.0
      %11342 = vmatmul.mubr.f32.gmra.mxu0 %v11131
      %v11343 = vpop.f32.mrf.mxu0
      %v11344 = vadd.f32 0.0, %v11343
      %v11345 = vpop.f32.mrf.mxu0
      %11346 = vmatprep.mubr.f32.mxu0 0.0
      %11347 = vmatmul.mubr.f32.gmra.mxu0 %v11134
      %v11348 = vpop.f32.mrf.mxu0
      %v11349 = vadd.f32 0.0, %v11348
      %v11350 = vpop.f32.mrf.mxu0
      %11351 = vmatprep.mubr.f32.mxu0 0.0
      %11352 = vmatmul.mubr.f32.gmra.mxu0 %v11137
      %v11353 = vpop.f32.mrf.mxu0
      %v11354 = vadd.f32 0.0, %v11353
      %v11355 = vpop.f32.mrf.mxu0
      %11356 = vmatprep.mubr.f32.mxu0 0.0
      %11357 = vmatmul.mubr.f32.gmra.mxu0 %v11140
      %v11358 = vpop.f32.mrf.mxu0
      %v11359 = vadd.f32 0.0, %v11358
      %v11360 = vpop.f32.mrf.mxu0
      %11361 = vmatprep.mubr.f32.mxu0 0.0
      %11362 = vmatmul.mubr.f32.gmra.mxu0 %v11143
      %v11363 = vpop.f32.mrf.mxu0
      %v11364 = vadd.f32 0.0, %v11363
      %v11365 = vpop.f32.mrf.mxu0
      %11366 = vmatprep.mubr.f32.mxu0 0.0
      %11367 = vmatmul.mubr.f32.gmra.mxu0 %v11146
      %v11368 = vpop.f32.mrf.mxu0
      %v11369 = vadd.f32 0.0, %v11368
      %v11370 = vpop.f32.mrf.mxu0
      %11371 = vmatprep.mubr.f32.mxu0 0.0
      %11372 = vmatmul.mubr.f32.gmra.mxu0 %v11149
      %v11373 = vpop.f32.mrf.mxu0
      %v11374 = vadd.f32 0.0, %v11373
      %v11375 = vpop.f32.mrf.mxu0
      %11376 = vmatprep.mubr.f32.mxu0 0.0
      %11377 = vmatmul.mubr.f32.gmra.mxu0 %v11152
      %v11378 = vpop.f32.mrf.mxu0
      %v11379 = vadd.f32 0.0, %v11378
      %v11380 = vpop.f32.mrf.mxu0
      %11381 = vdwg.mxu0
      %v11382 = vadd.f32 %v10992, %v11224
      %v11383 = vadd.f32 %v10993, %v11229
      %v11384 = vadd.f32 %v10994, %v11234
      %v11385 = vadd.f32 %v10995, %v11239
      %v11386 = vadd.f32 %v10996, %v11244
      %v11387 = vadd.f32 %v10997, %v11249
      %v11388 = vadd.f32 %v10998, %v11254
      %v11389 = vadd.f32 %v10999, %v11259
      %v11390 = vadd.f32 %v11000, %v11264
      %v11391 = vadd.f32 %v11001, %v11269
      %v11392 = vadd.f32 %v11002, %v11274
      %v11393 = vadd.f32 %v11003, %v11279
      %v11394 = vadd.f32 %v11004, %v11284
      %v11395 = vadd.f32 %v11005, %v11289
      %v11396 = vadd.f32 %v11006, %v11294
      %v11397 = vadd.f32 %v11007, %v11299
      %v11398 = vadd.f32 %v11008, %v11304
      %v11399 = vadd.f32 %v11009, %v11309
      %v11400 = vadd.f32 %v11010, %v11314
      %v11401 = vadd.f32 %v11011, %v11319
      %v11402 = vadd.f32 %v11012, %v11324
      %v11403 = vadd.f32 %v11013, %v11329
      %v11404 = vadd.f32 %v11014, %v11334
      %v11405 = vadd.f32 %v11015, %v11339
      %v11406 = vadd.f32 %v11016, %v11344
      %v11407 = vadd.f32 %v11017, %v11349
      %v11408 = vadd.f32 %v11018, %v11354
      %v11409 = vadd.f32 %v11019, %v11359
      %v11410 = vadd.f32 %v11020, %v11364
      %v11411 = vadd.f32 %v11021, %v11369
      %v11412 = vadd.f32 %v11022, %v11374
      %v11413 = vadd.f32 %v11023, %v11379
      %v11414 = vld [vmem:[%s10633 + $0x2] sm:$0xff]
      %v11415 = vld [vmem:[%s10633 + $0x12] sm:$0xff]
      %v11416 = vld [vmem:[%s10633 + $0x22] sm:$0xff]
      %v11417 = vld [vmem:[%s10633 + $0x32] sm:$0xff]
      %v11418 = vld [vmem:[%s10633 + $0x42] sm:$0xff]
      %v11419 = vld [vmem:[%s10633 + $0x52] sm:$0xff]
      %v11420 = vld [vmem:[%s10633 + $0x62] sm:$0xff]
      %v11421 = vld [vmem:[%s10633 + $0x72] sm:$0xff]
      %v11422 = vld [vmem:[%s10633 + $0xa2] sm:$0xff]
      %v11423 = vld [vmem:[%s10633 + $0xb2] sm:$0xff]
      %v11424 = vld [vmem:[%s10633 + $0xc2] sm:$0xff]
      %v11425 = vld [vmem:[%s10633 + $0xd2] sm:$0xff]
      %v11426 = vld [vmem:[%s10633 + $0xe2] sm:$0xff]
      %v11427 = vld [vmem:[%s10633 + $0xf2] sm:$0xff]
      %v11428 = vld [vmem:[%s10633 + $0x102] sm:$0xff]
      %v11429 = vld [vmem:[%s10633 + $0x112] sm:$0xff]
      %v11430 = vld [vmem:[%s10633 + $0x142] sm:$0xff]
      %v11431 = vld [vmem:[%s10633 + $0x152] sm:$0xff]
      %v11432 = vld [vmem:[%s10633 + $0x162] sm:$0xff]
      %v11433 = vld [vmem:[%s10633 + $0x172] sm:$0xff]
      %v11434 = vld [vmem:[%s10633 + $0x182] sm:$0xff]
      %v11435 = vld [vmem:[%s10633 + $0x192] sm:$0xff]
      %v11436 = vld [vmem:[%s10633 + $0x1a2] sm:$0xff]
      %v11437 = vld [vmem:[%s10633 + $0x1b2] sm:$0xff]
      %v11438 = vld [vmem:[%s10633 + $0x1e2] sm:$0xff]
      %v11439 = vld [vmem:[%s10633 + $0x1f2] sm:$0xff]
      %v11440 = vld [vmem:[%s10633 + $0x202] sm:$0xff]
      %v11441 = vld [vmem:[%s10633 + $0x212] sm:$0xff]
      %v11442 = vld [vmem:[%s10633 + $0x222] sm:$0xff]
      %v11443 = vld [vmem:[%s10633 + $0x232] sm:$0xff]
      %v11444 = vld [vmem:[%s10633 + $0x242] sm:$0xff]
      %v11445 = vld [vmem:[%s10633 + $0x252] sm:$0xff]
      %s11446 = scalar_lea.vmem %s5, 52
      %v11447 = vld [vmem:[%s11446] sm:$0x3]
      %v11449 = vsel %vm451, %v11414, 0
      %v11452 = vsel %vm451, %v11415, 0
      %v11455 = vsel %vm451, %v11416, 0
      %v11458 = vsel %vm451, %v11417, 0
      %v11461 = vsel %vm451, %v11418, 0
      %v11464 = vsel %vm451, %v11419, 0
      %v11467 = vsel %vm451, %v11420, 0
      %v11470 = vsel %vm451, %v11421, 0
      %v11473 = vsel %vm451, %v11422, 0
      %v11476 = vsel %vm451, %v11423, 0
      %v11479 = vsel %vm451, %v11424, 0
      %v11482 = vsel %vm451, %v11425, 0
      %v11485 = vsel %vm451, %v11426, 0
      %v11488 = vsel %vm451, %v11427, 0
      %v11491 = vsel %vm451, %v11428, 0
      %v11494 = vsel %vm451, %v11429, 0
      %v11497 = vsel %vm451, %v11430, 0
      %v11500 = vsel %vm451, %v11431, 0
      %v11503 = vsel %vm451, %v11432, 0
      %v11506 = vsel %vm451, %v11433, 0
      %v11509 = vsel %vm451, %v11434, 0
      %v11512 = vsel %vm451, %v11435, 0
      %v11515 = vsel %vm451, %v11436, 0
      %v11518 = vsel %vm451, %v11437, 0
      %v11521 = vsel %vm451, %v11438, 0
      %v11524 = vsel %vm451, %v11439, 0
      %v11527 = vsel %vm451, %v11440, 0
      %v11530 = vsel %vm451, %v11441, 0
      %v11533 = vsel %vm451, %v11442, 0
      %v11536 = vsel %vm451, %v11443, 0
      %v11539 = vsel %vm451, %v11444, 0
      %v11542 = vsel %vm451, %v11445, 0
      %v11545 = vsel %vm1495, %v11447, 0
      %11547 = vmatprep.subr.mxu0 0.0
      %11548 = vmatpush1.msra.mxu0 0.0
      %11549 = vmatprep.subr.mxu0 0.0
      %11550 = vmatpush1.msra.mxu0 0.0
      %11551 = vmatprep.subr.mxu0 0.0
      %11552 = vmatpush1.msra.mxu0 0.0
      %11553 = vmatprep.subr.mxu0 0.0
      %11554 = vmatpush1.msra.mxu0 0.0
      %11555 = vmatprep.subr.mxu0 0.0
      %11556 = vmatpush1.msra.mxu0 0.0
      %11557 = vmatprep.subr.mxu0 0.0
      %11558 = vmatpush1.msra.mxu0 0.0
      %11559 = vmatprep.subr.mxu0 0.0
      %11560 = vmatpush1.msra.mxu0 0.0
      %11561 = vmatprep.subr.mxu0 0.0
      %11562 = vmatpush1.msra.mxu0 0.0
      %11563 = vmatprep.subr.mxu0 0.0
      %11564 = vmatpush1.msra.mxu0 0.0
      %11565 = vmatprep.subr.mxu0 0.0
      %11566 = vmatpush1.msra.mxu0 0.0
      %11567 = vmatprep.subr.mxu0 0.0
      %11568 = vmatpush1.msra.mxu0 0.0
      %11569 = vmatprep.subr.mxu0 0.0
      %11570 = vmatpush1.msra.mxu0 0.0
      %11571 = vmatprep.subr.mxu0 0.0
      %11572 = vmatpush1.msra.mxu0 0.0
      %11573 = vmatprep.subr.mxu0 0.0
      %11574 = vmatpush1.msra.mxu0 0.0
      %11575 = vmatprep.subr.mxu0 0.0
      %11576 = vmatpush1.msra.mxu0 0.0
      %11577 = vmatprep.subr.mxu0 0.0
      %11578 = vmatpush1.msra.mxu0 %v11545
      %11579 = vmatprep.subr.mxu0 0.0
      %11580 = vmatpush2.msra.mxu0 0.0
      %11581 = vmatprep.subr.mxu0 0.0
      %11582 = vmatpush2.msra.mxu0 0.0
      %11583 = vmatprep.subr.mxu0 0.0
      %11584 = vmatpush2.msra.mxu0 0.0
      %11585 = vmatprep.subr.mxu0 0.0
      %11586 = vmatpush2.msra.mxu0 0.0
      %11587 = vmatprep.subr.mxu0 0.0
      %11588 = vmatpush2.msra.mxu0 0.0
      %11589 = vmatprep.subr.mxu0 0.0
      %11590 = vmatpush2.msra.mxu0 0.0
      %11591 = vmatprep.subr.mxu0 0.0
      %11592 = vmatpush2.msra.mxu0 0.0
      %11593 = vmatprep.subr.mxu0 0.0
      %11594 = vmatpush2.msra.mxu0 0.0
      %11595 = vmatprep.subr.mxu0 0.0
      %11596 = vmatpush2.msra.mxu0 0.0
      %11597 = vmatprep.subr.mxu0 0.0
      %11598 = vmatpush2.msra.mxu0 0.0
      %11599 = vmatprep.subr.mxu0 0.0
      %11600 = vmatpush2.msra.mxu0 0.0
      %11601 = vmatprep.subr.mxu0 0.0
      %11602 = vmatpush2.msra.mxu0 0.0
      %11603 = vmatprep.subr.mxu0 0.0
      %11604 = vmatpush2.msra.mxu0 0.0
      %11605 = vmatprep.subr.mxu0 0.0
      %11606 = vmatpush2.msra.mxu0 0.0
      %11607 = vmatprep.subr.mxu0 0.0
      %11608 = vmatpush2.msra.mxu0 0.0
      %11609 = vmatprep.subr.mxu0 0.0
      %11610 = vmatpush2.msra.mxu0 0.0
      %11611 = vmatprep.mubr.f32.mxu0 0.0
      %11612 = vmatmul.mubr.f32.gmra.mxu0 %v11449
      %v11613 = vpop.f32.mrf.mxu0
      %v11614 = vadd.f32 0.0, %v11613
      %v11615 = vpop.f32.mrf.mxu0
      %11616 = vmatprep.mubr.f32.mxu0 0.0
      %11617 = vmatmul.mubr.f32.gmra.mxu0 %v11452
      %v11618 = vpop.f32.mrf.mxu0
      %v11619 = vadd.f32 0.0, %v11618
      %v11620 = vpop.f32.mrf.mxu0
      %11621 = vmatprep.mubr.f32.mxu0 0.0
      %11622 = vmatmul.mubr.f32.gmra.mxu0 %v11455
      %v11623 = vpop.f32.mrf.mxu0
      %v11624 = vadd.f32 0.0, %v11623
      %v11625 = vpop.f32.mrf.mxu0
      %11626 = vmatprep.mubr.f32.mxu0 0.0
      %11627 = vmatmul.mubr.f32.gmra.mxu0 %v11458
      %v11628 = vpop.f32.mrf.mxu0
      %v11629 = vadd.f32 0.0, %v11628
      %v11630 = vpop.f32.mrf.mxu0
      %11631 = vmatprep.mubr.f32.mxu0 0.0
      %11632 = vmatmul.mubr.f32.gmra.mxu0 %v11461
      %v11633 = vpop.f32.mrf.mxu0
      %v11634 = vadd.f32 0.0, %v11633
      %v11635 = vpop.f32.mrf.mxu0
      %11636 = vmatprep.mubr.f32.mxu0 0.0
      %11637 = vmatmul.mubr.f32.gmra.mxu0 %v11464
      %v11638 = vpop.f32.mrf.mxu0
      %v11639 = vadd.f32 0.0, %v11638
      %v11640 = vpop.f32.mrf.mxu0
      %11641 = vmatprep.mubr.f32.mxu0 0.0
      %11642 = vmatmul.mubr.f32.gmra.mxu0 %v11467
      %v11643 = vpop.f32.mrf.mxu0
      %v11644 = vadd.f32 0.0, %v11643
      %v11645 = vpop.f32.mrf.mxu0
      %11646 = vmatprep.mubr.f32.mxu0 0.0
      %11647 = vmatmul.mubr.f32.gmra.mxu0 %v11470
      %v11648 = vpop.f32.mrf.mxu0
      %v11649 = vadd.f32 0.0, %v11648
      %v11650 = vpop.f32.mrf.mxu0
      %11651 = vmatprep.mubr.f32.mxu0 0.0
      %11652 = vmatmul.mubr.f32.gmra.mxu0 %v11473
      %v11653 = vpop.f32.mrf.mxu0
      %v11654 = vadd.f32 0.0, %v11653
      %v11655 = vpop.f32.mrf.mxu0
      %11656 = vmatprep.mubr.f32.mxu0 0.0
      %11657 = vmatmul.mubr.f32.gmra.mxu0 %v11476
      %v11658 = vpop.f32.mrf.mxu0
      %v11659 = vadd.f32 0.0, %v11658
      %v11660 = vpop.f32.mrf.mxu0
      %11661 = vmatprep.mubr.f32.mxu0 0.0
      %11662 = vmatmul.mubr.f32.gmra.mxu0 %v11479
      %v11663 = vpop.f32.mrf.mxu0
      %v11664 = vadd.f32 0.0, %v11663
      %v11665 = vpop.f32.mrf.mxu0
      %11666 = vmatprep.mubr.f32.mxu0 0.0
      %11667 = vmatmul.mubr.f32.gmra.mxu0 %v11482
      %v11668 = vpop.f32.mrf.mxu0
      %v11669 = vadd.f32 0.0, %v11668
      %v11670 = vpop.f32.mrf.mxu0
      %11671 = vmatprep.mubr.f32.mxu0 0.0
      %11672 = vmatmul.mubr.f32.gmra.mxu0 %v11485
      %v11673 = vpop.f32.mrf.mxu0
      %v11674 = vadd.f32 0.0, %v11673
      %v11675 = vpop.f32.mrf.mxu0
      %11676 = vmatprep.mubr.f32.mxu0 0.0
      %11677 = vmatmul.mubr.f32.gmra.mxu0 %v11488
      %v11678 = vpop.f32.mrf.mxu0
      %v11679 = vadd.f32 0.0, %v11678
      %v11680 = vpop.f32.mrf.mxu0
      %11681 = vmatprep.mubr.f32.mxu0 0.0
      %11682 = vmatmul.mubr.f32.gmra.mxu0 %v11491
      %v11683 = vpop.f32.mrf.mxu0
      %v11684 = vadd.f32 0.0, %v11683
      %v11685 = vpop.f32.mrf.mxu0
      %11686 = vmatprep.mubr.f32.mxu0 0.0
      %11687 = vmatmul.mubr.f32.gmra.mxu0 %v11494
      %v11688 = vpop.f32.mrf.mxu0
      %v11689 = vadd.f32 0.0, %v11688
      %v11690 = vpop.f32.mrf.mxu0
      %11691 = vmatprep.mubr.f32.mxu0 0.0
      %11692 = vmatmul.mubr.f32.gmra.mxu0 %v11497
      %v11693 = vpop.f32.mrf.mxu0
      %v11694 = vadd.f32 0.0, %v11693
      %v11695 = vpop.f32.mrf.mxu0
      %11696 = vmatprep.mubr.f32.mxu0 0.0
      %11697 = vmatmul.mubr.f32.gmra.mxu0 %v11500
      %v11698 = vpop.f32.mrf.mxu0
      %v11699 = vadd.f32 0.0, %v11698
      %v11700 = vpop.f32.mrf.mxu0
      %11701 = vmatprep.mubr.f32.mxu0 0.0
      %11702 = vmatmul.mubr.f32.gmra.mxu0 %v11503
      %v11703 = vpop.f32.mrf.mxu0
      %v11704 = vadd.f32 0.0, %v11703
      %v11705 = vpop.f32.mrf.mxu0
      %11706 = vmatprep.mubr.f32.mxu0 0.0
      %11707 = vmatmul.mubr.f32.gmra.mxu0 %v11506
      %v11708 = vpop.f32.mrf.mxu0
      %v11709 = vadd.f32 0.0, %v11708
      %v11710 = vpop.f32.mrf.mxu0
      %11711 = vmatprep.mubr.f32.mxu0 0.0
      %11712 = vmatmul.mubr.f32.gmra.mxu0 %v11509
      %v11713 = vpop.f32.mrf.mxu0
      %v11714 = vadd.f32 0.0, %v11713
      %v11715 = vpop.f32.mrf.mxu0
      %11716 = vmatprep.mubr.f32.mxu0 0.0
      %11717 = vmatmul.mubr.f32.gmra.mxu0 %v11512
      %v11718 = vpop.f32.mrf.mxu0
      %v11719 = vadd.f32 0.0, %v11718
      %v11720 = vpop.f32.mrf.mxu0
      %11721 = vmatprep.mubr.f32.mxu0 0.0
      %11722 = vmatmul.mubr.f32.gmra.mxu0 %v11515
      %v11723 = vpop.f32.mrf.mxu0
      %v11724 = vadd.f32 0.0, %v11723
      %v11725 = vpop.f32.mrf.mxu0
      %11726 = vmatprep.mubr.f32.mxu0 0.0
      %11727 = vmatmul.mubr.f32.gmra.mxu0 %v11518
      %v11728 = vpop.f32.mrf.mxu0
      %v11729 = vadd.f32 0.0, %v11728
      %v11730 = vpop.f32.mrf.mxu0
      %11731 = vmatprep.mubr.f32.mxu0 0.0
      %11732 = vmatmul.mubr.f32.gmra.mxu0 %v11521
      %v11733 = vpop.f32.mrf.mxu0
      %v11734 = vadd.f32 0.0, %v11733
      %v11735 = vpop.f32.mrf.mxu0
      %11736 = vmatprep.mubr.f32.mxu0 0.0
      %11737 = vmatmul.mubr.f32.gmra.mxu0 %v11524
      %v11738 = vpop.f32.mrf.mxu0
      %v11739 = vadd.f32 0.0, %v11738
      %v11740 = vpop.f32.mrf.mxu0
      %11741 = vmatprep.mubr.f32.mxu0 0.0
      %11742 = vmatmul.mubr.f32.gmra.mxu0 %v11527
      %v11743 = vpop.f32.mrf.mxu0
      %v11744 = vadd.f32 0.0, %v11743
      %v11745 = vpop.f32.mrf.mxu0
      %11746 = vmatprep.mubr.f32.mxu0 0.0
      %11747 = vmatmul.mubr.f32.gmra.mxu0 %v11530
      %v11748 = vpop.f32.mrf.mxu0
      %v11749 = vadd.f32 0.0, %v11748
      %v11750 = vpop.f32.mrf.mxu0
      %11751 = vmatprep.mubr.f32.mxu0 0.0
      %11752 = vmatmul.mubr.f32.gmra.mxu0 %v11533
      %v11753 = vpop.f32.mrf.mxu0
      %v11754 = vadd.f32 0.0, %v11753
      %v11755 = vpop.f32.mrf.mxu0
      %11756 = vmatprep.mubr.f32.mxu0 0.0
      %11757 = vmatmul.mubr.f32.gmra.mxu0 %v11536
      %v11758 = vpop.f32.mrf.mxu0
      %v11759 = vadd.f32 0.0, %v11758
      %v11760 = vpop.f32.mrf.mxu0
      %11761 = vmatprep.mubr.f32.mxu0 0.0
      %11762 = vmatmul.mubr.f32.gmra.mxu0 %v11539
      %v11763 = vpop.f32.mrf.mxu0
      %v11764 = vadd.f32 0.0, %v11763
      %v11765 = vpop.f32.mrf.mxu0
      %11766 = vmatprep.mubr.f32.mxu0 0.0
      %11767 = vmatmul.mubr.f32.gmra.mxu0 %v11542
      %v11768 = vpop.f32.mrf.mxu0
      %v11769 = vadd.f32 0.0, %v11768
      %v11770 = vpop.f32.mrf.mxu0
      %11771 = vdwg.mxu0
      %v11772 = vadd.f32 %v11382, %v11614
      %v11773 = vadd.f32 %v11383, %v11619
      %v11774 = vadd.f32 %v11384, %v11624
      %v11775 = vadd.f32 %v11385, %v11629
      %v11776 = vadd.f32 %v11386, %v11634
      %v11777 = vadd.f32 %v11387, %v11639
      %v11778 = vadd.f32 %v11388, %v11644
      %v11779 = vadd.f32 %v11389, %v11649
      %v11780 = vadd.f32 %v11390, %v11654
      %v11781 = vadd.f32 %v11391, %v11659
      %v11782 = vadd.f32 %v11392, %v11664
      %v11783 = vadd.f32 %v11393, %v11669
      %v11784 = vadd.f32 %v11394, %v11674
      %v11785 = vadd.f32 %v11395, %v11679
      %v11786 = vadd.f32 %v11396, %v11684
      %v11787 = vadd.f32 %v11397, %v11689
      %v11788 = vadd.f32 %v11398, %v11694
      %v11789 = vadd.f32 %v11399, %v11699
      %v11790 = vadd.f32 %v11400, %v11704
      %v11791 = vadd.f32 %v11401, %v11709
      %v11792 = vadd.f32 %v11402, %v11714
      %v11793 = vadd.f32 %v11403, %v11719
      %v11794 = vadd.f32 %v11404, %v11724
      %v11795 = vadd.f32 %v11405, %v11729
      %v11796 = vadd.f32 %v11406, %v11734
      %v11797 = vadd.f32 %v11407, %v11739
      %v11798 = vadd.f32 %v11408, %v11744
      %v11799 = vadd.f32 %v11409, %v11749
      %v11800 = vadd.f32 %v11410, %v11754
      %v11801 = vadd.f32 %v11411, %v11759
      %v11802 = vadd.f32 %v11412, %v11764
      %v11803 = vadd.f32 %v11413, %v11769
      %v11804 = vld [vmem:[%s6] sm:$0x1]
      %v11806 = vlaneseq
      %v11807 = vshrl.u32 %v11806, 7
      %v11808 = vsub.s32 0, %v11807
      %v11809 = vrot.slane %v11804, %v11808
      %v11811 = vadd.f32 %v11772, %v11809
      %v11812 = vadd.f32 %v11773, %v11809
      %v11813 = vadd.f32 %v11774, %v11809
      %v11814 = vadd.f32 %v11775, %v11809
      %v11815 = vadd.f32 %v11776, %v11809
      %v11816 = vadd.f32 %v11777, %v11809
      %v11817 = vadd.f32 %v11778, %v11809
      %v11818 = vadd.f32 %v11779, %v11809
      %v11819 = vadd.f32 %v11780, %v11809
      %v11820 = vadd.f32 %v11781, %v11809
      %v11821 = vadd.f32 %v11782, %v11809
      %v11822 = vadd.f32 %v11783, %v11809
      %v11823 = vadd.f32 %v11784, %v11809
      %v11824 = vadd.f32 %v11785, %v11809
      %v11825 = vadd.f32 %v11786, %v11809
      %v11826 = vadd.f32 %v11787, %v11809
      %v11827 = vadd.f32 %v11788, %v11809
      %v11828 = vadd.f32 %v11789, %v11809
      %v11829 = vadd.f32 %v11790, %v11809
      %v11830 = vadd.f32 %v11791, %v11809
      %v11831 = vadd.f32 %v11792, %v11809
      %v11832 = vadd.f32 %v11793, %v11809
      %v11833 = vadd.f32 %v11794, %v11809
      %v11834 = vadd.f32 %v11795, %v11809
      %v11835 = vadd.f32 %v11796, %v11809
      %v11836 = vadd.f32 %v11797, %v11809
      %v11837 = vadd.f32 %v11798, %v11809
      %v11838 = vadd.f32 %v11799, %v11809
      %v11839 = vadd.f32 %v11800, %v11809
      %v11840 = vadd.f32 %v11801, %v11809
      %v11841 = vadd.f32 %v11802, %v11809
      %v11842 = vadd.f32 %v11803, %v11809
      %v11843 = vmax.f32 %v11811, 0.0
      %v11844 = vmax.f32 %v11812, 0.0
      %v11845 = vmax.f32 %v11813, 0.0
      %v11846 = vmax.f32 %v11814, 0.0
      %v11847 = vmax.f32 %v11815, 0.0
      %v11848 = vmax.f32 %v11816, 0.0
      %v11849 = vmax.f32 %v11817, 0.0
      %v11850 = vmax.f32 %v11818, 0.0
      %v11851 = vmax.f32 %v11819, 0.0
      %v11852 = vmax.f32 %v11820, 0.0
      %v11853 = vmax.f32 %v11821, 0.0
      %v11854 = vmax.f32 %v11822, 0.0
      %v11855 = vmax.f32 %v11823, 0.0
      %v11856 = vmax.f32 %v11824, 0.0
      %v11857 = vmax.f32 %v11825, 0.0
      %v11858 = vmax.f32 %v11826, 0.0
      %v11859 = vmax.f32 %v11827, 0.0
      %v11860 = vmax.f32 %v11828, 0.0
      %v11861 = vmax.f32 %v11829, 0.0
      %v11862 = vmax.f32 %v11830, 0.0
      %v11863 = vmax.f32 %v11831, 0.0
      %v11864 = vmax.f32 %v11832, 0.0
      %v11865 = vmax.f32 %v11833, 0.0
      %v11866 = vmax.f32 %v11834, 0.0
      %v11867 = vmax.f32 %v11835, 0.0
      %v11868 = vmax.f32 %v11836, 0.0
      %v11869 = vmax.f32 %v11837, 0.0
      %v11870 = vmax.f32 %v11838, 0.0
      %v11871 = vmax.f32 %v11839, 0.0
      %v11872 = vmax.f32 %v11840, 0.0
      %v11873 = vmax.f32 %v11841, 0.0
      %v11874 = vmax.f32 %v11842, 0.0
      %v11875 = vadd.f32 %v11843, %v573
      %v11876 = vadd.f32 %v11844, %v574
      %v11877 = vadd.f32 %v11845, %v575
      %v11878 = vadd.f32 %v11846, %v576
      %v11879 = vadd.f32 %v11847, %v577
      %v11880 = vadd.f32 %v11848, %v578
      %v11881 = vadd.f32 %v11849, %v579
      %v11882 = vadd.f32 %v11850, %v580
      %v11883 = vadd.f32 %v11851, %v581
      %v11884 = vadd.f32 %v11852, %v582
      %v11885 = vadd.f32 %v11853, %v583
      %v11886 = vadd.f32 %v11854, %v584
      %v11887 = vadd.f32 %v11855, %v585
      %v11888 = vadd.f32 %v11856, %v586
      %v11889 = vadd.f32 %v11857, %v587
      %v11890 = vadd.f32 %v11858, %v588
      %v11891 = vadd.f32 %v11859, %v589
      %v11892 = vadd.f32 %v11860, %v590
      %v11893 = vadd.f32 %v11861, %v591
      %v11894 = vadd.f32 %v11862, %v592
      %v11895 = vadd.f32 %v11863, %v593
      %v11896 = vadd.f32 %v11864, %v594
      %v11897 = vadd.f32 %v11865, %v595
      %v11898 = vadd.f32 %v11866, %v596
      %v11899 = vadd.f32 %v11867, %v597
      %v11900 = vadd.f32 %v11868, %v598
      %v11901 = vadd.f32 %v11869, %v599
      %v11902 = vadd.f32 %v11870, %v600
      %v11903 = vadd.f32 %v11871, %v601
      %v11904 = vadd.f32 %v11872, %v602
      %v11905 = vadd.f32 %v11873, %v603
      %v11906 = vadd.f32 %v11874, %v604
      %11907 = vst.msk [vmem:[%s445] sm:$0xff] %vm611, %v11875
      %11908 = vst.msk [vmem:[%s445 + $0x8] sm:$0xff] %vm611, %v11876
      %11909 = vst.msk [vmem:[%s445 + $0x10] sm:$0xff] %vm611, %v11877
      %11910 = vst.msk [vmem:[%s445 + $0x18] sm:$0xff] %vm611, %v11878
      %11911 = vst.msk [vmem:[%s445 + $0x20] sm:$0xff] %vm611, %v11879
      %11912 = vst.msk [vmem:[%s445 + $0x28] sm:$0xff] %vm611, %v11880
      %11913 = vst.msk [vmem:[%s445 + $0x30] sm:$0xff] %vm611, %v11881
      %11914 = vst.msk [vmem:[%s445 + $0x38] sm:$0xff] %vm611, %v11882
      %11915 = vst.msk [vmem:[%s445 + $0x40] sm:$0xff] %vm611, %v11883
      %11916 = vst.msk [vmem:[%s445 + $0x48] sm:$0xff] %vm611, %v11884
      %11917 = vst.msk [vmem:[%s445 + $0x50] sm:$0xff] %vm611, %v11885
      %11918 = vst.msk [vmem:[%s445 + $0x58] sm:$0xff] %vm611, %v11886
      %11919 = vst.msk [vmem:[%s445 + $0x60] sm:$0xff] %vm611, %v11887
      %11920 = vst.msk [vmem:[%s445 + $0x68] sm:$0xff] %vm611, %v11888
      %11921 = vst.msk [vmem:[%s445 + $0x70] sm:$0xff] %vm611, %v11889
      %11922 = vst.msk [vmem:[%s445 + $0x78] sm:$0xff] %vm611, %v11890
      %11923 = vst.msk [vmem:[%s445 + $0x80] sm:$0xff] %vm611, %v11891
      %11924 = vst.msk [vmem:[%s445 + $0x88] sm:$0xff] %vm611, %v11892
      %11925 = vst.msk [vmem:[%s445 + $0x90] sm:$0xff] %vm611, %v11893
      %11926 = vst.msk [vmem:[%s445 + $0x98] sm:$0xff] %vm611, %v11894
      %11927 = vst.msk [vmem:[%s445 + $0xa0] sm:$0xff] %vm611, %v11895
      %11928 = vst.msk [vmem:[%s445 + $0xa8] sm:$0xff] %vm611, %v11896
      %11929 = vst.msk [vmem:[%s445 + $0xb0] sm:$0xff] %vm611, %v11897
      %11930 = vst.msk [vmem:[%s445 + $0xb8] sm:$0xff] %vm611, %v11898
      %11931 = vst.msk [vmem:[%s445 + $0xc0] sm:$0xff] %vm611, %v11899
      %11932 = vst.msk [vmem:[%s445 + $0xc8] sm:$0xff] %vm611, %v11900
      %11933 = vst.msk [vmem:[%s445 + $0xd0] sm:$0xff] %vm611, %v11901
      %11934 = vst.msk [vmem:[%s445 + $0xd8] sm:$0xff] %vm611, %v11902
      %11935 = vst.msk [vmem:[%s445 + $0xe0] sm:$0xff] %vm611, %v11903
      %11936 = vst.msk [vmem:[%s445 + $0xe8] sm:$0xff] %vm611, %v11904
      %11937 = vst.msk [vmem:[%s445 + $0xf0] sm:$0xff] %vm611, %v11905
      %11938 = vst.msk [vmem:[%s445 + $0xf8] sm:$0xff] %vm611, %v11906
      %s11939 = smul.u32 4, %s23
      %p11940 = scmp.lt.s32.totalorder %s22, 1
      %s11941 = scalar_select %p11940, %s22, 1
      %p11942 = scmp.lt.s32.totalorder %s11939, 7
      %s11943 = scalar_select %p11942, %s11939, 7
      %s11944 = smul.addr %s11943, 8
      %s11945 = smul.addr %s11941, 64
      %s11946 = sadd.s32 %s11944, %s11945
      %s11947 = smul.addr %s11946, 8
      %s11948 = scalar_lea.vmem %s7, %s11947
      // Predicated region
      $region49: #{tpu_custom_call.1} parent=47 // pred_check
        %p11949 = pneg %p234
      $region50: #{tpu_custom_call.1} parent=47 // pred_check_branch
        %11951 = sbr.rel (%p11949) target = $region52
      $region51: #{tpu_custom_call.1} parent=47 // pred_region
        %s11952 = smul.u32 4, %s23
      $region52: #{tpu_custom_call.1} parent=47 // pred_fallthru
        _
    $region48: #{tpu_custom_call.1} parent=5 // pred_fallthru
      _
    %p11953 = scmp.le.s32.totalorder 2, %s13
    // Predicated region
    $region53: #{tpu_custom_call.1} parent=5 // pred_check
      %p11954 = pneg %p11953
    $region54: #{tpu_custom_call.1} parent=5 // pred_check_branch
      %11956 = sbr.rel (%p11954) target = $region56
    $region55: #{tpu_custom_call.1} parent=5 // pred_region
      %s11957 = ssub.s32 %s13, 2
      // Predicated region
      $region57: #{tpu_custom_call.1} parent=55 // pred_check
        %p11958 = pneg %p240
      $region58: #{tpu_custom_call.1} parent=55 // pred_check_branch
        %11960 = sbr.rel (%p11958) target = $region60
      $region59: #{tpu_custom_call.1} parent=55 // pred_region
        %s11961 = smul.u32 4, %s25
        %p11962 = scmp.lt.s32.totalorder %s24, 1
        %s11963 = scalar_select %p11962, %s24, 1
        %p11964 = scmp.lt.s32.totalorder %s11961, 7
        %s11965 = scalar_select %p11964, %s11961, 7
        %s11966 = smul.addr %s11965, 8
        %s11967 = smul.addr %s11963, 64
        %s11968 = sadd.s32 %s11966, %s11967
        %s11969 = smul.addr %s11968, 8
        %s11970 = scalar_lea.vmem %s7, %s11969
      $region60: #{tpu_custom_call.1} parent=55 // pred_fallthru
        _
    $region56: #{tpu_custom_call.1} parent=5 // pred_fallthru
      _
  $region6: #{tpu_custom_call.1} parent=0 // loop_footer
    %s17 = sadd.s32 1, %s13
  $region7: #{tpu_custom_call.1} parent=0 // loop_footer_branch
    %12 = sbr.rel target = $region3
  $region8: #{tpu_custom_call.1} parent=0 // loop_exit
    _

</llo_original>
